<compile_context>
chip_gen: v6e
topology: v6e:2x2x1
jax: 0.10.0
libtpu: 0.0.40
codegen_flags: <defaults>
</compile_context>

<pallas_src>
import numpy as np
import jax
import jax.numpy as jnp
from jax import lax
from jax.experimental import pallas as pl
from jax.experimental.pallas import tpu as pltpu


def _round_up(x, m):
    return (x + m - 1) // m * m


_BASE = 128  # lane offset where activations start inside padded buffers (aligned stores)


def _tap_masks(B, H, W):
    """(9, 2*B*H*W) 0/1 masks: tap (di,dj) valid iff (h+di-1, w+dj-1) is inside the image."""
    P = H * W
    pos = np.arange(2 * B * P)
    hh = (pos % P) // W
    ww = pos % W
    rows = []
    for di in range(3):
        for dj in range(3):
            h2, w2 = hh + di - 1, ww + dj - 1
            rows.append((h2 >= 0) & (h2 < H) & (w2 >= 0) & (w2 < W))
    return jnp.asarray(np.stack(rows).astype(np.float32), dtype=jnp.bfloat16)


# ----------------------------------------------------------------------------
# Fused kernel: (conv3x3 + bias + ReLU) x n_layers  +  feat-L1 + gram-L1 + pixel-L1
# ----------------------------------------------------------------------------
def _make_fused_kernel(B, H, W, layer_dims, n_pix):
    """layer_dims: list of (Cin_p, Cout_p, Cout_true) per layer."""
    P = H * W
    N = 2 * B * P           # lanes: [input batch ; target batch] x H x W
    half = B * P
    n_layers = len(layer_dims)
    offsets = [(di - 1) * W + (dj - 1) for di in range(3) for dj in range(3)]

    def kernel(*refs):
        # ---- unpack refs ----------------------------------------------------
        x_ref, masks_ref, pa_ref, pb_ref = refs[:4]
        wb = refs[4:4 + 2 * n_layers]
        w_refs, b_refs = wb[0::2], wb[1::2]
        outs = refs[4 + 2 * n_layers:5 + 4 * n_layers]
        pix_ref = outs[0]
        feat_refs = outs[1:1 + n_layers]
        gram_refs = outs[1 + n_layers:]
        scratch = refs[5 + 4 * n_layers:]            # n_layers - 1 padded VMEM buffers

        # ---- pixel L1 (f32, lane-dense) --------------------------------------
        pix_ref[...] = (jnp.sum(jnp.abs(pa_ref[...] - pb_ref[...]), keepdims=True)
                        * (1.0 / float(n_pix)))

        # ---- conv / ReLU / loss stack, all VMEM resident ----------------------
        src_ref = x_ref
        for li in range(n_layers):
            _, Cout_p, Cout = layer_dims[li]
            w_ref, b_ref = w_refs[li], b_refs[li]

            # conv as 9 shifted bf16 matmuls (fused im2col), f32 MXU accumulation
            acc = jnp.zeros((Cout_p, N), jnp.float32)
            for t, off in enumerate(offsets):
                shifted = src_ref[:, _BASE + off:_BASE + off + N]      # (Cin_p, N) bf16
                if t == 4:                                             # center tap: no border
                    masked = shifted
                else:
                    masked = shifted * masks_ref[t:t + 1, :]           # zero image borders
                acc = acc + jnp.dot(w_ref[t], masked,
                                    preferred_element_type=jnp.float32)

            feat_f32 = jnp.maximum(acc + b_ref[...], 0.0)              # bias + ReLU
            feat_bf = feat_f32.astype(jnp.bfloat16)

            # feature L1: first half of lanes = input batch, second half = target batch
            fin_f32, ftg_f32 = feat_f32[:, :half], feat_f32[:, half:]
            feat_refs[li][...] = (jnp.sum(jnp.abs(fin_f32 - ftg_f32), keepdims=True)
                                  * (1.0 / float(B * Cout * P)))

            # gram L1: per-image (C,C) grams on the MXU, |diff| summed on the fly
            gacc = jnp.zeros((1, 1), jnp.float32)
            for b in range(B):
                xi = feat_bf[:, b * P:(b + 1) * P]
                xo = feat_bf[:, half + b * P:half + (b + 1) * P]
                gi = lax.dot_general(xi, xi, (((1,), (1,)), ((), ())),
                                     preferred_element_type=jnp.float32)
                go = lax.dot_general(xo, xo, (((1,), (1,)), ((), ())),
                                     preferred_element_type=jnp.float32)
                gacc = gacc + jnp.sum(jnp.abs(gi - go), keepdims=True)
            # gram = (f @ f.T) / (C*P); L1 mean over (B, C, C)
            gram_refs[li][...] = gacc * (1.0 / float(Cout * P * B * Cout * Cout))

            # stage features (lane-padded, 128-aligned store) as the next layer's input
            if li + 1 < n_layers:
                s_ref = scratch[li]
                s_ref[:, :_BASE] = jnp.zeros((Cout_p, _BASE), jnp.bfloat16)
                s_ref[:, _BASE + N:] = jnp.zeros((Cout_p, _BASE), jnp.bfloat16)
                s_ref[:, _BASE:_BASE + N] = feat_bf
                src_ref = s_ref

    return kernel


def fused_feature_loss(inp, target, conv_params):
    """Returns [pixel_l1, feat_l1_0..n-1, gram_l1_0..n-1] as scalars from ONE pallas_call."""
    B, C, H, W = inp.shape
    P = H * W
    N = 2 * B * P
    n_layers = len(conv_params)

    # layer-0 activations: channel-major, [input; target] folded into lanes, bf16
    xcat = jnp.concatenate([inp, target], axis=0)                     # (2B, C, H, W)
    C0_p = _round_up(C, 8)
    x2 = jnp.transpose(xcat, (1, 0, 2, 3)).reshape(C, N)
    x2 = jnp.pad(x2, ((0, C0_p - C), (0, 0))).astype(jnp.bfloat16)
    x_pad = jnp.pad(x2, ((0, 0), (_BASE, _BASE)))                     # lane headroom for taps

    masks = _tap_masks(B, H, W)

    # pixel L1 operands: flatten to lane-dense (rows, 128) f32, zero-pad the tail
    n_pix = inp.size
    pad_to = _round_up(n_pix, 8 * 128)
    pa = jnp.pad(inp.reshape(-1).astype(jnp.float32), (0, pad_to - n_pix)).reshape(-1, 128)
    pb = jnp.pad(target.reshape(-1).astype(jnp.float32), (0, pad_to - n_pix)).reshape(-1, 128)

    # per-tap (Cout_p, Cin_p) weight matrices + biases, channel-padded with zeros
    layer_dims, w_inputs = [], []
    cin_p = C0_p
    for (w, b) in conv_params:
        Cout, Cin = int(w.shape[0]), int(w.shape[1])
        Cout_p = _round_up(Cout, 8)
        wt = jnp.transpose(w, (2, 3, 0, 1)).reshape(9, Cout, Cin)
        wt = jnp.pad(wt, ((0, 0), (0, Cout_p - Cout), (0, cin_p - Cin))).astype(jnp.bfloat16)
        b2 = jnp.pad(b, (0, Cout_p - Cout)).reshape(Cout_p, 1).astype(jnp.float32)
        w_inputs += [wt, b2]
        layer_dims.append((cin_p, Cout_p, Cout))
        cin_p = Cout_p

    kernel = _make_fused_kernel(B, H, W, layer_dims, n_pix)
    vmem = pl.BlockSpec(memory_space=pltpu.MemorySpace.VMEM)
    out_shape = tuple([jax.ShapeDtypeStruct((1, 1), jnp.float32)] * (1 + 2 * n_layers))
    scratch_shapes = [pltpu.VMEM((layer_dims[li][1], N + 2 * _BASE), jnp.bfloat16)
                      for li in range(n_layers - 1)]

    outs = pl.pallas_call(
        kernel,
        out_shape=out_shape,
        in_specs=[vmem] * (4 + 2 * n_layers),
        out_specs=tuple([vmem] * (1 + 2 * n_layers)),
        scratch_shapes=scratch_shapes,
    )(x_pad, masks, pa, pb, *w_inputs)
    return [o[0, 0] for o in outs]


# ----------------------------------------------------------------------------
# FeatureLoss (synthetic m_feat: conv/ReLU stack, hooked after each ReLU)
# ----------------------------------------------------------------------------
class FeatureLossPallas:
    """pixel L1 + per-hook feature L1 (* w) + gram L1 (* w**2 * 5000)."""

    def __init__(self, conv_params, layer_wgts):
        # conv_params: list of (w, b) with w: (Cout, Cin, 3, 3), b: (Cout,)
        self.params = conv_params
        self.wgts = layer_wgts
        n = len(layer_wgts)
        self.metric_names = (["pixel"]
                             + [f"feat_{i}" for i in range(n)]
                             + [f"gram_{i}" for i in range(n)])

    def __call__(self, inp, target):
        n = len(self.params)
        raw = fused_feature_loss(inp, target, self.params)
        pixel, feats, grams = raw[0], raw[1:1 + n], raw[1 + n:]
        losses = [pixel]
        losses += [f * w for f, w in zip(feats, self.wgts)]
        losses += [g * (w ** 2) * 5000.0 for g, w in zip(grams, self.wgts)]
        self.metrics = dict(zip(self.metric_names, losses))
        return sum(losses)


# ----------------------------------------------------------------------------
# Main
# ----------------------------------------------------------------------------
if __name__ == "__main__":
    key = jax.random.PRNGKey(0)
    k_in, k_tg, k_w1, k_w2, k_w3, k_b1, k_b2, k_b3 = jax.random.split(key, 8)

    B, C, H, W = 2, 3, 16, 16
    inp = jax.random.normal(k_in, (B, C, H, W), jnp.float32)
    tgt = jax.random.normal(k_tg, (B, C, H, W), jnp.float32)

    # Deterministic synthetic feature extractor: 3 -> 8 -> 16 -> 16 channels.
    channels = [(3, 8), (8, 16), (16, 16)]
    conv_params = []
    for (cin, cout), kw, kb in zip(channels, [k_w1, k_w2, k_w3], [k_b1, k_b2, k_b3]):
        wgt = jax.random.normal(kw, (cout, cin, 3, 3), jnp.float32) * 0.1
        bia = jax.random.normal(kb, (cout,), jnp.float32) * 0.01
        conv_params.append((wgt, bia))

    layer_wgts = [5.0, 15.0, 2.0]
    loss_fn = FeatureLossPallas(conv_params, layer_wgts)

    total = jax.jit(lambda a, b: loss_fn(a, b))(inp, tgt)
    jax.block_until_ready(total)
    assert jnp.isfinite(total)
    print("KERNEL_OK")
</pallas_src>

<mosaic_0001>
module attributes {stable_mosaic.version = 11 : i64} {
  func.func @kernel(%arg0: memref<8x1280xbf16, #tpu.memory_space<vmem>>, %arg1: memref<9x1024xbf16, #tpu.memory_space<vmem>>, %arg2: memref<16x128xf32, #tpu.memory_space<vmem>>, %arg3: memref<16x128xf32, #tpu.memory_space<vmem>>, %arg4: memref<9x8x8xbf16, #tpu.memory_space<vmem>>, %arg5: memref<8x1xf32, #tpu.memory_space<vmem>>, %arg6: memref<9x16x8xbf16, #tpu.memory_space<vmem>>, %arg7: memref<16x1xf32, #tpu.memory_space<vmem>>, %arg8: memref<9x16x16xbf16, #tpu.memory_space<vmem>>, %arg9: memref<16x1xf32, #tpu.memory_space<vmem>>, %arg10: memref<1x1xf32, #tpu.memory_space<vmem>>, %arg11: memref<1x1xf32, #tpu.memory_space<vmem>>, %arg12: memref<1x1xf32, #tpu.memory_space<vmem>>, %arg13: memref<1x1xf32, #tpu.memory_space<vmem>>, %arg14: memref<1x1xf32, #tpu.memory_space<vmem>>, %arg15: memref<1x1xf32, #tpu.memory_space<vmem>>, %arg16: memref<1x1xf32, #tpu.memory_space<vmem>>, %arg17: memref<8x1280xbf16, #tpu.memory_space<vmem>>, %arg18: memref<16x1280xbf16, #tpu.memory_space<vmem>>) attributes {dimension_semantics = [], scalar_prefetch = 0 : i64, scratch_operands = 2 : i64, tpu.core_type = #tpu.core_type<tc>} {
    %c0 = arith.constant 0 : index
    %c0_0 = arith.constant 0 : index
    %0 = vector.load %arg2[%c0, %c0_0] : memref<16x128xf32, #tpu.memory_space<vmem>>, vector<16x128xf32>
    %c0_1 = arith.constant 0 : index
    %c0_2 = arith.constant 0 : index
    %1 = vector.load %arg3[%c0_1, %c0_2] : memref<16x128xf32, #tpu.memory_space<vmem>>, vector<16x128xf32>
    %2 = arith.subf %0, %1 : vector<16x128xf32>
    %3 = math.absf %2 : vector<16x128xf32>
    %4 = vector.shape_cast %3 : vector<16x128xf32> to vector<1x16x128xf32>
    %cst = arith.constant dense<0.000000e+00> : vector<1xf32>
    %5 = vector.multi_reduction <add>, %4, %cst [1, 2] : vector<1x16x128xf32> to vector<1xf32>
    %6 = vector.shape_cast %5 : vector<1xf32> to vector<1x1x1xf32>
    %7 = vector.extract %6[0, 0, 0] : f32 from vector<1x1x1xf32>
    %8 = vector.broadcast %7 : f32 to vector<1x1xf32>
    %cst_3 = arith.constant 6.51041686E-4 : f32
    %9 = vector.broadcast %cst_3 : f32 to vector<1x1xf32>
    %10 = arith.mulf %8, %9 : vector<1x1xf32>
    %c0_4 = arith.constant 0 : index
    %c0_5 = arith.constant 0 : index
    %11 = vector.load %arg10[%c0_4, %c0_5] : memref<1x1xf32, #tpu.memory_space<vmem>>, vector<1x1xf32>
    tpu.vector_store %arg10[%c0_4, %c0_5], %10 {strides = array<i32>} : memref<1x1xf32, #tpu.memory_space<vmem>>, vector<1x1xf32>,
    %cst_6 = arith.constant 0.000000e+00 : f32
    %12 = vector.broadcast %cst_6 : f32 to vector<8x1024xf32>
    %c0_7 = arith.constant 0 : index
    %c111 = arith.constant 111 : index
    %13 = vector.load %arg0[%c0_7, %c111] : memref<8x1280xbf16, #tpu.memory_space<vmem>>, vector<8x1024xbf16>
    %c0_8 = arith.constant 0 : index
    %c0_9 = arith.constant 0 : index
    %14 = vector.load %arg1[%c0_8, %c0_9] : memref<9x1024xbf16, #tpu.memory_space<vmem>>, vector<1x1024xbf16>
    %15 = vector.broadcast %14 : vector<1x1024xbf16> to vector<8x1024xbf16>
    %16 = arith.mulf %13, %15 : vector<8x1024xbf16>
    %c0_10 = arith.constant 0 : index
    %c0_11 = arith.constant 0 : index
    %c0_12 = arith.constant 0 : index
    %17 = vector.load %arg4[%c0_10, %c0_11, %c0_12] : memref<9x8x8xbf16, #tpu.memory_space<vmem>>, vector<1x8x8xbf16>
    %18 = vector.shape_cast %17 : vector<1x8x8xbf16> to vector<8x8xbf16>
    %cst_13 = arith.constant dense<0.000000e+00> : vector<8x1024xf32>
    %19 = tpu.matmul %18, %16, %cst_13 {dimension_numbers = #tpu.dot_dimension_numbers<[1], [0], [0], [1], [0, 0, 1, 1], [], []>} : vector<8x8xbf16>, vector<8x1024xbf16>, vector<8x1024xf32> -> vector<8x1024xf32>
    %20 = arith.addf %12, %19 : vector<8x1024xf32>
    %c0_14 = arith.constant 0 : index
    %c112 = arith.constant 112 : index
    %21 = vector.load %arg0[%c0_14, %c112] : memref<8x1280xbf16, #tpu.memory_space<vmem>>, vector<8x1024xbf16>
    %c1 = arith.constant 1 : index
    %c0_15 = arith.constant 0 : index
    %22 = vector.load %arg1[%c1, %c0_15] : memref<9x1024xbf16, #tpu.memory_space<vmem>>, vector<1x1024xbf16>
    %23 = vector.broadcast %22 : vector<1x1024xbf16> to vector<8x1024xbf16>
    %24 = arith.mulf %21, %23 : vector<8x1024xbf16>
    %c1_16 = arith.constant 1 : index
    %c0_17 = arith.constant 0 : index
    %c0_18 = arith.constant 0 : index
    %25 = vector.load %arg4[%c1_16, %c0_17, %c0_18] : memref<9x8x8xbf16, #tpu.memory_space<vmem>>, vector<1x8x8xbf16>
    %26 = vector.shape_cast %25 : vector<1x8x8xbf16> to vector<8x8xbf16>
    %cst_19 = arith.constant dense<0.000000e+00> : vector<8x1024xf32>
    %27 = tpu.matmul %26, %24, %cst_19 {dimension_numbers = #tpu.dot_dimension_numbers<[1], [0], [0], [1], [0, 0, 1, 1], [], []>} : vector<8x8xbf16>, vector<8x1024xbf16>, vector<8x1024xf32> -> vector<8x1024xf32>
    %28 = arith.addf %20, %27 : vector<8x1024xf32>
    %c0_20 = arith.constant 0 : index
    %c113 = arith.constant 113 : index
    %29 = vector.load %arg0[%c0_20, %c113] : memref<8x1280xbf16, #tpu.memory_space<vmem>>, vector<8x1024xbf16>
    %c2 = arith.constant 2 : index
    %c0_21 = arith.constant 0 : index
    %30 = vector.load %arg1[%c2, %c0_21] : memref<9x1024xbf16, #tpu.memory_space<vmem>>, vector<1x1024xbf16>
    %31 = vector.broadcast %30 : vector<1x1024xbf16> to vector<8x1024xbf16>
    %32 = arith.mulf %29, %31 : vector<8x1024xbf16>
    %c2_22 = arith.constant 2 : index
    %c0_23 = arith.constant 0 : index
    %c0_24 = arith.constant 0 : index
    %33 = vector.load %arg4[%c2_22, %c0_23, %c0_24] : memref<9x8x8xbf16, #tpu.memory_space<vmem>>, vector<1x8x8xbf16>
    %34 = vector.shape_cast %33 : vector<1x8x8xbf16> to vector<8x8xbf16>
    %cst_25 = arith.constant dense<0.000000e+00> : vector<8x1024xf32>
    %35 = tpu.matmul %34, %32, %cst_25 {dimension_numbers = #tpu.dot_dimension_numbers<[1], [0], [0], [1], [0, 0, 1, 1], [], []>} : vector<8x8xbf16>, vector<8x1024xbf16>, vector<8x1024xf32> -> vector<8x1024xf32>
    %36 = arith.addf %28, %35 : vector<8x1024xf32>
    %c0_26 = arith.constant 0 : index
    %c127 = arith.constant 127 : index
    %37 = vector.load %arg0[%c0_26, %c127] : memref<8x1280xbf16, #tpu.memory_space<vmem>>, vector<8x1024xbf16>
    %c3 = arith.constant 3 : index
    %c0_27 = arith.constant 0 : index
    %38 = vector.load %arg1[%c3, %c0_27] : memref<9x1024xbf16, #tpu.memory_space<vmem>>, vector<1x1024xbf16>
    %39 = vector.broadcast %38 : vector<1x1024xbf16> to vector<8x1024xbf16>
    %40 = arith.mulf %37, %39 : vector<8x1024xbf16>
    %c3_28 = arith.constant 3 : index
    %c0_29 = arith.constant 0 : index
    %c0_30 = arith.constant 0 : index
    %41 = vector.load %arg4[%c3_28, %c0_29, %c0_30] : memref<9x8x8xbf16, #tpu.memory_space<vmem>>, vector<1x8x8xbf16>
    %42 = vector.shape_cast %41 : vector<1x8x8xbf16> to vector<8x8xbf16>
    %cst_31 = arith.constant dense<0.000000e+00> : vector<8x1024xf32>
    %43 = tpu.matmul %42, %40, %cst_31 {dimension_numbers = #tpu.dot_dimension_numbers<[1], [0], [0], [1], [0, 0, 1, 1], [], []>} : vector<8x8xbf16>, vector<8x1024xbf16>, vector<8x1024xf32> -> vector<8x1024xf32>
    %44 = arith.addf %36, %43 : vector<8x1024xf32>
    %c0_32 = arith.constant 0 : index
    %c128 = arith.constant 128 : index
    %45 = vector.load %arg0[%c0_32, %c128] : memref<8x1280xbf16, #tpu.memory_space<vmem>>, vector<8x1024xbf16>
    %c4 = arith.constant 4 : index
    %c0_33 = arith.constant 0 : index
    %c0_34 = arith.constant 0 : index
    %46 = vector.load %arg4[%c4, %c0_33, %c0_34] : memref<9x8x8xbf16, #tpu.memory_space<vmem>>, vector<1x8x8xbf16>
    %47 = vector.shape_cast %46 : vector<1x8x8xbf16> to vector<8x8xbf16>
    %cst_35 = arith.constant dense<0.000000e+00> : vector<8x1024xf32>
    %48 = tpu.matmul %47, %45, %cst_35 {dimension_numbers = #tpu.dot_dimension_numbers<[1], [0], [0], [1], [0, 0, 1, 1], [], []>} : vector<8x8xbf16>, vector<8x1024xbf16>, vector<8x1024xf32> -> vector<8x1024xf32>
    %49 = arith.addf %44, %48 : vector<8x1024xf32>
    %c0_36 = arith.constant 0 : index
    %c129 = arith.constant 129 : index
    %50 = vector.load %arg0[%c0_36, %c129] : memref<8x1280xbf16, #tpu.memory_space<vmem>>, vector<8x1024xbf16>
    %c5 = arith.constant 5 : index
    %c0_37 = arith.constant 0 : index
    %51 = vector.load %arg1[%c5, %c0_37] : memref<9x1024xbf16, #tpu.memory_space<vmem>>, vector<1x1024xbf16>
    %52 = vector.broadcast %51 : vector<1x1024xbf16> to vector<8x1024xbf16>
    %53 = arith.mulf %50, %52 : vector<8x1024xbf16>
    %c5_38 = arith.constant 5 : index
    %c0_39 = arith.constant 0 : index
    %c0_40 = arith.constant 0 : index
    %54 = vector.load %arg4[%c5_38, %c0_39, %c0_40] : memref<9x8x8xbf16, #tpu.memory_space<vmem>>, vector<1x8x8xbf16>
    %55 = vector.shape_cast %54 : vector<1x8x8xbf16> to vector<8x8xbf16>
    %cst_41 = arith.constant dense<0.000000e+00> : vector<8x1024xf32>
    %56 = tpu.matmul %55, %53, %cst_41 {dimension_numbers = #tpu.dot_dimension_numbers<[1], [0], [0], [1], [0, 0, 1, 1], [], []>} : vector<8x8xbf16>, vector<8x1024xbf16>, vector<8x1024xf32> -> vector<8x1024xf32>
    %57 = arith.addf %49, %56 : vector<8x1024xf32>
    %c0_42 = arith.constant 0 : index
    %c143 = arith.constant 143 : index
    %58 = vector.load %arg0[%c0_42, %c143] : memref<8x1280xbf16, #tpu.memory_space<vmem>>, vector<8x1024xbf16>
    %c6 = arith.constant 6 : index
    %c0_43 = arith.constant 0 : index
    %59 = vector.load %arg1[%c6, %c0_43] : memref<9x1024xbf16, #tpu.memory_space<vmem>>, vector<1x1024xbf16>
    %60 = vector.broadcast %59 : vector<1x1024xbf16> to vector<8x1024xbf16>
    %61 = arith.mulf %58, %60 : vector<8x1024xbf16>
    %c6_44 = arith.constant 6 : index
    %c0_45 = arith.constant 0 : index
    %c0_46 = arith.constant 0 : index
    %62 = vector.load %arg4[%c6_44, %c0_45, %c0_46] : memref<9x8x8xbf16, #tpu.memory_space<vmem>>, vector<1x8x8xbf16>
    %63 = vector.shape_cast %62 : vector<1x8x8xbf16> to vector<8x8xbf16>
    %cst_47 = arith.constant dense<0.000000e+00> : vector<8x1024xf32>
    %64 = tpu.matmul %63, %61, %cst_47 {dimension_numbers = #tpu.dot_dimension_numbers<[1], [0], [0], [1], [0, 0, 1, 1], [], []>} : vector<8x8xbf16>, vector<8x1024xbf16>, vector<8x1024xf32> -> vector<8x1024xf32>
    %65 = arith.addf %57, %64 : vector<8x1024xf32>
    %c0_48 = arith.constant 0 : index
    %c144 = arith.constant 144 : index
    %66 = vector.load %arg0[%c0_48, %c144] : memref<8x1280xbf16, #tpu.memory_space<vmem>>, vector<8x1024xbf16>
    %c7 = arith.constant 7 : index
    %c0_49 = arith.constant 0 : index
    %67 = vector.load %arg1[%c7, %c0_49] : memref<9x1024xbf16, #tpu.memory_space<vmem>>, vector<1x1024xbf16>
    %68 = vector.broadcast %67 : vector<1x1024xbf16> to vector<8x1024xbf16>
    %69 = arith.mulf %66, %68 : vector<8x1024xbf16>
    %c7_50 = arith.constant 7 : index
    %c0_51 = arith.constant 0 : index
    %c0_52 = arith.constant 0 : index
    %70 = vector.load %arg4[%c7_50, %c0_51, %c0_52] : memref<9x8x8xbf16, #tpu.memory_space<vmem>>, vector<1x8x8xbf16>
    %71 = vector.shape_cast %70 : vector<1x8x8xbf16> to vector<8x8xbf16>
    %cst_53 = arith.constant dense<0.000000e+00> : vector<8x1024xf32>
    %72 = tpu.matmul %71, %69, %cst_53 {dimension_numbers = #tpu.dot_dimension_numbers<[1], [0], [0], [1], [0, 0, 1, 1], [], []>} : vector<8x8xbf16>, vector<8x1024xbf16>, vector<8x1024xf32> -> vector<8x1024xf32>
    %73 = arith.addf %65, %72 : vector<8x1024xf32>
    %c0_54 = arith.constant 0 : index
    %c145 = arith.constant 145 : index
    %74 = vector.load %arg0[%c0_54, %c145] : memref<8x1280xbf16, #tpu.memory_space<vmem>>, vector<8x1024xbf16>
    %c8 = arith.constant 8 : index
    %c0_55 = arith.constant 0 : index
    %75 = vector.load %arg1[%c8, %c0_55] : memref<9x1024xbf16, #tpu.memory_space<vmem>>, vector<1x1024xbf16>
    %76 = vector.broadcast %75 : vector<1x1024xbf16> to vector<8x1024xbf16>
    %77 = arith.mulf %74, %76 : vector<8x1024xbf16>
    %c8_56 = arith.constant 8 : index
    %c0_57 = arith.constant 0 : index
    %c0_58 = arith.constant 0 : index
    %78 = vector.load %arg4[%c8_56, %c0_57, %c0_58] : memref<9x8x8xbf16, #tpu.memory_space<vmem>>, vector<1x8x8xbf16>
    %79 = vector.shape_cast %78 : vector<1x8x8xbf16> to vector<8x8xbf16>
    %cst_59 = arith.constant dense<0.000000e+00> : vector<8x1024xf32>
    %80 = tpu.matmul %79, %77, %cst_59 {dimension_numbers = #tpu.dot_dimension_numbers<[1], [0], [0], [1], [0, 0, 1, 1], [], []>} : vector<8x8xbf16>, vector<8x1024xbf16>, vector<8x1024xf32> -> vector<8x1024xf32>
    %81 = arith.addf %73, %80 : vector<8x1024xf32>
    %c0_60 = arith.constant 0 : index
    %c0_61 = arith.constant 0 : index
    %82 = vector.load %arg5[%c0_60, %c0_61] : memref<8x1xf32, #tpu.memory_space<vmem>>, vector<8x1xf32>
    %83 = vector.broadcast %82 : vector<8x1xf32> to vector<8x1024xf32>
    %84 = arith.addf %81, %83 : vector<8x1024xf32>
    %cst_62 = arith.constant 0.000000e+00 : f32
    %85 = vector.broadcast %cst_62 : f32 to vector<8x1024xf32>
    %86 = arith.maximumf %84, %85 : vector<8x1024xf32>
    %87 = arith.truncf %86 : vector<8x1024xf32> to vector<8x1024xbf16>
    %88 = vector.extract_strided_slice %86 {offsets = [0, 0], sizes = [8, 512], strides = [1, 1]} : vector<8x1024xf32> to vector<8x512xf32>
    %89 = vector.extract_strided_slice %86 {offsets = [0, 512], sizes = [8, 512], strides = [1, 1]} : vector<8x1024xf32> to vector<8x512xf32>
    %90 = arith.subf %88, %89 : vector<8x512xf32>
    %91 = math.absf %90 : vector<8x512xf32>
    %92 = vector.shape_cast %91 : vector<8x512xf32> to vector<1x8x512xf32>
    %cst_63 = arith.constant dense<0.000000e+00> : vector<1xf32>
    %93 = vector.multi_reduction <add>, %92, %cst_63 [1, 2] : vector<1x8x512xf32> to vector<1xf32>
    %94 = vector.shape_cast %93 : vector<1xf32> to vector<1x1x1xf32>
    %95 = vector.extract %94[0, 0, 0] : f32 from vector<1x1x1xf32>
    %96 = vector.broadcast %95 : f32 to vector<1x1xf32>
    %cst_64 = arith.constant 2.44140625E-4 : f32
    %97 = vector.broadcast %cst_64 : f32 to vector<1x1xf32>
    %98 = arith.mulf %96, %97 : vector<1x1xf32>
    %c0_65 = arith.constant 0 : index
    %c0_66 = arith.constant 0 : index
    %99 = vector.load %arg11[%c0_65, %c0_66] : memref<1x1xf32, #tpu.memory_space<vmem>>, vector<1x1xf32>
    tpu.vector_store %arg11[%c0_65, %c0_66], %98 {strides = array<i32>} : memref<1x1xf32, #tpu.memory_space<vmem>>, vector<1x1xf32>,
    %cst_67 = arith.constant 0.000000e+00 : f32
    %100 = vector.broadcast %cst_67 : f32 to vector<1x1xf32>
    %101 = vector.extract_strided_slice %87 {offsets = [0, 0], sizes = [8, 256], strides = [1, 1]} : vector<8x1024xbf16> to vector<8x256xbf16>
    %102 = vector.extract_strided_slice %87 {offsets = [0, 512], sizes = [8, 256], strides = [1, 1]} : vector<8x1024xbf16> to vector<8x256xbf16>
    %cst_68 = arith.constant dense<0.000000e+00> : vector<8x8xf32>
    %103 = tpu.matmul %101, %101, %cst_68 {dimension_numbers = #tpu.dot_dimension_numbers<[1], [1], [0], [0], [0, 0, 1, 0], [], []>} : vector<8x256xbf16>, vector<8x256xbf16>, vector<8x8xf32> -> vector<8x8xf32>
    %cst_69 = arith.constant dense<0.000000e+00> : vector<8x8xf32>
    %104 = tpu.matmul %102, %102, %cst_69 {dimension_numbers = #tpu.dot_dimension_numbers<[1], [1], [0], [0], [0, 0, 1, 0], [], []>} : vector<8x256xbf16>, vector<8x256xbf16>, vector<8x8xf32> -> vector<8x8xf32>
    %105 = arith.subf %103, %104 : vector<8x8xf32>
    %106 = math.absf %105 : vector<8x8xf32>
    %107 = vector.shape_cast %106 : vector<8x8xf32> to vector<1x8x8xf32>
    %cst_70 = arith.constant dense<0.000000e+00> : vector<1xf32>
    %108 = vector.multi_reduction <add>, %107, %cst_70 [1, 2] : vector<1x8x8xf32> to vector<1xf32>
    %109 = vector.shape_cast %108 : vector<1xf32> to vector<1x1x1xf32>
    %110 = vector.extract %109[0, 0, 0] : f32 from vector<1x1x1xf32>
    %111 = vector.broadcast %110 : f32 to vector<1x1xf32>
    %112 = arith.addf %100, %111 : vector<1x1xf32>
    %113 = vector.extract_strided_slice %87 {offsets = [0, 256], sizes = [8, 256], strides = [1, 1]} : vector<8x1024xbf16> to vector<8x256xbf16>
    %114 = vector.extract_strided_slice %87 {offsets = [0, 768], sizes = [8, 256], strides = [1, 1]} : vector<8x1024xbf16> to vector<8x256xbf16>
    %cst_71 = arith.constant dense<0.000000e+00> : vector<8x8xf32>
    %115 = tpu.matmul %113, %113, %cst_71 {dimension_numbers = #tpu.dot_dimension_numbers<[1], [1], [0], [0], [0, 0, 1, 0], [], []>} : vector<8x256xbf16>, vector<8x256xbf16>, vector<8x8xf32> -> vector<8x8xf32>
    %cst_72 = arith.constant dense<0.000000e+00> : vector<8x8xf32>
    %116 = tpu.matmul %114, %114, %cst_72 {dimension_numbers = #tpu.dot_dimension_numbers<[1], [1], [0], [0], [0, 0, 1, 0], [], []>} : vector<8x256xbf16>, vector<8x256xbf16>, vector<8x8xf32> -> vector<8x8xf32>
    %117 = arith.subf %115, %116 : vector<8x8xf32>
    %118 = math.absf %117 : vector<8x8xf32>
    %119 = vector.shape_cast %118 : vector<8x8xf32> to vector<1x8x8xf32>
    %cst_73 = arith.constant dense<0.000000e+00> : vector<1xf32>
    %120 = vector.multi_reduction <add>, %119, %cst_73 [1, 2] : vector<1x8x8xf32> to vector<1xf32>
    %121 = vector.shape_cast %120 : vector<1xf32> to vector<1x1x1xf32>
    %122 = vector.extract %121[0, 0, 0] : f32 from vector<1x1x1xf32>
    %123 = vector.broadcast %122 : f32 to vector<1x1xf32>
    %124 = arith.addf %112, %123 : vector<1x1xf32>
    %cst_74 = arith.constant 3.81469727E-6 : f32
    %125 = vector.broadcast %cst_74 : f32 to vector<1x1xf32>
    %126 = arith.mulf %124, %125 : vector<1x1xf32>
    %c0_75 = arith.constant 0 : index
    %c0_76 = arith.constant 0 : index
    %127 = vector.load %arg14[%c0_75, %c0_76] : memref<1x1xf32, #tpu.memory_space<vmem>>, vector<1x1xf32>
    tpu.vector_store %arg14[%c0_75, %c0_76], %126 {strides = array<i32>} : memref<1x1xf32, #tpu.memory_space<vmem>>, vector<1x1xf32>,
    %cst_77 = arith.constant 0.000000e+00 : bf16
    %128 = vector.broadcast %cst_77 : bf16 to vector<8x128xbf16>
    %c0_78 = arith.constant 0 : index
    %c0_79 = arith.constant 0 : index
    %129 = vector.load %arg17[%c0_78, %c0_79] : memref<8x1280xbf16, #tpu.memory_space<vmem>>, vector<8x128xbf16>
    tpu.vector_store %arg17[%c0_78, %c0_79], %128 {strides = array<i32>} : memref<8x1280xbf16, #tpu.memory_space<vmem>>, vector<8x128xbf16>,
    %cst_80 = arith.constant 0.000000e+00 : bf16
    %130 = vector.broadcast %cst_80 : bf16 to vector<8x128xbf16>
    %c0_81 = arith.constant 0 : index
    %c1152 = arith.constant 1152 : index
    %131 = vector.load %arg17[%c0_81, %c1152] : memref<8x1280xbf16, #tpu.memory_space<vmem>>, vector<8x128xbf16>
    tpu.vector_store %arg17[%c0_81, %c1152], %130 {strides = array<i32>} : memref<8x1280xbf16, #tpu.memory_space<vmem>>, vector<8x128xbf16>,
    %c0_82 = arith.constant 0 : index
    %c128_83 = arith.constant 128 : index
    %132 = vector.load %arg17[%c0_82, %c128_83] : memref<8x1280xbf16, #tpu.memory_space<vmem>>, vector<8x1024xbf16>
    tpu.vector_store %arg17[%c0_82, %c128_83], %87 {strides = array<i32>} : memref<8x1280xbf16, #tpu.memory_space<vmem>>, vector<8x1024xbf16>,
    %cst_84 = arith.constant 0.000000e+00 : f32
    %133 = vector.broadcast %cst_84 : f32 to vector<16x1024xf32>
    %c0_85 = arith.constant 0 : index
    %c111_86 = arith.constant 111 : index
    %134 = vector.load %arg17[%c0_85, %c111_86] : memref<8x1280xbf16, #tpu.memory_space<vmem>>, vector<8x1024xbf16>
    %c0_87 = arith.constant 0 : index
    %c0_88 = arith.constant 0 : index
    %135 = vector.load %arg1[%c0_87, %c0_88] : memref<9x1024xbf16, #tpu.memory_space<vmem>>, vector<1x1024xbf16>
    %136 = vector.broadcast %135 : vector<1x1024xbf16> to vector<8x1024xbf16>
    %137 = arith.mulf %134, %136 : vector<8x1024xbf16>
    %c0_89 = arith.constant 0 : index
    %c0_90 = arith.constant 0 : index
    %c0_91 = arith.constant 0 : index
    %138 = vector.load %arg6[%c0_89, %c0_90, %c0_91] : memref<9x16x8xbf16, #tpu.memory_space<vmem>>, vector<1x16x8xbf16>
    %139 = vector.shape_cast %138 : vector<1x16x8xbf16> to vector<16x8xbf16>
    %cst_92 = arith.constant dense<0.000000e+00> : vector<16x1024xf32>
    %140 = tpu.matmul %139, %137, %cst_92 {dimension_numbers = #tpu.dot_dimension_numbers<[1], [0], [0], [1], [0, 0, 1, 1], [], []>} : vector<16x8xbf16>, vector<8x1024xbf16>, vector<16x1024xf32> -> vector<16x1024xf32>
    %141 = arith.addf %133, %140 : vector<16x1024xf32>
    %c0_93 = arith.constant 0 : index
    %c112_94 = arith.constant 112 : index
    %142 = vector.load %arg17[%c0_93, %c112_94] : memref<8x1280xbf16, #tpu.memory_space<vmem>>, vector<8x1024xbf16>
    %c1_95 = arith.constant 1 : index
    %c0_96 = arith.constant 0 : index
    %143 = vector.load %arg1[%c1_95, %c0_96] : memref<9x1024xbf16, #tpu.memory_space<vmem>>, vector<1x1024xbf16>
    %144 = vector.broadcast %143 : vector<1x1024xbf16> to vector<8x1024xbf16>
    %145 = arith.mulf %142, %144 : vector<8x1024xbf16>
    %c1_97 = arith.constant 1 : index
    %c0_98 = arith.constant 0 : index
    %c0_99 = arith.constant 0 : index
    %146 = vector.load %arg6[%c1_97, %c0_98, %c0_99] : memref<9x16x8xbf16, #tpu.memory_space<vmem>>, vector<1x16x8xbf16>
    %147 = vector.shape_cast %146 : vector<1x16x8xbf16> to vector<16x8xbf16>
    %cst_100 = arith.constant dense<0.000000e+00> : vector<16x1024xf32>
    %148 = tpu.matmul %147, %145, %cst_100 {dimension_numbers = #tpu.dot_dimension_numbers<[1], [0], [0], [1], [0, 0, 1, 1], [], []>} : vector<16x8xbf16>, vector<8x1024xbf16>, vector<16x1024xf32> -> vector<16x1024xf32>
    %149 = arith.addf %141, %148 : vector<16x1024xf32>
    %c0_101 = arith.constant 0 : index
    %c113_102 = arith.constant 113 : index
    %150 = vector.load %arg17[%c0_101, %c113_102] : memref<8x1280xbf16, #tpu.memory_space<vmem>>, vector<8x1024xbf16>
    %c2_103 = arith.constant 2 : index
    %c0_104 = arith.constant 0 : index
    %151 = vector.load %arg1[%c2_103, %c0_104] : memref<9x1024xbf16, #tpu.memory_space<vmem>>, vector<1x1024xbf16>
    %152 = vector.broadcast %151 : vector<1x1024xbf16> to vector<8x1024xbf16>
    %153 = arith.mulf %150, %152 : vector<8x1024xbf16>
    %c2_105 = arith.constant 2 : index
    %c0_106 = arith.constant 0 : index
    %c0_107 = arith.constant 0 : index
    %154 = vector.load %arg6[%c2_105, %c0_106, %c0_107] : memref<9x16x8xbf16, #tpu.memory_space<vmem>>, vector<1x16x8xbf16>
    %155 = vector.shape_cast %154 : vector<1x16x8xbf16> to vector<16x8xbf16>
    %cst_108 = arith.constant dense<0.000000e+00> : vector<16x1024xf32>
    %156 = tpu.matmul %155, %153, %cst_108 {dimension_numbers = #tpu.dot_dimension_numbers<[1], [0], [0], [1], [0, 0, 1, 1], [], []>} : vector<16x8xbf16>, vector<8x1024xbf16>, vector<16x1024xf32> -> vector<16x1024xf32>
    %157 = arith.addf %149, %156 : vector<16x1024xf32>
    %c0_109 = arith.constant 0 : index
    %c127_110 = arith.constant 127 : index
    %158 = vector.load %arg17[%c0_109, %c127_110] : memref<8x1280xbf16, #tpu.memory_space<vmem>>, vector<8x1024xbf16>
    %c3_111 = arith.constant 3 : index
    %c0_112 = arith.constant 0 : index
    %159 = vector.load %arg1[%c3_111, %c0_112] : memref<9x1024xbf16, #tpu.memory_space<vmem>>, vector<1x1024xbf16>
    %160 = vector.broadcast %159 : vector<1x1024xbf16> to vector<8x1024xbf16>
    %161 = arith.mulf %158, %160 : vector<8x1024xbf16>
    %c3_113 = arith.constant 3 : index
    %c0_114 = arith.constant 0 : index
    %c0_115 = arith.constant 0 : index
    %162 = vector.load %arg6[%c3_113, %c0_114, %c0_115] : memref<9x16x8xbf16, #tpu.memory_space<vmem>>, vector<1x16x8xbf16>
    %163 = vector.shape_cast %162 : vector<1x16x8xbf16> to vector<16x8xbf16>
    %cst_116 = arith.constant dense<0.000000e+00> : vector<16x1024xf32>
    %164 = tpu.matmul %163, %161, %cst_116 {dimension_numbers = #tpu.dot_dimension_numbers<[1], [0], [0], [1], [0, 0, 1, 1], [], []>} : vector<16x8xbf16>, vector<8x1024xbf16>, vector<16x1024xf32> -> vector<16x1024xf32>
    %165 = arith.addf %157, %164 : vector<16x1024xf32>
    %c0_117 = arith.constant 0 : index
    %c128_118 = arith.constant 128 : index
    %166 = vector.load %arg17[%c0_117, %c128_118] : memref<8x1280xbf16, #tpu.memory_space<vmem>>, vector<8x1024xbf16>
    %c4_119 = arith.constant 4 : index
    %c0_120 = arith.constant 0 : index
    %c0_121 = arith.constant 0 : index
    %167 = vector.load %arg6[%c4_119, %c0_120, %c0_121] : memref<9x16x8xbf16, #tpu.memory_space<vmem>>, vector<1x16x8xbf16>
    %168 = vector.shape_cast %167 : vector<1x16x8xbf16> to vector<16x8xbf16>
    %cst_122 = arith.constant dense<0.000000e+00> : vector<16x1024xf32>
    %169 = tpu.matmul %168, %166, %cst_122 {dimension_numbers = #tpu.dot_dimension_numbers<[1], [0], [0], [1], [0, 0, 1, 1], [], []>} : vector<16x8xbf16>, vector<8x1024xbf16>, vector<16x1024xf32> -> vector<16x1024xf32>
    %170 = arith.addf %165, %169 : vector<16x1024xf32>
    %c0_123 = arith.constant 0 : index
    %c129_124 = arith.constant 129 : index
    %171 = vector.load %arg17[%c0_123, %c129_124] : memref<8x1280xbf16, #tpu.memory_space<vmem>>, vector<8x1024xbf16>
    %c5_125 = arith.constant 5 : index
    %c0_126 = arith.constant 0 : index
    %172 = vector.load %arg1[%c5_125, %c0_126] : memref<9x1024xbf16, #tpu.memory_space<vmem>>, vector<1x1024xbf16>
    %173 = vector.broadcast %172 : vector<1x1024xbf16> to vector<8x1024xbf16>
    %174 = arith.mulf %171, %173 : vector<8x1024xbf16>
    %c5_127 = arith.constant 5 : index
    %c0_128 = arith.constant 0 : index
    %c0_129 = arith.constant 0 : index
    %175 = vector.load %arg6[%c5_127, %c0_128, %c0_129] : memref<9x16x8xbf16, #tpu.memory_space<vmem>>, vector<1x16x8xbf16>
    %176 = vector.shape_cast %175 : vector<1x16x8xbf16> to vector<16x8xbf16>
    %cst_130 = arith.constant dense<0.000000e+00> : vector<16x1024xf32>
    %177 = tpu.matmul %176, %174, %cst_130 {dimension_numbers = #tpu.dot_dimension_numbers<[1], [0], [0], [1], [0, 0, 1, 1], [], []>} : vector<16x8xbf16>, vector<8x1024xbf16>, vector<16x1024xf32> -> vector<16x1024xf32>
    %178 = arith.addf %170, %177 : vector<16x1024xf32>
    %c0_131 = arith.constant 0 : index
    %c143_132 = arith.constant 143 : index
    %179 = vector.load %arg17[%c0_131, %c143_132] : memref<8x1280xbf16, #tpu.memory_space<vmem>>, vector<8x1024xbf16>
    %c6_133 = arith.constant 6 : index
    %c0_134 = arith.constant 0 : index
    %180 = vector.load %arg1[%c6_133, %c0_134] : memref<9x1024xbf16, #tpu.memory_space<vmem>>, vector<1x1024xbf16>
    %181 = vector.broadcast %180 : vector<1x1024xbf16> to vector<8x1024xbf16>
    %182 = arith.mulf %179, %181 : vector<8x1024xbf16>
    %c6_135 = arith.constant 6 : index
    %c0_136 = arith.constant 0 : index
    %c0_137 = arith.constant 0 : index
    %183 = vector.load %arg6[%c6_135, %c0_136, %c0_137] : memref<9x16x8xbf16, #tpu.memory_space<vmem>>, vector<1x16x8xbf16>
    %184 = vector.shape_cast %183 : vector<1x16x8xbf16> to vector<16x8xbf16>
    %cst_138 = arith.constant dense<0.000000e+00> : vector<16x1024xf32>
    %185 = tpu.matmul %184, %182, %cst_138 {dimension_numbers = #tpu.dot_dimension_numbers<[1], [0], [0], [1], [0, 0, 1, 1], [], []>} : vector<16x8xbf16>, vector<8x1024xbf16>, vector<16x1024xf32> -> vector<16x1024xf32>
    %186 = arith.addf %178, %185 : vector<16x1024xf32>
    %c0_139 = arith.constant 0 : index
    %c144_140 = arith.constant 144 : index
    %187 = vector.load %arg17[%c0_139, %c144_140] : memref<8x1280xbf16, #tpu.memory_space<vmem>>, vector<8x1024xbf16>
    %c7_141 = arith.constant 7 : index
    %c0_142 = arith.constant 0 : index
    %188 = vector.load %arg1[%c7_141, %c0_142] : memref<9x1024xbf16, #tpu.memory_space<vmem>>, vector<1x1024xbf16>
    %189 = vector.broadcast %188 : vector<1x1024xbf16> to vector<8x1024xbf16>
    %190 = arith.mulf %187, %189 : vector<8x1024xbf16>
    %c7_143 = arith.constant 7 : index
    %c0_144 = arith.constant 0 : index
    %c0_145 = arith.constant 0 : index
    %191 = vector.load %arg6[%c7_143, %c0_144, %c0_145] : memref<9x16x8xbf16, #tpu.memory_space<vmem>>, vector<1x16x8xbf16>
    %192 = vector.shape_cast %191 : vector<1x16x8xbf16> to vector<16x8xbf16>
    %cst_146 = arith.constant dense<0.000000e+00> : vector<16x1024xf32>
    %193 = tpu.matmul %192, %190, %cst_146 {dimension_numbers = #tpu.dot_dimension_numbers<[1], [0], [0], [1], [0, 0, 1, 1], [], []>} : vector<16x8xbf16>, vector<8x1024xbf16>, vector<16x1024xf32> -> vector<16x1024xf32>
    %194 = arith.addf %186, %193 : vector<16x1024xf32>
    %c0_147 = arith.constant 0 : index
    %c145_148 = arith.constant 145 : index
    %195 = vector.load %arg17[%c0_147, %c145_148] : memref<8x1280xbf16, #tpu.memory_space<vmem>>, vector<8x1024xbf16>
    %c8_149 = arith.constant 8 : index
    %c0_150 = arith.constant 0 : index
    %196 = vector.load %arg1[%c8_149, %c0_150] : memref<9x1024xbf16, #tpu.memory_space<vmem>>, vector<1x1024xbf16>
    %197 = vector.broadcast %196 : vector<1x1024xbf16> to vector<8x1024xbf16>
    %198 = arith.mulf %195, %197 : vector<8x1024xbf16>
    %c8_151 = arith.constant 8 : index
    %c0_152 = arith.constant 0 : index
    %c0_153 = arith.constant 0 : index
    %199 = vector.load %arg6[%c8_151, %c0_152, %c0_153] : memref<9x16x8xbf16, #tpu.memory_space<vmem>>, vector<1x16x8xbf16>
    %200 = vector.shape_cast %199 : vector<1x16x8xbf16> to vector<16x8xbf16>
    %cst_154 = arith.constant dense<0.000000e+00> : vector<16x1024xf32>
    %201 = tpu.matmul %200, %198, %cst_154 {dimension_numbers = #tpu.dot_dimension_numbers<[1], [0], [0], [1], [0, 0, 1, 1], [], []>} : vector<16x8xbf16>, vector<8x1024xbf16>, vector<16x1024xf32> -> vector<16x1024xf32>
    %202 = arith.addf %194, %201 : vector<16x1024xf32>
    %c0_155 = arith.constant 0 : index
    %c0_156 = arith.constant 0 : index
    %203 = vector.load %arg7[%c0_155, %c0_156] : memref<16x1xf32, #tpu.memory_space<vmem>>, vector<16x1xf32>
    %204 = vector.broadcast %203 : vector<16x1xf32> to vector<16x1024xf32>
    %205 = arith.addf %202, %204 : vector<16x1024xf32>
    %cst_157 = arith.constant 0.000000e+00 : f32
    %206 = vector.broadcast %cst_157 : f32 to vector<16x1024xf32>
    %207 = arith.maximumf %205, %206 : vector<16x1024xf32>
    %208 = arith.truncf %207 : vector<16x1024xf32> to vector<16x1024xbf16>
    %209 = vector.extract_strided_slice %207 {offsets = [0, 0], sizes = [16, 512], strides = [1, 1]} : vector<16x1024xf32> to vector<16x512xf32>
    %210 = vector.extract_strided_slice %207 {offsets = [0, 512], sizes = [16, 512], strides = [1, 1]} : vector<16x1024xf32> to vector<16x512xf32>
    %211 = arith.subf %209, %210 : vector<16x512xf32>
    %212 = math.absf %211 : vector<16x512xf32>
    %213 = vector.shape_cast %212 : vector<16x512xf32> to vector<1x16x512xf32>
    %cst_158 = arith.constant dense<0.000000e+00> : vector<1xf32>
    %214 = vector.multi_reduction <add>, %213, %cst_158 [1, 2] : vector<1x16x512xf32> to vector<1xf32>
    %215 = vector.shape_cast %214 : vector<1xf32> to vector<1x1x1xf32>
    %216 = vector.extract %215[0, 0, 0] : f32 from vector<1x1x1xf32>
    %217 = vector.broadcast %216 : f32 to vector<1x1xf32>
    %cst_159 = arith.constant 1.22070313E-4 : f32
    %218 = vector.broadcast %cst_159 : f32 to vector<1x1xf32>
    %219 = arith.mulf %217, %218 : vector<1x1xf32>
    %c0_160 = arith.constant 0 : index
    %c0_161 = arith.constant 0 : index
    %220 = vector.load %arg12[%c0_160, %c0_161] : memref<1x1xf32, #tpu.memory_space<vmem>>, vector<1x1xf32>
    tpu.vector_store %arg12[%c0_160, %c0_161], %219 {strides = array<i32>} : memref<1x1xf32, #tpu.memory_space<vmem>>, vector<1x1xf32>,
    %cst_162 = arith.constant 0.000000e+00 : f32
    %221 = vector.broadcast %cst_162 : f32 to vector<1x1xf32>
    %222 = vector.extract_strided_slice %208 {offsets = [0, 0], sizes = [16, 256], strides = [1, 1]} : vector<16x1024xbf16> to vector<16x256xbf16>
    %223 = vector.extract_strided_slice %208 {offsets = [0, 512], sizes = [16, 256], strides = [1, 1]} : vector<16x1024xbf16> to vector<16x256xbf16>
    %cst_163 = arith.constant dense<0.000000e+00> : vector<16x16xf32>
    %224 = tpu.matmul %222, %222, %cst_163 {dimension_numbers = #tpu.dot_dimension_numbers<[1], [1], [0], [0], [0, 0, 1, 0], [], []>} : vector<16x256xbf16>, vector<16x256xbf16>, vector<16x16xf32> -> vector<16x16xf32>
    %cst_164 = arith.constant dense<0.000000e+00> : vector<16x16xf32>
    %225 = tpu.matmul %223, %223, %cst_164 {dimension_numbers = #tpu.dot_dimension_numbers<[1], [1], [0], [0], [0, 0, 1, 0], [], []>} : vector<16x256xbf16>, vector<16x256xbf16>, vector<16x16xf32> -> vector<16x16xf32>
    %226 = arith.subf %224, %225 : vector<16x16xf32>
    %227 = math.absf %226 : vector<16x16xf32>
    %228 = vector.shape_cast %227 : vector<16x16xf32> to vector<1x16x16xf32>
    %cst_165 = arith.constant dense<0.000000e+00> : vector<1xf32>
    %229 = vector.multi_reduction <add>, %228, %cst_165 [1, 2] : vector<1x16x16xf32> to vector<1xf32>
    %230 = vector.shape_cast %229 : vector<1xf32> to vector<1x1x1xf32>
    %231 = vector.extract %230[0, 0, 0] : f32 from vector<1x1x1xf32>
    %232 = vector.broadcast %231 : f32 to vector<1x1xf32>
    %233 = arith.addf %221, %232 : vector<1x1xf32>
    %234 = vector.extract_strided_slice %208 {offsets = [0, 256], sizes = [16, 256], strides = [1, 1]} : vector<16x1024xbf16> to vector<16x256xbf16>
    %235 = vector.extract_strided_slice %208 {offsets = [0, 768], sizes = [16, 256], strides = [1, 1]} : vector<16x1024xbf16> to vector<16x256xbf16>
    %cst_166 = arith.constant dense<0.000000e+00> : vector<16x16xf32>
    %236 = tpu.matmul %234, %234, %cst_166 {dimension_numbers = #tpu.dot_dimension_numbers<[1], [1], [0], [0], [0, 0, 1, 0], [], []>} : vector<16x256xbf16>, vector<16x256xbf16>, vector<16x16xf32> -> vector<16x16xf32>
    %cst_167 = arith.constant dense<0.000000e+00> : vector<16x16xf32>
    %237 = tpu.matmul %235, %235, %cst_167 {dimension_numbers = #tpu.dot_dimension_numbers<[1], [1], [0], [0], [0, 0, 1, 0], [], []>} : vector<16x256xbf16>, vector<16x256xbf16>, vector<16x16xf32> -> vector<16x16xf32>
    %238 = arith.subf %236, %237 : vector<16x16xf32>
    %239 = math.absf %238 : vector<16x16xf32>
    %240 = vector.shape_cast %239 : vector<16x16xf32> to vector<1x16x16xf32>
    %cst_168 = arith.constant dense<0.000000e+00> : vector<1xf32>
    %241 = vector.multi_reduction <add>, %240, %cst_168 [1, 2] : vector<1x16x16xf32> to vector<1xf32>
    %242 = vector.shape_cast %241 : vector<1xf32> to vector<1x1x1xf32>
    %243 = vector.extract %242[0, 0, 0] : f32 from vector<1x1x1xf32>
    %244 = vector.broadcast %243 : f32 to vector<1x1xf32>
    %245 = arith.addf %233, %244 : vector<1x1xf32>
    %cst_169 = arith.constant 4.76837158E-7 : f32
    %246 = vector.broadcast %cst_169 : f32 to vector<1x1xf32>
    %247 = arith.mulf %245, %246 : vector<1x1xf32>
    %c0_170 = arith.constant 0 : index
    %c0_171 = arith.constant 0 : index
    %248 = vector.load %arg15[%c0_170, %c0_171] : memref<1x1xf32, #tpu.memory_space<vmem>>, vector<1x1xf32>
    tpu.vector_store %arg15[%c0_170, %c0_171], %247 {strides = array<i32>} : memref<1x1xf32, #tpu.memory_space<vmem>>, vector<1x1xf32>,
    %cst_172 = arith.constant 0.000000e+00 : bf16
    %249 = vector.broadcast %cst_172 : bf16 to vector<16x128xbf16>
    %c0_173 = arith.constant 0 : index
    %c0_174 = arith.constant 0 : index
    %250 = vector.load %arg18[%c0_173, %c0_174] : memref<16x1280xbf16, #tpu.memory_space<vmem>>, vector<16x128xbf16>
    tpu.vector_store %arg18[%c0_173, %c0_174], %249 {strides = array<i32>} : memref<16x1280xbf16, #tpu.memory_space<vmem>>, vector<16x128xbf16>,
    %cst_175 = arith.constant 0.000000e+00 : bf16
    %251 = vector.broadcast %cst_175 : bf16 to vector<16x128xbf16>
    %c0_176 = arith.constant 0 : index
    %c1152_177 = arith.constant 1152 : index
    %252 = vector.load %arg18[%c0_176, %c1152_177] : memref<16x1280xbf16, #tpu.memory_space<vmem>>, vector<16x128xbf16>
    tpu.vector_store %arg18[%c0_176, %c1152_177], %251 {strides = array<i32>} : memref<16x1280xbf16, #tpu.memory_space<vmem>>, vector<16x128xbf16>,
    %c0_178 = arith.constant 0 : index
    %c128_179 = arith.constant 128 : index
    %253 = vector.load %arg18[%c0_178, %c128_179] : memref<16x1280xbf16, #tpu.memory_space<vmem>>, vector<16x1024xbf16>
    tpu.vector_store %arg18[%c0_178, %c128_179], %208 {strides = array<i32>} : memref<16x1280xbf16, #tpu.memory_space<vmem>>, vector<16x1024xbf16>,
    %cst_180 = arith.constant 0.000000e+00 : f32
    %254 = vector.broadcast %cst_180 : f32 to vector<16x1024xf32>
    %c0_181 = arith.constant 0 : index
    %c111_182 = arith.constant 111 : index
    %255 = vector.load %arg18[%c0_181, %c111_182] : memref<16x1280xbf16, #tpu.memory_space<vmem>>, vector<16x1024xbf16>
    %c0_183 = arith.constant 0 : index
    %c0_184 = arith.constant 0 : index
    %256 = vector.load %arg1[%c0_183, %c0_184] : memref<9x1024xbf16, #tpu.memory_space<vmem>>, vector<1x1024xbf16>
    %257 = vector.broadcast %256 : vector<1x1024xbf16> to vector<16x1024xbf16>
    %258 = arith.mulf %255, %257 : vector<16x1024xbf16>
    %c0_185 = arith.constant 0 : index
    %c0_186 = arith.constant 0 : index
    %c0_187 = arith.constant 0 : index
    %259 = vector.load %arg8[%c0_185, %c0_186, %c0_187] : memref<9x16x16xbf16, #tpu.memory_space<vmem>>, vector<1x16x16xbf16>
    %260 = vector.shape_cast %259 : vector<1x16x16xbf16> to vector<16x16xbf16>
    %cst_188 = arith.constant dense<0.000000e+00> : vector<16x1024xf32>
    %261 = tpu.matmul %260, %258, %cst_188 {dimension_numbers = #tpu.dot_dimension_numbers<[1], [0], [0], [1], [0, 0, 1, 1], [], []>} : vector<16x16xbf16>, vector<16x1024xbf16>, vector<16x1024xf32> -> vector<16x1024xf32>
    %262 = arith.addf %254, %261 : vector<16x1024xf32>
    %c0_189 = arith.constant 0 : index
    %c112_190 = arith.constant 112 : index
    %263 = vector.load %arg18[%c0_189, %c112_190] : memref<16x1280xbf16, #tpu.memory_space<vmem>>, vector<16x1024xbf16>
    %c1_191 = arith.constant 1 : index
    %c0_192 = arith.constant 0 : index
    %264 = vector.load %arg1[%c1_191, %c0_192] : memref<9x1024xbf16, #tpu.memory_space<vmem>>, vector<1x1024xbf16>
    %265 = vector.broadcast %264 : vector<1x1024xbf16> to vector<16x1024xbf16>
    %266 = arith.mulf %263, %265 : vector<16x1024xbf16>
    %c1_193 = arith.constant 1 : index
    %c0_194 = arith.constant 0 : index
    %c0_195 = arith.constant 0 : index
    %267 = vector.load %arg8[%c1_193, %c0_194, %c0_195] : memref<9x16x16xbf16, #tpu.memory_space<vmem>>, vector<1x16x16xbf16>
    %268 = vector.shape_cast %267 : vector<1x16x16xbf16> to vector<16x16xbf16>
    %cst_196 = arith.constant dense<0.000000e+00> : vector<16x1024xf32>
    %269 = tpu.matmul %268, %266, %cst_196 {dimension_numbers = #tpu.dot_dimension_numbers<[1], [0], [0], [1], [0, 0, 1, 1], [], []>} : vector<16x16xbf16>, vector<16x1024xbf16>, vector<16x1024xf32> -> vector<16x1024xf32>
    %270 = arith.addf %262, %269 : vector<16x1024xf32>
    %c0_197 = arith.constant 0 : index
    %c113_198 = arith.constant 113 : index
    %271 = vector.load %arg18[%c0_197, %c113_198] : memref<16x1280xbf16, #tpu.memory_space<vmem>>, vector<16x1024xbf16>
    %c2_199 = arith.constant 2 : index
    %c0_200 = arith.constant 0 : index
    %272 = vector.load %arg1[%c2_199, %c0_200] : memref<9x1024xbf16, #tpu.memory_space<vmem>>, vector<1x1024xbf16>
    %273 = vector.broadcast %272 : vector<1x1024xbf16> to vector<16x1024xbf16>
    %274 = arith.mulf %271, %273 : vector<16x1024xbf16>
    %c2_201 = arith.constant 2 : index
    %c0_202 = arith.constant 0 : index
    %c0_203 = arith.constant 0 : index
    %275 = vector.load %arg8[%c2_201, %c0_202, %c0_203] : memref<9x16x16xbf16, #tpu.memory_space<vmem>>, vector<1x16x16xbf16>
    %276 = vector.shape_cast %275 : vector<1x16x16xbf16> to vector<16x16xbf16>
    %cst_204 = arith.constant dense<0.000000e+00> : vector<16x1024xf32>
    %277 = tpu.matmul %276, %274, %cst_204 {dimension_numbers = #tpu.dot_dimension_numbers<[1], [0], [0], [1], [0, 0, 1, 1], [], []>} : vector<16x16xbf16>, vector<16x1024xbf16>, vector<16x1024xf32> -> vector<16x1024xf32>
    %278 = arith.addf %270, %277 : vector<16x1024xf32>
    %c0_205 = arith.constant 0 : index
    %c127_206 = arith.constant 127 : index
    %279 = vector.load %arg18[%c0_205, %c127_206] : memref<16x1280xbf16, #tpu.memory_space<vmem>>, vector<16x1024xbf16>
    %c3_207 = arith.constant 3 : index
    %c0_208 = arith.constant 0 : index
    %280 = vector.load %arg1[%c3_207, %c0_208] : memref<9x1024xbf16, #tpu.memory_space<vmem>>, vector<1x1024xbf16>
    %281 = vector.broadcast %280 : vector<1x1024xbf16> to vector<16x1024xbf16>
    %282 = arith.mulf %279, %281 : vector<16x1024xbf16>
    %c3_209 = arith.constant 3 : index
    %c0_210 = arith.constant 0 : index
    %c0_211 = arith.constant 0 : index
    %283 = vector.load %arg8[%c3_209, %c0_210, %c0_211] : memref<9x16x16xbf16, #tpu.memory_space<vmem>>, vector<1x16x16xbf16>
    %284 = vector.shape_cast %283 : vector<1x16x16xbf16> to vector<16x16xbf16>
    %cst_212 = arith.constant dense<0.000000e+00> : vector<16x1024xf32>
    %285 = tpu.matmul %284, %282, %cst_212 {dimension_numbers = #tpu.dot_dimension_numbers<[1], [0], [0], [1], [0, 0, 1, 1], [], []>} : vector<16x16xbf16>, vector<16x1024xbf16>, vector<16x1024xf32> -> vector<16x1024xf32>
    %286 = arith.addf %278, %285 : vector<16x1024xf32>
    %c0_213 = arith.constant 0 : index
    %c128_214 = arith.constant 128 : index
    %287 = vector.load %arg18[%c0_213, %c128_214] : memref<16x1280xbf16, #tpu.memory_space<vmem>>, vector<16x1024xbf16>
    %c4_215 = arith.constant 4 : index
    %c0_216 = arith.constant 0 : index
    %c0_217 = arith.constant 0 : index
    %288 = vector.load %arg8[%c4_215, %c0_216, %c0_217] : memref<9x16x16xbf16, #tpu.memory_space<vmem>>, vector<1x16x16xbf16>
    %289 = vector.shape_cast %288 : vector<1x16x16xbf16> to vector<16x16xbf16>
    %cst_218 = arith.constant dense<0.000000e+00> : vector<16x1024xf32>
    %290 = tpu.matmul %289, %287, %cst_218 {dimension_numbers = #tpu.dot_dimension_numbers<[1], [0], [0], [1], [0, 0, 1, 1], [], []>} : vector<16x16xbf16>, vector<16x1024xbf16>, vector<16x1024xf32> -> vector<16x1024xf32>
    %291 = arith.addf %286, %290 : vector<16x1024xf32>
    %c0_219 = arith.constant 0 : index
    %c129_220 = arith.constant 129 : index
    %292 = vector.load %arg18[%c0_219, %c129_220] : memref<16x1280xbf16, #tpu.memory_space<vmem>>, vector<16x1024xbf16>
    %c5_221 = arith.constant 5 : index
    %c0_222 = arith.constant 0 : index
    %293 = vector.load %arg1[%c5_221, %c0_222] : memref<9x1024xbf16, #tpu.memory_space<vmem>>, vector<1x1024xbf16>
    %294 = vector.broadcast %293 : vector<1x1024xbf16> to vector<16x1024xbf16>
    %295 = arith.mulf %292, %294 : vector<16x1024xbf16>
    %c5_223 = arith.constant 5 : index
    %c0_224 = arith.constant 0 : index
    %c0_225 = arith.constant 0 : index
    %296 = vector.load %arg8[%c5_223, %c0_224, %c0_225] : memref<9x16x16xbf16, #tpu.memory_space<vmem>>, vector<1x16x16xbf16>
    %297 = vector.shape_cast %296 : vector<1x16x16xbf16> to vector<16x16xbf16>
    %cst_226 = arith.constant dense<0.000000e+00> : vector<16x1024xf32>
    %298 = tpu.matmul %297, %295, %cst_226 {dimension_numbers = #tpu.dot_dimension_numbers<[1], [0], [0], [1], [0, 0, 1, 1], [], []>} : vector<16x16xbf16>, vector<16x1024xbf16>, vector<16x1024xf32> -> vector<16x1024xf32>
    %299 = arith.addf %291, %298 : vector<16x1024xf32>
    %c0_227 = arith.constant 0 : index
    %c143_228 = arith.constant 143 : index
    %300 = vector.load %arg18[%c0_227, %c143_228] : memref<16x1280xbf16, #tpu.memory_space<vmem>>, vector<16x1024xbf16>
    %c6_229 = arith.constant 6 : index
    %c0_230 = arith.constant 0 : index
    %301 = vector.load %arg1[%c6_229, %c0_230] : memref<9x1024xbf16, #tpu.memory_space<vmem>>, vector<1x1024xbf16>
    %302 = vector.broadcast %301 : vector<1x1024xbf16> to vector<16x1024xbf16>
    %303 = arith.mulf %300, %302 : vector<16x1024xbf16>
    %c6_231 = arith.constant 6 : index
    %c0_232 = arith.constant 0 : index
    %c0_233 = arith.constant 0 : index
    %304 = vector.load %arg8[%c6_231, %c0_232, %c0_233] : memref<9x16x16xbf16, #tpu.memory_space<vmem>>, vector<1x16x16xbf16>
    %305 = vector.shape_cast %304 : vector<1x16x16xbf16> to vector<16x16xbf16>
    %cst_234 = arith.constant dense<0.000000e+00> : vector<16x1024xf32>
    %306 = tpu.matmul %305, %303, %cst_234 {dimension_numbers = #tpu.dot_dimension_numbers<[1], [0], [0], [1], [0, 0, 1, 1], [], []>} : vector<16x16xbf16>, vector<16x1024xbf16>, vector<16x1024xf32> -> vector<16x1024xf32>
    %307 = arith.addf %299, %306 : vector<16x1024xf32>
    %c0_235 = arith.constant 0 : index
    %c144_236 = arith.constant 144 : index
    %308 = vector.load %arg18[%c0_235, %c144_236] : memref<16x1280xbf16, #tpu.memory_space<vmem>>, vector<16x1024xbf16>
    %c7_237 = arith.constant 7 : index
    %c0_238 = arith.constant 0 : index
    %309 = vector.load %arg1[%c7_237, %c0_238] : memref<9x1024xbf16, #tpu.memory_space<vmem>>, vector<1x1024xbf16>
    %310 = vector.broadcast %309 : vector<1x1024xbf16> to vector<16x1024xbf16>
    %311 = arith.mulf %308, %310 : vector<16x1024xbf16>
    %c7_239 = arith.constant 7 : index
    %c0_240 = arith.constant 0 : index
    %c0_241 = arith.constant 0 : index
    %312 = vector.load %arg8[%c7_239, %c0_240, %c0_241] : memref<9x16x16xbf16, #tpu.memory_space<vmem>>, vector<1x16x16xbf16>
    %313 = vector.shape_cast %312 : vector<1x16x16xbf16> to vector<16x16xbf16>
    %cst_242 = arith.constant dense<0.000000e+00> : vector<16x1024xf32>
    %314 = tpu.matmul %313, %311, %cst_242 {dimension_numbers = #tpu.dot_dimension_numbers<[1], [0], [0], [1], [0, 0, 1, 1], [], []>} : vector<16x16xbf16>, vector<16x1024xbf16>, vector<16x1024xf32> -> vector<16x1024xf32>
    %315 = arith.addf %307, %314 : vector<16x1024xf32>
    %c0_243 = arith.constant 0 : index
    %c145_244 = arith.constant 145 : index
    %316 = vector.load %arg18[%c0_243, %c145_244] : memref<16x1280xbf16, #tpu.memory_space<vmem>>, vector<16x1024xbf16>
    %c8_245 = arith.constant 8 : index
    %c0_246 = arith.constant 0 : index
    %317 = vector.load %arg1[%c8_245, %c0_246] : memref<9x1024xbf16, #tpu.memory_space<vmem>>, vector<1x1024xbf16>
    %318 = vector.broadcast %317 : vector<1x1024xbf16> to vector<16x1024xbf16>
    %319 = arith.mulf %316, %318 : vector<16x1024xbf16>
    %c8_247 = arith.constant 8 : index
    %c0_248 = arith.constant 0 : index
    %c0_249 = arith.constant 0 : index
    %320 = vector.load %arg8[%c8_247, %c0_248, %c0_249] : memref<9x16x16xbf16, #tpu.memory_space<vmem>>, vector<1x16x16xbf16>
    %321 = vector.shape_cast %320 : vector<1x16x16xbf16> to vector<16x16xbf16>
    %cst_250 = arith.constant dense<0.000000e+00> : vector<16x1024xf32>
    %322 = tpu.matmul %321, %319, %cst_250 {dimension_numbers = #tpu.dot_dimension_numbers<[1], [0], [0], [1], [0, 0, 1, 1], [], []>} : vector<16x16xbf16>, vector<16x1024xbf16>, vector<16x1024xf32> -> vector<16x1024xf32>
    %323 = arith.addf %315, %322 : vector<16x1024xf32>
    %c0_251 = arith.constant 0 : index
    %c0_252 = arith.constant 0 : index
    %324 = vector.load %arg9[%c0_251, %c0_252] : memref<16x1xf32, #tpu.memory_space<vmem>>, vector<16x1xf32>
    %325 = vector.broadcast %324 : vector<16x1xf32> to vector<16x1024xf32>
    %326 = arith.addf %323, %325 : vector<16x1024xf32>
    %cst_253 = arith.constant 0.000000e+00 : f32
    %327 = vector.broadcast %cst_253 : f32 to vector<16x1024xf32>
    %328 = arith.maximumf %326, %327 : vector<16x1024xf32>
    %329 = arith.truncf %328 : vector<16x1024xf32> to vector<16x1024xbf16>
    %330 = vector.extract_strided_slice %328 {offsets = [0, 0], sizes = [16, 512], strides = [1, 1]} : vector<16x1024xf32> to vector<16x512xf32>
    %331 = vector.extract_strided_slice %328 {offsets = [0, 512], sizes = [16, 512], strides = [1, 1]} : vector<16x1024xf32> to vector<16x512xf32>
    %332 = arith.subf %330, %331 : vector<16x512xf32>
    %333 = math.absf %332 : vector<16x512xf32>
    %334 = vector.shape_cast %333 : vector<16x512xf32> to vector<1x16x512xf32>
    %cst_254 = arith.constant dense<0.000000e+00> : vector<1xf32>
    %335 = vector.multi_reduction <add>, %334, %cst_254 [1, 2] : vector<1x16x512xf32> to vector<1xf32>
    %336 = vector.shape_cast %335 : vector<1xf32> to vector<1x1x1xf32>
    %337 = vector.extract %336[0, 0, 0] : f32 from vector<1x1x1xf32>
    %338 = vector.broadcast %337 : f32 to vector<1x1xf32>
    %cst_255 = arith.constant 1.22070313E-4 : f32
    %339 = vector.broadcast %cst_255 : f32 to vector<1x1xf32>
    %340 = arith.mulf %338, %339 : vector<1x1xf32>
    %c0_256 = arith.constant 0 : index
    %c0_257 = arith.constant 0 : index
    %341 = vector.load %arg13[%c0_256, %c0_257] : memref<1x1xf32, #tpu.memory_space<vmem>>, vector<1x1xf32>
    tpu.vector_store %arg13[%c0_256, %c0_257], %340 {strides = array<i32>} : memref<1x1xf32, #tpu.memory_space<vmem>>, vector<1x1xf32>,
    %cst_258 = arith.constant 0.000000e+00 : f32
    %342 = vector.broadcast %cst_258 : f32 to vector<1x1xf32>
    %343 = vector.extract_strided_slice %329 {offsets = [0, 0], sizes = [16, 256], strides = [1, 1]} : vector<16x1024xbf16> to vector<16x256xbf16>
    %344 = vector.extract_strided_slice %329 {offsets = [0, 512], sizes = [16, 256], strides = [1, 1]} : vector<16x1024xbf16> to vector<16x256xbf16>
    %cst_259 = arith.constant dense<0.000000e+00> : vector<16x16xf32>
    %345 = tpu.matmul %343, %343, %cst_259 {dimension_numbers = #tpu.dot_dimension_numbers<[1], [1], [0], [0], [0, 0, 1, 0], [], []>} : vector<16x256xbf16>, vector<16x256xbf16>, vector<16x16xf32> -> vector<16x16xf32>
    %cst_260 = arith.constant dense<0.000000e+00> : vector<16x16xf32>
    %346 = tpu.matmul %344, %344, %cst_260 {dimension_numbers = #tpu.dot_dimension_numbers<[1], [1], [0], [0], [0, 0, 1, 0], [], []>} : vector<16x256xbf16>, vector<16x256xbf16>, vector<16x16xf32> -> vector<16x16xf32>
    %347 = arith.subf %345, %346 : vector<16x16xf32>
    %348 = math.absf %347 : vector<16x16xf32>
    %349 = vector.shape_cast %348 : vector<16x16xf32> to vector<1x16x16xf32>
    %cst_261 = arith.constant dense<0.000000e+00> : vector<1xf32>
    %350 = vector.multi_reduction <add>, %349, %cst_261 [1, 2] : vector<1x16x16xf32> to vector<1xf32>
    %351 = vector.shape_cast %350 : vector<1xf32> to vector<1x1x1xf32>
    %352 = vector.extract %351[0, 0, 0] : f32 from vector<1x1x1xf32>
    %353 = vector.broadcast %352 : f32 to vector<1x1xf32>
    %354 = arith.addf %342, %353 : vector<1x1xf32>
    %355 = vector.extract_strided_slice %329 {offsets = [0, 256], sizes = [16, 256], strides = [1, 1]} : vector<16x1024xbf16> to vector<16x256xbf16>
    %356 = vector.extract_strided_slice %329 {offsets = [0, 768], sizes = [16, 256], strides = [1, 1]} : vector<16x1024xbf16> to vector<16x256xbf16>
    %cst_262 = arith.constant dense<0.000000e+00> : vector<16x16xf32>
    %357 = tpu.matmul %355, %355, %cst_262 {dimension_numbers = #tpu.dot_dimension_numbers<[1], [1], [0], [0], [0, 0, 1, 0], [], []>} : vector<16x256xbf16>, vector<16x256xbf16>, vector<16x16xf32> -> vector<16x16xf32>
    %cst_263 = arith.constant dense<0.000000e+00> : vector<16x16xf32>
    %358 = tpu.matmul %356, %356, %cst_263 {dimension_numbers = #tpu.dot_dimension_numbers<[1], [1], [0], [0], [0, 0, 1, 0], [], []>} : vector<16x256xbf16>, vector<16x256xbf16>, vector<16x16xf32> -> vector<16x16xf32>
    %359 = arith.subf %357, %358 : vector<16x16xf32>
    %360 = math.absf %359 : vector<16x16xf32>
    %361 = vector.shape_cast %360 : vector<16x16xf32> to vector<1x16x16xf32>
    %cst_264 = arith.constant dense<0.000000e+00> : vector<1xf32>
    %362 = vector.multi_reduction <add>, %361, %cst_264 [1, 2] : vector<1x16x16xf32> to vector<1xf32>
    %363 = vector.shape_cast %362 : vector<1xf32> to vector<1x1x1xf32>
    %364 = vector.extract %363[0, 0, 0] : f32 from vector<1x1x1xf32>
    %365 = vector.broadcast %364 : f32 to vector<1x1xf32>
    %366 = arith.addf %354, %365 : vector<1x1xf32>
    %cst_265 = arith.constant 4.76837158E-7 : f32
    %367 = vector.broadcast %cst_265 : f32 to vector<1x1xf32>
    %368 = arith.mulf %366, %367 : vector<1x1xf32>
    %c0_266 = arith.constant 0 : index
    %c0_267 = arith.constant 0 : index
    %369 = vector.load %arg16[%c0_266, %c0_267] : memref<1x1xf32, #tpu.memory_space<vmem>>, vector<1x1xf32>
    tpu.vector_store %arg16[%c0_266, %c0_267], %368 {strides = array<i32>} : memref<1x1xf32, #tpu.memory_space<vmem>>, vector<1x1xf32>,
    return
  }
}

</mosaic_0001>

<llo_original>
// kernel: _lambda_.1
$region0: #{_lambda_.1}
  #allocation0 [shape = 'u32[]', space=smem, size = 0x4, offset = 0x4, fixed_abs, tag = 'smem constant byte address 0x4 - core index']
  #allocation1 [shape = 'u32[144,128]{1,0:T(1,128)}', space=vmem, size = 0x12000, scoped, tag = 'internal scratch']
  #allocation2 [shape = 'bf16[8,1280]{1,0:T(8,128)(2,1)}', space=vmem, size = 0x5000, scoped, tag = 'scratch operand']
  #allocation3 [shape = 'bf16[16,1280]{1,0:T(8,128)(2,1)}', space=vmem, size = 0xa000, scoped, tag = 'scratch operand']
  %s0 = inlined_call_operand.vmem [shape: bf16[8,1280], index: 0, kind: input, shape index: {}]
  %s1 = inlined_call_operand.vmem [shape: bf16[9,1024], index: 1, kind: input, shape index: {}]
  %s2 = inlined_call_operand.vmem [shape: f32[16,128], index: 2, kind: input, shape index: {}]
  %s3 = inlined_call_operand.vmem [shape: f32[16,128], index: 3, kind: input, shape index: {}]
  %s4 = inlined_call_operand.vmem [shape: bf16[9,8,8], index: 4, kind: input, shape index: {}]
  %s5 = inlined_call_operand.vmem [shape: f32[8,1], index: 5, kind: input, shape index: {}]
  %s6 = inlined_call_operand.vmem [shape: bf16[9,16,8], index: 6, kind: input, shape index: {}]
  %s7 = inlined_call_operand.vmem [shape: f32[16,1], index: 7, kind: input, shape index: {}]
  %s8 = inlined_call_operand.vmem [shape: bf16[9,16,16], index: 8, kind: input, shape index: {}]
  %s9 = inlined_call_operand.vmem [shape: f32[16,1], index: 9, kind: input, shape index: {}]
  %s10 = inlined_call_operand.hbm [shape: f32[1,1], index: 10, kind: output, shape index: {0}]
  %s11 = inlined_call_operand.hbm [shape: f32[1,1], index: 11, kind: output, shape index: {1}]
  %s12 = inlined_call_operand.hbm [shape: f32[1,1], index: 12, kind: output, shape index: {2}]
  %s13 = inlined_call_operand.hbm [shape: f32[1,1], index: 13, kind: output, shape index: {3}]
  %s14 = inlined_call_operand.hbm [shape: f32[1,1], index: 14, kind: output, shape index: {4}]
  %s15 = inlined_call_operand.hbm [shape: f32[1,1], index: 15, kind: output, shape index: {5}]
  %s16 = inlined_call_operand.hbm [shape: f32[1,1], index: 16, kind: output, shape index: {6}]
  %17 = xla_tuple %s10, %s11, %s12, %s13, %s14, %s15, %s16
  %s18 = sld [smem:[#allocation0]]
  $region98: #{_lambda_.1} parent=0
    _
  %s20 = ssub.s32 1, %s18
  %s21 = scalar_select 0, %s20, %s18
  $region1: #{_lambda_.1} parent=0
    #allocation4 [shape = 'u8[512]{0}', space=vmem, size = 0x400, scoped, tag = 'output window, operand 0, single buffered']
    #allocation5 [shape = 's32[1]{0}', space=sflag, size = 0x4, scoped, tag = 'scoped memory for _lambda_.1']
    #allocation6 [shape = 'u8[512]{0}', space=vmem, size = 0x400, scoped, tag = 'output window, operand 1, single buffered']
    #allocation7 [shape = 's32[1]{0}', space=sflag, size = 0x4, scoped, tag = 'scoped memory for _lambda_.1']
    #allocation8 [shape = 'u8[512]{0}', space=vmem, size = 0x400, scoped, tag = 'output window, operand 2, single buffered']
    #allocation9 [shape = 'u8[512]{0}', space=vmem, size = 0x400, scoped, tag = 'output window, operand 3, single buffered']
    #allocation10 [shape = 's32[1]{0}', space=sflag, size = 0x4, scoped, tag = 'scoped memory for _lambda_.1']
    #allocation11 [shape = 'u8[512]{0}', space=vmem, size = 0x400, scoped, tag = 'output window, operand 4, single buffered']
    #allocation12 [shape = 'u8[512]{0}', space=vmem, size = 0x400, scoped, tag = 'output window, operand 5, single buffered']
    #allocation13 [shape = 's32[1]{0}', space=sflag, size = 0x4, scoped, tag = 'scoped memory for _lambda_.1']
    #allocation14 [shape = 'u8[512]{0}', space=vmem, size = 0x400, scoped, tag = 'output window, operand 6, single buffered']
    %22 = vsyncpa [#allocation5], 0
    %23 = vsyncpa [#allocation7], 0
    %24 = vsyncpa [#allocation10], 0
    %25 = vsyncpa [#allocation13], 0
    // Predicated region
    $region2: #{_lambda_.1} parent=1 // pred_check
      _
    $region3: #{_lambda_.1} parent=1 // pred_check_branch
      %27 = sbr.rel (0) target = $region5
    $region4: #{_lambda_.1} parent=1 // pred_region
      _
    $region5: #{_lambda_.1} parent=1 // pred_fallthru
      _
    // Predicated region
    $region6: #{_lambda_.1} parent=1 // pred_check
      _
    $region7: #{_lambda_.1} parent=1 // pred_check_branch
      %29 = sbr.rel (0) target = $region9
    $region8: #{_lambda_.1} parent=1 // pred_region
      _
    $region9: #{_lambda_.1} parent=1 // pred_fallthru
      _
    // Predicated region
    $region10: #{_lambda_.1} parent=1 // pred_check
      _
    $region11: #{_lambda_.1} parent=1 // pred_check_branch
      %31 = sbr.rel (0) target = $region13
    $region12: #{_lambda_.1} parent=1 // pred_region
      _
    $region13: #{_lambda_.1} parent=1 // pred_fallthru
      _
    // Predicated region
    $region14: #{_lambda_.1} parent=1 // pred_check
      _
    $region15: #{_lambda_.1} parent=1 // pred_check_branch
      %33 = sbr.rel (0) target = $region17
    $region16: #{_lambda_.1} parent=1 // pred_region
      _
    $region17: #{_lambda_.1} parent=1 // pred_fallthru
      _
    // Predicated region
    $region18: #{_lambda_.1} parent=1 // pred_check
      _
    $region19: #{_lambda_.1} parent=1 // pred_check_branch
      %35 = sbr.rel (0) target = $region21
    $region20: #{_lambda_.1} parent=1 // pred_region
      _
    $region21: #{_lambda_.1} parent=1 // pred_fallthru
      _
    // Predicated region
    $region22: #{_lambda_.1} parent=1 // pred_check
      _
    $region23: #{_lambda_.1} parent=1 // pred_check_branch
      %37 = sbr.rel (0) target = $region25
    $region24: #{_lambda_.1} parent=1 // pred_region
      _
    $region25: #{_lambda_.1} parent=1 // pred_fallthru
      _
    // Predicated region
    $region26: #{_lambda_.1} parent=1 // pred_check
      _
    $region27: #{_lambda_.1} parent=1 // pred_check_branch
      %39 = sbr.rel (0) target = $region29
    $region28: #{_lambda_.1} parent=1 // pred_region
      _
    $region29: #{_lambda_.1} parent=1 // pred_fallthru
      _
    // Predicated region
    $region30: #{_lambda_.1} parent=1 // pred_check
      _
    $region31: #{_lambda_.1} parent=1 // pred_check_branch
      %41 = sbr.rel (0) target = $region33
    $region32: #{_lambda_.1} parent=1 // pred_region
      _
    $region33: #{_lambda_.1} parent=1 // pred_fallthru
      _
    // Predicated region
    $region34: #{_lambda_.1} parent=1 // pred_check
      _
    $region35: #{_lambda_.1} parent=1 // pred_check_branch
      %43 = sbr.rel (0) target = $region37
    $region36: #{_lambda_.1} parent=1 // pred_region
      _
    $region37: #{_lambda_.1} parent=1 // pred_fallthru
      _
    // Predicated region
    $region38: #{_lambda_.1} parent=1 // pred_check
      _
    $region39: #{_lambda_.1} parent=1 // pred_check_branch
      %45 = sbr.rel (0) target = $region41
    $region40: #{_lambda_.1} parent=1 // pred_region
      _
    $region41: #{_lambda_.1} parent=1 // pred_fallthru
      _
    %v47 = vld [vmem:[%s2] sm:$0xff]
    %v48 = vld [vmem:[%s2 + $0x8] sm:$0xff]
    %v49 = vld [vmem:[%s3] sm:$0xff]
    %v50 = vld [vmem:[%s3 + $0x8] sm:$0xff]
    %v51 = vsub.f32 %v47, %v49
    %v52 = vsub.f32 %v48, %v50
    %v53 = vand.u32 2147483647, %v51
    %v54 = vand.u32 2147483647, %v52
    %v55 = vadd.f32 %v53, %v54
    %56 = vadd.xlane.f32.xlu0 %v55
    %v57 = vpop.xlane.xlu0 %56
    %v58 = vrot.slane %v57, 4
    %v59 = vadd.f32 %v57, %v58
    %v60 = vrot.slane %v59, 2
    %v61 = vadd.f32 %v59, %v60
    %v62 = vrot.slane %v61, 1
    %v63 = vadd.f32 %v61, %v62
    %s64 = vtos %v63
    %v65 = vstv %s64
    %v66 = vmul.f32 %v65, 0.0006510417
    %vm67 = vcmask 0
    %68 = vst.msk [vmem:[#allocation4] sm:$0x1] %vm67, %v66
    %v69 = vld [vmem:[%s0] sm:$0xff]
    %v70 = vld [vmem:[%s0 + $0x8] sm:$0xff]
    %v71 = vld [vmem:[%s0 + $0x10] sm:$0xff]
    %v72 = vld [vmem:[%s0 + $0x18] sm:$0xff]
    %v73 = vld [vmem:[%s0 + $0x20] sm:$0xf]
    %v74 = vld [vmem:[%s1] sm:$0x11]
    %v75 = vld [vmem:[%s1 + $0x8] sm:$0x11]
    %v76 = vld [vmem:[%s1 + $0x10] sm:$0x11]
    %v77 = vld [vmem:[%s1 + $0x18] sm:$0x11]
    %v82 = vunpack.c.l.b16 %v74
    %v83 = vunpack.c.h.b16 %v74
    %v84 = vunpack.c.l.b16 %v75
    %v85 = vunpack.c.h.b16 %v75
    %v86 = vunpack.c.l.b16 %v76
    %v87 = vunpack.c.h.b16 %v76
    %v88 = vunpack.c.l.b16 %v77
    %v89 = vunpack.c.h.b16 %v77
    %v90 = vpack.c.b16 %v82, %v82
    %v91 = vpack.c.b16 %v83, %v83
    %v92 = vpack.c.b16 %v84, %v84
    %v93 = vpack.c.b16 %v85, %v85
    %v94 = vpack.c.b16 %v86, %v86
    %v95 = vpack.c.b16 %v87, %v87
    %v96 = vpack.c.b16 %v88, %v88
    %v97 = vpack.c.b16 %v89, %v89
    %v99 = vpack.i.b16 %v90, %v90
    %v101 = vlaneseq
    %v102 = vshrl.u32 %v101, 7
    %v103 = vsub.s32 0, %v102
    %v104 = vrot.slane %v99, %v103
    %v106 = vpack.i.b16 %v91, %v91
    %v108 = vlaneseq
    %v109 = vshrl.u32 %v108, 7
    %v110 = vsub.s32 0, %v109
    %v111 = vrot.slane %v106, %v110
    %v113 = vpack.i.b16 %v92, %v92
    %v115 = vlaneseq
    %v116 = vshrl.u32 %v115, 7
    %v117 = vsub.s32 0, %v116
    %v118 = vrot.slane %v113, %v117
    %v120 = vpack.i.b16 %v93, %v93
    %v122 = vlaneseq
    %v123 = vshrl.u32 %v122, 7
    %v124 = vsub.s32 0, %v123
    %v125 = vrot.slane %v120, %v124
    %v127 = vpack.i.b16 %v94, %v94
    %v129 = vlaneseq
    %v130 = vshrl.u32 %v129, 7
    %v131 = vsub.s32 0, %v130
    %v132 = vrot.slane %v127, %v131
    %v134 = vpack.i.b16 %v95, %v95
    %v136 = vlaneseq
    %v137 = vshrl.u32 %v136, 7
    %v138 = vsub.s32 0, %v137
    %v139 = vrot.slane %v134, %v138
    %v141 = vpack.i.b16 %v96, %v96
    %v143 = vlaneseq
    %v144 = vshrl.u32 %v143, 7
    %v145 = vsub.s32 0, %v144
    %v146 = vrot.slane %v141, %v145
    %v148 = vpack.i.b16 %v97, %v97
    %v150 = vlaneseq
    %v151 = vshrl.u32 %v150, 7
    %v152 = vsub.s32 0, %v151
    %v153 = vrot.slane %v148, %v152
    %v162 = vunpack.c.l.b16 %v104
    %v163 = vunpack.c.l.b16 %v111
    %v164 = vunpack.c.l.b16 %v118
    %v165 = vunpack.c.l.b16 %v125
    %v166 = vunpack.c.l.b16 %v132
    %v167 = vunpack.c.l.b16 %v139
    %v168 = vunpack.c.l.b16 %v146
    %v169 = vunpack.c.l.b16 %v153
    %v170 = vpack.c.b16 %v163, %v162
    %v171 = vpack.c.b16 %v165, %v164
    %v172 = vpack.c.b16 %v167, %v166
    %v173 = vpack.c.b16 %v169, %v168
    %174 = vrot.lane.b32.xlu0 %v170, 111
    %v175 = vpop.permute.xlu0 %174
    %176 = vrot.lane.b32.xlu0 %v171, 111
    %v177 = vpop.permute.xlu0 %176
    %178 = vrot.lane.b32.xlu0 %v172, 111
    %v179 = vpop.permute.xlu0 %178
    %180 = vrot.lane.b32.xlu0 %v173, 111
    %v181 = vpop.permute.xlu0 %180
    %v182 = vrot.slane %v175, 4
    %v183 = vrot.slane %v177, 4
    %v184 = vrot.slane %v179, 4
    %v185 = vrot.slane %v181, 4
    %vm186 = vcmask 908288
    %v187 = vsel %vm186, %v182, %v175
    %vm188 = vcmask 1043456
    %v189 = vsel %vm188, %v182, %v183
    %v190 = vsel %vm186, %v189, %v177
    %v191 = vsel %vm188, %v183, %v184
    %v192 = vsel %vm186, %v191, %v179
    %v193 = vsel %vm188, %v184, %v185
    %v194 = vsel %vm186, %v193, %v181
    %v200 = vmul.bf16 %v69, %v187
    %v201 = vmul.bf16 %v70, %v190
    %v202 = vmul.bf16 %v71, %v192
    %v203 = vmul.bf16 %v72, %v194
    %v204 = vmul.bf16 %v73, %v185
    %v205 = vld [vmem:[%s4] sm:$0xf]
    %v206 = vshrl.u32 %v90, 16
    %v207 = vpack.i.b16 %v206, %v206
    %v209 = vlaneseq
    %v210 = vshrl.u32 %v209, 7
    %v211 = vsub.s32 0, %v210
    %v212 = vrot.slane %v207, %v211
    %v213 = vshrl.u32 %v91, 16
    %v214 = vpack.i.b16 %v213, %v213
    %v216 = vlaneseq
    %v217 = vshrl.u32 %v216, 7
    %v218 = vsub.s32 0, %v217
    %v219 = vrot.slane %v214, %v218
    %v220 = vshrl.u32 %v92, 16
    %v221 = vpack.i.b16 %v220, %v220
    %v223 = vlaneseq
    %v224 = vshrl.u32 %v223, 7
    %v225 = vsub.s32 0, %v224
    %v226 = vrot.slane %v221, %v225
    %v227 = vshrl.u32 %v93, 16
    %v228 = vpack.i.b16 %v227, %v227
    %v230 = vlaneseq
    %v231 = vshrl.u32 %v230, 7
    %v232 = vsub.s32 0, %v231
    %v233 = vrot.slane %v228, %v232
    %v234 = vshrl.u32 %v94, 16
    %v235 = vpack.i.b16 %v234, %v234
    %v237 = vlaneseq
    %v238 = vshrl.u32 %v237, 7
    %v239 = vsub.s32 0, %v238
    %v240 = vrot.slane %v235, %v239
    %v241 = vshrl.u32 %v95, 16
    %v242 = vpack.i.b16 %v241, %v241
    %v244 = vlaneseq
    %v245 = vshrl.u32 %v244, 7
    %v246 = vsub.s32 0, %v245
    %v247 = vrot.slane %v242, %v246
    %v248 = vshrl.u32 %v96, 16
    %v249 = vpack.i.b16 %v248, %v248
    %v251 = vlaneseq
    %v252 = vshrl.u32 %v251, 7
    %v253 = vsub.s32 0, %v252
    %v254 = vrot.slane %v249, %v253
    %v255 = vshrl.u32 %v97, 16
    %v256 = vpack.i.b16 %v255, %v255
    %v258 = vlaneseq
    %v259 = vshrl.u32 %v258, 7
    %v260 = vsub.s32 0, %v259
    %v261 = vrot.slane %v256, %v260
    %v270 = vunpack.c.l.b16 %v212
    %v271 = vunpack.c.l.b16 %v219
    %v272 = vunpack.c.l.b16 %v226
    %v273 = vunpack.c.l.b16 %v233
    %v274 = vunpack.c.l.b16 %v240
    %v275 = vunpack.c.l.b16 %v247
    %v276 = vunpack.c.l.b16 %v254
    %v277 = vunpack.c.l.b16 %v261
    %v278 = vpack.c.b16 %v271, %v270
    %v279 = vpack.c.b16 %v273, %v272
    %v280 = vpack.c.b16 %v275, %v274
    %v281 = vpack.c.b16 %v277, %v276
    %282 = vrot.lane.b32.xlu0 %v278, 112
    %v283 = vpop.permute.xlu0 %282
    %284 = vrot.lane.b32.xlu0 %v279, 112
    %v285 = vpop.permute.xlu0 %284
    %286 = vrot.lane.b32.xlu0 %v280, 112
    %v287 = vpop.permute.xlu0 %286
    %288 = vrot.lane.b32.xlu0 %v281, 112
    %v289 = vpop.permute.xlu0 %288
    %v290 = vrot.slane %v283, 4
    %v291 = vrot.slane %v285, 4
    %v292 = vrot.slane %v287, 4
    %v293 = vrot.slane %v289, 4
    %vm294 = vcmask 916480
    %v295 = vsel %vm294, %v290, %v283
    %v296 = vsel %vm188, %v290, %v291
    %v297 = vsel %vm294, %v296, %v285
    %v298 = vsel %vm188, %v291, %v292
    %v299 = vsel %vm294, %v298, %v287
    %v300 = vsel %vm188, %v292, %v293
    %v301 = vsel %vm294, %v300, %v289
    %v307 = vmul.bf16 %v69, %v295
    %v308 = vmul.bf16 %v70, %v297
    %v309 = vmul.bf16 %v71, %v299
    %v310 = vmul.bf16 %v72, %v301
    %v311 = vmul.bf16 %v73, %v293
    %s312 = scalar_lea.vmem %s4, 4
    %v313 = vld [vmem:[%s312] sm:$0xf]
    %v319 = vunpack.c.l.b16 %v307
    %v320 = vunpack.c.h.b16 %v307
    %v321 = vunpack.c.l.b16 %v308
    %v322 = vunpack.c.h.b16 %v308
    %v323 = vunpack.c.l.b16 %v309
    %v324 = vunpack.c.h.b16 %v309
    %v325 = vunpack.c.l.b16 %v310
    %v326 = vunpack.c.h.b16 %v310
    %v327 = vunpack.c.l.b16 %v311
    %v328 = vpack.c.b16 %v319, %v319
    %v329 = vpack.c.b16 %v320, %v320
    %v330 = vpack.c.b16 %v321, %v321
    %v331 = vpack.c.b16 %v322, %v322
    %v332 = vpack.c.b16 %v323, %v323
    %v333 = vpack.c.b16 %v324, %v324
    %v334 = vpack.c.b16 %v325, %v325
    %v335 = vpack.c.b16 %v326, %v326
    %v336 = vpack.c.b16 %v327, %v327
    %337 = vrot.lane.b32.xlu0 %v328, 16
    %v338 = vpop.permute.xlu0 %337
    %339 = vrot.lane.b32.xlu0 %v329, 16
    %v340 = vpop.permute.xlu0 %339
    %341 = vrot.lane.b32.xlu0 %v330, 16
    %v342 = vpop.permute.xlu0 %341
    %343 = vrot.lane.b32.xlu0 %v331, 16
    %v344 = vpop.permute.xlu0 %343
    %345 = vrot.lane.b32.xlu0 %v332, 16
    %v346 = vpop.permute.xlu0 %345
    %347 = vrot.lane.b32.xlu0 %v333, 16
    %v348 = vpop.permute.xlu0 %347
    %349 = vrot.lane.b32.xlu0 %v334, 16
    %v350 = vpop.permute.xlu0 %349
    %351 = vrot.lane.b32.xlu0 %v335, 16
    %v352 = vpop.permute.xlu0 %351
    %353 = vrot.lane.b32.xlu0 %v336, 16
    %v354 = vpop.permute.xlu0 %353
    %vm355 = vcmask 130048
    %v356 = vsel %vm355, %v338, %v340
    %v357 = vsel %vm355, %v340, %v342
    %v358 = vsel %vm355, %v342, %v344
    %v359 = vsel %vm355, %v344, %v346
    %v360 = vsel %vm355, %v346, %v348
    %v361 = vsel %vm355, %v348, %v350
    %v362 = vsel %vm355, %v350, %v352
    %v363 = vsel %vm355, %v352, %v354
    %vm364 = vcmask 64512
    %v366 = vsel %vm364, %v313, 0
    %vm368 = vcmask 1043456
    %v370 = vsel %vm368, %v356, 0
    %v373 = vsel %vm368, %v357, 0
    %v376 = vsel %vm368, %v358, 0
    %v379 = vsel %vm368, %v359, 0
    %v382 = vsel %vm368, %v360, 0
    %v385 = vsel %vm368, %v361, 0
    %v388 = vsel %vm368, %v362, 0
    %v391 = vsel %vm368, %v363, 0
    %393 = vmatprep.subr.bf16.mxu0 0
    %394 = vmatpush1.bf16.msra.mxu0 0
    %395 = vmatprep.subr.bf16.mxu0 0
    %396 = vmatpush1.bf16.msra.mxu0 0
    %397 = vmatprep.subr.bf16.mxu0 0
    %398 = vmatpush1.bf16.msra.mxu0 0
    %399 = vmatprep.subr.bf16.mxu0 0
    %400 = vmatpush1.bf16.msra.mxu0 0
    %401 = vmatprep.subr.bf16.mxu0 0
    %402 = vmatpush1.bf16.msra.mxu0 0
    %403 = vmatprep.subr.bf16.mxu0 0
    %404 = vmatpush1.bf16.msra.mxu0 0
    %405 = vmatprep.subr.bf16.mxu0 0
    %406 = vmatpush1.bf16.msra.mxu0 0
    %407 = vmatprep.subr.bf16.mxu0 %v373
    %408 = vmatpush1.bf16.msra.mxu0 %v370
    %409 = vmatprep.subr.bf16.mxu0 0
    %410 = vmatpush2.bf16.msra.mxu0 0
    %411 = vmatprep.subr.bf16.mxu0 0
    %412 = vmatpush2.bf16.msra.mxu0 0
    %413 = vmatprep.subr.bf16.mxu0 0
    %414 = vmatpush2.bf16.msra.mxu0 0
    %415 = vmatprep.subr.bf16.mxu0 0
    %416 = vmatpush2.bf16.msra.mxu0 0
    %417 = vmatprep.subr.bf16.mxu0 0
    %418 = vmatpush2.bf16.msra.mxu0 0
    %419 = vmatprep.subr.bf16.mxu0 0
    %420 = vmatpush2.bf16.msra.mxu0 0
    %421 = vmatprep.subr.bf16.mxu0 0
    %422 = vmatpush2.bf16.msra.mxu0 0
    %423 = vmatprep.subr.bf16.mxu0 0
    %424 = vmatpush2.bf16.msra.mxu0 0
    %425 = vmatprep.mubr.bf16.mxu0 0
    %426 = vmatmul.mubr.bf16.gmra.mxu0 %v366
    %v427 = vpop.f32.mrf.mxu0
    %v428 = vadd.f32 0.0, %v427
    %v429 = vpop.f32.mrf.mxu0
    %v430 = vadd.f32 0.0, %v429
    %v431 = vpop.f32.mrf.mxu0
    %v432 = vpop.f32.mrf.mxu0
    %433 = vdwg.mxu0
    %434 = vmatprep.subr.bf16.mxu0 0
    %435 = vmatpush1.bf16.msra.mxu0 0
    %436 = vmatprep.subr.bf16.mxu0 0
    %437 = vmatpush1.bf16.msra.mxu0 0
    %438 = vmatprep.subr.bf16.mxu0 0
    %439 = vmatpush1.bf16.msra.mxu0 0
    %440 = vmatprep.subr.bf16.mxu0 0
    %441 = vmatpush1.bf16.msra.mxu0 0
    %442 = vmatprep.subr.bf16.mxu0 0
    %443 = vmatpush1.bf16.msra.mxu0 0
    %444 = vmatprep.subr.bf16.mxu0 0
    %445 = vmatpush1.bf16.msra.mxu0 0
    %446 = vmatprep.subr.bf16.mxu0 0
    %447 = vmatpush1.bf16.msra.mxu0 0
    %448 = vmatprep.subr.bf16.mxu0 %v379
    %449 = vmatpush1.bf16.msra.mxu0 %v376
    %450 = vmatprep.subr.bf16.mxu0 0
    %451 = vmatpush2.bf16.msra.mxu0 0
    %452 = vmatprep.subr.bf16.mxu0 0
    %453 = vmatpush2.bf16.msra.mxu0 0
    %454 = vmatprep.subr.bf16.mxu0 0
    %455 = vmatpush2.bf16.msra.mxu0 0
    %456 = vmatprep.subr.bf16.mxu0 0
    %457 = vmatpush2.bf16.msra.mxu0 0
    %458 = vmatprep.subr.bf16.mxu0 0
    %459 = vmatpush2.bf16.msra.mxu0 0
    %460 = vmatprep.subr.bf16.mxu0 0
    %461 = vmatpush2.bf16.msra.mxu0 0
    %462 = vmatprep.subr.bf16.mxu0 0
    %463 = vmatpush2.bf16.msra.mxu0 0
    %464 = vmatprep.subr.bf16.mxu0 0
    %465 = vmatpush2.bf16.msra.mxu0 0
    %466 = vmatprep.mubr.bf16.mxu0 0
    %467 = vmatmul.mubr.bf16.gmra.mxu0 %v366
    %v468 = vpop.f32.mrf.mxu0
    %v469 = vadd.f32 0.0, %v468
    %v470 = vpop.f32.mrf.mxu0
    %v471 = vadd.f32 0.0, %v470
    %v472 = vpop.f32.mrf.mxu0
    %v473 = vpop.f32.mrf.mxu0
    %474 = vdwg.mxu0
    %475 = vmatprep.subr.bf16.mxu0 0
    %476 = vmatpush1.bf16.msra.mxu0 0
    %477 = vmatprep.subr.bf16.mxu0 0
    %478 = vmatpush1.bf16.msra.mxu0 0
    %479 = vmatprep.subr.bf16.mxu0 0
    %480 = vmatpush1.bf16.msra.mxu0 0
    %481 = vmatprep.subr.bf16.mxu0 0
    %482 = vmatpush1.bf16.msra.mxu0 0
    %483 = vmatprep.subr.bf16.mxu0 0
    %484 = vmatpush1.bf16.msra.mxu0 0
    %485 = vmatprep.subr.bf16.mxu0 0
    %486 = vmatpush1.bf16.msra.mxu0 0
    %487 = vmatprep.subr.bf16.mxu0 0
    %488 = vmatpush1.bf16.msra.mxu0 0
    %489 = vmatprep.subr.bf16.mxu0 %v385
    %490 = vmatpush1.bf16.msra.mxu0 %v382
    %491 = vmatprep.subr.bf16.mxu0 0
    %492 = vmatpush2.bf16.msra.mxu0 0
    %493 = vmatprep.subr.bf16.mxu0 0
    %494 = vmatpush2.bf16.msra.mxu0 0
    %495 = vmatprep.subr.bf16.mxu0 0
    %496 = vmatpush2.bf16.msra.mxu0 0
    %497 = vmatprep.subr.bf16.mxu0 0
    %498 = vmatpush2.bf16.msra.mxu0 0
    %499 = vmatprep.subr.bf16.mxu0 0
    %500 = vmatpush2.bf16.msra.mxu0 0
    %501 = vmatprep.subr.bf16.mxu0 0
    %502 = vmatpush2.bf16.msra.mxu0 0
    %503 = vmatprep.subr.bf16.mxu0 0
    %504 = vmatpush2.bf16.msra.mxu0 0
    %505 = vmatprep.subr.bf16.mxu0 0
    %506 = vmatpush2.bf16.msra.mxu0 0
    %507 = vmatprep.mubr.bf16.mxu0 0
    %508 = vmatmul.mubr.bf16.gmra.mxu0 %v366
    %v509 = vpop.f32.mrf.mxu0
    %v510 = vadd.f32 0.0, %v509
    %v511 = vpop.f32.mrf.mxu0
    %v512 = vadd.f32 0.0, %v511
    %v513 = vpop.f32.mrf.mxu0
    %v514 = vpop.f32.mrf.mxu0
    %515 = vdwg.mxu0
    %516 = vmatprep.subr.bf16.mxu0 0
    %517 = vmatpush1.bf16.msra.mxu0 0
    %518 = vmatprep.subr.bf16.mxu0 0
    %519 = vmatpush1.bf16.msra.mxu0 0
    %520 = vmatprep.subr.bf16.mxu0 0
    %521 = vmatpush1.bf16.msra.mxu0 0
    %522 = vmatprep.subr.bf16.mxu0 0
    %523 = vmatpush1.bf16.msra.mxu0 0
    %524 = vmatprep.subr.bf16.mxu0 0
    %525 = vmatpush1.bf16.msra.mxu0 0
    %526 = vmatprep.subr.bf16.mxu0 0
    %527 = vmatpush1.bf16.msra.mxu0 0
    %528 = vmatprep.subr.bf16.mxu0 0
    %529 = vmatpush1.bf16.msra.mxu0 0
    %530 = vmatprep.subr.bf16.mxu0 %v391
    %531 = vmatpush1.bf16.msra.mxu0 %v388
    %532 = vmatprep.subr.bf16.mxu0 0
    %533 = vmatpush2.bf16.msra.mxu0 0
    %534 = vmatprep.subr.bf16.mxu0 0
    %535 = vmatpush2.bf16.msra.mxu0 0
    %536 = vmatprep.subr.bf16.mxu0 0
    %537 = vmatpush2.bf16.msra.mxu0 0
    %538 = vmatprep.subr.bf16.mxu0 0
    %539 = vmatpush2.bf16.msra.mxu0 0
    %540 = vmatprep.subr.bf16.mxu0 0
    %541 = vmatpush2.bf16.msra.mxu0 0
    %542 = vmatprep.subr.bf16.mxu0 0
    %543 = vmatpush2.bf16.msra.mxu0 0
    %544 = vmatprep.subr.bf16.mxu0 0
    %545 = vmatpush2.bf16.msra.mxu0 0
    %546 = vmatprep.subr.bf16.mxu0 0
    %547 = vmatpush2.bf16.msra.mxu0 0
    %548 = vmatprep.mubr.bf16.mxu0 0
    %549 = vmatmul.mubr.bf16.gmra.mxu0 %v366
    %v550 = vpop.f32.mrf.mxu0
    %v551 = vadd.f32 0.0, %v550
    %v552 = vpop.f32.mrf.mxu0
    %v553 = vadd.f32 0.0, %v552
    %v554 = vpop.f32.mrf.mxu0
    %v555 = vpop.f32.mrf.mxu0
    %556 = vdwg.mxu0
    %v562 = vunpack.c.l.b16 %v200
    %v563 = vunpack.c.h.b16 %v200
    %v564 = vunpack.c.l.b16 %v201
    %v565 = vunpack.c.h.b16 %v201
    %v566 = vunpack.c.l.b16 %v202
    %v567 = vunpack.c.h.b16 %v202
    %v568 = vunpack.c.l.b16 %v203
    %v569 = vunpack.c.h.b16 %v203
    %v570 = vunpack.c.l.b16 %v204
    %v571 = vpack.c.b16 %v562, %v562
    %v572 = vpack.c.b16 %v563, %v563
    %v573 = vpack.c.b16 %v564, %v564
    %v574 = vpack.c.b16 %v565, %v565
    %v575 = vpack.c.b16 %v566, %v566
    %v576 = vpack.c.b16 %v567, %v567
    %v577 = vpack.c.b16 %v568, %v568
    %v578 = vpack.c.b16 %v569, %v569
    %v579 = vpack.c.b16 %v570, %v570
    %580 = vrot.lane.b32.xlu0 %v571, 17
    %v581 = vpop.permute.xlu0 %580
    %582 = vrot.lane.b32.xlu0 %v572, 17
    %v583 = vpop.permute.xlu0 %582
    %584 = vrot.lane.b32.xlu0 %v573, 17
    %v585 = vpop.permute.xlu0 %584
    %586 = vrot.lane.b32.xlu0 %v574, 17
    %v587 = vpop.permute.xlu0 %586
    %588 = vrot.lane.b32.xlu0 %v575, 17
    %v589 = vpop.permute.xlu0 %588
    %590 = vrot.lane.b32.xlu0 %v576, 17
    %v591 = vpop.permute.xlu0 %590
    %592 = vrot.lane.b32.xlu0 %v577, 17
    %v593 = vpop.permute.xlu0 %592
    %594 = vrot.lane.b32.xlu0 %v578, 17
    %v595 = vpop.permute.xlu0 %594
    %596 = vrot.lane.b32.xlu0 %v579, 17
    %v597 = vpop.permute.xlu0 %596
    %vm598 = vcmask 138240
    %v599 = vsel %vm598, %v581, %v583
    %v600 = vsel %vm598, %v583, %v585
    %v601 = vsel %vm598, %v585, %v587
    %v602 = vsel %vm598, %v587, %v589
    %v603 = vsel %vm598, %v589, %v591
    %v604 = vsel %vm598, %v591, %v593
    %v605 = vsel %vm598, %v593, %v595
    %v606 = vsel %vm598, %v595, %v597
    %v608 = vsel %vm364, %v205, 0
    %v611 = vsel %vm368, %v599, 0
    %v614 = vsel %vm368, %v600, 0
    %v617 = vsel %vm368, %v601, 0
    %v620 = vsel %vm368, %v602, 0
    %v623 = vsel %vm368, %v603, 0
    %v626 = vsel %vm368, %v604, 0
    %v629 = vsel %vm368, %v605, 0
    %v632 = vsel %vm368, %v606, 0
    %634 = vmatprep.subr.bf16.mxu0 0
    %635 = vmatpush1.bf16.msra.mxu0 0
    %636 = vmatprep.subr.bf16.mxu0 0
    %637 = vmatpush1.bf16.msra.mxu0 0
    %638 = vmatprep.subr.bf16.mxu0 0
    %639 = vmatpush1.bf16.msra.mxu0 0
    %640 = vmatprep.subr.bf16.mxu0 0
    %641 = vmatpush1.bf16.msra.mxu0 0
    %642 = vmatprep.subr.bf16.mxu0 0
    %643 = vmatpush1.bf16.msra.mxu0 0
    %644 = vmatprep.subr.bf16.mxu0 0
    %645 = vmatpush1.bf16.msra.mxu0 0
    %646 = vmatprep.subr.bf16.mxu0 0
    %647 = vmatpush1.bf16.msra.mxu0 0
    %648 = vmatprep.subr.bf16.mxu0 %v614
    %649 = vmatpush1.bf16.msra.mxu0 %v611
    %650 = vmatprep.subr.bf16.mxu0 0
    %651 = vmatpush2.bf16.msra.mxu0 0
    %652 = vmatprep.subr.bf16.mxu0 0
    %653 = vmatpush2.bf16.msra.mxu0 0
    %654 = vmatprep.subr.bf16.mxu0 0
    %655 = vmatpush2.bf16.msra.mxu0 0
    %656 = vmatprep.subr.bf16.mxu0 0
    %657 = vmatpush2.bf16.msra.mxu0 0
    %658 = vmatprep.subr.bf16.mxu0 0
    %659 = vmatpush2.bf16.msra.mxu0 0
    %660 = vmatprep.subr.bf16.mxu0 0
    %661 = vmatpush2.bf16.msra.mxu0 0
    %662 = vmatprep.subr.bf16.mxu0 0
    %663 = vmatpush2.bf16.msra.mxu0 0
    %664 = vmatprep.subr.bf16.mxu0 0
    %665 = vmatpush2.bf16.msra.mxu0 0
    %666 = vmatprep.mubr.bf16.mxu0 0
    %667 = vmatmul.mubr.bf16.gmra.mxu0 %v608
    %v668 = vpop.f32.mrf.mxu0
    %v669 = vadd.f32 %v428, %v668
    %v670 = vpop.f32.mrf.mxu0
    %v671 = vadd.f32 %v430, %v670
    %v672 = vpop.f32.mrf.mxu0
    %v673 = vpop.f32.mrf.mxu0
    %674 = vdwg.mxu0
    %675 = vmatprep.subr.bf16.mxu0 0
    %676 = vmatpush1.bf16.msra.mxu0 0
    %677 = vmatprep.subr.bf16.mxu0 0
    %678 = vmatpush1.bf16.msra.mxu0 0
    %679 = vmatprep.subr.bf16.mxu0 0
    %680 = vmatpush1.bf16.msra.mxu0 0
    %681 = vmatprep.subr.bf16.mxu0 0
    %682 = vmatpush1.bf16.msra.mxu0 0
    %683 = vmatprep.subr.bf16.mxu0 0
    %684 = vmatpush1.bf16.msra.mxu0 0
    %685 = vmatprep.subr.bf16.mxu0 0
    %686 = vmatpush1.bf16.msra.mxu0 0
    %687 = vmatprep.subr.bf16.mxu0 0
    %688 = vmatpush1.bf16.msra.mxu0 0
    %689 = vmatprep.subr.bf16.mxu0 %v620
    %690 = vmatpush1.bf16.msra.mxu0 %v617
    %691 = vmatprep.subr.bf16.mxu0 0
    %692 = vmatpush2.bf16.msra.mxu0 0
    %693 = vmatprep.subr.bf16.mxu0 0
    %694 = vmatpush2.bf16.msra.mxu0 0
    %695 = vmatprep.subr.bf16.mxu0 0
    %696 = vmatpush2.bf16.msra.mxu0 0
    %697 = vmatprep.subr.bf16.mxu0 0
    %698 = vmatpush2.bf16.msra.mxu0 0
    %699 = vmatprep.subr.bf16.mxu0 0
    %700 = vmatpush2.bf16.msra.mxu0 0
    %701 = vmatprep.subr.bf16.mxu0 0
    %702 = vmatpush2.bf16.msra.mxu0 0
    %703 = vmatprep.subr.bf16.mxu0 0
    %704 = vmatpush2.bf16.msra.mxu0 0
    %705 = vmatprep.subr.bf16.mxu0 0
    %706 = vmatpush2.bf16.msra.mxu0 0
    %707 = vmatprep.mubr.bf16.mxu0 0
    %708 = vmatmul.mubr.bf16.gmra.mxu0 %v608
    %v709 = vpop.f32.mrf.mxu0
    %v710 = vadd.f32 %v469, %v709
    %v711 = vpop.f32.mrf.mxu0
    %v712 = vadd.f32 %v471, %v711
    %v713 = vpop.f32.mrf.mxu0
    %v714 = vpop.f32.mrf.mxu0
    %715 = vdwg.mxu0
    %716 = vmatprep.subr.bf16.mxu0 0
    %717 = vmatpush1.bf16.msra.mxu0 0
    %718 = vmatprep.subr.bf16.mxu0 0
    %719 = vmatpush1.bf16.msra.mxu0 0
    %720 = vmatprep.subr.bf16.mxu0 0
    %721 = vmatpush1.bf16.msra.mxu0 0
    %722 = vmatprep.subr.bf16.mxu0 0
    %723 = vmatpush1.bf16.msra.mxu0 0
    %724 = vmatprep.subr.bf16.mxu0 0
    %725 = vmatpush1.bf16.msra.mxu0 0
    %726 = vmatprep.subr.bf16.mxu0 0
    %727 = vmatpush1.bf16.msra.mxu0 0
    %728 = vmatprep.subr.bf16.mxu0 0
    %729 = vmatpush1.bf16.msra.mxu0 0
    %730 = vmatprep.subr.bf16.mxu0 %v626
    %731 = vmatpush1.bf16.msra.mxu0 %v623
    %732 = vmatprep.subr.bf16.mxu0 0
    %733 = vmatpush2.bf16.msra.mxu0 0
    %734 = vmatprep.subr.bf16.mxu0 0
    %735 = vmatpush2.bf16.msra.mxu0 0
    %736 = vmatprep.subr.bf16.mxu0 0
    %737 = vmatpush2.bf16.msra.mxu0 0
    %738 = vmatprep.subr.bf16.mxu0 0
    %739 = vmatpush2.bf16.msra.mxu0 0
    %740 = vmatprep.subr.bf16.mxu0 0
    %741 = vmatpush2.bf16.msra.mxu0 0
    %742 = vmatprep.subr.bf16.mxu0 0
    %743 = vmatpush2.bf16.msra.mxu0 0
    %744 = vmatprep.subr.bf16.mxu0 0
    %745 = vmatpush2.bf16.msra.mxu0 0
    %746 = vmatprep.subr.bf16.mxu0 0
    %747 = vmatpush2.bf16.msra.mxu0 0
    %748 = vmatprep.mubr.bf16.mxu0 0
    %749 = vmatmul.mubr.bf16.gmra.mxu0 %v608
    %v750 = vpop.f32.mrf.mxu0
    %v751 = vadd.f32 %v510, %v750
    %v752 = vpop.f32.mrf.mxu0
    %v753 = vadd.f32 %v512, %v752
    %v754 = vpop.f32.mrf.mxu0
    %v755 = vpop.f32.mrf.mxu0
    %756 = vdwg.mxu0
    %757 = vmatprep.subr.bf16.mxu0 0
    %758 = vmatpush1.bf16.msra.mxu0 0
    %759 = vmatprep.subr.bf16.mxu0 0
    %760 = vmatpush1.bf16.msra.mxu0 0
    %761 = vmatprep.subr.bf16.mxu0 0
    %762 = vmatpush1.bf16.msra.mxu0 0
    %763 = vmatprep.subr.bf16.mxu0 0
    %764 = vmatpush1.bf16.msra.mxu0 0
    %765 = vmatprep.subr.bf16.mxu0 0
    %766 = vmatpush1.bf16.msra.mxu0 0
    %767 = vmatprep.subr.bf16.mxu0 0
    %768 = vmatpush1.bf16.msra.mxu0 0
    %769 = vmatprep.subr.bf16.mxu0 0
    %770 = vmatpush1.bf16.msra.mxu0 0
    %771 = vmatprep.subr.bf16.mxu0 %v632
    %772 = vmatpush1.bf16.msra.mxu0 %v629
    %773 = vmatprep.subr.bf16.mxu0 0
    %774 = vmatpush2.bf16.msra.mxu0 0
    %775 = vmatprep.subr.bf16.mxu0 0
    %776 = vmatpush2.bf16.msra.mxu0 0
    %777 = vmatprep.subr.bf16.mxu0 0
    %778 = vmatpush2.bf16.msra.mxu0 0
    %779 = vmatprep.subr.bf16.mxu0 0
    %780 = vmatpush2.bf16.msra.mxu0 0
    %781 = vmatprep.subr.bf16.mxu0 0
    %782 = vmatpush2.bf16.msra.mxu0 0
    %783 = vmatprep.subr.bf16.mxu0 0
    %784 = vmatpush2.bf16.msra.mxu0 0
    %785 = vmatprep.subr.bf16.mxu0 0
    %786 = vmatpush2.bf16.msra.mxu0 0
    %787 = vmatprep.subr.bf16.mxu0 0
    %788 = vmatpush2.bf16.msra.mxu0 0
    %789 = vmatprep.mubr.bf16.mxu0 0
    %790 = vmatmul.mubr.bf16.gmra.mxu0 %v608
    %v791 = vpop.f32.mrf.mxu0
    %v792 = vadd.f32 %v551, %v791
    %v793 = vpop.f32.mrf.mxu0
    %v794 = vadd.f32 %v553, %v793
    %v795 = vpop.f32.mrf.mxu0
    %v796 = vpop.f32.mrf.mxu0
    %797 = vdwg.mxu0
    %v798 = vld [vmem:[%s1] sm:$0x22]
    %v799 = vld [vmem:[%s1 + $0x8] sm:$0x22]
    %v800 = vld [vmem:[%s1 + $0x10] sm:$0x22]
    %v801 = vld [vmem:[%s1 + $0x18] sm:$0x22]
    %v806 = vunpack.c.l.b16 %v798
    %v807 = vunpack.c.h.b16 %v798
    %v808 = vunpack.c.l.b16 %v799
    %v809 = vunpack.c.h.b16 %v799
    %v810 = vunpack.c.l.b16 %v800
    %v811 = vunpack.c.h.b16 %v800
    %v812 = vunpack.c.l.b16 %v801
    %v813 = vunpack.c.h.b16 %v801
    %v814 = vpack.c.b16 %v806, %v806
    %v815 = vpack.c.b16 %v807, %v807
    %v816 = vpack.c.b16 %v808, %v808
    %v817 = vpack.c.b16 %v809, %v809
    %v818 = vpack.c.b16 %v810, %v810
    %v819 = vpack.c.b16 %v811, %v811
    %v820 = vpack.c.b16 %v812, %v812
    %v821 = vpack.c.b16 %v813, %v813
    %v823 = vpack.i.b16 %v814, %v814
    %v825 = vlaneseq
    %v826 = vshrl.u32 %v825, 7
    %v827 = vsub.s32 1, %v826
    %v828 = vrot.slane %v823, %v827
    %v830 = vpack.i.b16 %v815, %v815
    %v832 = vlaneseq
    %v833 = vshrl.u32 %v832, 7
    %v834 = vsub.s32 1, %v833
    %v835 = vrot.slane %v830, %v834
    %v837 = vpack.i.b16 %v816, %v816
    %v839 = vlaneseq
    %v840 = vshrl.u32 %v839, 7
    %v841 = vsub.s32 1, %v840
    %v842 = vrot.slane %v837, %v841
    %v844 = vpack.i.b16 %v817, %v817
    %v846 = vlaneseq
    %v847 = vshrl.u32 %v846, 7
    %v848 = vsub.s32 1, %v847
    %v849 = vrot.slane %v844, %v848
    %v851 = vpack.i.b16 %v818, %v818
    %v853 = vlaneseq
    %v854 = vshrl.u32 %v853, 7
    %v855 = vsub.s32 1, %v854
    %v856 = vrot.slane %v851, %v855
    %v858 = vpack.i.b16 %v819, %v819
    %v860 = vlaneseq
    %v861 = vshrl.u32 %v860, 7
    %v862 = vsub.s32 1, %v861
    %v863 = vrot.slane %v858, %v862
    %v865 = vpack.i.b16 %v820, %v820
    %v867 = vlaneseq
    %v868 = vshrl.u32 %v867, 7
    %v869 = vsub.s32 1, %v868
    %v870 = vrot.slane %v865, %v869
    %v872 = vpack.i.b16 %v821, %v821
    %v874 = vlaneseq
    %v875 = vshrl.u32 %v874, 7
    %v876 = vsub.s32 1, %v875
    %v877 = vrot.slane %v872, %v876
    %v886 = vunpack.c.l.b16 %v828
    %v887 = vunpack.c.l.b16 %v835
    %v888 = vunpack.c.l.b16 %v842
    %v889 = vunpack.c.l.b16 %v849
    %v890 = vunpack.c.l.b16 %v856
    %v891 = vunpack.c.l.b16 %v863
    %v892 = vunpack.c.l.b16 %v870
    %v893 = vunpack.c.l.b16 %v877
    %v894 = vpack.c.b16 %v887, %v886
    %v895 = vpack.c.b16 %v889, %v888
    %v896 = vpack.c.b16 %v891, %v890
    %v897 = vpack.c.b16 %v893, %v892
    %898 = vrot.lane.b32.xlu0 %v894, 113
    %v899 = vpop.permute.xlu0 %898
    %900 = vrot.lane.b32.xlu0 %v895, 113
    %v901 = vpop.permute.xlu0 %900
    %902 = vrot.lane.b32.xlu0 %v896, 113
    %v903 = vpop.permute.xlu0 %902
    %904 = vrot.lane.b32.xlu0 %v897, 113
    %v905 = vpop.permute.xlu0 %904
    %v906 = vrot.slane %v899, 4
    %v907 = vrot.slane %v901, 4
    %v908 = vrot.slane %v903, 4
    %v909 = vrot.slane %v905, 4
    %vm910 = vcmask 924672
    %v911 = vsel %vm910, %v906, %v899
    %v912 = vsel %vm188, %v906, %v907
    %v913 = vsel %vm910, %v912, %v901
    %v914 = vsel %vm188, %v907, %v908
    %v915 = vsel %vm910, %v914, %v903
    %v916 = vsel %vm188, %v908, %v909
    %v917 = vsel %vm910, %v916, %v905
    %v923 = vmul.bf16 %v69, %v911
    %v924 = vmul.bf16 %v70, %v913
    %v925 = vmul.bf16 %v71, %v915
    %v926 = vmul.bf16 %v72, %v917
    %v927 = vmul.bf16 %v73, %v909
    %s928 = scalar_lea.vmem %s4, 8
    %v929 = vld [vmem:[%s928] sm:$0xf]
    %v935 = vunpack.c.l.b16 %v923
    %v936 = vunpack.c.h.b16 %v923
    %v937 = vunpack.c.l.b16 %v924
    %v938 = vunpack.c.h.b16 %v924
    %v939 = vunpack.c.l.b16 %v925
    %v940 = vunpack.c.h.b16 %v925
    %v941 = vunpack.c.l.b16 %v926
    %v942 = vunpack.c.h.b16 %v926
    %v943 = vunpack.c.l.b16 %v927
    %v944 = vpack.c.b16 %v935, %v935
    %v945 = vpack.c.b16 %v936, %v936
    %v946 = vpack.c.b16 %v937, %v937
    %v947 = vpack.c.b16 %v938, %v938
    %v948 = vpack.c.b16 %v939, %v939
    %v949 = vpack.c.b16 %v940, %v940
    %v950 = vpack.c.b16 %v941, %v941
    %v951 = vpack.c.b16 %v942, %v942
    %v952 = vpack.c.b16 %v943, %v943
    %953 = vrot.lane.b32.xlu0 %v944, 15
    %v954 = vpop.permute.xlu0 %953
    %955 = vrot.lane.b32.xlu0 %v945, 15
    %v956 = vpop.permute.xlu0 %955
    %957 = vrot.lane.b32.xlu0 %v946, 15
    %v958 = vpop.permute.xlu0 %957
    %959 = vrot.lane.b32.xlu0 %v947, 15
    %v960 = vpop.permute.xlu0 %959
    %961 = vrot.lane.b32.xlu0 %v948, 15
    %v962 = vpop.permute.xlu0 %961
    %963 = vrot.lane.b32.xlu0 %v949, 15
    %v964 = vpop.permute.xlu0 %963
    %965 = vrot.lane.b32.xlu0 %v950, 15
    %v966 = vpop.permute.xlu0 %965
    %967 = vrot.lane.b32.xlu0 %v951, 15
    %v968 = vpop.permute.xlu0 %967
    %969 = vrot.lane.b32.xlu0 %v952, 15
    %v970 = vpop.permute.xlu0 %969
    %vm971 = vcmask 121856
    %v972 = vsel %vm971, %v954, %v956
    %v973 = vsel %vm971, %v956, %v958
    %v974 = vsel %vm971, %v958, %v960
    %v975 = vsel %vm971, %v960, %v962
    %v976 = vsel %vm971, %v962, %v964
    %v977 = vsel %vm971, %v964, %v966
    %v978 = vsel %vm971, %v966, %v968
    %v979 = vsel %vm971, %v968, %v970
    %v981 = vsel %vm364, %v929, 0
    %v984 = vsel %vm368, %v972, 0
    %v987 = vsel %vm368, %v973, 0
    %v990 = vsel %vm368, %v974, 0
    %v993 = vsel %vm368, %v975, 0
    %v996 = vsel %vm368, %v976, 0
    %v999 = vsel %vm368, %v977, 0
    %v1002 = vsel %vm368, %v978, 0
    %v1005 = vsel %vm368, %v979, 0
    %1007 = vmatprep.subr.bf16.mxu0 0
    %1008 = vmatpush1.bf16.msra.mxu0 0
    %1009 = vmatprep.subr.bf16.mxu0 0
    %1010 = vmatpush1.bf16.msra.mxu0 0
    %1011 = vmatprep.subr.bf16.mxu0 0
    %1012 = vmatpush1.bf16.msra.mxu0 0
    %1013 = vmatprep.subr.bf16.mxu0 0
    %1014 = vmatpush1.bf16.msra.mxu0 0
    %1015 = vmatprep.subr.bf16.mxu0 0
    %1016 = vmatpush1.bf16.msra.mxu0 0
    %1017 = vmatprep.subr.bf16.mxu0 0
    %1018 = vmatpush1.bf16.msra.mxu0 0
    %1019 = vmatprep.subr.bf16.mxu0 0
    %1020 = vmatpush1.bf16.msra.mxu0 0
    %1021 = vmatprep.subr.bf16.mxu0 %v987
    %1022 = vmatpush1.bf16.msra.mxu0 %v984
    %1023 = vmatprep.subr.bf16.mxu0 0
    %1024 = vmatpush2.bf16.msra.mxu0 0
    %1025 = vmatprep.subr.bf16.mxu0 0
    %1026 = vmatpush2.bf16.msra.mxu0 0
    %1027 = vmatprep.subr.bf16.mxu0 0
    %1028 = vmatpush2.bf16.msra.mxu0 0
    %1029 = vmatprep.subr.bf16.mxu0 0
    %1030 = vmatpush2.bf16.msra.mxu0 0
    %1031 = vmatprep.subr.bf16.mxu0 0
    %1032 = vmatpush2.bf16.msra.mxu0 0
    %1033 = vmatprep.subr.bf16.mxu0 0
    %1034 = vmatpush2.bf16.msra.mxu0 0
    %1035 = vmatprep.subr.bf16.mxu0 0
    %1036 = vmatpush2.bf16.msra.mxu0 0
    %1037 = vmatprep.subr.bf16.mxu0 0
    %1038 = vmatpush2.bf16.msra.mxu0 0
    %1039 = vmatprep.mubr.bf16.mxu0 0
    %1040 = vmatmul.mubr.bf16.gmra.mxu0 %v981
    %v1041 = vpop.f32.mrf.mxu0
    %v1042 = vadd.f32 0.0, %v1041
    %v1043 = vpop.f32.mrf.mxu0
    %v1044 = vadd.f32 0.0, %v1043
    %v1045 = vpop.f32.mrf.mxu0
    %v1046 = vpop.f32.mrf.mxu0
    %1047 = vdwg.mxu0
    %1048 = vmatprep.subr.bf16.mxu0 0
    %1049 = vmatpush1.bf16.msra.mxu0 0
    %1050 = vmatprep.subr.bf16.mxu0 0
    %1051 = vmatpush1.bf16.msra.mxu0 0
    %1052 = vmatprep.subr.bf16.mxu0 0
    %1053 = vmatpush1.bf16.msra.mxu0 0
    %1054 = vmatprep.subr.bf16.mxu0 0
    %1055 = vmatpush1.bf16.msra.mxu0 0
    %1056 = vmatprep.subr.bf16.mxu0 0
    %1057 = vmatpush1.bf16.msra.mxu0 0
    %1058 = vmatprep.subr.bf16.mxu0 0
    %1059 = vmatpush1.bf16.msra.mxu0 0
    %1060 = vmatprep.subr.bf16.mxu0 0
    %1061 = vmatpush1.bf16.msra.mxu0 0
    %1062 = vmatprep.subr.bf16.mxu0 %v993
    %1063 = vmatpush1.bf16.msra.mxu0 %v990
    %1064 = vmatprep.subr.bf16.mxu0 0
    %1065 = vmatpush2.bf16.msra.mxu0 0
    %1066 = vmatprep.subr.bf16.mxu0 0
    %1067 = vmatpush2.bf16.msra.mxu0 0
    %1068 = vmatprep.subr.bf16.mxu0 0
    %1069 = vmatpush2.bf16.msra.mxu0 0
    %1070 = vmatprep.subr.bf16.mxu0 0
    %1071 = vmatpush2.bf16.msra.mxu0 0
    %1072 = vmatprep.subr.bf16.mxu0 0
    %1073 = vmatpush2.bf16.msra.mxu0 0
    %1074 = vmatprep.subr.bf16.mxu0 0
    %1075 = vmatpush2.bf16.msra.mxu0 0
    %1076 = vmatprep.subr.bf16.mxu0 0
    %1077 = vmatpush2.bf16.msra.mxu0 0
    %1078 = vmatprep.subr.bf16.mxu0 0
    %1079 = vmatpush2.bf16.msra.mxu0 0
    %1080 = vmatprep.mubr.bf16.mxu0 0
    %1081 = vmatmul.mubr.bf16.gmra.mxu0 %v981
    %v1082 = vpop.f32.mrf.mxu0
    %v1083 = vadd.f32 0.0, %v1082
    %v1084 = vpop.f32.mrf.mxu0
    %v1085 = vadd.f32 0.0, %v1084
    %v1086 = vpop.f32.mrf.mxu0
    %v1087 = vpop.f32.mrf.mxu0
    %1088 = vdwg.mxu0
    %1089 = vmatprep.subr.bf16.mxu0 0
    %1090 = vmatpush1.bf16.msra.mxu0 0
    %1091 = vmatprep.subr.bf16.mxu0 0
    %1092 = vmatpush1.bf16.msra.mxu0 0
    %1093 = vmatprep.subr.bf16.mxu0 0
    %1094 = vmatpush1.bf16.msra.mxu0 0
    %1095 = vmatprep.subr.bf16.mxu0 0
    %1096 = vmatpush1.bf16.msra.mxu0 0
    %1097 = vmatprep.subr.bf16.mxu0 0
    %1098 = vmatpush1.bf16.msra.mxu0 0
    %1099 = vmatprep.subr.bf16.mxu0 0
    %1100 = vmatpush1.bf16.msra.mxu0 0
    %1101 = vmatprep.subr.bf16.mxu0 0
    %1102 = vmatpush1.bf16.msra.mxu0 0
    %1103 = vmatprep.subr.bf16.mxu0 %v999
    %1104 = vmatpush1.bf16.msra.mxu0 %v996
    %1105 = vmatprep.subr.bf16.mxu0 0
    %1106 = vmatpush2.bf16.msra.mxu0 0
    %1107 = vmatprep.subr.bf16.mxu0 0
    %1108 = vmatpush2.bf16.msra.mxu0 0
    %1109 = vmatprep.subr.bf16.mxu0 0
    %1110 = vmatpush2.bf16.msra.mxu0 0
    %1111 = vmatprep.subr.bf16.mxu0 0
    %1112 = vmatpush2.bf16.msra.mxu0 0
    %1113 = vmatprep.subr.bf16.mxu0 0
    %1114 = vmatpush2.bf16.msra.mxu0 0
    %1115 = vmatprep.subr.bf16.mxu0 0
    %1116 = vmatpush2.bf16.msra.mxu0 0
    %1117 = vmatprep.subr.bf16.mxu0 0
    %1118 = vmatpush2.bf16.msra.mxu0 0
    %1119 = vmatprep.subr.bf16.mxu0 0
    %1120 = vmatpush2.bf16.msra.mxu0 0
    %1121 = vmatprep.mubr.bf16.mxu0 0
    %1122 = vmatmul.mubr.bf16.gmra.mxu0 %v981
    %v1123 = vpop.f32.mrf.mxu0
    %v1124 = vadd.f32 0.0, %v1123
    %v1125 = vpop.f32.mrf.mxu0
    %v1126 = vadd.f32 0.0, %v1125
    %v1127 = vpop.f32.mrf.mxu0
    %v1128 = vpop.f32.mrf.mxu0
    %1129 = vdwg.mxu0
    %1130 = vmatprep.subr.bf16.mxu0 0
    %1131 = vmatpush1.bf16.msra.mxu0 0
    %1132 = vmatprep.subr.bf16.mxu0 0
    %1133 = vmatpush1.bf16.msra.mxu0 0
    %1134 = vmatprep.subr.bf16.mxu0 0
    %1135 = vmatpush1.bf16.msra.mxu0 0
    %1136 = vmatprep.subr.bf16.mxu0 0
    %1137 = vmatpush1.bf16.msra.mxu0 0
    %1138 = vmatprep.subr.bf16.mxu0 0
    %1139 = vmatpush1.bf16.msra.mxu0 0
    %1140 = vmatprep.subr.bf16.mxu0 0
    %1141 = vmatpush1.bf16.msra.mxu0 0
    %1142 = vmatprep.subr.bf16.mxu0 0
    %1143 = vmatpush1.bf16.msra.mxu0 0
    %1144 = vmatprep.subr.bf16.mxu0 %v1005
    %1145 = vmatpush1.bf16.msra.mxu0 %v1002
    %1146 = vmatprep.subr.bf16.mxu0 0
    %1147 = vmatpush2.bf16.msra.mxu0 0
    %1148 = vmatprep.subr.bf16.mxu0 0
    %1149 = vmatpush2.bf16.msra.mxu0 0
    %1150 = vmatprep.subr.bf16.mxu0 0
    %1151 = vmatpush2.bf16.msra.mxu0 0
    %1152 = vmatprep.subr.bf16.mxu0 0
    %1153 = vmatpush2.bf16.msra.mxu0 0
    %1154 = vmatprep.subr.bf16.mxu0 0
    %1155 = vmatpush2.bf16.msra.mxu0 0
    %1156 = vmatprep.subr.bf16.mxu0 0
    %1157 = vmatpush2.bf16.msra.mxu0 0
    %1158 = vmatprep.subr.bf16.mxu0 0
    %1159 = vmatpush2.bf16.msra.mxu0 0
    %1160 = vmatprep.subr.bf16.mxu0 0
    %1161 = vmatpush2.bf16.msra.mxu0 0
    %1162 = vmatprep.mubr.bf16.mxu0 0
    %1163 = vmatmul.mubr.bf16.gmra.mxu0 %v981
    %v1164 = vpop.f32.mrf.mxu0
    %v1165 = vadd.f32 0.0, %v1164
    %v1166 = vpop.f32.mrf.mxu0
    %v1167 = vadd.f32 0.0, %v1166
    %v1168 = vpop.f32.mrf.mxu0
    %v1169 = vpop.f32.mrf.mxu0
    %1170 = vdwg.mxu0
    %v1171 = vadd.f32 %v669, %v1042
    %v1172 = vadd.f32 %v671, %v1044
    %v1173 = vadd.f32 %v710, %v1083
    %v1174 = vadd.f32 %v712, %v1085
    %v1175 = vadd.f32 %v751, %v1124
    %v1176 = vadd.f32 %v753, %v1126
    %v1177 = vadd.f32 %v792, %v1165
    %v1178 = vadd.f32 %v794, %v1167
    %v1179 = vshrl.u32 %v814, 16
    %v1180 = vpack.i.b16 %v1179, %v1179
    %v1182 = vlaneseq
    %v1183 = vshrl.u32 %v1182, 7
    %v1184 = vsub.s32 1, %v1183
    %v1185 = vrot.slane %v1180, %v1184
    %v1186 = vshrl.u32 %v815, 16
    %v1187 = vpack.i.b16 %v1186, %v1186
    %v1189 = vlaneseq
    %v1190 = vshrl.u32 %v1189, 7
    %v1191 = vsub.s32 1, %v1190
    %v1192 = vrot.slane %v1187, %v1191
    %v1193 = vshrl.u32 %v816, 16
    %v1194 = vpack.i.b16 %v1193, %v1193
    %v1196 = vlaneseq
    %v1197 = vshrl.u32 %v1196, 7
    %v1198 = vsub.s32 1, %v1197
    %v1199 = vrot.slane %v1194, %v1198
    %v1200 = vshrl.u32 %v817, 16
    %v1201 = vpack.i.b16 %v1200, %v1200
    %v1203 = vlaneseq
    %v1204 = vshrl.u32 %v1203, 7
    %v1205 = vsub.s32 1, %v1204
    %v1206 = vrot.slane %v1201, %v1205
    %v1207 = vshrl.u32 %v818, 16
    %v1208 = vpack.i.b16 %v1207, %v1207
    %v1210 = vlaneseq
    %v1211 = vshrl.u32 %v1210, 7
    %v1212 = vsub.s32 1, %v1211
    %v1213 = vrot.slane %v1208, %v1212
    %v1214 = vshrl.u32 %v819, 16
    %v1215 = vpack.i.b16 %v1214, %v1214
    %v1217 = vlaneseq
    %v1218 = vshrl.u32 %v1217, 7
    %v1219 = vsub.s32 1, %v1218
    %v1220 = vrot.slane %v1215, %v1219
    %v1221 = vshrl.u32 %v820, 16
    %v1222 = vpack.i.b16 %v1221, %v1221
    %v1224 = vlaneseq
    %v1225 = vshrl.u32 %v1224, 7
    %v1226 = vsub.s32 1, %v1225
    %v1227 = vrot.slane %v1222, %v1226
    %v1228 = vshrl.u32 %v821, 16
    %v1229 = vpack.i.b16 %v1228, %v1228
    %v1231 = vlaneseq
    %v1232 = vshrl.u32 %v1231, 7
    %v1233 = vsub.s32 1, %v1232
    %v1234 = vrot.slane %v1229, %v1233
    %v1243 = vunpack.c.l.b16 %v1185
    %v1244 = vunpack.c.l.b16 %v1192
    %v1245 = vunpack.c.l.b16 %v1199
    %v1246 = vunpack.c.l.b16 %v1206
    %v1247 = vunpack.c.l.b16 %v1213
    %v1248 = vunpack.c.l.b16 %v1220
    %v1249 = vunpack.c.l.b16 %v1227
    %v1250 = vunpack.c.l.b16 %v1234
    %v1251 = vpack.c.b16 %v1244, %v1243
    %v1252 = vpack.c.b16 %v1246, %v1245
    %v1253 = vpack.c.b16 %v1248, %v1247
    %v1254 = vpack.c.b16 %v1250, %v1249
    %1255 = vrot.lane.b32.xlu0 %v1251, 127
    %v1256 = vpop.permute.xlu0 %1255
    %1257 = vrot.lane.b32.xlu0 %v1252, 127
    %v1258 = vpop.permute.xlu0 %1257
    %1259 = vrot.lane.b32.xlu0 %v1253, 127
    %v1260 = vpop.permute.xlu0 %1259
    %1261 = vrot.lane.b32.xlu0 %v1254, 127
    %v1262 = vpop.permute.xlu0 %1261
    %v1263 = vrot.slane %v1256, 4
    %v1264 = vrot.slane %v1258, 4
    %v1265 = vrot.slane %v1260, 4
    %v1266 = vrot.slane %v1262, 4
    %vm1267 = vcmask 1039360
    %v1268 = vsel %vm1267, %v1263, %v1256
    %v1269 = vsel %vm188, %v1263, %v1264
    %v1270 = vsel %vm1267, %v1269, %v1258
    %v1271 = vsel %vm188, %v1264, %v1265
    %v1272 = vsel %vm1267, %v1271, %v1260
    %v1273 = vsel %vm188, %v1265, %v1266
    %v1274 = vsel %vm1267, %v1273, %v1262
    %v1280 = vmul.bf16 %v69, %v1268
    %v1281 = vmul.bf16 %v70, %v1270
    %v1282 = vmul.bf16 %v71, %v1272
    %v1283 = vmul.bf16 %v72, %v1274
    %v1284 = vmul.bf16 %v73, %v1266
    %s1285 = scalar_lea.vmem %s4, 12
    %v1286 = vld [vmem:[%s1285] sm:$0xf]
    %v1292 = vunpack.c.l.b16 %v1280
    %v1293 = vunpack.c.h.b16 %v1280
    %v1294 = vunpack.c.l.b16 %v1281
    %v1295 = vunpack.c.h.b16 %v1281
    %v1296 = vunpack.c.l.b16 %v1282
    %v1297 = vunpack.c.h.b16 %v1282
    %v1298 = vunpack.c.l.b16 %v1283
    %v1299 = vunpack.c.h.b16 %v1283
    %v1300 = vunpack.c.l.b16 %v1284
    %v1301 = vpack.c.b16 %v1292, %v1292
    %v1302 = vpack.c.b16 %v1293, %v1293
    %v1303 = vpack.c.b16 %v1294, %v1294
    %v1304 = vpack.c.b16 %v1295, %v1295
    %v1305 = vpack.c.b16 %v1296, %v1296
    %v1306 = vpack.c.b16 %v1297, %v1297
    %v1307 = vpack.c.b16 %v1298, %v1298
    %v1308 = vpack.c.b16 %v1299, %v1299
    %v1309 = vpack.c.b16 %v1300, %v1300
    %1310 = vrot.lane.b32.xlu0 %v1301, 1
    %v1311 = vpop.permute.xlu0 %1310
    %1312 = vrot.lane.b32.xlu0 %v1302, 1
    %v1313 = vpop.permute.xlu0 %1312
    %1314 = vrot.lane.b32.xlu0 %v1303, 1
    %v1315 = vpop.permute.xlu0 %1314
    %1316 = vrot.lane.b32.xlu0 %v1304, 1
    %v1317 = vpop.permute.xlu0 %1316
    %1318 = vrot.lane.b32.xlu0 %v1305, 1
    %v1319 = vpop.permute.xlu0 %1318
    %1320 = vrot.lane.b32.xlu0 %v1306, 1
    %v1321 = vpop.permute.xlu0 %1320
    %1322 = vrot.lane.b32.xlu0 %v1307, 1
    %v1323 = vpop.permute.xlu0 %1322
    %1324 = vrot.lane.b32.xlu0 %v1308, 1
    %v1325 = vpop.permute.xlu0 %1324
    %1326 = vrot.lane.b32.xlu0 %v1309, 1
    %v1327 = vpop.permute.xlu0 %1326
    %vm1328 = vcmask 7168
    %v1329 = vsel %vm1328, %v1311, %v1313
    %v1330 = vsel %vm1328, %v1313, %v1315
    %v1331 = vsel %vm1328, %v1315, %v1317
    %v1332 = vsel %vm1328, %v1317, %v1319
    %v1333 = vsel %vm1328, %v1319, %v1321
    %v1334 = vsel %vm1328, %v1321, %v1323
    %v1335 = vsel %vm1328, %v1323, %v1325
    %v1336 = vsel %vm1328, %v1325, %v1327
    %v1338 = vsel %vm364, %v1286, 0
    %v1341 = vsel %vm368, %v1329, 0
    %v1344 = vsel %vm368, %v1330, 0
    %v1347 = vsel %vm368, %v1331, 0
    %v1350 = vsel %vm368, %v1332, 0
    %v1353 = vsel %vm368, %v1333, 0
    %v1356 = vsel %vm368, %v1334, 0
    %v1359 = vsel %vm368, %v1335, 0
    %v1362 = vsel %vm368, %v1336, 0
    %1364 = vmatprep.subr.bf16.mxu0 0
    %1365 = vmatpush1.bf16.msra.mxu0 0
    %1366 = vmatprep.subr.bf16.mxu0 0
    %1367 = vmatpush1.bf16.msra.mxu0 0
    %1368 = vmatprep.subr.bf16.mxu0 0
    %1369 = vmatpush1.bf16.msra.mxu0 0
    %1370 = vmatprep.subr.bf16.mxu0 0
    %1371 = vmatpush1.bf16.msra.mxu0 0
    %1372 = vmatprep.subr.bf16.mxu0 0
    %1373 = vmatpush1.bf16.msra.mxu0 0
    %1374 = vmatprep.subr.bf16.mxu0 0
    %1375 = vmatpush1.bf16.msra.mxu0 0
    %1376 = vmatprep.subr.bf16.mxu0 0
    %1377 = vmatpush1.bf16.msra.mxu0 0
    %1378 = vmatprep.subr.bf16.mxu0 %v1344
    %1379 = vmatpush1.bf16.msra.mxu0 %v1341
    %1380 = vmatprep.subr.bf16.mxu0 0
    %1381 = vmatpush2.bf16.msra.mxu0 0
    %1382 = vmatprep.subr.bf16.mxu0 0
    %1383 = vmatpush2.bf16.msra.mxu0 0
    %1384 = vmatprep.subr.bf16.mxu0 0
    %1385 = vmatpush2.bf16.msra.mxu0 0
    %1386 = vmatprep.subr.bf16.mxu0 0
    %1387 = vmatpush2.bf16.msra.mxu0 0
    %1388 = vmatprep.subr.bf16.mxu0 0
    %1389 = vmatpush2.bf16.msra.mxu0 0
    %1390 = vmatprep.subr.bf16.mxu0 0
    %1391 = vmatpush2.bf16.msra.mxu0 0
    %1392 = vmatprep.subr.bf16.mxu0 0
    %1393 = vmatpush2.bf16.msra.mxu0 0
    %1394 = vmatprep.subr.bf16.mxu0 0
    %1395 = vmatpush2.bf16.msra.mxu0 0
    %1396 = vmatprep.mubr.bf16.mxu0 0
    %1397 = vmatmul.mubr.bf16.gmra.mxu0 %v1338
    %v1398 = vpop.f32.mrf.mxu0
    %v1399 = vadd.f32 0.0, %v1398
    %v1400 = vpop.f32.mrf.mxu0
    %v1401 = vadd.f32 0.0, %v1400
    %v1402 = vpop.f32.mrf.mxu0
    %v1403 = vpop.f32.mrf.mxu0
    %1404 = vdwg.mxu0
    %1405 = vmatprep.subr.bf16.mxu0 0
    %1406 = vmatpush1.bf16.msra.mxu0 0
    %1407 = vmatprep.subr.bf16.mxu0 0
    %1408 = vmatpush1.bf16.msra.mxu0 0
    %1409 = vmatprep.subr.bf16.mxu0 0
    %1410 = vmatpush1.bf16.msra.mxu0 0
    %1411 = vmatprep.subr.bf16.mxu0 0
    %1412 = vmatpush1.bf16.msra.mxu0 0
    %1413 = vmatprep.subr.bf16.mxu0 0
    %1414 = vmatpush1.bf16.msra.mxu0 0
    %1415 = vmatprep.subr.bf16.mxu0 0
    %1416 = vmatpush1.bf16.msra.mxu0 0
    %1417 = vmatprep.subr.bf16.mxu0 0
    %1418 = vmatpush1.bf16.msra.mxu0 0
    %1419 = vmatprep.subr.bf16.mxu0 %v1350
    %1420 = vmatpush1.bf16.msra.mxu0 %v1347
    %1421 = vmatprep.subr.bf16.mxu0 0
    %1422 = vmatpush2.bf16.msra.mxu0 0
    %1423 = vmatprep.subr.bf16.mxu0 0
    %1424 = vmatpush2.bf16.msra.mxu0 0
    %1425 = vmatprep.subr.bf16.mxu0 0
    %1426 = vmatpush2.bf16.msra.mxu0 0
    %1427 = vmatprep.subr.bf16.mxu0 0
    %1428 = vmatpush2.bf16.msra.mxu0 0
    %1429 = vmatprep.subr.bf16.mxu0 0
    %1430 = vmatpush2.bf16.msra.mxu0 0
    %1431 = vmatprep.subr.bf16.mxu0 0
    %1432 = vmatpush2.bf16.msra.mxu0 0
    %1433 = vmatprep.subr.bf16.mxu0 0
    %1434 = vmatpush2.bf16.msra.mxu0 0
    %1435 = vmatprep.subr.bf16.mxu0 0
    %1436 = vmatpush2.bf16.msra.mxu0 0
    %1437 = vmatprep.mubr.bf16.mxu0 0
    %1438 = vmatmul.mubr.bf16.gmra.mxu0 %v1338
    %v1439 = vpop.f32.mrf.mxu0
    %v1440 = vadd.f32 0.0, %v1439
    %v1441 = vpop.f32.mrf.mxu0
    %v1442 = vadd.f32 0.0, %v1441
    %v1443 = vpop.f32.mrf.mxu0
    %v1444 = vpop.f32.mrf.mxu0
    %1445 = vdwg.mxu0
    %1446 = vmatprep.subr.bf16.mxu0 0
    %1447 = vmatpush1.bf16.msra.mxu0 0
    %1448 = vmatprep.subr.bf16.mxu0 0
    %1449 = vmatpush1.bf16.msra.mxu0 0
    %1450 = vmatprep.subr.bf16.mxu0 0
    %1451 = vmatpush1.bf16.msra.mxu0 0
    %1452 = vmatprep.subr.bf16.mxu0 0
    %1453 = vmatpush1.bf16.msra.mxu0 0
    %1454 = vmatprep.subr.bf16.mxu0 0
    %1455 = vmatpush1.bf16.msra.mxu0 0
    %1456 = vmatprep.subr.bf16.mxu0 0
    %1457 = vmatpush1.bf16.msra.mxu0 0
    %1458 = vmatprep.subr.bf16.mxu0 0
    %1459 = vmatpush1.bf16.msra.mxu0 0
    %1460 = vmatprep.subr.bf16.mxu0 %v1356
    %1461 = vmatpush1.bf16.msra.mxu0 %v1353
    %1462 = vmatprep.subr.bf16.mxu0 0
    %1463 = vmatpush2.bf16.msra.mxu0 0
    %1464 = vmatprep.subr.bf16.mxu0 0
    %1465 = vmatpush2.bf16.msra.mxu0 0
    %1466 = vmatprep.subr.bf16.mxu0 0
    %1467 = vmatpush2.bf16.msra.mxu0 0
    %1468 = vmatprep.subr.bf16.mxu0 0
    %1469 = vmatpush2.bf16.msra.mxu0 0
    %1470 = vmatprep.subr.bf16.mxu0 0
    %1471 = vmatpush2.bf16.msra.mxu0 0
    %1472 = vmatprep.subr.bf16.mxu0 0
    %1473 = vmatpush2.bf16.msra.mxu0 0
    %1474 = vmatprep.subr.bf16.mxu0 0
    %1475 = vmatpush2.bf16.msra.mxu0 0
    %1476 = vmatprep.subr.bf16.mxu0 0
    %1477 = vmatpush2.bf16.msra.mxu0 0
    %1478 = vmatprep.mubr.bf16.mxu0 0
    %1479 = vmatmul.mubr.bf16.gmra.mxu0 %v1338
    %v1480 = vpop.f32.mrf.mxu0
    %v1481 = vadd.f32 0.0, %v1480
    %v1482 = vpop.f32.mrf.mxu0
    %v1483 = vadd.f32 0.0, %v1482
    %v1484 = vpop.f32.mrf.mxu0
    %v1485 = vpop.f32.mrf.mxu0
    %1486 = vdwg.mxu0
    %1487 = vmatprep.subr.bf16.mxu0 0
    %1488 = vmatpush1.bf16.msra.mxu0 0
    %1489 = vmatprep.subr.bf16.mxu0 0
    %1490 = vmatpush1.bf16.msra.mxu0 0
    %1491 = vmatprep.subr.bf16.mxu0 0
    %1492 = vmatpush1.bf16.msra.mxu0 0
    %1493 = vmatprep.subr.bf16.mxu0 0
    %1494 = vmatpush1.bf16.msra.mxu0 0
    %1495 = vmatprep.subr.bf16.mxu0 0
    %1496 = vmatpush1.bf16.msra.mxu0 0
    %1497 = vmatprep.subr.bf16.mxu0 0
    %1498 = vmatpush1.bf16.msra.mxu0 0
    %1499 = vmatprep.subr.bf16.mxu0 0
    %1500 = vmatpush1.bf16.msra.mxu0 0
    %1501 = vmatprep.subr.bf16.mxu0 %v1362
    %1502 = vmatpush1.bf16.msra.mxu0 %v1359
    %1503 = vmatprep.subr.bf16.mxu0 0
    %1504 = vmatpush2.bf16.msra.mxu0 0
    %1505 = vmatprep.subr.bf16.mxu0 0
    %1506 = vmatpush2.bf16.msra.mxu0 0
    %1507 = vmatprep.subr.bf16.mxu0 0
    %1508 = vmatpush2.bf16.msra.mxu0 0
    %1509 = vmatprep.subr.bf16.mxu0 0
    %1510 = vmatpush2.bf16.msra.mxu0 0
    %1511 = vmatprep.subr.bf16.mxu0 0
    %1512 = vmatpush2.bf16.msra.mxu0 0
    %1513 = vmatprep.subr.bf16.mxu0 0
    %1514 = vmatpush2.bf16.msra.mxu0 0
    %1515 = vmatprep.subr.bf16.mxu0 0
    %1516 = vmatpush2.bf16.msra.mxu0 0
    %1517 = vmatprep.subr.bf16.mxu0 0
    %1518 = vmatpush2.bf16.msra.mxu0 0
    %1519 = vmatprep.mubr.bf16.mxu0 0
    %1520 = vmatmul.mubr.bf16.gmra.mxu0 %v1338
    %v1521 = vpop.f32.mrf.mxu0
    %v1522 = vadd.f32 0.0, %v1521
    %v1523 = vpop.f32.mrf.mxu0
    %v1524 = vadd.f32 0.0, %v1523
    %v1525 = vpop.f32.mrf.mxu0
    %v1526 = vpop.f32.mrf.mxu0
    %1527 = vdwg.mxu0
    %v1528 = vadd.f32 %v1171, %v1399
    %v1529 = vadd.f32 %v1172, %v1401
    %v1530 = vadd.f32 %v1173, %v1440
    %v1531 = vadd.f32 %v1174, %v1442
    %v1532 = vadd.f32 %v1175, %v1481
    %v1533 = vadd.f32 %v1176, %v1483
    %v1534 = vadd.f32 %v1177, %v1522
    %v1535 = vadd.f32 %v1178, %v1524
    %v1536 = vld [vmem:[%s0 + $0x4] sm:$0xff]
    %v1537 = vld [vmem:[%s0 + $0xc] sm:$0xff]
    %v1538 = vld [vmem:[%s0 + $0x14] sm:$0xff]
    %v1539 = vld [vmem:[%s0 + $0x1c] sm:$0xff]
    %s1540 = scalar_lea.vmem %s4, 16
    %v1541 = vld [vmem:[%s1540] sm:$0xf]
    %v1546 = vunpack.c.l.b16 %v1536
    %v1547 = vunpack.c.h.b16 %v1536
    %v1548 = vunpack.c.l.b16 %v1537
    %v1549 = vunpack.c.h.b16 %v1537
    %v1550 = vunpack.c.l.b16 %v1538
    %v1551 = vunpack.c.h.b16 %v1538
    %v1552 = vunpack.c.l.b16 %v1539
    %v1553 = vunpack.c.h.b16 %v1539
    %v1554 = vpack.c.b16 %v1546, %v1546
    %v1555 = vpack.c.b16 %v1547, %v1547
    %v1556 = vpack.c.b16 %v1548, %v1548
    %v1557 = vpack.c.b16 %v1549, %v1549
    %v1558 = vpack.c.b16 %v1550, %v1550
    %v1559 = vpack.c.b16 %v1551, %v1551
    %v1560 = vpack.c.b16 %v1552, %v1552
    %v1561 = vpack.c.b16 %v1553, %v1553
    %v1563 = vsel %vm364, %v1541, 0
    %v1566 = vsel %vm368, %v1554, 0
    %v1569 = vsel %vm368, %v1555, 0
    %v1572 = vsel %vm368, %v1556, 0
    %v1575 = vsel %vm368, %v1557, 0
    %v1578 = vsel %vm368, %v1558, 0
    %v1581 = vsel %vm368, %v1559, 0
    %v1584 = vsel %vm368, %v1560, 0
    %v1587 = vsel %vm368, %v1561, 0
    %1589 = vmatprep.subr.bf16.mxu0 0
    %1590 = vmatpush1.bf16.msra.mxu0 0
    %1591 = vmatprep.subr.bf16.mxu0 0
    %1592 = vmatpush1.bf16.msra.mxu0 0
    %1593 = vmatprep.subr.bf16.mxu0 0
    %1594 = vmatpush1.bf16.msra.mxu0 0
    %1595 = vmatprep.subr.bf16.mxu0 0
    %1596 = vmatpush1.bf16.msra.mxu0 0
    %1597 = vmatprep.subr.bf16.mxu0 0
    %1598 = vmatpush1.bf16.msra.mxu0 0
    %1599 = vmatprep.subr.bf16.mxu0 0
    %1600 = vmatpush1.bf16.msra.mxu0 0
    %1601 = vmatprep.subr.bf16.mxu0 0
    %1602 = vmatpush1.bf16.msra.mxu0 0
    %1603 = vmatprep.subr.bf16.mxu0 %v1569
    %1604 = vmatpush1.bf16.msra.mxu0 %v1566
    %1605 = vmatprep.subr.bf16.mxu0 0
    %1606 = vmatpush2.bf16.msra.mxu0 0
    %1607 = vmatprep.subr.bf16.mxu0 0
    %1608 = vmatpush2.bf16.msra.mxu0 0
    %1609 = vmatprep.subr.bf16.mxu0 0
    %1610 = vmatpush2.bf16.msra.mxu0 0
    %1611 = vmatprep.subr.bf16.mxu0 0
    %1612 = vmatpush2.bf16.msra.mxu0 0
    %1613 = vmatprep.subr.bf16.mxu0 0
    %1614 = vmatpush2.bf16.msra.mxu0 0
    %1615 = vmatprep.subr.bf16.mxu0 0
    %1616 = vmatpush2.bf16.msra.mxu0 0
    %1617 = vmatprep.subr.bf16.mxu0 0
    %1618 = vmatpush2.bf16.msra.mxu0 0
    %1619 = vmatprep.subr.bf16.mxu0 0
    %1620 = vmatpush2.bf16.msra.mxu0 0
    %1621 = vmatprep.mubr.bf16.mxu0 0
    %1622 = vmatmul.mubr.bf16.gmra.mxu0 %v1563
    %v1623 = vpop.f32.mrf.mxu0
    %v1624 = vadd.f32 0.0, %v1623
    %v1625 = vpop.f32.mrf.mxu0
    %v1626 = vadd.f32 0.0, %v1625
    %v1627 = vpop.f32.mrf.mxu0
    %v1628 = vpop.f32.mrf.mxu0
    %1629 = vdwg.mxu0
    %1630 = vmatprep.subr.bf16.mxu0 0
    %1631 = vmatpush1.bf16.msra.mxu0 0
    %1632 = vmatprep.subr.bf16.mxu0 0
    %1633 = vmatpush1.bf16.msra.mxu0 0
    %1634 = vmatprep.subr.bf16.mxu0 0
    %1635 = vmatpush1.bf16.msra.mxu0 0
    %1636 = vmatprep.subr.bf16.mxu0 0
    %1637 = vmatpush1.bf16.msra.mxu0 0
    %1638 = vmatprep.subr.bf16.mxu0 0
    %1639 = vmatpush1.bf16.msra.mxu0 0
    %1640 = vmatprep.subr.bf16.mxu0 0
    %1641 = vmatpush1.bf16.msra.mxu0 0
    %1642 = vmatprep.subr.bf16.mxu0 0
    %1643 = vmatpush1.bf16.msra.mxu0 0
    %1644 = vmatprep.subr.bf16.mxu0 %v1575
    %1645 = vmatpush1.bf16.msra.mxu0 %v1572
    %1646 = vmatprep.subr.bf16.mxu0 0
    %1647 = vmatpush2.bf16.msra.mxu0 0
    %1648 = vmatprep.subr.bf16.mxu0 0
    %1649 = vmatpush2.bf16.msra.mxu0 0
    %1650 = vmatprep.subr.bf16.mxu0 0
    %1651 = vmatpush2.bf16.msra.mxu0 0
    %1652 = vmatprep.subr.bf16.mxu0 0
    %1653 = vmatpush2.bf16.msra.mxu0 0
    %1654 = vmatprep.subr.bf16.mxu0 0
    %1655 = vmatpush2.bf16.msra.mxu0 0
    %1656 = vmatprep.subr.bf16.mxu0 0
    %1657 = vmatpush2.bf16.msra.mxu0 0
    %1658 = vmatprep.subr.bf16.mxu0 0
    %1659 = vmatpush2.bf16.msra.mxu0 0
    %1660 = vmatprep.subr.bf16.mxu0 0
    %1661 = vmatpush2.bf16.msra.mxu0 0
    %1662 = vmatprep.mubr.bf16.mxu0 0
    %1663 = vmatmul.mubr.bf16.gmra.mxu0 %v1563
    %v1664 = vpop.f32.mrf.mxu0
    %v1665 = vadd.f32 0.0, %v1664
    %v1666 = vpop.f32.mrf.mxu0
    %v1667 = vadd.f32 0.0, %v1666
    %v1668 = vpop.f32.mrf.mxu0
    %v1669 = vpop.f32.mrf.mxu0
    %1670 = vdwg.mxu0
    %1671 = vmatprep.subr.bf16.mxu0 0
    %1672 = vmatpush1.bf16.msra.mxu0 0
    %1673 = vmatprep.subr.bf16.mxu0 0
    %1674 = vmatpush1.bf16.msra.mxu0 0
    %1675 = vmatprep.subr.bf16.mxu0 0
    %1676 = vmatpush1.bf16.msra.mxu0 0
    %1677 = vmatprep.subr.bf16.mxu0 0
    %1678 = vmatpush1.bf16.msra.mxu0 0
    %1679 = vmatprep.subr.bf16.mxu0 0
    %1680 = vmatpush1.bf16.msra.mxu0 0
    %1681 = vmatprep.subr.bf16.mxu0 0
    %1682 = vmatpush1.bf16.msra.mxu0 0
    %1683 = vmatprep.subr.bf16.mxu0 0
    %1684 = vmatpush1.bf16.msra.mxu0 0
    %1685 = vmatprep.subr.bf16.mxu0 %v1581
    %1686 = vmatpush1.bf16.msra.mxu0 %v1578
    %1687 = vmatprep.subr.bf16.mxu0 0
    %1688 = vmatpush2.bf16.msra.mxu0 0
    %1689 = vmatprep.subr.bf16.mxu0 0
    %1690 = vmatpush2.bf16.msra.mxu0 0
    %1691 = vmatprep.subr.bf16.mxu0 0
    %1692 = vmatpush2.bf16.msra.mxu0 0
    %1693 = vmatprep.subr.bf16.mxu0 0
    %1694 = vmatpush2.bf16.msra.mxu0 0
    %1695 = vmatprep.subr.bf16.mxu0 0
    %1696 = vmatpush2.bf16.msra.mxu0 0
    %1697 = vmatprep.subr.bf16.mxu0 0
    %1698 = vmatpush2.bf16.msra.mxu0 0
    %1699 = vmatprep.subr.bf16.mxu0 0
    %1700 = vmatpush2.bf16.msra.mxu0 0
    %1701 = vmatprep.subr.bf16.mxu0 0
    %1702 = vmatpush2.bf16.msra.mxu0 0
    %1703 = vmatprep.mubr.bf16.mxu0 0
    %1704 = vmatmul.mubr.bf16.gmra.mxu0 %v1563
    %v1705 = vpop.f32.mrf.mxu0
    %v1706 = vadd.f32 0.0, %v1705
    %v1707 = vpop.f32.mrf.mxu0
    %v1708 = vadd.f32 0.0, %v1707
    %v1709 = vpop.f32.mrf.mxu0
    %v1710 = vpop.f32.mrf.mxu0
    %1711 = vdwg.mxu0
    %1712 = vmatprep.subr.bf16.mxu0 0
    %1713 = vmatpush1.bf16.msra.mxu0 0
    %1714 = vmatprep.subr.bf16.mxu0 0
    %1715 = vmatpush1.bf16.msra.mxu0 0
    %1716 = vmatprep.subr.bf16.mxu0 0
    %1717 = vmatpush1.bf16.msra.mxu0 0
    %1718 = vmatprep.subr.bf16.mxu0 0
    %1719 = vmatpush1.bf16.msra.mxu0 0
    %1720 = vmatprep.subr.bf16.mxu0 0
    %1721 = vmatpush1.bf16.msra.mxu0 0
    %1722 = vmatprep.subr.bf16.mxu0 0
    %1723 = vmatpush1.bf16.msra.mxu0 0
    %1724 = vmatprep.subr.bf16.mxu0 0
    %1725 = vmatpush1.bf16.msra.mxu0 0
    %1726 = vmatprep.subr.bf16.mxu0 %v1587
    %1727 = vmatpush1.bf16.msra.mxu0 %v1584
    %1728 = vmatprep.subr.bf16.mxu0 0
    %1729 = vmatpush2.bf16.msra.mxu0 0
    %1730 = vmatprep.subr.bf16.mxu0 0
    %1731 = vmatpush2.bf16.msra.mxu0 0
    %1732 = vmatprep.subr.bf16.mxu0 0
    %1733 = vmatpush2.bf16.msra.mxu0 0
    %1734 = vmatprep.subr.bf16.mxu0 0
    %1735 = vmatpush2.bf16.msra.mxu0 0
    %1736 = vmatprep.subr.bf16.mxu0 0
    %1737 = vmatpush2.bf16.msra.mxu0 0
    %1738 = vmatprep.subr.bf16.mxu0 0
    %1739 = vmatpush2.bf16.msra.mxu0 0
    %1740 = vmatprep.subr.bf16.mxu0 0
    %1741 = vmatpush2.bf16.msra.mxu0 0
    %1742 = vmatprep.subr.bf16.mxu0 0
    %1743 = vmatpush2.bf16.msra.mxu0 0
    %1744 = vmatprep.mubr.bf16.mxu0 0
    %1745 = vmatmul.mubr.bf16.gmra.mxu0 %v1563
    %v1746 = vpop.f32.mrf.mxu0
    %v1747 = vadd.f32 0.0, %v1746
    %v1748 = vpop.f32.mrf.mxu0
    %v1749 = vadd.f32 0.0, %v1748
    %v1750 = vpop.f32.mrf.mxu0
    %v1751 = vpop.f32.mrf.mxu0
    %1752 = vdwg.mxu0
    %v1753 = vadd.f32 %v1528, %v1624
    %v1754 = vadd.f32 %v1529, %v1626
    %v1755 = vadd.f32 %v1530, %v1665
    %v1756 = vadd.f32 %v1531, %v1667
    %v1757 = vadd.f32 %v1532, %v1706
    %v1758 = vadd.f32 %v1533, %v1708
    %v1759 = vadd.f32 %v1534, %v1747
    %v1760 = vadd.f32 %v1535, %v1749
    %v1761 = vld [vmem:[%s0 + $0x4] sm:$0xff]
    %v1762 = vld [vmem:[%s0 + $0xc] sm:$0xff]
    %v1763 = vld [vmem:[%s0 + $0x14] sm:$0xff]
    %v1764 = vld [vmem:[%s0 + $0x1c] sm:$0xff]
    %v1765 = vld [vmem:[%s0 + $0x24] sm:$0xf]
    %v1766 = vld [vmem:[%s1] sm:$0x44]
    %v1767 = vld [vmem:[%s1 + $0x8] sm:$0x44]
    %v1768 = vld [vmem:[%s1 + $0x10] sm:$0x44]
    %v1769 = vld [vmem:[%s1 + $0x18] sm:$0x44]
    %v1774 = vunpack.c.l.b16 %v1766
    %v1775 = vunpack.c.h.b16 %v1766
    %v1776 = vunpack.c.l.b16 %v1767
    %v1777 = vunpack.c.h.b16 %v1767
    %v1778 = vunpack.c.l.b16 %v1768
    %v1779 = vunpack.c.h.b16 %v1768
    %v1780 = vunpack.c.l.b16 %v1769
    %v1781 = vunpack.c.h.b16 %v1769
    %v1782 = vpack.c.b16 %v1774, %v1774
    %v1783 = vpack.c.b16 %v1775, %v1775
    %v1784 = vpack.c.b16 %v1776, %v1776
    %v1785 = vpack.c.b16 %v1777, %v1777
    %v1786 = vpack.c.b16 %v1778, %v1778
    %v1787 = vpack.c.b16 %v1779, %v1779
    %v1788 = vpack.c.b16 %v1780, %v1780
    %v1789 = vpack.c.b16 %v1781, %v1781
    %v1791 = vshrl.u32 %v1782, 16
    %v1792 = vpack.i.b16 %v1791, %v1791
    %v1794 = vlaneseq
    %v1795 = vshrl.u32 %v1794, 7
    %v1796 = vsub.s32 2, %v1795
    %v1797 = vrot.slane %v1792, %v1796
    %v1799 = vshrl.u32 %v1783, 16
    %v1800 = vpack.i.b16 %v1799, %v1799
    %v1802 = vlaneseq
    %v1803 = vshrl.u32 %v1802, 7
    %v1804 = vsub.s32 2, %v1803
    %v1805 = vrot.slane %v1800, %v1804
    %v1807 = vshrl.u32 %v1784, 16
    %v1808 = vpack.i.b16 %v1807, %v1807
    %v1810 = vlaneseq
    %v1811 = vshrl.u32 %v1810, 7
    %v1812 = vsub.s32 2, %v1811
    %v1813 = vrot.slane %v1808, %v1812
    %v1815 = vshrl.u32 %v1785, 16
    %v1816 = vpack.i.b16 %v1815, %v1815
    %v1818 = vlaneseq
    %v1819 = vshrl.u32 %v1818, 7
    %v1820 = vsub.s32 2, %v1819
    %v1821 = vrot.slane %v1816, %v1820
    %v1823 = vshrl.u32 %v1786, 16
    %v1824 = vpack.i.b16 %v1823, %v1823
    %v1826 = vlaneseq
    %v1827 = vshrl.u32 %v1826, 7
    %v1828 = vsub.s32 2, %v1827
    %v1829 = vrot.slane %v1824, %v1828
    %v1831 = vshrl.u32 %v1787, 16
    %v1832 = vpack.i.b16 %v1831, %v1831
    %v1834 = vlaneseq
    %v1835 = vshrl.u32 %v1834, 7
    %v1836 = vsub.s32 2, %v1835
    %v1837 = vrot.slane %v1832, %v1836
    %v1839 = vshrl.u32 %v1788, 16
    %v1840 = vpack.i.b16 %v1839, %v1839
    %v1842 = vlaneseq
    %v1843 = vshrl.u32 %v1842, 7
    %v1844 = vsub.s32 2, %v1843
    %v1845 = vrot.slane %v1840, %v1844
    %v1847 = vshrl.u32 %v1789, 16
    %v1848 = vpack.i.b16 %v1847, %v1847
    %v1850 = vlaneseq
    %v1851 = vshrl.u32 %v1850, 7
    %v1852 = vsub.s32 2, %v1851
    %v1853 = vrot.slane %v1848, %v1852
    %v1862 = vunpack.c.l.b16 %v1797
    %v1863 = vunpack.c.l.b16 %v1805
    %v1864 = vunpack.c.l.b16 %v1813
    %v1865 = vunpack.c.l.b16 %v1821
    %v1866 = vunpack.c.l.b16 %v1829
    %v1867 = vunpack.c.l.b16 %v1837
    %v1868 = vunpack.c.l.b16 %v1845
    %v1869 = vunpack.c.l.b16 %v1853
    %v1870 = vpack.c.b16 %v1863, %v1862
    %v1871 = vpack.c.b16 %v1865, %v1864
    %v1872 = vpack.c.b16 %v1867, %v1866
    %v1873 = vpack.c.b16 %v1869, %v1868
    %1874 = vrot.lane.b32.xlu0 %v1870, 1
    %v1875 = vpop.permute.xlu0 %1874
    %1876 = vrot.lane.b32.xlu0 %v1871, 1
    %v1877 = vpop.permute.xlu0 %1876
    %1878 = vrot.lane.b32.xlu0 %v1872, 1
    %v1879 = vpop.permute.xlu0 %1878
    %1880 = vrot.lane.b32.xlu0 %v1873, 1
    %v1881 = vpop.permute.xlu0 %1880
    %v1882 = vrot.slane %v1875, 4
    %v1883 = vrot.slane %v1877, 4
    %v1884 = vrot.slane %v1879, 4
    %v1885 = vrot.slane %v1881, 4
    %v1886 = vsel %vm1328, %v1882, %v1875
    %v1887 = vsel %vm188, %v1882, %v1883
    %v1888 = vsel %vm1328, %v1887, %v1877
    %v1889 = vsel %vm188, %v1883, %v1884
    %v1890 = vsel %vm1328, %v1889, %v1879
    %v1891 = vsel %vm188, %v1884, %v1885
    %v1892 = vsel %vm1328, %v1891, %v1881
    %v1898 = vmul.bf16 %v1761, %v1886
    %v1899 = vmul.bf16 %v1762, %v1888
    %v1900 = vmul.bf16 %v1763, %v1890
    %v1901 = vmul.bf16 %v1764, %v1892
    %v1902 = vmul.bf16 %v1765, %v1885
    %s1903 = scalar_lea.vmem %s4, 20
    %v1904 = vld [vmem:[%s1903] sm:$0xf]
    %v1910 = vunpack.c.l.b16 %v1898
    %v1911 = vunpack.c.h.b16 %v1898
    %v1912 = vunpack.c.l.b16 %v1899
    %v1913 = vunpack.c.h.b16 %v1899
    %v1914 = vunpack.c.l.b16 %v1900
    %v1915 = vunpack.c.h.b16 %v1900
    %v1916 = vunpack.c.l.b16 %v1901
    %v1917 = vunpack.c.h.b16 %v1901
    %v1918 = vunpack.c.l.b16 %v1902
    %v1919 = vpack.c.b16 %v1910, %v1910
    %v1920 = vpack.c.b16 %v1911, %v1911
    %v1921 = vpack.c.b16 %v1912, %v1912
    %v1922 = vpack.c.b16 %v1913, %v1913
    %v1923 = vpack.c.b16 %v1914, %v1914
    %v1924 = vpack.c.b16 %v1915, %v1915
    %v1925 = vpack.c.b16 %v1916, %v1916
    %v1926 = vpack.c.b16 %v1917, %v1917
    %v1927 = vpack.c.b16 %v1918, %v1918
    %1928 = vrot.lane.b32.xlu0 %v1919, 127
    %v1929 = vpop.permute.xlu0 %1928
    %1930 = vrot.lane.b32.xlu0 %v1920, 127
    %v1931 = vpop.permute.xlu0 %1930
    %1932 = vrot.lane.b32.xlu0 %v1921, 127
    %v1933 = vpop.permute.xlu0 %1932
    %1934 = vrot.lane.b32.xlu0 %v1922, 127
    %v1935 = vpop.permute.xlu0 %1934
    %1936 = vrot.lane.b32.xlu0 %v1923, 127
    %v1937 = vpop.permute.xlu0 %1936
    %1938 = vrot.lane.b32.xlu0 %v1924, 127
    %v1939 = vpop.permute.xlu0 %1938
    %1940 = vrot.lane.b32.xlu0 %v1925, 127
    %v1941 = vpop.permute.xlu0 %1940
    %1942 = vrot.lane.b32.xlu0 %v1926, 127
    %v1943 = vpop.permute.xlu0 %1942
    %1944 = vrot.lane.b32.xlu0 %v1927, 127
    %v1945 = vpop.permute.xlu0 %1944
    %v1946 = vsel %vm1267, %v1929, %v1931
    %v1947 = vsel %vm1267, %v1931, %v1933
    %v1948 = vsel %vm1267, %v1933, %v1935
    %v1949 = vsel %vm1267, %v1935, %v1937
    %v1950 = vsel %vm1267, %v1937, %v1939
    %v1951 = vsel %vm1267, %v1939, %v1941
    %v1952 = vsel %vm1267, %v1941, %v1943
    %v1953 = vsel %vm1267, %v1943, %v1945
    %v1955 = vsel %vm364, %v1904, 0
    %v1958 = vsel %vm368, %v1946, 0
    %v1961 = vsel %vm368, %v1947, 0
    %v1964 = vsel %vm368, %v1948, 0
    %v1967 = vsel %vm368, %v1949, 0
    %v1970 = vsel %vm368, %v1950, 0
    %v1973 = vsel %vm368, %v1951, 0
    %v1976 = vsel %vm368, %v1952, 0
    %v1979 = vsel %vm368, %v1953, 0
    %1981 = vmatprep.subr.bf16.mxu0 0
    %1982 = vmatpush1.bf16.msra.mxu0 0
    %1983 = vmatprep.subr.bf16.mxu0 0
    %1984 = vmatpush1.bf16.msra.mxu0 0
    %1985 = vmatprep.subr.bf16.mxu0 0
    %1986 = vmatpush1.bf16.msra.mxu0 0
    %1987 = vmatprep.subr.bf16.mxu0 0
    %1988 = vmatpush1.bf16.msra.mxu0 0
    %1989 = vmatprep.subr.bf16.mxu0 0
    %1990 = vmatpush1.bf16.msra.mxu0 0
    %1991 = vmatprep.subr.bf16.mxu0 0
    %1992 = vmatpush1.bf16.msra.mxu0 0
    %1993 = vmatprep.subr.bf16.mxu0 0
    %1994 = vmatpush1.bf16.msra.mxu0 0
    %1995 = vmatprep.subr.bf16.mxu0 %v1961
    %1996 = vmatpush1.bf16.msra.mxu0 %v1958
    %1997 = vmatprep.subr.bf16.mxu0 0
    %1998 = vmatpush2.bf16.msra.mxu0 0
    %1999 = vmatprep.subr.bf16.mxu0 0
    %2000 = vmatpush2.bf16.msra.mxu0 0
    %2001 = vmatprep.subr.bf16.mxu0 0
    %2002 = vmatpush2.bf16.msra.mxu0 0
    %2003 = vmatprep.subr.bf16.mxu0 0
    %2004 = vmatpush2.bf16.msra.mxu0 0
    %2005 = vmatprep.subr.bf16.mxu0 0
    %2006 = vmatpush2.bf16.msra.mxu0 0
    %2007 = vmatprep.subr.bf16.mxu0 0
    %2008 = vmatpush2.bf16.msra.mxu0 0
    %2009 = vmatprep.subr.bf16.mxu0 0
    %2010 = vmatpush2.bf16.msra.mxu0 0
    %2011 = vmatprep.subr.bf16.mxu0 0
    %2012 = vmatpush2.bf16.msra.mxu0 0
    %2013 = vmatprep.mubr.bf16.mxu0 0
    %2014 = vmatmul.mubr.bf16.gmra.mxu0 %v1955
    %v2015 = vpop.f32.mrf.mxu0
    %v2016 = vadd.f32 0.0, %v2015
    %v2017 = vpop.f32.mrf.mxu0
    %v2018 = vadd.f32 0.0, %v2017
    %v2019 = vpop.f32.mrf.mxu0
    %v2020 = vpop.f32.mrf.mxu0
    %2021 = vdwg.mxu0
    %2022 = vmatprep.subr.bf16.mxu0 0
    %2023 = vmatpush1.bf16.msra.mxu0 0
    %2024 = vmatprep.subr.bf16.mxu0 0
    %2025 = vmatpush1.bf16.msra.mxu0 0
    %2026 = vmatprep.subr.bf16.mxu0 0
    %2027 = vmatpush1.bf16.msra.mxu0 0
    %2028 = vmatprep.subr.bf16.mxu0 0
    %2029 = vmatpush1.bf16.msra.mxu0 0
    %2030 = vmatprep.subr.bf16.mxu0 0
    %2031 = vmatpush1.bf16.msra.mxu0 0
    %2032 = vmatprep.subr.bf16.mxu0 0
    %2033 = vmatpush1.bf16.msra.mxu0 0
    %2034 = vmatprep.subr.bf16.mxu0 0
    %2035 = vmatpush1.bf16.msra.mxu0 0
    %2036 = vmatprep.subr.bf16.mxu0 %v1967
    %2037 = vmatpush1.bf16.msra.mxu0 %v1964
    %2038 = vmatprep.subr.bf16.mxu0 0
    %2039 = vmatpush2.bf16.msra.mxu0 0
    %2040 = vmatprep.subr.bf16.mxu0 0
    %2041 = vmatpush2.bf16.msra.mxu0 0
    %2042 = vmatprep.subr.bf16.mxu0 0
    %2043 = vmatpush2.bf16.msra.mxu0 0
    %2044 = vmatprep.subr.bf16.mxu0 0
    %2045 = vmatpush2.bf16.msra.mxu0 0
    %2046 = vmatprep.subr.bf16.mxu0 0
    %2047 = vmatpush2.bf16.msra.mxu0 0
    %2048 = vmatprep.subr.bf16.mxu0 0
    %2049 = vmatpush2.bf16.msra.mxu0 0
    %2050 = vmatprep.subr.bf16.mxu0 0
    %2051 = vmatpush2.bf16.msra.mxu0 0
    %2052 = vmatprep.subr.bf16.mxu0 0
    %2053 = vmatpush2.bf16.msra.mxu0 0
    %2054 = vmatprep.mubr.bf16.mxu0 0
    %2055 = vmatmul.mubr.bf16.gmra.mxu0 %v1955
    %v2056 = vpop.f32.mrf.mxu0
    %v2057 = vadd.f32 0.0, %v2056
    %v2058 = vpop.f32.mrf.mxu0
    %v2059 = vadd.f32 0.0, %v2058
    %v2060 = vpop.f32.mrf.mxu0
    %v2061 = vpop.f32.mrf.mxu0
    %2062 = vdwg.mxu0
    %2063 = vmatprep.subr.bf16.mxu0 0
    %2064 = vmatpush1.bf16.msra.mxu0 0
    %2065 = vmatprep.subr.bf16.mxu0 0
    %2066 = vmatpush1.bf16.msra.mxu0 0
    %2067 = vmatprep.subr.bf16.mxu0 0
    %2068 = vmatpush1.bf16.msra.mxu0 0
    %2069 = vmatprep.subr.bf16.mxu0 0
    %2070 = vmatpush1.bf16.msra.mxu0 0
    %2071 = vmatprep.subr.bf16.mxu0 0
    %2072 = vmatpush1.bf16.msra.mxu0 0
    %2073 = vmatprep.subr.bf16.mxu0 0
    %2074 = vmatpush1.bf16.msra.mxu0 0
    %2075 = vmatprep.subr.bf16.mxu0 0
    %2076 = vmatpush1.bf16.msra.mxu0 0
    %2077 = vmatprep.subr.bf16.mxu0 %v1973
    %2078 = vmatpush1.bf16.msra.mxu0 %v1970
    %2079 = vmatprep.subr.bf16.mxu0 0
    %2080 = vmatpush2.bf16.msra.mxu0 0
    %2081 = vmatprep.subr.bf16.mxu0 0
    %2082 = vmatpush2.bf16.msra.mxu0 0
    %2083 = vmatprep.subr.bf16.mxu0 0
    %2084 = vmatpush2.bf16.msra.mxu0 0
    %2085 = vmatprep.subr.bf16.mxu0 0
    %2086 = vmatpush2.bf16.msra.mxu0 0
    %2087 = vmatprep.subr.bf16.mxu0 0
    %2088 = vmatpush2.bf16.msra.mxu0 0
    %2089 = vmatprep.subr.bf16.mxu0 0
    %2090 = vmatpush2.bf16.msra.mxu0 0
    %2091 = vmatprep.subr.bf16.mxu0 0
    %2092 = vmatpush2.bf16.msra.mxu0 0
    %2093 = vmatprep.subr.bf16.mxu0 0
    %2094 = vmatpush2.bf16.msra.mxu0 0
    %2095 = vmatprep.mubr.bf16.mxu0 0
    %2096 = vmatmul.mubr.bf16.gmra.mxu0 %v1955
    %v2097 = vpop.f32.mrf.mxu0
    %v2098 = vadd.f32 0.0, %v2097
    %v2099 = vpop.f32.mrf.mxu0
    %v2100 = vadd.f32 0.0, %v2099
    %v2101 = vpop.f32.mrf.mxu0
    %v2102 = vpop.f32.mrf.mxu0
    %2103 = vdwg.mxu0
    %2104 = vmatprep.subr.bf16.mxu0 0
    %2105 = vmatpush1.bf16.msra.mxu0 0
    %2106 = vmatprep.subr.bf16.mxu0 0
    %2107 = vmatpush1.bf16.msra.mxu0 0
    %2108 = vmatprep.subr.bf16.mxu0 0
    %2109 = vmatpush1.bf16.msra.mxu0 0
    %2110 = vmatprep.subr.bf16.mxu0 0
    %2111 = vmatpush1.bf16.msra.mxu0 0
    %2112 = vmatprep.subr.bf16.mxu0 0
    %2113 = vmatpush1.bf16.msra.mxu0 0
    %2114 = vmatprep.subr.bf16.mxu0 0
    %2115 = vmatpush1.bf16.msra.mxu0 0
    %2116 = vmatprep.subr.bf16.mxu0 0
    %2117 = vmatpush1.bf16.msra.mxu0 0
    %2118 = vmatprep.subr.bf16.mxu0 %v1979
    %2119 = vmatpush1.bf16.msra.mxu0 %v1976
    %2120 = vmatprep.subr.bf16.mxu0 0
    %2121 = vmatpush2.bf16.msra.mxu0 0
    %2122 = vmatprep.subr.bf16.mxu0 0
    %2123 = vmatpush2.bf16.msra.mxu0 0
    %2124 = vmatprep.subr.bf16.mxu0 0
    %2125 = vmatpush2.bf16.msra.mxu0 0
    %2126 = vmatprep.subr.bf16.mxu0 0
    %2127 = vmatpush2.bf16.msra.mxu0 0
    %2128 = vmatprep.subr.bf16.mxu0 0
    %2129 = vmatpush2.bf16.msra.mxu0 0
    %2130 = vmatprep.subr.bf16.mxu0 0
    %2131 = vmatpush2.bf16.msra.mxu0 0
    %2132 = vmatprep.subr.bf16.mxu0 0
    %2133 = vmatpush2.bf16.msra.mxu0 0
    %2134 = vmatprep.subr.bf16.mxu0 0
    %2135 = vmatpush2.bf16.msra.mxu0 0
    %2136 = vmatprep.mubr.bf16.mxu0 0
    %2137 = vmatmul.mubr.bf16.gmra.mxu0 %v1955
    %v2138 = vpop.f32.mrf.mxu0
    %v2139 = vadd.f32 0.0, %v2138
    %v2140 = vpop.f32.mrf.mxu0
    %v2141 = vadd.f32 0.0, %v2140
    %v2142 = vpop.f32.mrf.mxu0
    %v2143 = vpop.f32.mrf.mxu0
    %2144 = vdwg.mxu0
    %v2145 = vadd.f32 %v1753, %v2016
    %v2146 = vadd.f32 %v1754, %v2018
    %v2147 = vadd.f32 %v1755, %v2057
    %v2148 = vadd.f32 %v1756, %v2059
    %v2149 = vadd.f32 %v1757, %v2098
    %v2150 = vadd.f32 %v1758, %v2100
    %v2151 = vadd.f32 %v1759, %v2139
    %v2152 = vadd.f32 %v1760, %v2141
    %v2153 = vld [vmem:[%s1] sm:$0x88]
    %v2154 = vld [vmem:[%s1 + $0x8] sm:$0x88]
    %v2155 = vld [vmem:[%s1 + $0x10] sm:$0x88]
    %v2156 = vld [vmem:[%s1 + $0x18] sm:$0x88]
    %v2161 = vunpack.c.l.b16 %v2153
    %v2162 = vunpack.c.h.b16 %v2153
    %v2163 = vunpack.c.l.b16 %v2154
    %v2164 = vunpack.c.h.b16 %v2154
    %v2165 = vunpack.c.l.b16 %v2155
    %v2166 = vunpack.c.h.b16 %v2155
    %v2167 = vunpack.c.l.b16 %v2156
    %v2168 = vunpack.c.h.b16 %v2156
    %v2169 = vpack.c.b16 %v2161, %v2161
    %v2170 = vpack.c.b16 %v2162, %v2162
    %v2171 = vpack.c.b16 %v2163, %v2163
    %v2172 = vpack.c.b16 %v2164, %v2164
    %v2173 = vpack.c.b16 %v2165, %v2165
    %v2174 = vpack.c.b16 %v2166, %v2166
    %v2175 = vpack.c.b16 %v2167, %v2167
    %v2176 = vpack.c.b16 %v2168, %v2168
    %v2178 = vpack.i.b16 %v2169, %v2169
    %v2180 = vlaneseq
    %v2181 = vshrl.u32 %v2180, 7
    %v2182 = vsub.s32 3, %v2181
    %v2183 = vrot.slane %v2178, %v2182
    %v2185 = vpack.i.b16 %v2170, %v2170
    %v2187 = vlaneseq
    %v2188 = vshrl.u32 %v2187, 7
    %v2189 = vsub.s32 3, %v2188
    %v2190 = vrot.slane %v2185, %v2189
    %v2192 = vpack.i.b16 %v2171, %v2171
    %v2194 = vlaneseq
    %v2195 = vshrl.u32 %v2194, 7
    %v2196 = vsub.s32 3, %v2195
    %v2197 = vrot.slane %v2192, %v2196
    %v2199 = vpack.i.b16 %v2172, %v2172
    %v2201 = vlaneseq
    %v2202 = vshrl.u32 %v2201, 7
    %v2203 = vsub.s32 3, %v2202
    %v2204 = vrot.slane %v2199, %v2203
    %v2206 = vpack.i.b16 %v2173, %v2173
    %v2208 = vlaneseq
    %v2209 = vshrl.u32 %v2208, 7
    %v2210 = vsub.s32 3, %v2209
    %v2211 = vrot.slane %v2206, %v2210
    %v2213 = vpack.i.b16 %v2174, %v2174
    %v2215 = vlaneseq
    %v2216 = vshrl.u32 %v2215, 7
    %v2217 = vsub.s32 3, %v2216
    %v2218 = vrot.slane %v2213, %v2217
    %v2220 = vpack.i.b16 %v2175, %v2175
    %v2222 = vlaneseq
    %v2223 = vshrl.u32 %v2222, 7
    %v2224 = vsub.s32 3, %v2223
    %v2225 = vrot.slane %v2220, %v2224
    %v2227 = vpack.i.b16 %v2176, %v2176
    %v2229 = vlaneseq
    %v2230 = vshrl.u32 %v2229, 7
    %v2231 = vsub.s32 3, %v2230
    %v2232 = vrot.slane %v2227, %v2231
    %v2241 = vunpack.c.l.b16 %v2183
    %v2242 = vunpack.c.l.b16 %v2190
    %v2243 = vunpack.c.l.b16 %v2197
    %v2244 = vunpack.c.l.b16 %v2204
    %v2245 = vunpack.c.l.b16 %v2211
    %v2246 = vunpack.c.l.b16 %v2218
    %v2247 = vunpack.c.l.b16 %v2225
    %v2248 = vunpack.c.l.b16 %v2232
    %v2249 = vpack.c.b16 %v2242, %v2241
    %v2250 = vpack.c.b16 %v2244, %v2243
    %v2251 = vpack.c.b16 %v2246, %v2245
    %v2252 = vpack.c.b16 %v2248, %v2247
    %2253 = vrot.lane.b32.xlu0 %v2249, 15
    %v2254 = vpop.permute.xlu0 %2253
    %2255 = vrot.lane.b32.xlu0 %v2250, 15
    %v2256 = vpop.permute.xlu0 %2255
    %2257 = vrot.lane.b32.xlu0 %v2251, 15
    %v2258 = vpop.permute.xlu0 %2257
    %2259 = vrot.lane.b32.xlu0 %v2252, 15
    %v2260 = vpop.permute.xlu0 %2259
    %v2261 = vrot.slane %v2254, 4
    %v2262 = vrot.slane %v2256, 4
    %v2263 = vrot.slane %v2258, 4
    %v2264 = vrot.slane %v2260, 4
    %v2265 = vsel %vm971, %v2261, %v2254
    %v2266 = vsel %vm188, %v2261, %v2262
    %v2267 = vsel %vm971, %v2266, %v2256
    %v2268 = vsel %vm188, %v2262, %v2263
    %v2269 = vsel %vm971, %v2268, %v2258
    %v2270 = vsel %vm188, %v2263, %v2264
    %v2271 = vsel %vm971, %v2270, %v2260
    %v2277 = vmul.bf16 %v1761, %v2265
    %v2278 = vmul.bf16 %v1762, %v2267
    %v2279 = vmul.bf16 %v1763, %v2269
    %v2280 = vmul.bf16 %v1764, %v2271
    %v2281 = vmul.bf16 %v1765, %v2264
    %s2282 = scalar_lea.vmem %s4, 24
    %v2283 = vld [vmem:[%s2282] sm:$0xf]
    %v2289 = vunpack.c.l.b16 %v2277
    %v2290 = vunpack.c.h.b16 %v2277
    %v2291 = vunpack.c.l.b16 %v2278
    %v2292 = vunpack.c.h.b16 %v2278
    %v2293 = vunpack.c.l.b16 %v2279
    %v2294 = vunpack.c.h.b16 %v2279
    %v2295 = vunpack.c.l.b16 %v2280
    %v2296 = vunpack.c.h.b16 %v2280
    %v2297 = vunpack.c.l.b16 %v2281
    %v2298 = vpack.c.b16 %v2289, %v2289
    %v2299 = vpack.c.b16 %v2290, %v2290
    %v2300 = vpack.c.b16 %v2291, %v2291
    %v2301 = vpack.c.b16 %v2292, %v2292
    %v2302 = vpack.c.b16 %v2293, %v2293
    %v2303 = vpack.c.b16 %v2294, %v2294
    %v2304 = vpack.c.b16 %v2295, %v2295
    %v2305 = vpack.c.b16 %v2296, %v2296
    %v2306 = vpack.c.b16 %v2297, %v2297
    %2307 = vrot.lane.b32.xlu0 %v2298, 113
    %v2308 = vpop.permute.xlu0 %2307
    %2309 = vrot.lane.b32.xlu0 %v2299, 113
    %v2310 = vpop.permute.xlu0 %2309
    %2311 = vrot.lane.b32.xlu0 %v2300, 113
    %v2312 = vpop.permute.xlu0 %2311
    %2313 = vrot.lane.b32.xlu0 %v2301, 113
    %v2314 = vpop.permute.xlu0 %2313
    %2315 = vrot.lane.b32.xlu0 %v2302, 113
    %v2316 = vpop.permute.xlu0 %2315
    %2317 = vrot.lane.b32.xlu0 %v2303, 113
    %v2318 = vpop.permute.xlu0 %2317
    %2319 = vrot.lane.b32.xlu0 %v2304, 113
    %v2320 = vpop.permute.xlu0 %2319
    %2321 = vrot.lane.b32.xlu0 %v2305, 113
    %v2322 = vpop.permute.xlu0 %2321
    %2323 = vrot.lane.b32.xlu0 %v2306, 113
    %v2324 = vpop.permute.xlu0 %2323
    %v2325 = vsel %vm910, %v2308, %v2310
    %v2326 = vsel %vm910, %v2310, %v2312
    %v2327 = vsel %vm910, %v2312, %v2314
    %v2328 = vsel %vm910, %v2314, %v2316
    %v2329 = vsel %vm910, %v2316, %v2318
    %v2330 = vsel %vm910, %v2318, %v2320
    %v2331 = vsel %vm910, %v2320, %v2322
    %v2332 = vsel %vm910, %v2322, %v2324
    %v2334 = vsel %vm364, %v2283, 0
    %v2337 = vsel %vm368, %v2325, 0
    %v2340 = vsel %vm368, %v2326, 0
    %v2343 = vsel %vm368, %v2327, 0
    %v2346 = vsel %vm368, %v2328, 0
    %v2349 = vsel %vm368, %v2329, 0
    %v2352 = vsel %vm368, %v2330, 0
    %v2355 = vsel %vm368, %v2331, 0
    %v2358 = vsel %vm368, %v2332, 0
    %2360 = vmatprep.subr.bf16.mxu0 0
    %2361 = vmatpush1.bf16.msra.mxu0 0
    %2362 = vmatprep.subr.bf16.mxu0 0
    %2363 = vmatpush1.bf16.msra.mxu0 0
    %2364 = vmatprep.subr.bf16.mxu0 0
    %2365 = vmatpush1.bf16.msra.mxu0 0
    %2366 = vmatprep.subr.bf16.mxu0 0
    %2367 = vmatpush1.bf16.msra.mxu0 0
    %2368 = vmatprep.subr.bf16.mxu0 0
    %2369 = vmatpush1.bf16.msra.mxu0 0
    %2370 = vmatprep.subr.bf16.mxu0 0
    %2371 = vmatpush1.bf16.msra.mxu0 0
    %2372 = vmatprep.subr.bf16.mxu0 0
    %2373 = vmatpush1.bf16.msra.mxu0 0
    %2374 = vmatprep.subr.bf16.mxu0 %v2340
    %2375 = vmatpush1.bf16.msra.mxu0 %v2337
    %2376 = vmatprep.subr.bf16.mxu0 0
    %2377 = vmatpush2.bf16.msra.mxu0 0
    %2378 = vmatprep.subr.bf16.mxu0 0
    %2379 = vmatpush2.bf16.msra.mxu0 0
    %2380 = vmatprep.subr.bf16.mxu0 0
    %2381 = vmatpush2.bf16.msra.mxu0 0
    %2382 = vmatprep.subr.bf16.mxu0 0
    %2383 = vmatpush2.bf16.msra.mxu0 0
    %2384 = vmatprep.subr.bf16.mxu0 0
    %2385 = vmatpush2.bf16.msra.mxu0 0
    %2386 = vmatprep.subr.bf16.mxu0 0
    %2387 = vmatpush2.bf16.msra.mxu0 0
    %2388 = vmatprep.subr.bf16.mxu0 0
    %2389 = vmatpush2.bf16.msra.mxu0 0
    %2390 = vmatprep.subr.bf16.mxu0 0
    %2391 = vmatpush2.bf16.msra.mxu0 0
    %2392 = vmatprep.mubr.bf16.mxu0 0
    %2393 = vmatmul.mubr.bf16.gmra.mxu0 %v2334
    %v2394 = vpop.f32.mrf.mxu0
    %v2395 = vadd.f32 0.0, %v2394
    %v2396 = vpop.f32.mrf.mxu0
    %v2397 = vadd.f32 0.0, %v2396
    %v2398 = vpop.f32.mrf.mxu0
    %v2399 = vpop.f32.mrf.mxu0
    %2400 = vdwg.mxu0
    %2401 = vmatprep.subr.bf16.mxu0 0
    %2402 = vmatpush1.bf16.msra.mxu0 0
    %2403 = vmatprep.subr.bf16.mxu0 0
    %2404 = vmatpush1.bf16.msra.mxu0 0
    %2405 = vmatprep.subr.bf16.mxu0 0
    %2406 = vmatpush1.bf16.msra.mxu0 0
    %2407 = vmatprep.subr.bf16.mxu0 0
    %2408 = vmatpush1.bf16.msra.mxu0 0
    %2409 = vmatprep.subr.bf16.mxu0 0
    %2410 = vmatpush1.bf16.msra.mxu0 0
    %2411 = vmatprep.subr.bf16.mxu0 0
    %2412 = vmatpush1.bf16.msra.mxu0 0
    %2413 = vmatprep.subr.bf16.mxu0 0
    %2414 = vmatpush1.bf16.msra.mxu0 0
    %2415 = vmatprep.subr.bf16.mxu0 %v2346
    %2416 = vmatpush1.bf16.msra.mxu0 %v2343
    %2417 = vmatprep.subr.bf16.mxu0 0
    %2418 = vmatpush2.bf16.msra.mxu0 0
    %2419 = vmatprep.subr.bf16.mxu0 0
    %2420 = vmatpush2.bf16.msra.mxu0 0
    %2421 = vmatprep.subr.bf16.mxu0 0
    %2422 = vmatpush2.bf16.msra.mxu0 0
    %2423 = vmatprep.subr.bf16.mxu0 0
    %2424 = vmatpush2.bf16.msra.mxu0 0
    %2425 = vmatprep.subr.bf16.mxu0 0
    %2426 = vmatpush2.bf16.msra.mxu0 0
    %2427 = vmatprep.subr.bf16.mxu0 0
    %2428 = vmatpush2.bf16.msra.mxu0 0
    %2429 = vmatprep.subr.bf16.mxu0 0
    %2430 = vmatpush2.bf16.msra.mxu0 0
    %2431 = vmatprep.subr.bf16.mxu0 0
    %2432 = vmatpush2.bf16.msra.mxu0 0
    %2433 = vmatprep.mubr.bf16.mxu0 0
    %2434 = vmatmul.mubr.bf16.gmra.mxu0 %v2334
    %v2435 = vpop.f32.mrf.mxu0
    %v2436 = vadd.f32 0.0, %v2435
    %v2437 = vpop.f32.mrf.mxu0
    %v2438 = vadd.f32 0.0, %v2437
    %v2439 = vpop.f32.mrf.mxu0
    %v2440 = vpop.f32.mrf.mxu0
    %2441 = vdwg.mxu0
    %2442 = vmatprep.subr.bf16.mxu0 0
    %2443 = vmatpush1.bf16.msra.mxu0 0
    %2444 = vmatprep.subr.bf16.mxu0 0
    %2445 = vmatpush1.bf16.msra.mxu0 0
    %2446 = vmatprep.subr.bf16.mxu0 0
    %2447 = vmatpush1.bf16.msra.mxu0 0
    %2448 = vmatprep.subr.bf16.mxu0 0
    %2449 = vmatpush1.bf16.msra.mxu0 0
    %2450 = vmatprep.subr.bf16.mxu0 0
    %2451 = vmatpush1.bf16.msra.mxu0 0
    %2452 = vmatprep.subr.bf16.mxu0 0
    %2453 = vmatpush1.bf16.msra.mxu0 0
    %2454 = vmatprep.subr.bf16.mxu0 0
    %2455 = vmatpush1.bf16.msra.mxu0 0
    %2456 = vmatprep.subr.bf16.mxu0 %v2352
    %2457 = vmatpush1.bf16.msra.mxu0 %v2349
    %2458 = vmatprep.subr.bf16.mxu0 0
    %2459 = vmatpush2.bf16.msra.mxu0 0
    %2460 = vmatprep.subr.bf16.mxu0 0
    %2461 = vmatpush2.bf16.msra.mxu0 0
    %2462 = vmatprep.subr.bf16.mxu0 0
    %2463 = vmatpush2.bf16.msra.mxu0 0
    %2464 = vmatprep.subr.bf16.mxu0 0
    %2465 = vmatpush2.bf16.msra.mxu0 0
    %2466 = vmatprep.subr.bf16.mxu0 0
    %2467 = vmatpush2.bf16.msra.mxu0 0
    %2468 = vmatprep.subr.bf16.mxu0 0
    %2469 = vmatpush2.bf16.msra.mxu0 0
    %2470 = vmatprep.subr.bf16.mxu0 0
    %2471 = vmatpush2.bf16.msra.mxu0 0
    %2472 = vmatprep.subr.bf16.mxu0 0
    %2473 = vmatpush2.bf16.msra.mxu0 0
    %2474 = vmatprep.mubr.bf16.mxu0 0
    %2475 = vmatmul.mubr.bf16.gmra.mxu0 %v2334
    %v2476 = vpop.f32.mrf.mxu0
    %v2477 = vadd.f32 0.0, %v2476
    %v2478 = vpop.f32.mrf.mxu0
    %v2479 = vadd.f32 0.0, %v2478
    %v2480 = vpop.f32.mrf.mxu0
    %v2481 = vpop.f32.mrf.mxu0
    %2482 = vdwg.mxu0
    %2483 = vmatprep.subr.bf16.mxu0 0
    %2484 = vmatpush1.bf16.msra.mxu0 0
    %2485 = vmatprep.subr.bf16.mxu0 0
    %2486 = vmatpush1.bf16.msra.mxu0 0
    %2487 = vmatprep.subr.bf16.mxu0 0
    %2488 = vmatpush1.bf16.msra.mxu0 0
    %2489 = vmatprep.subr.bf16.mxu0 0
    %2490 = vmatpush1.bf16.msra.mxu0 0
    %2491 = vmatprep.subr.bf16.mxu0 0
    %2492 = vmatpush1.bf16.msra.mxu0 0
    %2493 = vmatprep.subr.bf16.mxu0 0
    %2494 = vmatpush1.bf16.msra.mxu0 0
    %2495 = vmatprep.subr.bf16.mxu0 0
    %2496 = vmatpush1.bf16.msra.mxu0 0
    %2497 = vmatprep.subr.bf16.mxu0 %v2358
    %2498 = vmatpush1.bf16.msra.mxu0 %v2355
    %2499 = vmatprep.subr.bf16.mxu0 0
    %2500 = vmatpush2.bf16.msra.mxu0 0
    %2501 = vmatprep.subr.bf16.mxu0 0
    %2502 = vmatpush2.bf16.msra.mxu0 0
    %2503 = vmatprep.subr.bf16.mxu0 0
    %2504 = vmatpush2.bf16.msra.mxu0 0
    %2505 = vmatprep.subr.bf16.mxu0 0
    %2506 = vmatpush2.bf16.msra.mxu0 0
    %2507 = vmatprep.subr.bf16.mxu0 0
    %2508 = vmatpush2.bf16.msra.mxu0 0
    %2509 = vmatprep.subr.bf16.mxu0 0
    %2510 = vmatpush2.bf16.msra.mxu0 0
    %2511 = vmatprep.subr.bf16.mxu0 0
    %2512 = vmatpush2.bf16.msra.mxu0 0
    %2513 = vmatprep.subr.bf16.mxu0 0
    %2514 = vmatpush2.bf16.msra.mxu0 0
    %2515 = vmatprep.mubr.bf16.mxu0 0
    %2516 = vmatmul.mubr.bf16.gmra.mxu0 %v2334
    %v2517 = vpop.f32.mrf.mxu0
    %v2518 = vadd.f32 0.0, %v2517
    %v2519 = vpop.f32.mrf.mxu0
    %v2520 = vadd.f32 0.0, %v2519
    %v2521 = vpop.f32.mrf.mxu0
    %v2522 = vpop.f32.mrf.mxu0
    %2523 = vdwg.mxu0
    %v2524 = vadd.f32 %v2145, %v2395
    %v2525 = vadd.f32 %v2146, %v2397
    %v2526 = vadd.f32 %v2147, %v2436
    %v2527 = vadd.f32 %v2148, %v2438
    %v2528 = vadd.f32 %v2149, %v2477
    %v2529 = vadd.f32 %v2150, %v2479
    %v2530 = vadd.f32 %v2151, %v2518
    %v2531 = vadd.f32 %v2152, %v2520
    %v2532 = vshrl.u32 %v2169, 16
    %v2533 = vpack.i.b16 %v2532, %v2532
    %v2535 = vlaneseq
    %v2536 = vshrl.u32 %v2535, 7
    %v2537 = vsub.s32 3, %v2536
    %v2538 = vrot.slane %v2533, %v2537
    %v2539 = vshrl.u32 %v2170, 16
    %v2540 = vpack.i.b16 %v2539, %v2539
    %v2542 = vlaneseq
    %v2543 = vshrl.u32 %v2542, 7
    %v2544 = vsub.s32 3, %v2543
    %v2545 = vrot.slane %v2540, %v2544
    %v2546 = vshrl.u32 %v2171, 16
    %v2547 = vpack.i.b16 %v2546, %v2546
    %v2549 = vlaneseq
    %v2550 = vshrl.u32 %v2549, 7
    %v2551 = vsub.s32 3, %v2550
    %v2552 = vrot.slane %v2547, %v2551
    %v2553 = vshrl.u32 %v2172, 16
    %v2554 = vpack.i.b16 %v2553, %v2553
    %v2556 = vlaneseq
    %v2557 = vshrl.u32 %v2556, 7
    %v2558 = vsub.s32 3, %v2557
    %v2559 = vrot.slane %v2554, %v2558
    %v2560 = vshrl.u32 %v2173, 16
    %v2561 = vpack.i.b16 %v2560, %v2560
    %v2563 = vlaneseq
    %v2564 = vshrl.u32 %v2563, 7
    %v2565 = vsub.s32 3, %v2564
    %v2566 = vrot.slane %v2561, %v2565
    %v2567 = vshrl.u32 %v2174, 16
    %v2568 = vpack.i.b16 %v2567, %v2567
    %v2570 = vlaneseq
    %v2571 = vshrl.u32 %v2570, 7
    %v2572 = vsub.s32 3, %v2571
    %v2573 = vrot.slane %v2568, %v2572
    %v2574 = vshrl.u32 %v2175, 16
    %v2575 = vpack.i.b16 %v2574, %v2574
    %v2577 = vlaneseq
    %v2578 = vshrl.u32 %v2577, 7
    %v2579 = vsub.s32 3, %v2578
    %v2580 = vrot.slane %v2575, %v2579
    %v2581 = vshrl.u32 %v2176, 16
    %v2582 = vpack.i.b16 %v2581, %v2581
    %v2584 = vlaneseq
    %v2585 = vshrl.u32 %v2584, 7
    %v2586 = vsub.s32 3, %v2585
    %v2587 = vrot.slane %v2582, %v2586
    %v2596 = vunpack.c.l.b16 %v2538
    %v2597 = vunpack.c.l.b16 %v2545
    %v2598 = vunpack.c.l.b16 %v2552
    %v2599 = vunpack.c.l.b16 %v2559
    %v2600 = vunpack.c.l.b16 %v2566
    %v2601 = vunpack.c.l.b16 %v2573
    %v2602 = vunpack.c.l.b16 %v2580
    %v2603 = vunpack.c.l.b16 %v2587
    %v2604 = vpack.c.b16 %v2597, %v2596
    %v2605 = vpack.c.b16 %v2599, %v2598
    %v2606 = vpack.c.b16 %v2601, %v2600
    %v2607 = vpack.c.b16 %v2603, %v2602
    %2608 = vrot.lane.b32.xlu0 %v2604, 16
    %v2609 = vpop.permute.xlu0 %2608
    %2610 = vrot.lane.b32.xlu0 %v2605, 16
    %v2611 = vpop.permute.xlu0 %2610
    %2612 = vrot.lane.b32.xlu0 %v2606, 16
    %v2613 = vpop.permute.xlu0 %2612
    %2614 = vrot.lane.b32.xlu0 %v2607, 16
    %v2615 = vpop.permute.xlu0 %2614
    %v2616 = vrot.slane %v2609, 4
    %v2617 = vrot.slane %v2611, 4
    %v2618 = vrot.slane %v2613, 4
    %v2619 = vrot.slane %v2615, 4
    %v2620 = vsel %vm355, %v2616, %v2609
    %v2621 = vsel %vm188, %v2616, %v2617
    %v2622 = vsel %vm355, %v2621, %v2611
    %v2623 = vsel %vm188, %v2617, %v2618
    %v2624 = vsel %vm355, %v2623, %v2613
    %v2625 = vsel %vm188, %v2618, %v2619
    %v2626 = vsel %vm355, %v2625, %v2615
    %v2632 = vmul.bf16 %v1761, %v2620
    %v2633 = vmul.bf16 %v1762, %v2622
    %v2634 = vmul.bf16 %v1763, %v2624
    %v2635 = vmul.bf16 %v1764, %v2626
    %v2636 = vmul.bf16 %v1765, %v2619
    %s2637 = scalar_lea.vmem %s4, 28
    %v2638 = vld [vmem:[%s2637] sm:$0xf]
    %v2644 = vunpack.c.l.b16 %v2632
    %v2645 = vunpack.c.h.b16 %v2632
    %v2646 = vunpack.c.l.b16 %v2633
    %v2647 = vunpack.c.h.b16 %v2633
    %v2648 = vunpack.c.l.b16 %v2634
    %v2649 = vunpack.c.h.b16 %v2634
    %v2650 = vunpack.c.l.b16 %v2635
    %v2651 = vunpack.c.h.b16 %v2635
    %v2652 = vunpack.c.l.b16 %v2636
    %v2653 = vpack.c.b16 %v2644, %v2644
    %v2654 = vpack.c.b16 %v2645, %v2645
    %v2655 = vpack.c.b16 %v2646, %v2646
    %v2656 = vpack.c.b16 %v2647, %v2647
    %v2657 = vpack.c.b16 %v2648, %v2648
    %v2658 = vpack.c.b16 %v2649, %v2649
    %v2659 = vpack.c.b16 %v2650, %v2650
    %v2660 = vpack.c.b16 %v2651, %v2651
    %v2661 = vpack.c.b16 %v2652, %v2652
    %2662 = vrot.lane.b32.xlu0 %v2653, 112
    %v2663 = vpop.permute.xlu0 %2662
    %2664 = vrot.lane.b32.xlu0 %v2654, 112
    %v2665 = vpop.permute.xlu0 %2664
    %2666 = vrot.lane.b32.xlu0 %v2655, 112
    %v2667 = vpop.permute.xlu0 %2666
    %2668 = vrot.lane.b32.xlu0 %v2656, 112
    %v2669 = vpop.permute.xlu0 %2668
    %2670 = vrot.lane.b32.xlu0 %v2657, 112
    %v2671 = vpop.permute.xlu0 %2670
    %2672 = vrot.lane.b32.xlu0 %v2658, 112
    %v2673 = vpop.permute.xlu0 %2672
    %2674 = vrot.lane.b32.xlu0 %v2659, 112
    %v2675 = vpop.permute.xlu0 %2674
    %2676 = vrot.lane.b32.xlu0 %v2660, 112
    %v2677 = vpop.permute.xlu0 %2676
    %2678 = vrot.lane.b32.xlu0 %v2661, 112
    %v2679 = vpop.permute.xlu0 %2678
    %v2680 = vsel %vm294, %v2663, %v2665
    %v2681 = vsel %vm294, %v2665, %v2667
    %v2682 = vsel %vm294, %v2667, %v2669
    %v2683 = vsel %vm294, %v2669, %v2671
    %v2684 = vsel %vm294, %v2671, %v2673
    %v2685 = vsel %vm294, %v2673, %v2675
    %v2686 = vsel %vm294, %v2675, %v2677
    %v2687 = vsel %vm294, %v2677, %v2679
    %v2689 = vsel %vm364, %v2638, 0
    %v2692 = vsel %vm368, %v2680, 0
    %v2695 = vsel %vm368, %v2681, 0
    %v2698 = vsel %vm368, %v2682, 0
    %v2701 = vsel %vm368, %v2683, 0
    %v2704 = vsel %vm368, %v2684, 0
    %v2707 = vsel %vm368, %v2685, 0
    %v2710 = vsel %vm368, %v2686, 0
    %v2713 = vsel %vm368, %v2687, 0
    %2715 = vmatprep.subr.bf16.mxu0 0
    %2716 = vmatpush1.bf16.msra.mxu0 0
    %2717 = vmatprep.subr.bf16.mxu0 0
    %2718 = vmatpush1.bf16.msra.mxu0 0
    %2719 = vmatprep.subr.bf16.mxu0 0
    %2720 = vmatpush1.bf16.msra.mxu0 0
    %2721 = vmatprep.subr.bf16.mxu0 0
    %2722 = vmatpush1.bf16.msra.mxu0 0
    %2723 = vmatprep.subr.bf16.mxu0 0
    %2724 = vmatpush1.bf16.msra.mxu0 0
    %2725 = vmatprep.subr.bf16.mxu0 0
    %2726 = vmatpush1.bf16.msra.mxu0 0
    %2727 = vmatprep.subr.bf16.mxu0 0
    %2728 = vmatpush1.bf16.msra.mxu0 0
    %2729 = vmatprep.subr.bf16.mxu0 %v2695
    %2730 = vmatpush1.bf16.msra.mxu0 %v2692
    %2731 = vmatprep.subr.bf16.mxu0 0
    %2732 = vmatpush2.bf16.msra.mxu0 0
    %2733 = vmatprep.subr.bf16.mxu0 0
    %2734 = vmatpush2.bf16.msra.mxu0 0
    %2735 = vmatprep.subr.bf16.mxu0 0
    %2736 = vmatpush2.bf16.msra.mxu0 0
    %2737 = vmatprep.subr.bf16.mxu0 0
    %2738 = vmatpush2.bf16.msra.mxu0 0
    %2739 = vmatprep.subr.bf16.mxu0 0
    %2740 = vmatpush2.bf16.msra.mxu0 0
    %2741 = vmatprep.subr.bf16.mxu0 0
    %2742 = vmatpush2.bf16.msra.mxu0 0
    %2743 = vmatprep.subr.bf16.mxu0 0
    %2744 = vmatpush2.bf16.msra.mxu0 0
    %2745 = vmatprep.subr.bf16.mxu0 0
    %2746 = vmatpush2.bf16.msra.mxu0 0
    %2747 = vmatprep.mubr.bf16.mxu0 0
    %2748 = vmatmul.mubr.bf16.gmra.mxu0 %v2689
    %v2749 = vpop.f32.mrf.mxu0
    %v2750 = vadd.f32 0.0, %v2749
    %v2751 = vpop.f32.mrf.mxu0
    %v2752 = vadd.f32 0.0, %v2751
    %v2753 = vpop.f32.mrf.mxu0
    %v2754 = vpop.f32.mrf.mxu0
    %2755 = vdwg.mxu0
    %2756 = vmatprep.subr.bf16.mxu0 0
    %2757 = vmatpush1.bf16.msra.mxu0 0
    %2758 = vmatprep.subr.bf16.mxu0 0
    %2759 = vmatpush1.bf16.msra.mxu0 0
    %2760 = vmatprep.subr.bf16.mxu0 0
    %2761 = vmatpush1.bf16.msra.mxu0 0
    %2762 = vmatprep.subr.bf16.mxu0 0
    %2763 = vmatpush1.bf16.msra.mxu0 0
    %2764 = vmatprep.subr.bf16.mxu0 0
    %2765 = vmatpush1.bf16.msra.mxu0 0
    %2766 = vmatprep.subr.bf16.mxu0 0
    %2767 = vmatpush1.bf16.msra.mxu0 0
    %2768 = vmatprep.subr.bf16.mxu0 0
    %2769 = vmatpush1.bf16.msra.mxu0 0
    %2770 = vmatprep.subr.bf16.mxu0 %v2701
    %2771 = vmatpush1.bf16.msra.mxu0 %v2698
    %2772 = vmatprep.subr.bf16.mxu0 0
    %2773 = vmatpush2.bf16.msra.mxu0 0
    %2774 = vmatprep.subr.bf16.mxu0 0
    %2775 = vmatpush2.bf16.msra.mxu0 0
    %2776 = vmatprep.subr.bf16.mxu0 0
    %2777 = vmatpush2.bf16.msra.mxu0 0
    %2778 = vmatprep.subr.bf16.mxu0 0
    %2779 = vmatpush2.bf16.msra.mxu0 0
    %2780 = vmatprep.subr.bf16.mxu0 0
    %2781 = vmatpush2.bf16.msra.mxu0 0
    %2782 = vmatprep.subr.bf16.mxu0 0
    %2783 = vmatpush2.bf16.msra.mxu0 0
    %2784 = vmatprep.subr.bf16.mxu0 0
    %2785 = vmatpush2.bf16.msra.mxu0 0
    %2786 = vmatprep.subr.bf16.mxu0 0
    %2787 = vmatpush2.bf16.msra.mxu0 0
    %2788 = vmatprep.mubr.bf16.mxu0 0
    %2789 = vmatmul.mubr.bf16.gmra.mxu0 %v2689
    %v2790 = vpop.f32.mrf.mxu0
    %v2791 = vadd.f32 0.0, %v2790
    %v2792 = vpop.f32.mrf.mxu0
    %v2793 = vadd.f32 0.0, %v2792
    %v2794 = vpop.f32.mrf.mxu0
    %v2795 = vpop.f32.mrf.mxu0
    %2796 = vdwg.mxu0
    %2797 = vmatprep.subr.bf16.mxu0 0
    %2798 = vmatpush1.bf16.msra.mxu0 0
    %2799 = vmatprep.subr.bf16.mxu0 0
    %2800 = vmatpush1.bf16.msra.mxu0 0
    %2801 = vmatprep.subr.bf16.mxu0 0
    %2802 = vmatpush1.bf16.msra.mxu0 0
    %2803 = vmatprep.subr.bf16.mxu0 0
    %2804 = vmatpush1.bf16.msra.mxu0 0
    %2805 = vmatprep.subr.bf16.mxu0 0
    %2806 = vmatpush1.bf16.msra.mxu0 0
    %2807 = vmatprep.subr.bf16.mxu0 0
    %2808 = vmatpush1.bf16.msra.mxu0 0
    %2809 = vmatprep.subr.bf16.mxu0 0
    %2810 = vmatpush1.bf16.msra.mxu0 0
    %2811 = vmatprep.subr.bf16.mxu0 %v2707
    %2812 = vmatpush1.bf16.msra.mxu0 %v2704
    %2813 = vmatprep.subr.bf16.mxu0 0
    %2814 = vmatpush2.bf16.msra.mxu0 0
    %2815 = vmatprep.subr.bf16.mxu0 0
    %2816 = vmatpush2.bf16.msra.mxu0 0
    %2817 = vmatprep.subr.bf16.mxu0 0
    %2818 = vmatpush2.bf16.msra.mxu0 0
    %2819 = vmatprep.subr.bf16.mxu0 0
    %2820 = vmatpush2.bf16.msra.mxu0 0
    %2821 = vmatprep.subr.bf16.mxu0 0
    %2822 = vmatpush2.bf16.msra.mxu0 0
    %2823 = vmatprep.subr.bf16.mxu0 0
    %2824 = vmatpush2.bf16.msra.mxu0 0
    %2825 = vmatprep.subr.bf16.mxu0 0
    %2826 = vmatpush2.bf16.msra.mxu0 0
    %2827 = vmatprep.subr.bf16.mxu0 0
    %2828 = vmatpush2.bf16.msra.mxu0 0
    %2829 = vmatprep.mubr.bf16.mxu0 0
    %2830 = vmatmul.mubr.bf16.gmra.mxu0 %v2689
    %v2831 = vpop.f32.mrf.mxu0
    %v2832 = vadd.f32 0.0, %v2831
    %v2833 = vpop.f32.mrf.mxu0
    %v2834 = vadd.f32 0.0, %v2833
    %v2835 = vpop.f32.mrf.mxu0
    %v2836 = vpop.f32.mrf.mxu0
    %2837 = vdwg.mxu0
    %2838 = vmatprep.subr.bf16.mxu0 0
    %2839 = vmatpush1.bf16.msra.mxu0 0
    %2840 = vmatprep.subr.bf16.mxu0 0
    %2841 = vmatpush1.bf16.msra.mxu0 0
    %2842 = vmatprep.subr.bf16.mxu0 0
    %2843 = vmatpush1.bf16.msra.mxu0 0
    %2844 = vmatprep.subr.bf16.mxu0 0
    %2845 = vmatpush1.bf16.msra.mxu0 0
    %2846 = vmatprep.subr.bf16.mxu0 0
    %2847 = vmatpush1.bf16.msra.mxu0 0
    %2848 = vmatprep.subr.bf16.mxu0 0
    %2849 = vmatpush1.bf16.msra.mxu0 0
    %2850 = vmatprep.subr.bf16.mxu0 0
    %2851 = vmatpush1.bf16.msra.mxu0 0
    %2852 = vmatprep.subr.bf16.mxu0 %v2713
    %2853 = vmatpush1.bf16.msra.mxu0 %v2710
    %2854 = vmatprep.subr.bf16.mxu0 0
    %2855 = vmatpush2.bf16.msra.mxu0 0
    %2856 = vmatprep.subr.bf16.mxu0 0
    %2857 = vmatpush2.bf16.msra.mxu0 0
    %2858 = vmatprep.subr.bf16.mxu0 0
    %2859 = vmatpush2.bf16.msra.mxu0 0
    %2860 = vmatprep.subr.bf16.mxu0 0
    %2861 = vmatpush2.bf16.msra.mxu0 0
    %2862 = vmatprep.subr.bf16.mxu0 0
    %2863 = vmatpush2.bf16.msra.mxu0 0
    %2864 = vmatprep.subr.bf16.mxu0 0
    %2865 = vmatpush2.bf16.msra.mxu0 0
    %2866 = vmatprep.subr.bf16.mxu0 0
    %2867 = vmatpush2.bf16.msra.mxu0 0
    %2868 = vmatprep.subr.bf16.mxu0 0
    %2869 = vmatpush2.bf16.msra.mxu0 0
    %2870 = vmatprep.mubr.bf16.mxu0 0
    %2871 = vmatmul.mubr.bf16.gmra.mxu0 %v2689
    %v2872 = vpop.f32.mrf.mxu0
    %v2873 = vadd.f32 0.0, %v2872
    %v2874 = vpop.f32.mrf.mxu0
    %v2875 = vadd.f32 0.0, %v2874
    %v2876 = vpop.f32.mrf.mxu0
    %v2877 = vpop.f32.mrf.mxu0
    %2878 = vdwg.mxu0
    %v2879 = vadd.f32 %v2524, %v2750
    %v2880 = vadd.f32 %v2525, %v2752
    %v2881 = vadd.f32 %v2526, %v2791
    %v2882 = vadd.f32 %v2527, %v2793
    %v2883 = vadd.f32 %v2528, %v2832
    %v2884 = vadd.f32 %v2529, %v2834
    %v2885 = vadd.f32 %v2530, %v2873
    %v2886 = vadd.f32 %v2531, %v2875
    %v2887 = vld [vmem:[%s1 + $0x20] sm:$0x11]
    %v2888 = vld [vmem:[%s1 + $0x28] sm:$0x11]
    %v2889 = vld [vmem:[%s1 + $0x30] sm:$0x11]
    %v2890 = vld [vmem:[%s1 + $0x38] sm:$0x11]
    %v2895 = vunpack.c.l.b16 %v2887
    %v2896 = vunpack.c.h.b16 %v2887
    %v2897 = vunpack.c.l.b16 %v2888
    %v2898 = vunpack.c.h.b16 %v2888
    %v2899 = vunpack.c.l.b16 %v2889
    %v2900 = vunpack.c.h.b16 %v2889
    %v2901 = vunpack.c.l.b16 %v2890
    %v2902 = vunpack.c.h.b16 %v2890
    %v2903 = vpack.c.b16 %v2895, %v2895
    %v2904 = vpack.c.b16 %v2896, %v2896
    %v2905 = vpack.c.b16 %v2897, %v2897
    %v2906 = vpack.c.b16 %v2898, %v2898
    %v2907 = vpack.c.b16 %v2899, %v2899
    %v2908 = vpack.c.b16 %v2900, %v2900
    %v2909 = vpack.c.b16 %v2901, %v2901
    %v2910 = vpack.c.b16 %v2902, %v2902
    %v2912 = vpack.i.b16 %v2903, %v2903
    %v2914 = vlaneseq
    %v2915 = vshrl.u32 %v2914, 7
    %v2916 = vsub.s32 0, %v2915
    %v2917 = vrot.slane %v2912, %v2916
    %v2919 = vpack.i.b16 %v2904, %v2904
    %v2921 = vlaneseq
    %v2922 = vshrl.u32 %v2921, 7
    %v2923 = vsub.s32 0, %v2922
    %v2924 = vrot.slane %v2919, %v2923
    %v2926 = vpack.i.b16 %v2905, %v2905
    %v2928 = vlaneseq
    %v2929 = vshrl.u32 %v2928, 7
    %v2930 = vsub.s32 0, %v2929
    %v2931 = vrot.slane %v2926, %v2930
    %v2933 = vpack.i.b16 %v2906, %v2906
    %v2935 = vlaneseq
    %v2936 = vshrl.u32 %v2935, 7
    %v2937 = vsub.s32 0, %v2936
    %v2938 = vrot.slane %v2933, %v2937
    %v2940 = vpack.i.b16 %v2907, %v2907
    %v2942 = vlaneseq
    %v2943 = vshrl.u32 %v2942, 7
    %v2944 = vsub.s32 0, %v2943
    %v2945 = vrot.slane %v2940, %v2944
    %v2947 = vpack.i.b16 %v2908, %v2908
    %v2949 = vlaneseq
    %v2950 = vshrl.u32 %v2949, 7
    %v2951 = vsub.s32 0, %v2950
    %v2952 = vrot.slane %v2947, %v2951
    %v2954 = vpack.i.b16 %v2909, %v2909
    %v2956 = vlaneseq
    %v2957 = vshrl.u32 %v2956, 7
    %v2958 = vsub.s32 0, %v2957
    %v2959 = vrot.slane %v2954, %v2958
    %v2961 = vpack.i.b16 %v2910, %v2910
    %v2963 = vlaneseq
    %v2964 = vshrl.u32 %v2963, 7
    %v2965 = vsub.s32 0, %v2964
    %v2966 = vrot.slane %v2961, %v2965
    %v2975 = vunpack.c.l.b16 %v2917
    %v2976 = vunpack.c.l.b16 %v2924
    %v2977 = vunpack.c.l.b16 %v2931
    %v2978 = vunpack.c.l.b16 %v2938
    %v2979 = vunpack.c.l.b16 %v2945
    %v2980 = vunpack.c.l.b16 %v2952
    %v2981 = vunpack.c.l.b16 %v2959
    %v2982 = vunpack.c.l.b16 %v2966
    %v2983 = vpack.c.b16 %v2976, %v2975
    %v2984 = vpack.c.b16 %v2978, %v2977
    %v2985 = vpack.c.b16 %v2980, %v2979
    %v2986 = vpack.c.b16 %v2982, %v2981
    %2987 = vrot.lane.b32.xlu0 %v2983, 17
    %v2988 = vpop.permute.xlu0 %2987
    %2989 = vrot.lane.b32.xlu0 %v2984, 17
    %v2990 = vpop.permute.xlu0 %2989
    %2991 = vrot.lane.b32.xlu0 %v2985, 17
    %v2992 = vpop.permute.xlu0 %2991
    %2993 = vrot.lane.b32.xlu0 %v2986, 17
    %v2994 = vpop.permute.xlu0 %2993
    %v2995 = vrot.slane %v2988, 4
    %v2996 = vrot.slane %v2990, 4
    %v2997 = vrot.slane %v2992, 4
    %v2998 = vrot.slane %v2994, 4
    %v2999 = vsel %vm598, %v2995, %v2988
    %v3000 = vsel %vm188, %v2995, %v2996
    %v3001 = vsel %vm598, %v3000, %v2990
    %v3002 = vsel %vm188, %v2996, %v2997
    %v3003 = vsel %vm598, %v3002, %v2992
    %v3004 = vsel %vm188, %v2997, %v2998
    %v3005 = vsel %vm598, %v3004, %v2994
    %v3011 = vmul.bf16 %v1761, %v2999
    %v3012 = vmul.bf16 %v1762, %v3001
    %v3013 = vmul.bf16 %v1763, %v3003
    %v3014 = vmul.bf16 %v1764, %v3005
    %v3015 = vmul.bf16 %v1765, %v2998
    %s3016 = scalar_lea.vmem %s4, 32
    %v3017 = vld [vmem:[%s3016] sm:$0xf]
    %v3023 = vunpack.c.l.b16 %v3011
    %v3024 = vunpack.c.h.b16 %v3011
    %v3025 = vunpack.c.l.b16 %v3012
    %v3026 = vunpack.c.h.b16 %v3012
    %v3027 = vunpack.c.l.b16 %v3013
    %v3028 = vunpack.c.h.b16 %v3013
    %v3029 = vunpack.c.l.b16 %v3014
    %v3030 = vunpack.c.h.b16 %v3014
    %v3031 = vunpack.c.l.b16 %v3015
    %v3032 = vpack.c.b16 %v3023, %v3023
    %v3033 = vpack.c.b16 %v3024, %v3024
    %v3034 = vpack.c.b16 %v3025, %v3025
    %v3035 = vpack.c.b16 %v3026, %v3026
    %v3036 = vpack.c.b16 %v3027, %v3027
    %v3037 = vpack.c.b16 %v3028, %v3028
    %v3038 = vpack.c.b16 %v3029, %v3029
    %v3039 = vpack.c.b16 %v3030, %v3030
    %v3040 = vpack.c.b16 %v3031, %v3031
    %3041 = vrot.lane.b32.xlu0 %v3032, 111
    %v3042 = vpop.permute.xlu0 %3041
    %3043 = vrot.lane.b32.xlu0 %v3033, 111
    %v3044 = vpop.permute.xlu0 %3043
    %3045 = vrot.lane.b32.xlu0 %v3034, 111
    %v3046 = vpop.permute.xlu0 %3045
    %3047 = vrot.lane.b32.xlu0 %v3035, 111
    %v3048 = vpop.permute.xlu0 %3047
    %3049 = vrot.lane.b32.xlu0 %v3036, 111
    %v3050 = vpop.permute.xlu0 %3049
    %3051 = vrot.lane.b32.xlu0 %v3037, 111
    %v3052 = vpop.permute.xlu0 %3051
    %3053 = vrot.lane.b32.xlu0 %v3038, 111
    %v3054 = vpop.permute.xlu0 %3053
    %3055 = vrot.lane.b32.xlu0 %v3039, 111
    %v3056 = vpop.permute.xlu0 %3055
    %3057 = vrot.lane.b32.xlu0 %v3040, 111
    %v3058 = vpop.permute.xlu0 %3057
    %v3059 = vsel %vm186, %v3042, %v3044
    %v3060 = vsel %vm186, %v3044, %v3046
    %v3061 = vsel %vm186, %v3046, %v3048
    %v3062 = vsel %vm186, %v3048, %v3050
    %v3063 = vsel %vm186, %v3050, %v3052
    %v3064 = vsel %vm186, %v3052, %v3054
    %v3065 = vsel %vm186, %v3054, %v3056
    %v3066 = vsel %vm186, %v3056, %v3058
    %v3068 = vsel %vm364, %v3017, 0
    %v3071 = vsel %vm368, %v3059, 0
    %v3074 = vsel %vm368, %v3060, 0
    %v3077 = vsel %vm368, %v3061, 0
    %v3080 = vsel %vm368, %v3062, 0
    %v3083 = vsel %vm368, %v3063, 0
    %v3086 = vsel %vm368, %v3064, 0
    %v3089 = vsel %vm368, %v3065, 0
    %v3092 = vsel %vm368, %v3066, 0
    %3094 = vmatprep.subr.bf16.mxu0 0
    %3095 = vmatpush1.bf16.msra.mxu0 0
    %3096 = vmatprep.subr.bf16.mxu0 0
    %3097 = vmatpush1.bf16.msra.mxu0 0
    %3098 = vmatprep.subr.bf16.mxu0 0
    %3099 = vmatpush1.bf16.msra.mxu0 0
    %3100 = vmatprep.subr.bf16.mxu0 0
    %3101 = vmatpush1.bf16.msra.mxu0 0
    %3102 = vmatprep.subr.bf16.mxu0 0
    %3103 = vmatpush1.bf16.msra.mxu0 0
    %3104 = vmatprep.subr.bf16.mxu0 0
    %3105 = vmatpush1.bf16.msra.mxu0 0
    %3106 = vmatprep.subr.bf16.mxu0 0
    %3107 = vmatpush1.bf16.msra.mxu0 0
    %3108 = vmatprep.subr.bf16.mxu0 %v3074
    %3109 = vmatpush1.bf16.msra.mxu0 %v3071
    %3110 = vmatprep.subr.bf16.mxu0 0
    %3111 = vmatpush2.bf16.msra.mxu0 0
    %3112 = vmatprep.subr.bf16.mxu0 0
    %3113 = vmatpush2.bf16.msra.mxu0 0
    %3114 = vmatprep.subr.bf16.mxu0 0
    %3115 = vmatpush2.bf16.msra.mxu0 0
    %3116 = vmatprep.subr.bf16.mxu0 0
    %3117 = vmatpush2.bf16.msra.mxu0 0
    %3118 = vmatprep.subr.bf16.mxu0 0
    %3119 = vmatpush2.bf16.msra.mxu0 0
    %3120 = vmatprep.subr.bf16.mxu0 0
    %3121 = vmatpush2.bf16.msra.mxu0 0
    %3122 = vmatprep.subr.bf16.mxu0 0
    %3123 = vmatpush2.bf16.msra.mxu0 0
    %3124 = vmatprep.subr.bf16.mxu0 0
    %3125 = vmatpush2.bf16.msra.mxu0 0
    %3126 = vmatprep.mubr.bf16.mxu0 0
    %3127 = vmatmul.mubr.bf16.gmra.mxu0 %v3068
    %v3128 = vpop.f32.mrf.mxu0
    %v3129 = vadd.f32 0.0, %v3128
    %v3130 = vpop.f32.mrf.mxu0
    %v3131 = vadd.f32 0.0, %v3130
    %v3132 = vpop.f32.mrf.mxu0
    %v3133 = vpop.f32.mrf.mxu0
    %3134 = vdwg.mxu0
    %3135 = vmatprep.subr.bf16.mxu0 0
    %3136 = vmatpush1.bf16.msra.mxu0 0
    %3137 = vmatprep.subr.bf16.mxu0 0
    %3138 = vmatpush1.bf16.msra.mxu0 0
    %3139 = vmatprep.subr.bf16.mxu0 0
    %3140 = vmatpush1.bf16.msra.mxu0 0
    %3141 = vmatprep.subr.bf16.mxu0 0
    %3142 = vmatpush1.bf16.msra.mxu0 0
    %3143 = vmatprep.subr.bf16.mxu0 0
    %3144 = vmatpush1.bf16.msra.mxu0 0
    %3145 = vmatprep.subr.bf16.mxu0 0
    %3146 = vmatpush1.bf16.msra.mxu0 0
    %3147 = vmatprep.subr.bf16.mxu0 0
    %3148 = vmatpush1.bf16.msra.mxu0 0
    %3149 = vmatprep.subr.bf16.mxu0 %v3080
    %3150 = vmatpush1.bf16.msra.mxu0 %v3077
    %3151 = vmatprep.subr.bf16.mxu0 0
    %3152 = vmatpush2.bf16.msra.mxu0 0
    %3153 = vmatprep.subr.bf16.mxu0 0
    %3154 = vmatpush2.bf16.msra.mxu0 0
    %3155 = vmatprep.subr.bf16.mxu0 0
    %3156 = vmatpush2.bf16.msra.mxu0 0
    %3157 = vmatprep.subr.bf16.mxu0 0
    %3158 = vmatpush2.bf16.msra.mxu0 0
    %3159 = vmatprep.subr.bf16.mxu0 0
    %3160 = vmatpush2.bf16.msra.mxu0 0
    %3161 = vmatprep.subr.bf16.mxu0 0
    %3162 = vmatpush2.bf16.msra.mxu0 0
    %3163 = vmatprep.subr.bf16.mxu0 0
    %3164 = vmatpush2.bf16.msra.mxu0 0
    %3165 = vmatprep.subr.bf16.mxu0 0
    %3166 = vmatpush2.bf16.msra.mxu0 0
    %3167 = vmatprep.mubr.bf16.mxu0 0
    %3168 = vmatmul.mubr.bf16.gmra.mxu0 %v3068
    %v3169 = vpop.f32.mrf.mxu0
    %v3170 = vadd.f32 0.0, %v3169
    %v3171 = vpop.f32.mrf.mxu0
    %v3172 = vadd.f32 0.0, %v3171
    %v3173 = vpop.f32.mrf.mxu0
    %v3174 = vpop.f32.mrf.mxu0
    %3175 = vdwg.mxu0
    %3176 = vmatprep.subr.bf16.mxu0 0
    %3177 = vmatpush1.bf16.msra.mxu0 0
    %3178 = vmatprep.subr.bf16.mxu0 0
    %3179 = vmatpush1.bf16.msra.mxu0 0
    %3180 = vmatprep.subr.bf16.mxu0 0
    %3181 = vmatpush1.bf16.msra.mxu0 0
    %3182 = vmatprep.subr.bf16.mxu0 0
    %3183 = vmatpush1.bf16.msra.mxu0 0
    %3184 = vmatprep.subr.bf16.mxu0 0
    %3185 = vmatpush1.bf16.msra.mxu0 0
    %3186 = vmatprep.subr.bf16.mxu0 0
    %3187 = vmatpush1.bf16.msra.mxu0 0
    %3188 = vmatprep.subr.bf16.mxu0 0
    %3189 = vmatpush1.bf16.msra.mxu0 0
    %3190 = vmatprep.subr.bf16.mxu0 %v3086
    %3191 = vmatpush1.bf16.msra.mxu0 %v3083
    %3192 = vmatprep.subr.bf16.mxu0 0
    %3193 = vmatpush2.bf16.msra.mxu0 0
    %3194 = vmatprep.subr.bf16.mxu0 0
    %3195 = vmatpush2.bf16.msra.mxu0 0
    %3196 = vmatprep.subr.bf16.mxu0 0
    %3197 = vmatpush2.bf16.msra.mxu0 0
    %3198 = vmatprep.subr.bf16.mxu0 0
    %3199 = vmatpush2.bf16.msra.mxu0 0
    %3200 = vmatprep.subr.bf16.mxu0 0
    %3201 = vmatpush2.bf16.msra.mxu0 0
    %3202 = vmatprep.subr.bf16.mxu0 0
    %3203 = vmatpush2.bf16.msra.mxu0 0
    %3204 = vmatprep.subr.bf16.mxu0 0
    %3205 = vmatpush2.bf16.msra.mxu0 0
    %3206 = vmatprep.subr.bf16.mxu0 0
    %3207 = vmatpush2.bf16.msra.mxu0 0
    %3208 = vmatprep.mubr.bf16.mxu0 0
    %3209 = vmatmul.mubr.bf16.gmra.mxu0 %v3068
    %v3210 = vpop.f32.mrf.mxu0
    %v3211 = vadd.f32 0.0, %v3210
    %v3212 = vpop.f32.mrf.mxu0
    %v3213 = vadd.f32 0.0, %v3212
    %v3214 = vpop.f32.mrf.mxu0
    %v3215 = vpop.f32.mrf.mxu0
    %3216 = vdwg.mxu0
    %3217 = vmatprep.subr.bf16.mxu0 0
    %3218 = vmatpush1.bf16.msra.mxu0 0
    %3219 = vmatprep.subr.bf16.mxu0 0
    %3220 = vmatpush1.bf16.msra.mxu0 0
    %3221 = vmatprep.subr.bf16.mxu0 0
    %3222 = vmatpush1.bf16.msra.mxu0 0
    %3223 = vmatprep.subr.bf16.mxu0 0
    %3224 = vmatpush1.bf16.msra.mxu0 0
    %3225 = vmatprep.subr.bf16.mxu0 0
    %3226 = vmatpush1.bf16.msra.mxu0 0
    %3227 = vmatprep.subr.bf16.mxu0 0
    %3228 = vmatpush1.bf16.msra.mxu0 0
    %3229 = vmatprep.subr.bf16.mxu0 0
    %3230 = vmatpush1.bf16.msra.mxu0 0
    %3231 = vmatprep.subr.bf16.mxu0 %v3092
    %3232 = vmatpush1.bf16.msra.mxu0 %v3089
    %3233 = vmatprep.subr.bf16.mxu0 0
    %3234 = vmatpush2.bf16.msra.mxu0 0
    %3235 = vmatprep.subr.bf16.mxu0 0
    %3236 = vmatpush2.bf16.msra.mxu0 0
    %3237 = vmatprep.subr.bf16.mxu0 0
    %3238 = vmatpush2.bf16.msra.mxu0 0
    %3239 = vmatprep.subr.bf16.mxu0 0
    %3240 = vmatpush2.bf16.msra.mxu0 0
    %3241 = vmatprep.subr.bf16.mxu0 0
    %3242 = vmatpush2.bf16.msra.mxu0 0
    %3243 = vmatprep.subr.bf16.mxu0 0
    %3244 = vmatpush2.bf16.msra.mxu0 0
    %3245 = vmatprep.subr.bf16.mxu0 0
    %3246 = vmatpush2.bf16.msra.mxu0 0
    %3247 = vmatprep.subr.bf16.mxu0 0
    %3248 = vmatpush2.bf16.msra.mxu0 0
    %3249 = vmatprep.mubr.bf16.mxu0 0
    %3250 = vmatmul.mubr.bf16.gmra.mxu0 %v3068
    %v3251 = vpop.f32.mrf.mxu0
    %v3252 = vadd.f32 0.0, %v3251
    %v3253 = vpop.f32.mrf.mxu0
    %v3254 = vadd.f32 0.0, %v3253
    %v3255 = vpop.f32.mrf.mxu0
    %v3256 = vpop.f32.mrf.mxu0
    %3257 = vdwg.mxu0
    %v3258 = vadd.f32 %v2879, %v3129
    %v3259 = vadd.f32 %v2880, %v3131
    %v3260 = vadd.f32 %v2881, %v3170
    %v3261 = vadd.f32 %v2882, %v3172
    %v3262 = vadd.f32 %v2883, %v3211
    %v3263 = vadd.f32 %v2884, %v3213
    %v3264 = vadd.f32 %v2885, %v3252
    %v3265 = vadd.f32 %v2886, %v3254
    %v3266 = vld [vmem:[%s5] sm:$0xff]
    %3268 = vset.pattern.permute.xlu0 0
    %3269 = vperm.xlu0 %3268, %v3266
    %v3270 = vpop.permute.xlu0 %3269
    %v3272 = vadd.f32 %v3258, %v3270
    %v3273 = vadd.f32 %v3259, %v3270
    %v3274 = vadd.f32 %v3260, %v3270
    %v3275 = vadd.f32 %v3261, %v3270
    %v3276 = vadd.f32 %v3262, %v3270
    %v3277 = vadd.f32 %v3263, %v3270
    %v3278 = vadd.f32 %v3264, %v3270
    %v3279 = vadd.f32 %v3265, %v3270
    %v3280 = vmax.f32 %v3272, 0.0
    %v3281 = vmax.f32 %v3273, 0.0
    %v3282 = vmax.f32 %v3274, 0.0
    %v3283 = vmax.f32 %v3275, 0.0
    %v3284 = vmax.f32 %v3276, 0.0
    %v3285 = vmax.f32 %v3277, 0.0
    %v3286 = vmax.f32 %v3278, 0.0
    %v3287 = vmax.f32 %v3279, 0.0
    %v3288 = vpack.c.bf16 %v3280, %v3280
    %v3289 = vpack.c.bf16 %v3281, %v3281
    %v3290 = vpack.c.bf16 %v3282, %v3282
    %v3291 = vpack.c.bf16 %v3283, %v3283
    %v3292 = vpack.c.bf16 %v3284, %v3284
    %v3293 = vpack.c.bf16 %v3285, %v3285
    %v3294 = vpack.c.bf16 %v3286, %v3286
    %v3295 = vpack.c.bf16 %v3287, %v3287
    %v3296 = vsub.f32 %v3280, %v3284
    %v3297 = vsub.f32 %v3281, %v3285
    %v3298 = vsub.f32 %v3282, %v3286
    %v3299 = vsub.f32 %v3283, %v3287
    %v3300 = vand.u32 2147483647, %v3296
    %v3301 = vand.u32 2147483647, %v3297
    %v3302 = vand.u32 2147483647, %v3298
    %v3303 = vand.u32 2147483647, %v3299
    %v3304 = vadd.f32 %v3300, %v3301
    %v3305 = vadd.f32 %v3304, %v3302
    %v3306 = vadd.f32 %v3305, %v3303
    %3307 = vadd.xlane.f32.xlu0 %v3306
    %v3308 = vpop.xlane.xlu0 %3307
    %v3309 = vrot.slane %v3308, 4
    %v3310 = vadd.f32 %v3308, %v3309
    %v3311 = vrot.slane %v3310, 2
    %v3312 = vadd.f32 %v3310, %v3311
    %v3313 = vrot.slane %v3312, 1
    %v3314 = vadd.f32 %v3312, %v3313
    %s3315 = vtos %v3314
    %v3316 = vstv %s3315
    %v3317 = vmul.f32 %v3316, 0.00024414063
    %3318 = vst.msk [vmem:[#allocation6] sm:$0x1] %vm67, %v3317
    %3319 = vmatprep.subr.bf16.mxu0 0
    %3320 = vmatpush1.bf16.xpose.msra.mxu0 0
    %3321 = vmatprep.subr.bf16.mxu0 0
    %3322 = vmatpush1.bf16.xpose.msra.mxu0 0
    %3323 = vmatprep.subr.bf16.mxu0 0
    %3324 = vmatpush1.bf16.xpose.msra.mxu0 0
    %3325 = vmatprep.subr.bf16.mxu0 0
    %3326 = vmatpush1.bf16.xpose.msra.mxu0 0
    %3327 = vmatprep.subr.bf16.mxu0 0
    %3328 = vmatpush1.bf16.xpose.msra.mxu0 0
    %3329 = vmatprep.subr.bf16.mxu0 0
    %3330 = vmatpush1.bf16.xpose.msra.mxu0 0
    %3331 = vmatprep.subr.bf16.mxu0 0
    %3332 = vmatpush1.bf16.xpose.msra.mxu0 0
    %3333 = vmatprep.subr.bf16.mxu0 %v3289
    %3334 = vmatpush1.bf16.xpose.msra.mxu0 %v3288
    %3335 = vmatprep.subr.bf16.mxu0 0
    %3336 = vmatpush2.bf16.xpose.msra.mxu0 0
    %3337 = vmatprep.subr.bf16.mxu0 0
    %3338 = vmatpush2.bf16.xpose.msra.mxu0 0
    %3339 = vmatprep.subr.bf16.mxu0 0
    %3340 = vmatpush2.bf16.xpose.msra.mxu0 0
    %3341 = vmatprep.subr.bf16.mxu0 0
    %3342 = vmatpush2.bf16.xpose.msra.mxu0 0
    %3343 = vmatprep.subr.bf16.mxu0 0
    %3344 = vmatpush2.bf16.xpose.msra.mxu0 0
    %3345 = vmatprep.subr.bf16.mxu0 0
    %3346 = vmatpush2.bf16.xpose.msra.mxu0 0
    %3347 = vmatprep.subr.bf16.mxu0 0
    %3348 = vmatpush2.bf16.xpose.msra.mxu0 0
    %3349 = vmatprep.subr.bf16.mxu0 0
    %3350 = vmatpush2.bf16.xpose.msra.mxu0 0
    %3351 = vmatprep.mubr.bf16.mxu0 %v3289
    %3352 = vmatmul.mubr.bf16.gmra.mxu0 %v3288
    %v3353 = vpop.f32.mrf.mxu0
    %v3354 = vadd.f32 0.0, %v3353
    %v3355 = vpop.f32.mrf.mxu0
    %v3356 = vpop.f32.mrf.mxu0
    %v3357 = vpop.f32.mrf.mxu0
    %3358 = vdwg.mxu0
    %3359 = vmatprep.subr.bf16.mxu0 0
    %3360 = vmatpush1.bf16.xpose.msra.mxu0 0
    %3361 = vmatprep.subr.bf16.mxu0 0
    %3362 = vmatpush1.bf16.xpose.msra.mxu0 0
    %3363 = vmatprep.subr.bf16.mxu0 0
    %3364 = vmatpush1.bf16.xpose.msra.mxu0 0
    %3365 = vmatprep.subr.bf16.mxu0 0
    %3366 = vmatpush1.bf16.xpose.msra.mxu0 0
    %3367 = vmatprep.subr.bf16.mxu0 0
    %3368 = vmatpush1.bf16.xpose.msra.mxu0 0
    %3369 = vmatprep.subr.bf16.mxu0 0
    %3370 = vmatpush1.bf16.xpose.msra.mxu0 0
    %3371 = vmatprep.subr.bf16.mxu0 0
    %3372 = vmatpush1.bf16.xpose.msra.mxu0 0
    %3373 = vmatprep.subr.bf16.mxu0 %v3293
    %3374 = vmatpush1.bf16.xpose.msra.mxu0 %v3292
    %3375 = vmatprep.subr.bf16.mxu0 0
    %3376 = vmatpush2.bf16.xpose.msra.mxu0 0
    %3377 = vmatprep.subr.bf16.mxu0 0
    %3378 = vmatpush2.bf16.xpose.msra.mxu0 0
    %3379 = vmatprep.subr.bf16.mxu0 0
    %3380 = vmatpush2.bf16.xpose.msra.mxu0 0
    %3381 = vmatprep.subr.bf16.mxu0 0
    %3382 = vmatpush2.bf16.xpose.msra.mxu0 0
    %3383 = vmatprep.subr.bf16.mxu0 0
    %3384 = vmatpush2.bf16.xpose.msra.mxu0 0
    %3385 = vmatprep.subr.bf16.mxu0 0
    %3386 = vmatpush2.bf16.xpose.msra.mxu0 0
    %3387 = vmatprep.subr.bf16.mxu0 0
    %3388 = vmatpush2.bf16.xpose.msra.mxu0 0
    %3389 = vmatprep.subr.bf16.mxu0 0
    %3390 = vmatpush2.bf16.xpose.msra.mxu0 0
    %3391 = vmatprep.mubr.bf16.mxu0 %v3293
    %3392 = vmatmul.mubr.bf16.gmra.mxu0 %v3292
    %v3393 = vpop.f32.mrf.mxu0
    %v3394 = vadd.f32 0.0, %v3393
    %v3395 = vpop.f32.mrf.mxu0
    %v3396 = vpop.f32.mrf.mxu0
    %v3397 = vpop.f32.mrf.mxu0
    %3398 = vdwg.mxu0
    %v3399 = vsub.f32 %v3354, %v3394
    %v3400 = vand.u32 2147483647, %v3399
    %v3401 = vsel %vm364, %v3400, 0.0
    %3402 = vadd.xlane.f32.xlu0 %v3401
    %v3403 = vpop.xlane.xlu0 %3402
    %v3404 = vrot.slane %v3403, 4
    %v3405 = vadd.f32 %v3403, %v3404
    %v3406 = vrot.slane %v3405, 2
    %v3407 = vadd.f32 %v3405, %v3406
    %v3408 = vrot.slane %v3407, 1
    %v3409 = vadd.f32 %v3407, %v3408
    %s3410 = vtos %v3409
    %v3411 = vstv %s3410
    %v3412 = vadd.f32 %v3411, 0.0
    %3413 = vmatprep.subr.bf16.mxu0 0
    %3414 = vmatpush1.bf16.xpose.msra.mxu0 0
    %3415 = vmatprep.subr.bf16.mxu0 0
    %3416 = vmatpush1.bf16.xpose.msra.mxu0 0
    %3417 = vmatprep.subr.bf16.mxu0 0
    %3418 = vmatpush1.bf16.xpose.msra.mxu0 0
    %3419 = vmatprep.subr.bf16.mxu0 0
    %3420 = vmatpush1.bf16.xpose.msra.mxu0 0
    %3421 = vmatprep.subr.bf16.mxu0 0
    %3422 = vmatpush1.bf16.xpose.msra.mxu0 0
    %3423 = vmatprep.subr.bf16.mxu0 0
    %3424 = vmatpush1.bf16.xpose.msra.mxu0 0
    %3425 = vmatprep.subr.bf16.mxu0 0
    %3426 = vmatpush1.bf16.xpose.msra.mxu0 0
    %3427 = vmatprep.subr.bf16.mxu0 %v3291
    %3428 = vmatpush1.bf16.xpose.msra.mxu0 %v3290
    %3429 = vmatprep.subr.bf16.mxu0 0
    %3430 = vmatpush2.bf16.xpose.msra.mxu0 0
    %3431 = vmatprep.subr.bf16.mxu0 0
    %3432 = vmatpush2.bf16.xpose.msra.mxu0 0
    %3433 = vmatprep.subr.bf16.mxu0 0
    %3434 = vmatpush2.bf16.xpose.msra.mxu0 0
    %3435 = vmatprep.subr.bf16.mxu0 0
    %3436 = vmatpush2.bf16.xpose.msra.mxu0 0
    %3437 = vmatprep.subr.bf16.mxu0 0
    %3438 = vmatpush2.bf16.xpose.msra.mxu0 0
    %3439 = vmatprep.subr.bf16.mxu0 0
    %3440 = vmatpush2.bf16.xpose.msra.mxu0 0
    %3441 = vmatprep.subr.bf16.mxu0 0
    %3442 = vmatpush2.bf16.xpose.msra.mxu0 0
    %3443 = vmatprep.subr.bf16.mxu0 0
    %3444 = vmatpush2.bf16.xpose.msra.mxu0 0
    %3445 = vmatprep.mubr.bf16.mxu0 %v3291
    %3446 = vmatmul.mubr.bf16.gmra.mxu0 %v3290
    %v3447 = vpop.f32.mrf.mxu0
    %v3448 = vadd.f32 0.0, %v3447
    %v3449 = vpop.f32.mrf.mxu0
    %v3450 = vpop.f32.mrf.mxu0
    %v3451 = vpop.f32.mrf.mxu0
    %3452 = vdwg.mxu0
    %3453 = vmatprep.subr.bf16.mxu0 0
    %3454 = vmatpush1.bf16.xpose.msra.mxu0 0
    %3455 = vmatprep.subr.bf16.mxu0 0
    %3456 = vmatpush1.bf16.xpose.msra.mxu0 0
    %3457 = vmatprep.subr.bf16.mxu0 0
    %3458 = vmatpush1.bf16.xpose.msra.mxu0 0
    %3459 = vmatprep.subr.bf16.mxu0 0
    %3460 = vmatpush1.bf16.xpose.msra.mxu0 0
    %3461 = vmatprep.subr.bf16.mxu0 0
    %3462 = vmatpush1.bf16.xpose.msra.mxu0 0
    %3463 = vmatprep.subr.bf16.mxu0 0
    %3464 = vmatpush1.bf16.xpose.msra.mxu0 0
    %3465 = vmatprep.subr.bf16.mxu0 0
    %3466 = vmatpush1.bf16.xpose.msra.mxu0 0
    %3467 = vmatprep.subr.bf16.mxu0 %v3295
    %3468 = vmatpush1.bf16.xpose.msra.mxu0 %v3294
    %3469 = vmatprep.subr.bf16.mxu0 0
    %3470 = vmatpush2.bf16.xpose.msra.mxu0 0
    %3471 = vmatprep.subr.bf16.mxu0 0
    %3472 = vmatpush2.bf16.xpose.msra.mxu0 0
    %3473 = vmatprep.subr.bf16.mxu0 0
    %3474 = vmatpush2.bf16.xpose.msra.mxu0 0
    %3475 = vmatprep.subr.bf16.mxu0 0
    %3476 = vmatpush2.bf16.xpose.msra.mxu0 0
    %3477 = vmatprep.subr.bf16.mxu0 0
    %3478 = vmatpush2.bf16.xpose.msra.mxu0 0
    %3479 = vmatprep.subr.bf16.mxu0 0
    %3480 = vmatpush2.bf16.xpose.msra.mxu0 0
    %3481 = vmatprep.subr.bf16.mxu0 0
    %3482 = vmatpush2.bf16.xpose.msra.mxu0 0
    %3483 = vmatprep.subr.bf16.mxu0 0
    %3484 = vmatpush2.bf16.xpose.msra.mxu0 0
    %3485 = vmatprep.mubr.bf16.mxu0 %v3295
    %3486 = vmatmul.mubr.bf16.gmra.mxu0 %v3294
    %v3487 = vpop.f32.mrf.mxu0
    %v3488 = vadd.f32 0.0, %v3487
    %v3489 = vpop.f32.mrf.mxu0
    %v3490 = vpop.f32.mrf.mxu0
    %v3491 = vpop.f32.mrf.mxu0
    %3492 = vdwg.mxu0
    %v3493 = vsub.f32 %v3448, %v3488
    %v3494 = vand.u32 2147483647, %v3493
    %v3495 = vsel %vm364, %v3494, 0.0
    %3496 = vadd.xlane.f32.xlu0 %v3495
    %v3497 = vpop.xlane.xlu0 %3496
    %v3498 = vrot.slane %v3497, 4
    %v3499 = vadd.f32 %v3497, %v3498
    %v3500 = vrot.slane %v3499, 2
    %v3501 = vadd.f32 %v3499, %v3500
    %v3502 = vrot.slane %v3501, 1
    %v3503 = vadd.f32 %v3501, %v3502
    %s3504 = vtos %v3503
    %v3505 = vstv %s3504
    %v3506 = vadd.f32 %v3412, %v3505
    %v3507 = vmul.f32 %v3506, 3.8146973e-06
    %3508 = vst.msk [vmem:[#allocation11] sm:$0x1] %vm67, %v3507
    %3509 = vst [vmem:[#allocation2] sm:$0xf] 0
    %3510 = vst [vmem:[#allocation2 + $0x24] sm:$0xf] 0
    %v3519 = vunpack.c.l.b16 %v3288
    %v3520 = vunpack.c.l.b16 %v3289
    %v3521 = vunpack.c.l.b16 %v3290
    %v3522 = vunpack.c.l.b16 %v3291
    %v3523 = vunpack.c.l.b16 %v3292
    %v3524 = vunpack.c.l.b16 %v3293
    %v3525 = vunpack.c.l.b16 %v3294
    %v3526 = vunpack.c.l.b16 %v3295
    %v3527 = vpack.c.b16 %v3520, %v3519
    %v3528 = vpack.c.b16 %v3522, %v3521
    %v3529 = vpack.c.b16 %v3524, %v3523
    %v3530 = vpack.c.b16 %v3526, %v3525
    %3535 = vst [vmem:[#allocation2 + $0x4] sm:$0xff] %v3527
    %3536 = vst [vmem:[#allocation2 + $0xc] sm:$0xff] %v3528
    %3537 = vst [vmem:[#allocation2 + $0x14] sm:$0xff] %v3529
    %3538 = vst [vmem:[#allocation2 + $0x1c] sm:$0xff] %v3530
    %v3539 = vld [vmem:[#allocation2] sm:$0xff]
    %v3540 = vld [vmem:[#allocation2 + $0x8] sm:$0xff]
    %v3541 = vld [vmem:[#allocation2 + $0x10] sm:$0xff]
    %v3542 = vld [vmem:[#allocation2 + $0x18] sm:$0xff]
    %v3543 = vld [vmem:[#allocation2 + $0x20] sm:$0xf]
    %v3544 = vld [vmem:[%s1] sm:$0x11]
    %v3545 = vld [vmem:[%s1 + $0x8] sm:$0x11]
    %v3546 = vld [vmem:[%s1 + $0x10] sm:$0x11]
    %v3547 = vld [vmem:[%s1 + $0x18] sm:$0x11]
    %v3552 = vunpack.c.l.b16 %v3544
    %v3553 = vunpack.c.h.b16 %v3544
    %v3554 = vunpack.c.l.b16 %v3545
    %v3555 = vunpack.c.h.b16 %v3545
    %v3556 = vunpack.c.l.b16 %v3546
    %v3557 = vunpack.c.h.b16 %v3546
    %v3558 = vunpack.c.l.b16 %v3547
    %v3559 = vunpack.c.h.b16 %v3547
    %v3560 = vpack.c.b16 %v3552, %v3552
    %v3561 = vpack.c.b16 %v3553, %v3553
    %v3562 = vpack.c.b16 %v3554, %v3554
    %v3563 = vpack.c.b16 %v3555, %v3555
    %v3564 = vpack.c.b16 %v3556, %v3556
    %v3565 = vpack.c.b16 %v3557, %v3557
    %v3566 = vpack.c.b16 %v3558, %v3558
    %v3567 = vpack.c.b16 %v3559, %v3559
    %v3569 = vpack.i.b16 %v3560, %v3560
    %v3571 = vlaneseq
    %v3572 = vshrl.u32 %v3571, 7
    %v3573 = vsub.s32 0, %v3572
    %v3574 = vrot.slane %v3569, %v3573
    %v3576 = vpack.i.b16 %v3561, %v3561
    %v3578 = vlaneseq
    %v3579 = vshrl.u32 %v3578, 7
    %v3580 = vsub.s32 0, %v3579
    %v3581 = vrot.slane %v3576, %v3580
    %v3583 = vpack.i.b16 %v3562, %v3562
    %v3585 = vlaneseq
    %v3586 = vshrl.u32 %v3585, 7
    %v3587 = vsub.s32 0, %v3586
    %v3588 = vrot.slane %v3583, %v3587
    %v3590 = vpack.i.b16 %v3563, %v3563
    %v3592 = vlaneseq
    %v3593 = vshrl.u32 %v3592, 7
    %v3594 = vsub.s32 0, %v3593
    %v3595 = vrot.slane %v3590, %v3594
    %v3597 = vpack.i.b16 %v3564, %v3564
    %v3599 = vlaneseq
    %v3600 = vshrl.u32 %v3599, 7
    %v3601 = vsub.s32 0, %v3600
    %v3602 = vrot.slane %v3597, %v3601
    %v3604 = vpack.i.b16 %v3565, %v3565
    %v3606 = vlaneseq
    %v3607 = vshrl.u32 %v3606, 7
    %v3608 = vsub.s32 0, %v3607
    %v3609 = vrot.slane %v3604, %v3608
    %v3611 = vpack.i.b16 %v3566, %v3566
    %v3613 = vlaneseq
    %v3614 = vshrl.u32 %v3613, 7
    %v3615 = vsub.s32 0, %v3614
    %v3616 = vrot.slane %v3611, %v3615
    %v3618 = vpack.i.b16 %v3567, %v3567
    %v3620 = vlaneseq
    %v3621 = vshrl.u32 %v3620, 7
    %v3622 = vsub.s32 0, %v3621
    %v3623 = vrot.slane %v3618, %v3622
    %v3632 = vunpack.c.l.b16 %v3574
    %v3633 = vunpack.c.l.b16 %v3581
    %v3634 = vunpack.c.l.b16 %v3588
    %v3635 = vunpack.c.l.b16 %v3595
    %v3636 = vunpack.c.l.b16 %v3602
    %v3637 = vunpack.c.l.b16 %v3609
    %v3638 = vunpack.c.l.b16 %v3616
    %v3639 = vunpack.c.l.b16 %v3623
    %v3640 = vpack.c.b16 %v3633, %v3632
    %v3641 = vpack.c.b16 %v3635, %v3634
    %v3642 = vpack.c.b16 %v3637, %v3636
    %v3643 = vpack.c.b16 %v3639, %v3638
    %3644 = vrot.lane.b32.xlu0 %v3640, 111
    %v3645 = vpop.permute.xlu0 %3644
    %3646 = vrot.lane.b32.xlu0 %v3641, 111
    %v3647 = vpop.permute.xlu0 %3646
    %3648 = vrot.lane.b32.xlu0 %v3642, 111
    %v3649 = vpop.permute.xlu0 %3648
    %3650 = vrot.lane.b32.xlu0 %v3643, 111
    %v3651 = vpop.permute.xlu0 %3650
    %v3652 = vrot.slane %v3645, 4
    %v3653 = vrot.slane %v3647, 4
    %v3654 = vrot.slane %v3649, 4
    %v3655 = vrot.slane %v3651, 4
    %v3656 = vsel %vm186, %v3652, %v3645
    %v3657 = vsel %vm188, %v3652, %v3653
    %v3658 = vsel %vm186, %v3657, %v3647
    %v3659 = vsel %vm188, %v3653, %v3654
    %v3660 = vsel %vm186, %v3659, %v3649
    %v3661 = vsel %vm188, %v3654, %v3655
    %v3662 = vsel %vm186, %v3661, %v3651
    %v3668 = vmul.bf16 %v3539, %v3656
    %v3669 = vmul.bf16 %v3540, %v3658
    %v3670 = vmul.bf16 %v3541, %v3660
    %v3671 = vmul.bf16 %v3542, %v3662
    %v3672 = vmul.bf16 %v3543, %v3655
    %v3673 = vld [vmem:[%s6] sm:$0xf]
    %v3674 = vld [vmem:[%s6 + $0x4] sm:$0xf]
    %v3675 = vshrl.u32 %v3560, 16
    %v3676 = vpack.i.b16 %v3675, %v3675
    %v3678 = vlaneseq
    %v3679 = vshrl.u32 %v3678, 7
    %v3680 = vsub.s32 0, %v3679
    %v3681 = vrot.slane %v3676, %v3680
    %v3682 = vshrl.u32 %v3561, 16
    %v3683 = vpack.i.b16 %v3682, %v3682
    %v3685 = vlaneseq
    %v3686 = vshrl.u32 %v3685, 7
    %v3687 = vsub.s32 0, %v3686
    %v3688 = vrot.slane %v3683, %v3687
    %v3689 = vshrl.u32 %v3562, 16
    %v3690 = vpack.i.b16 %v3689, %v3689
    %v3692 = vlaneseq
    %v3693 = vshrl.u32 %v3692, 7
    %v3694 = vsub.s32 0, %v3693
    %v3695 = vrot.slane %v3690, %v3694
    %v3696 = vshrl.u32 %v3563, 16
    %v3697 = vpack.i.b16 %v3696, %v3696
    %v3699 = vlaneseq
    %v3700 = vshrl.u32 %v3699, 7
    %v3701 = vsub.s32 0, %v3700
    %v3702 = vrot.slane %v3697, %v3701
    %v3703 = vshrl.u32 %v3564, 16
    %v3704 = vpack.i.b16 %v3703, %v3703
    %v3706 = vlaneseq
    %v3707 = vshrl.u32 %v3706, 7
    %v3708 = vsub.s32 0, %v3707
    %v3709 = vrot.slane %v3704, %v3708
    %v3710 = vshrl.u32 %v3565, 16
    %v3711 = vpack.i.b16 %v3710, %v3710
    %v3713 = vlaneseq
    %v3714 = vshrl.u32 %v3713, 7
    %v3715 = vsub.s32 0, %v3714
    %v3716 = vrot.slane %v3711, %v3715
    %v3717 = vshrl.u32 %v3566, 16
    %v3718 = vpack.i.b16 %v3717, %v3717
    %v3720 = vlaneseq
    %v3721 = vshrl.u32 %v3720, 7
    %v3722 = vsub.s32 0, %v3721
    %v3723 = vrot.slane %v3718, %v3722
    %v3724 = vshrl.u32 %v3567, 16
    %v3725 = vpack.i.b16 %v3724, %v3724
    %v3727 = vlaneseq
    %v3728 = vshrl.u32 %v3727, 7
    %v3729 = vsub.s32 0, %v3728
    %v3730 = vrot.slane %v3725, %v3729
    %v3739 = vunpack.c.l.b16 %v3681
    %v3740 = vunpack.c.l.b16 %v3688
    %v3741 = vunpack.c.l.b16 %v3695
    %v3742 = vunpack.c.l.b16 %v3702
    %v3743 = vunpack.c.l.b16 %v3709
    %v3744 = vunpack.c.l.b16 %v3716
    %v3745 = vunpack.c.l.b16 %v3723
    %v3746 = vunpack.c.l.b16 %v3730
    %v3747 = vpack.c.b16 %v3740, %v3739
    %v3748 = vpack.c.b16 %v3742, %v3741
    %v3749 = vpack.c.b16 %v3744, %v3743
    %v3750 = vpack.c.b16 %v3746, %v3745
    %3751 = vrot.lane.b32.xlu0 %v3747, 112
    %v3752 = vpop.permute.xlu0 %3751
    %3753 = vrot.lane.b32.xlu0 %v3748, 112
    %v3754 = vpop.permute.xlu0 %3753
    %3755 = vrot.lane.b32.xlu0 %v3749, 112
    %v3756 = vpop.permute.xlu0 %3755
    %3757 = vrot.lane.b32.xlu0 %v3750, 112
    %v3758 = vpop.permute.xlu0 %3757
    %v3759 = vrot.slane %v3752, 4
    %v3760 = vrot.slane %v3754, 4
    %v3761 = vrot.slane %v3756, 4
    %v3762 = vrot.slane %v3758, 4
    %v3763 = vsel %vm294, %v3759, %v3752
    %v3764 = vsel %vm188, %v3759, %v3760
    %v3765 = vsel %vm294, %v3764, %v3754
    %v3766 = vsel %vm188, %v3760, %v3761
    %v3767 = vsel %vm294, %v3766, %v3756
    %v3768 = vsel %vm188, %v3761, %v3762
    %v3769 = vsel %vm294, %v3768, %v3758
    %v3775 = vmul.bf16 %v3539, %v3763
    %v3776 = vmul.bf16 %v3540, %v3765
    %v3777 = vmul.bf16 %v3541, %v3767
    %v3778 = vmul.bf16 %v3542, %v3769
    %v3779 = vmul.bf16 %v3543, %v3762
    %s3780 = scalar_lea.vmem %s6, 8
    %v3781 = vld [vmem:[%s3780] sm:$0xf]
    %v3782 = vld [vmem:[%s3780 + $0x4] sm:$0xf]
    %v3785 = vunpack.c.l.b16 %v3781
    %v3786 = vunpack.c.l.b16 %v3782
    %v3787 = vpack.c.b16 %v3786, %v3785
    %v3793 = vunpack.c.l.b16 %v3775
    %v3794 = vunpack.c.h.b16 %v3775
    %v3795 = vunpack.c.l.b16 %v3776
    %v3796 = vunpack.c.h.b16 %v3776
    %v3797 = vunpack.c.l.b16 %v3777
    %v3798 = vunpack.c.h.b16 %v3777
    %v3799 = vunpack.c.l.b16 %v3778
    %v3800 = vunpack.c.h.b16 %v3778
    %v3801 = vunpack.c.l.b16 %v3779
    %v3802 = vpack.c.b16 %v3793, %v3793
    %v3803 = vpack.c.b16 %v3794, %v3794
    %v3804 = vpack.c.b16 %v3795, %v3795
    %v3805 = vpack.c.b16 %v3796, %v3796
    %v3806 = vpack.c.b16 %v3797, %v3797
    %v3807 = vpack.c.b16 %v3798, %v3798
    %v3808 = vpack.c.b16 %v3799, %v3799
    %v3809 = vpack.c.b16 %v3800, %v3800
    %v3810 = vpack.c.b16 %v3801, %v3801
    %3811 = vrot.lane.b32.xlu0 %v3802, 16
    %v3812 = vpop.permute.xlu0 %3811
    %3813 = vrot.lane.b32.xlu0 %v3803, 16
    %v3814 = vpop.permute.xlu0 %3813
    %3815 = vrot.lane.b32.xlu0 %v3804, 16
    %v3816 = vpop.permute.xlu0 %3815
    %3817 = vrot.lane.b32.xlu0 %v3805, 16
    %v3818 = vpop.permute.xlu0 %3817
    %3819 = vrot.lane.b32.xlu0 %v3806, 16
    %v3820 = vpop.permute.xlu0 %3819
    %3821 = vrot.lane.b32.xlu0 %v3807, 16
    %v3822 = vpop.permute.xlu0 %3821
    %3823 = vrot.lane.b32.xlu0 %v3808, 16
    %v3824 = vpop.permute.xlu0 %3823
    %3825 = vrot.lane.b32.xlu0 %v3809, 16
    %v3826 = vpop.permute.xlu0 %3825
    %3827 = vrot.lane.b32.xlu0 %v3810, 16
    %v3828 = vpop.permute.xlu0 %3827
    %v3829 = vsel %vm355, %v3812, %v3814
    %v3830 = vsel %vm355, %v3814, %v3816
    %v3831 = vsel %vm355, %v3816, %v3818
    %v3832 = vsel %vm355, %v3818, %v3820
    %v3833 = vsel %vm355, %v3820, %v3822
    %v3834 = vsel %vm355, %v3822, %v3824
    %v3835 = vsel %vm355, %v3824, %v3826
    %v3836 = vsel %vm355, %v3826, %v3828
    %v3838 = vsel %vm364, %v3787, 0
    %v3841 = vsel %vm368, %v3829, 0
    %v3844 = vsel %vm368, %v3830, 0
    %v3847 = vsel %vm368, %v3831, 0
    %v3850 = vsel %vm368, %v3832, 0
    %v3853 = vsel %vm368, %v3833, 0
    %v3856 = vsel %vm368, %v3834, 0
    %v3859 = vsel %vm368, %v3835, 0
    %v3862 = vsel %vm368, %v3836, 0
    %3864 = vmatprep.subr.bf16.mxu0 0
    %3865 = vmatpush1.bf16.msra.mxu0 0
    %3866 = vmatprep.subr.bf16.mxu0 0
    %3867 = vmatpush1.bf16.msra.mxu0 0
    %3868 = vmatprep.subr.bf16.mxu0 0
    %3869 = vmatpush1.bf16.msra.mxu0 0
    %3870 = vmatprep.subr.bf16.mxu0 0
    %3871 = vmatpush1.bf16.msra.mxu0 0
    %3872 = vmatprep.subr.bf16.mxu0 0
    %3873 = vmatpush1.bf16.msra.mxu0 0
    %3874 = vmatprep.subr.bf16.mxu0 0
    %3875 = vmatpush1.bf16.msra.mxu0 0
    %3876 = vmatprep.subr.bf16.mxu0 0
    %3877 = vmatpush1.bf16.msra.mxu0 0
    %3878 = vmatprep.subr.bf16.mxu0 %v3844
    %3879 = vmatpush1.bf16.msra.mxu0 %v3841
    %3880 = vmatprep.subr.bf16.mxu0 0
    %3881 = vmatpush2.bf16.msra.mxu0 0
    %3882 = vmatprep.subr.bf16.mxu0 0
    %3883 = vmatpush2.bf16.msra.mxu0 0
    %3884 = vmatprep.subr.bf16.mxu0 0
    %3885 = vmatpush2.bf16.msra.mxu0 0
    %3886 = vmatprep.subr.bf16.mxu0 0
    %3887 = vmatpush2.bf16.msra.mxu0 0
    %3888 = vmatprep.subr.bf16.mxu0 0
    %3889 = vmatpush2.bf16.msra.mxu0 0
    %3890 = vmatprep.subr.bf16.mxu0 0
    %3891 = vmatpush2.bf16.msra.mxu0 0
    %3892 = vmatprep.subr.bf16.mxu0 0
    %3893 = vmatpush2.bf16.msra.mxu0 0
    %3894 = vmatprep.subr.bf16.mxu0 0
    %3895 = vmatpush2.bf16.msra.mxu0 0
    %3896 = vmatprep.mubr.bf16.mxu0 0
    %3897 = vmatmul.mubr.bf16.gmra.mxu0 %v3838
    %v3898 = vpop.f32.mrf.mxu0
    %v3899 = vadd.f32 0.0, %v3898
    %v3900 = vpop.f32.mrf.mxu0
    %v3901 = vadd.f32 0.0, %v3900
    %v3902 = vpop.f32.mrf.mxu0
    %v3903 = vadd.f32 0.0, %v3902
    %v3904 = vpop.f32.mrf.mxu0
    %v3905 = vadd.f32 0.0, %v3904
    %3906 = vdwg.mxu0
    %3907 = vmatprep.subr.bf16.mxu0 0
    %3908 = vmatpush1.bf16.msra.mxu0 0
    %3909 = vmatprep.subr.bf16.mxu0 0
    %3910 = vmatpush1.bf16.msra.mxu0 0
    %3911 = vmatprep.subr.bf16.mxu0 0
    %3912 = vmatpush1.bf16.msra.mxu0 0
    %3913 = vmatprep.subr.bf16.mxu0 0
    %3914 = vmatpush1.bf16.msra.mxu0 0
    %3915 = vmatprep.subr.bf16.mxu0 0
    %3916 = vmatpush1.bf16.msra.mxu0 0
    %3917 = vmatprep.subr.bf16.mxu0 0
    %3918 = vmatpush1.bf16.msra.mxu0 0
    %3919 = vmatprep.subr.bf16.mxu0 0
    %3920 = vmatpush1.bf16.msra.mxu0 0
    %3921 = vmatprep.subr.bf16.mxu0 %v3850
    %3922 = vmatpush1.bf16.msra.mxu0 %v3847
    %3923 = vmatprep.subr.bf16.mxu0 0
    %3924 = vmatpush2.bf16.msra.mxu0 0
    %3925 = vmatprep.subr.bf16.mxu0 0
    %3926 = vmatpush2.bf16.msra.mxu0 0
    %3927 = vmatprep.subr.bf16.mxu0 0
    %3928 = vmatpush2.bf16.msra.mxu0 0
    %3929 = vmatprep.subr.bf16.mxu0 0
    %3930 = vmatpush2.bf16.msra.mxu0 0
    %3931 = vmatprep.subr.bf16.mxu0 0
    %3932 = vmatpush2.bf16.msra.mxu0 0
    %3933 = vmatprep.subr.bf16.mxu0 0
    %3934 = vmatpush2.bf16.msra.mxu0 0
    %3935 = vmatprep.subr.bf16.mxu0 0
    %3936 = vmatpush2.bf16.msra.mxu0 0
    %3937 = vmatprep.subr.bf16.mxu0 0
    %3938 = vmatpush2.bf16.msra.mxu0 0
    %3939 = vmatprep.mubr.bf16.mxu0 0
    %3940 = vmatmul.mubr.bf16.gmra.mxu0 %v3838
    %v3941 = vpop.f32.mrf.mxu0
    %v3942 = vadd.f32 0.0, %v3941
    %v3943 = vpop.f32.mrf.mxu0
    %v3944 = vadd.f32 0.0, %v3943
    %v3945 = vpop.f32.mrf.mxu0
    %v3946 = vadd.f32 0.0, %v3945
    %v3947 = vpop.f32.mrf.mxu0
    %v3948 = vadd.f32 0.0, %v3947
    %3949 = vdwg.mxu0
    %3950 = vmatprep.subr.bf16.mxu0 0
    %3951 = vmatpush1.bf16.msra.mxu0 0
    %3952 = vmatprep.subr.bf16.mxu0 0
    %3953 = vmatpush1.bf16.msra.mxu0 0
    %3954 = vmatprep.subr.bf16.mxu0 0
    %3955 = vmatpush1.bf16.msra.mxu0 0
    %3956 = vmatprep.subr.bf16.mxu0 0
    %3957 = vmatpush1.bf16.msra.mxu0 0
    %3958 = vmatprep.subr.bf16.mxu0 0
    %3959 = vmatpush1.bf16.msra.mxu0 0
    %3960 = vmatprep.subr.bf16.mxu0 0
    %3961 = vmatpush1.bf16.msra.mxu0 0
    %3962 = vmatprep.subr.bf16.mxu0 0
    %3963 = vmatpush1.bf16.msra.mxu0 0
    %3964 = vmatprep.subr.bf16.mxu0 %v3856
    %3965 = vmatpush1.bf16.msra.mxu0 %v3853
    %3966 = vmatprep.subr.bf16.mxu0 0
    %3967 = vmatpush2.bf16.msra.mxu0 0
    %3968 = vmatprep.subr.bf16.mxu0 0
    %3969 = vmatpush2.bf16.msra.mxu0 0
    %3970 = vmatprep.subr.bf16.mxu0 0
    %3971 = vmatpush2.bf16.msra.mxu0 0
    %3972 = vmatprep.subr.bf16.mxu0 0
    %3973 = vmatpush2.bf16.msra.mxu0 0
    %3974 = vmatprep.subr.bf16.mxu0 0
    %3975 = vmatpush2.bf16.msra.mxu0 0
    %3976 = vmatprep.subr.bf16.mxu0 0
    %3977 = vmatpush2.bf16.msra.mxu0 0
    %3978 = vmatprep.subr.bf16.mxu0 0
    %3979 = vmatpush2.bf16.msra.mxu0 0
    %3980 = vmatprep.subr.bf16.mxu0 0
    %3981 = vmatpush2.bf16.msra.mxu0 0
    %3982 = vmatprep.mubr.bf16.mxu0 0
    %3983 = vmatmul.mubr.bf16.gmra.mxu0 %v3838
    %v3984 = vpop.f32.mrf.mxu0
    %v3985 = vadd.f32 0.0, %v3984
    %v3986 = vpop.f32.mrf.mxu0
    %v3987 = vadd.f32 0.0, %v3986
    %v3988 = vpop.f32.mrf.mxu0
    %v3989 = vadd.f32 0.0, %v3988
    %v3990 = vpop.f32.mrf.mxu0
    %v3991 = vadd.f32 0.0, %v3990
    %3992 = vdwg.mxu0
    %3993 = vmatprep.subr.bf16.mxu0 0
    %3994 = vmatpush1.bf16.msra.mxu0 0
    %3995 = vmatprep.subr.bf16.mxu0 0
    %3996 = vmatpush1.bf16.msra.mxu0 0
    %3997 = vmatprep.subr.bf16.mxu0 0
    %3998 = vmatpush1.bf16.msra.mxu0 0
    %3999 = vmatprep.subr.bf16.mxu0 0
    %4000 = vmatpush1.bf16.msra.mxu0 0
    %4001 = vmatprep.subr.bf16.mxu0 0
    %4002 = vmatpush1.bf16.msra.mxu0 0
    %4003 = vmatprep.subr.bf16.mxu0 0
    %4004 = vmatpush1.bf16.msra.mxu0 0
    %4005 = vmatprep.subr.bf16.mxu0 0
    %4006 = vmatpush1.bf16.msra.mxu0 0
    %4007 = vmatprep.subr.bf16.mxu0 %v3862
    %4008 = vmatpush1.bf16.msra.mxu0 %v3859
    %4009 = vmatprep.subr.bf16.mxu0 0
    %4010 = vmatpush2.bf16.msra.mxu0 0
    %4011 = vmatprep.subr.bf16.mxu0 0
    %4012 = vmatpush2.bf16.msra.mxu0 0
    %4013 = vmatprep.subr.bf16.mxu0 0
    %4014 = vmatpush2.bf16.msra.mxu0 0
    %4015 = vmatprep.subr.bf16.mxu0 0
    %4016 = vmatpush2.bf16.msra.mxu0 0
    %4017 = vmatprep.subr.bf16.mxu0 0
    %4018 = vmatpush2.bf16.msra.mxu0 0
    %4019 = vmatprep.subr.bf16.mxu0 0
    %4020 = vmatpush2.bf16.msra.mxu0 0
    %4021 = vmatprep.subr.bf16.mxu0 0
    %4022 = vmatpush2.bf16.msra.mxu0 0
    %4023 = vmatprep.subr.bf16.mxu0 0
    %4024 = vmatpush2.bf16.msra.mxu0 0
    %4025 = vmatprep.mubr.bf16.mxu0 0
    %4026 = vmatmul.mubr.bf16.gmra.mxu0 %v3838
    %v4027 = vpop.f32.mrf.mxu0
    %v4028 = vadd.f32 0.0, %v4027
    %v4029 = vpop.f32.mrf.mxu0
    %v4030 = vadd.f32 0.0, %v4029
    %v4031 = vpop.f32.mrf.mxu0
    %v4032 = vadd.f32 0.0, %v4031
    %v4033 = vpop.f32.mrf.mxu0
    %v4034 = vadd.f32 0.0, %v4033
    %4035 = vdwg.mxu0
    %v4038 = vunpack.c.l.b16 %v3673
    %v4039 = vunpack.c.l.b16 %v3674
    %v4040 = vpack.c.b16 %v4039, %v4038
    %v4046 = vunpack.c.l.b16 %v3668
    %v4047 = vunpack.c.h.b16 %v3668
    %v4048 = vunpack.c.l.b16 %v3669
    %v4049 = vunpack.c.h.b16 %v3669
    %v4050 = vunpack.c.l.b16 %v3670
    %v4051 = vunpack.c.h.b16 %v3670
    %v4052 = vunpack.c.l.b16 %v3671
    %v4053 = vunpack.c.h.b16 %v3671
    %v4054 = vunpack.c.l.b16 %v3672
    %v4055 = vpack.c.b16 %v4046, %v4046
    %v4056 = vpack.c.b16 %v4047, %v4047
    %v4057 = vpack.c.b16 %v4048, %v4048
    %v4058 = vpack.c.b16 %v4049, %v4049
    %v4059 = vpack.c.b16 %v4050, %v4050
    %v4060 = vpack.c.b16 %v4051, %v4051
    %v4061 = vpack.c.b16 %v4052, %v4052
    %v4062 = vpack.c.b16 %v4053, %v4053
    %v4063 = vpack.c.b16 %v4054, %v4054
    %4064 = vrot.lane.b32.xlu0 %v4055, 17
    %v4065 = vpop.permute.xlu0 %4064
    %4066 = vrot.lane.b32.xlu0 %v4056, 17
    %v4067 = vpop.permute.xlu0 %4066
    %4068 = vrot.lane.b32.xlu0 %v4057, 17
    %v4069 = vpop.permute.xlu0 %4068
    %4070 = vrot.lane.b32.xlu0 %v4058, 17
    %v4071 = vpop.permute.xlu0 %4070
    %4072 = vrot.lane.b32.xlu0 %v4059, 17
    %v4073 = vpop.permute.xlu0 %4072
    %4074 = vrot.lane.b32.xlu0 %v4060, 17
    %v4075 = vpop.permute.xlu0 %4074
    %4076 = vrot.lane.b32.xlu0 %v4061, 17
    %v4077 = vpop.permute.xlu0 %4076
    %4078 = vrot.lane.b32.xlu0 %v4062, 17
    %v4079 = vpop.permute.xlu0 %4078
    %4080 = vrot.lane.b32.xlu0 %v4063, 17
    %v4081 = vpop.permute.xlu0 %4080
    %v4082 = vsel %vm598, %v4065, %v4067
    %v4083 = vsel %vm598, %v4067, %v4069
    %v4084 = vsel %vm598, %v4069, %v4071
    %v4085 = vsel %vm598, %v4071, %v4073
    %v4086 = vsel %vm598, %v4073, %v4075
    %v4087 = vsel %vm598, %v4075, %v4077
    %v4088 = vsel %vm598, %v4077, %v4079
    %v4089 = vsel %vm598, %v4079, %v4081
    %v4091 = vsel %vm364, %v4040, 0
    %v4094 = vsel %vm368, %v4082, 0
    %v4097 = vsel %vm368, %v4083, 0
    %v4100 = vsel %vm368, %v4084, 0
    %v4103 = vsel %vm368, %v4085, 0
    %v4106 = vsel %vm368, %v4086, 0
    %v4109 = vsel %vm368, %v4087, 0
    %v4112 = vsel %vm368, %v4088, 0
    %v4115 = vsel %vm368, %v4089, 0
    %4117 = vmatprep.subr.bf16.mxu0 0
    %4118 = vmatpush1.bf16.msra.mxu0 0
    %4119 = vmatprep.subr.bf16.mxu0 0
    %4120 = vmatpush1.bf16.msra.mxu0 0
    %4121 = vmatprep.subr.bf16.mxu0 0
    %4122 = vmatpush1.bf16.msra.mxu0 0
    %4123 = vmatprep.subr.bf16.mxu0 0
    %4124 = vmatpush1.bf16.msra.mxu0 0
    %4125 = vmatprep.subr.bf16.mxu0 0
    %4126 = vmatpush1.bf16.msra.mxu0 0
    %4127 = vmatprep.subr.bf16.mxu0 0
    %4128 = vmatpush1.bf16.msra.mxu0 0
    %4129 = vmatprep.subr.bf16.mxu0 0
    %4130 = vmatpush1.bf16.msra.mxu0 0
    %4131 = vmatprep.subr.bf16.mxu0 %v4097
    %4132 = vmatpush1.bf16.msra.mxu0 %v4094
    %4133 = vmatprep.subr.bf16.mxu0 0
    %4134 = vmatpush2.bf16.msra.mxu0 0
    %4135 = vmatprep.subr.bf16.mxu0 0
    %4136 = vmatpush2.bf16.msra.mxu0 0
    %4137 = vmatprep.subr.bf16.mxu0 0
    %4138 = vmatpush2.bf16.msra.mxu0 0
    %4139 = vmatprep.subr.bf16.mxu0 0
    %4140 = vmatpush2.bf16.msra.mxu0 0
    %4141 = vmatprep.subr.bf16.mxu0 0
    %4142 = vmatpush2.bf16.msra.mxu0 0
    %4143 = vmatprep.subr.bf16.mxu0 0
    %4144 = vmatpush2.bf16.msra.mxu0 0
    %4145 = vmatprep.subr.bf16.mxu0 0
    %4146 = vmatpush2.bf16.msra.mxu0 0
    %4147 = vmatprep.subr.bf16.mxu0 0
    %4148 = vmatpush2.bf16.msra.mxu0 0
    %4149 = vmatprep.mubr.bf16.mxu0 0
    %4150 = vmatmul.mubr.bf16.gmra.mxu0 %v4091
    %v4151 = vpop.f32.mrf.mxu0
    %v4152 = vadd.f32 %v3899, %v4151
    %v4153 = vpop.f32.mrf.mxu0
    %v4154 = vadd.f32 %v3901, %v4153
    %v4155 = vpop.f32.mrf.mxu0
    %v4156 = vadd.f32 %v3903, %v4155
    %v4157 = vpop.f32.mrf.mxu0
    %v4158 = vadd.f32 %v3905, %v4157
    %4159 = vdwg.mxu0
    %4160 = vmatprep.subr.bf16.mxu0 0
    %4161 = vmatpush1.bf16.msra.mxu0 0
    %4162 = vmatprep.subr.bf16.mxu0 0
    %4163 = vmatpush1.bf16.msra.mxu0 0
    %4164 = vmatprep.subr.bf16.mxu0 0
    %4165 = vmatpush1.bf16.msra.mxu0 0
    %4166 = vmatprep.subr.bf16.mxu0 0
    %4167 = vmatpush1.bf16.msra.mxu0 0
    %4168 = vmatprep.subr.bf16.mxu0 0
    %4169 = vmatpush1.bf16.msra.mxu0 0
    %4170 = vmatprep.subr.bf16.mxu0 0
    %4171 = vmatpush1.bf16.msra.mxu0 0
    %4172 = vmatprep.subr.bf16.mxu0 0
    %4173 = vmatpush1.bf16.msra.mxu0 0
    %4174 = vmatprep.subr.bf16.mxu0 %v4103
    %4175 = vmatpush1.bf16.msra.mxu0 %v4100
    %4176 = vmatprep.subr.bf16.mxu0 0
    %4177 = vmatpush2.bf16.msra.mxu0 0
    %4178 = vmatprep.subr.bf16.mxu0 0
    %4179 = vmatpush2.bf16.msra.mxu0 0
    %4180 = vmatprep.subr.bf16.mxu0 0
    %4181 = vmatpush2.bf16.msra.mxu0 0
    %4182 = vmatprep.subr.bf16.mxu0 0
    %4183 = vmatpush2.bf16.msra.mxu0 0
    %4184 = vmatprep.subr.bf16.mxu0 0
    %4185 = vmatpush2.bf16.msra.mxu0 0
    %4186 = vmatprep.subr.bf16.mxu0 0
    %4187 = vmatpush2.bf16.msra.mxu0 0
    %4188 = vmatprep.subr.bf16.mxu0 0
    %4189 = vmatpush2.bf16.msra.mxu0 0
    %4190 = vmatprep.subr.bf16.mxu0 0
    %4191 = vmatpush2.bf16.msra.mxu0 0
    %4192 = vmatprep.mubr.bf16.mxu0 0
    %4193 = vmatmul.mubr.bf16.gmra.mxu0 %v4091
    %v4194 = vpop.f32.mrf.mxu0
    %v4195 = vadd.f32 %v3942, %v4194
    %v4196 = vpop.f32.mrf.mxu0
    %v4197 = vadd.f32 %v3944, %v4196
    %v4198 = vpop.f32.mrf.mxu0
    %v4199 = vadd.f32 %v3946, %v4198
    %v4200 = vpop.f32.mrf.mxu0
    %v4201 = vadd.f32 %v3948, %v4200
    %4202 = vdwg.mxu0
    %4203 = vmatprep.subr.bf16.mxu0 0
    %4204 = vmatpush1.bf16.msra.mxu0 0
    %4205 = vmatprep.subr.bf16.mxu0 0
    %4206 = vmatpush1.bf16.msra.mxu0 0
    %4207 = vmatprep.subr.bf16.mxu0 0
    %4208 = vmatpush1.bf16.msra.mxu0 0
    %4209 = vmatprep.subr.bf16.mxu0 0
    %4210 = vmatpush1.bf16.msra.mxu0 0
    %4211 = vmatprep.subr.bf16.mxu0 0
    %4212 = vmatpush1.bf16.msra.mxu0 0
    %4213 = vmatprep.subr.bf16.mxu0 0
    %4214 = vmatpush1.bf16.msra.mxu0 0
    %4215 = vmatprep.subr.bf16.mxu0 0
    %4216 = vmatpush1.bf16.msra.mxu0 0
    %4217 = vmatprep.subr.bf16.mxu0 %v4109
    %4218 = vmatpush1.bf16.msra.mxu0 %v4106
    %4219 = vmatprep.subr.bf16.mxu0 0
    %4220 = vmatpush2.bf16.msra.mxu0 0
    %4221 = vmatprep.subr.bf16.mxu0 0
    %4222 = vmatpush2.bf16.msra.mxu0 0
    %4223 = vmatprep.subr.bf16.mxu0 0
    %4224 = vmatpush2.bf16.msra.mxu0 0
    %4225 = vmatprep.subr.bf16.mxu0 0
    %4226 = vmatpush2.bf16.msra.mxu0 0
    %4227 = vmatprep.subr.bf16.mxu0 0
    %4228 = vmatpush2.bf16.msra.mxu0 0
    %4229 = vmatprep.subr.bf16.mxu0 0
    %4230 = vmatpush2.bf16.msra.mxu0 0
    %4231 = vmatprep.subr.bf16.mxu0 0
    %4232 = vmatpush2.bf16.msra.mxu0 0
    %4233 = vmatprep.subr.bf16.mxu0 0
    %4234 = vmatpush2.bf16.msra.mxu0 0
    %4235 = vmatprep.mubr.bf16.mxu0 0
    %4236 = vmatmul.mubr.bf16.gmra.mxu0 %v4091
    %v4237 = vpop.f32.mrf.mxu0
    %v4238 = vadd.f32 %v3985, %v4237
    %v4239 = vpop.f32.mrf.mxu0
    %v4240 = vadd.f32 %v3987, %v4239
    %v4241 = vpop.f32.mrf.mxu0
    %v4242 = vadd.f32 %v3989, %v4241
    %v4243 = vpop.f32.mrf.mxu0
    %v4244 = vadd.f32 %v3991, %v4243
    %4245 = vdwg.mxu0
    %4246 = vmatprep.subr.bf16.mxu0 0
    %4247 = vmatpush1.bf16.msra.mxu0 0
    %4248 = vmatprep.subr.bf16.mxu0 0
    %4249 = vmatpush1.bf16.msra.mxu0 0
    %4250 = vmatprep.subr.bf16.mxu0 0
    %4251 = vmatpush1.bf16.msra.mxu0 0
    %4252 = vmatprep.subr.bf16.mxu0 0
    %4253 = vmatpush1.bf16.msra.mxu0 0
    %4254 = vmatprep.subr.bf16.mxu0 0
    %4255 = vmatpush1.bf16.msra.mxu0 0
    %4256 = vmatprep.subr.bf16.mxu0 0
    %4257 = vmatpush1.bf16.msra.mxu0 0
    %4258 = vmatprep.subr.bf16.mxu0 0
    %4259 = vmatpush1.bf16.msra.mxu0 0
    %4260 = vmatprep.subr.bf16.mxu0 %v4115
    %4261 = vmatpush1.bf16.msra.mxu0 %v4112
    %4262 = vmatprep.subr.bf16.mxu0 0
    %4263 = vmatpush2.bf16.msra.mxu0 0
    %4264 = vmatprep.subr.bf16.mxu0 0
    %4265 = vmatpush2.bf16.msra.mxu0 0
    %4266 = vmatprep.subr.bf16.mxu0 0
    %4267 = vmatpush2.bf16.msra.mxu0 0
    %4268 = vmatprep.subr.bf16.mxu0 0
    %4269 = vmatpush2.bf16.msra.mxu0 0
    %4270 = vmatprep.subr.bf16.mxu0 0
    %4271 = vmatpush2.bf16.msra.mxu0 0
    %4272 = vmatprep.subr.bf16.mxu0 0
    %4273 = vmatpush2.bf16.msra.mxu0 0
    %4274 = vmatprep.subr.bf16.mxu0 0
    %4275 = vmatpush2.bf16.msra.mxu0 0
    %4276 = vmatprep.subr.bf16.mxu0 0
    %4277 = vmatpush2.bf16.msra.mxu0 0
    %4278 = vmatprep.mubr.bf16.mxu0 0
    %4279 = vmatmul.mubr.bf16.gmra.mxu0 %v4091
    %v4280 = vpop.f32.mrf.mxu0
    %v4281 = vadd.f32 %v4028, %v4280
    %v4282 = vpop.f32.mrf.mxu0
    %v4283 = vadd.f32 %v4030, %v4282
    %v4284 = vpop.f32.mrf.mxu0
    %v4285 = vadd.f32 %v4032, %v4284
    %v4286 = vpop.f32.mrf.mxu0
    %v4287 = vadd.f32 %v4034, %v4286
    %4288 = vdwg.mxu0
    %v4289 = vld [vmem:[%s1] sm:$0x22]
    %v4290 = vld [vmem:[%s1 + $0x8] sm:$0x22]
    %v4291 = vld [vmem:[%s1 + $0x10] sm:$0x22]
    %v4292 = vld [vmem:[%s1 + $0x18] sm:$0x22]
    %v4297 = vunpack.c.l.b16 %v4289
    %v4298 = vunpack.c.h.b16 %v4289
    %v4299 = vunpack.c.l.b16 %v4290
    %v4300 = vunpack.c.h.b16 %v4290
    %v4301 = vunpack.c.l.b16 %v4291
    %v4302 = vunpack.c.h.b16 %v4291
    %v4303 = vunpack.c.l.b16 %v4292
    %v4304 = vunpack.c.h.b16 %v4292
    %v4305 = vpack.c.b16 %v4297, %v4297
    %v4306 = vpack.c.b16 %v4298, %v4298
    %v4307 = vpack.c.b16 %v4299, %v4299
    %v4308 = vpack.c.b16 %v4300, %v4300
    %v4309 = vpack.c.b16 %v4301, %v4301
    %v4310 = vpack.c.b16 %v4302, %v4302
    %v4311 = vpack.c.b16 %v4303, %v4303
    %v4312 = vpack.c.b16 %v4304, %v4304
    %v4314 = vpack.i.b16 %v4305, %v4305
    %v4316 = vlaneseq
    %v4317 = vshrl.u32 %v4316, 7
    %v4318 = vsub.s32 1, %v4317
    %v4319 = vrot.slane %v4314, %v4318
    %v4321 = vpack.i.b16 %v4306, %v4306
    %v4323 = vlaneseq
    %v4324 = vshrl.u32 %v4323, 7
    %v4325 = vsub.s32 1, %v4324
    %v4326 = vrot.slane %v4321, %v4325
    %v4328 = vpack.i.b16 %v4307, %v4307
    %v4330 = vlaneseq
    %v4331 = vshrl.u32 %v4330, 7
    %v4332 = vsub.s32 1, %v4331
    %v4333 = vrot.slane %v4328, %v4332
    %v4335 = vpack.i.b16 %v4308, %v4308
    %v4337 = vlaneseq
    %v4338 = vshrl.u32 %v4337, 7
    %v4339 = vsub.s32 1, %v4338
    %v4340 = vrot.slane %v4335, %v4339
    %v4342 = vpack.i.b16 %v4309, %v4309
    %v4344 = vlaneseq
    %v4345 = vshrl.u32 %v4344, 7
    %v4346 = vsub.s32 1, %v4345
    %v4347 = vrot.slane %v4342, %v4346
    %v4349 = vpack.i.b16 %v4310, %v4310
    %v4351 = vlaneseq
    %v4352 = vshrl.u32 %v4351, 7
    %v4353 = vsub.s32 1, %v4352
    %v4354 = vrot.slane %v4349, %v4353
    %v4356 = vpack.i.b16 %v4311, %v4311
    %v4358 = vlaneseq
    %v4359 = vshrl.u32 %v4358, 7
    %v4360 = vsub.s32 1, %v4359
    %v4361 = vrot.slane %v4356, %v4360
    %v4363 = vpack.i.b16 %v4312, %v4312
    %v4365 = vlaneseq
    %v4366 = vshrl.u32 %v4365, 7
    %v4367 = vsub.s32 1, %v4366
    %v4368 = vrot.slane %v4363, %v4367
    %v4377 = vunpack.c.l.b16 %v4319
    %v4378 = vunpack.c.l.b16 %v4326
    %v4379 = vunpack.c.l.b16 %v4333
    %v4380 = vunpack.c.l.b16 %v4340
    %v4381 = vunpack.c.l.b16 %v4347
    %v4382 = vunpack.c.l.b16 %v4354
    %v4383 = vunpack.c.l.b16 %v4361
    %v4384 = vunpack.c.l.b16 %v4368
    %v4385 = vpack.c.b16 %v4378, %v4377
    %v4386 = vpack.c.b16 %v4380, %v4379
    %v4387 = vpack.c.b16 %v4382, %v4381
    %v4388 = vpack.c.b16 %v4384, %v4383
    %4389 = vrot.lane.b32.xlu0 %v4385, 113
    %v4390 = vpop.permute.xlu0 %4389
    %4391 = vrot.lane.b32.xlu0 %v4386, 113
    %v4392 = vpop.permute.xlu0 %4391
    %4393 = vrot.lane.b32.xlu0 %v4387, 113
    %v4394 = vpop.permute.xlu0 %4393
    %4395 = vrot.lane.b32.xlu0 %v4388, 113
    %v4396 = vpop.permute.xlu0 %4395
    %v4397 = vrot.slane %v4390, 4
    %v4398 = vrot.slane %v4392, 4
    %v4399 = vrot.slane %v4394, 4
    %v4400 = vrot.slane %v4396, 4
    %v4401 = vsel %vm910, %v4397, %v4390
    %v4402 = vsel %vm188, %v4397, %v4398
    %v4403 = vsel %vm910, %v4402, %v4392
    %v4404 = vsel %vm188, %v4398, %v4399
    %v4405 = vsel %vm910, %v4404, %v4394
    %v4406 = vsel %vm188, %v4399, %v4400
    %v4407 = vsel %vm910, %v4406, %v4396
    %v4413 = vmul.bf16 %v3539, %v4401
    %v4414 = vmul.bf16 %v3540, %v4403
    %v4415 = vmul.bf16 %v3541, %v4405
    %v4416 = vmul.bf16 %v3542, %v4407
    %v4417 = vmul.bf16 %v3543, %v4400
    %s4418 = scalar_lea.vmem %s6, 16
    %v4419 = vld [vmem:[%s4418] sm:$0xf]
    %v4420 = vld [vmem:[%s4418 + $0x4] sm:$0xf]
    %v4423 = vunpack.c.l.b16 %v4419
    %v4424 = vunpack.c.l.b16 %v4420
    %v4425 = vpack.c.b16 %v4424, %v4423
    %v4431 = vunpack.c.l.b16 %v4413
    %v4432 = vunpack.c.h.b16 %v4413
    %v4433 = vunpack.c.l.b16 %v4414
    %v4434 = vunpack.c.h.b16 %v4414
    %v4435 = vunpack.c.l.b16 %v4415
    %v4436 = vunpack.c.h.b16 %v4415
    %v4437 = vunpack.c.l.b16 %v4416
    %v4438 = vunpack.c.h.b16 %v4416
    %v4439 = vunpack.c.l.b16 %v4417
    %v4440 = vpack.c.b16 %v4431, %v4431
    %v4441 = vpack.c.b16 %v4432, %v4432
    %v4442 = vpack.c.b16 %v4433, %v4433
    %v4443 = vpack.c.b16 %v4434, %v4434
    %v4444 = vpack.c.b16 %v4435, %v4435
    %v4445 = vpack.c.b16 %v4436, %v4436
    %v4446 = vpack.c.b16 %v4437, %v4437
    %v4447 = vpack.c.b16 %v4438, %v4438
    %v4448 = vpack.c.b16 %v4439, %v4439
    %4449 = vrot.lane.b32.xlu0 %v4440, 15
    %v4450 = vpop.permute.xlu0 %4449
    %4451 = vrot.lane.b32.xlu0 %v4441, 15
    %v4452 = vpop.permute.xlu0 %4451
    %4453 = vrot.lane.b32.xlu0 %v4442, 15
    %v4454 = vpop.permute.xlu0 %4453
    %4455 = vrot.lane.b32.xlu0 %v4443, 15
    %v4456 = vpop.permute.xlu0 %4455
    %4457 = vrot.lane.b32.xlu0 %v4444, 15
    %v4458 = vpop.permute.xlu0 %4457
    %4459 = vrot.lane.b32.xlu0 %v4445, 15
    %v4460 = vpop.permute.xlu0 %4459
    %4461 = vrot.lane.b32.xlu0 %v4446, 15
    %v4462 = vpop.permute.xlu0 %4461
    %4463 = vrot.lane.b32.xlu0 %v4447, 15
    %v4464 = vpop.permute.xlu0 %4463
    %4465 = vrot.lane.b32.xlu0 %v4448, 15
    %v4466 = vpop.permute.xlu0 %4465
    %v4467 = vsel %vm971, %v4450, %v4452
    %v4468 = vsel %vm971, %v4452, %v4454
    %v4469 = vsel %vm971, %v4454, %v4456
    %v4470 = vsel %vm971, %v4456, %v4458
    %v4471 = vsel %vm971, %v4458, %v4460
    %v4472 = vsel %vm971, %v4460, %v4462
    %v4473 = vsel %vm971, %v4462, %v4464
    %v4474 = vsel %vm971, %v4464, %v4466
    %v4476 = vsel %vm364, %v4425, 0
    %v4479 = vsel %vm368, %v4467, 0
    %v4482 = vsel %vm368, %v4468, 0
    %v4485 = vsel %vm368, %v4469, 0
    %v4488 = vsel %vm368, %v4470, 0
    %v4491 = vsel %vm368, %v4471, 0
    %v4494 = vsel %vm368, %v4472, 0
    %v4497 = vsel %vm368, %v4473, 0
    %v4500 = vsel %vm368, %v4474, 0
    %4502 = vmatprep.subr.bf16.mxu0 0
    %4503 = vmatpush1.bf16.msra.mxu0 0
    %4504 = vmatprep.subr.bf16.mxu0 0
    %4505 = vmatpush1.bf16.msra.mxu0 0
    %4506 = vmatprep.subr.bf16.mxu0 0
    %4507 = vmatpush1.bf16.msra.mxu0 0
    %4508 = vmatprep.subr.bf16.mxu0 0
    %4509 = vmatpush1.bf16.msra.mxu0 0
    %4510 = vmatprep.subr.bf16.mxu0 0
    %4511 = vmatpush1.bf16.msra.mxu0 0
    %4512 = vmatprep.subr.bf16.mxu0 0
    %4513 = vmatpush1.bf16.msra.mxu0 0
    %4514 = vmatprep.subr.bf16.mxu0 0
    %4515 = vmatpush1.bf16.msra.mxu0 0
    %4516 = vmatprep.subr.bf16.mxu0 %v4482
    %4517 = vmatpush1.bf16.msra.mxu0 %v4479
    %4518 = vmatprep.subr.bf16.mxu0 0
    %4519 = vmatpush2.bf16.msra.mxu0 0
    %4520 = vmatprep.subr.bf16.mxu0 0
    %4521 = vmatpush2.bf16.msra.mxu0 0
    %4522 = vmatprep.subr.bf16.mxu0 0
    %4523 = vmatpush2.bf16.msra.mxu0 0
    %4524 = vmatprep.subr.bf16.mxu0 0
    %4525 = vmatpush2.bf16.msra.mxu0 0
    %4526 = vmatprep.subr.bf16.mxu0 0
    %4527 = vmatpush2.bf16.msra.mxu0 0
    %4528 = vmatprep.subr.bf16.mxu0 0
    %4529 = vmatpush2.bf16.msra.mxu0 0
    %4530 = vmatprep.subr.bf16.mxu0 0
    %4531 = vmatpush2.bf16.msra.mxu0 0
    %4532 = vmatprep.subr.bf16.mxu0 0
    %4533 = vmatpush2.bf16.msra.mxu0 0
    %4534 = vmatprep.mubr.bf16.mxu0 0
    %4535 = vmatmul.mubr.bf16.gmra.mxu0 %v4476
    %v4536 = vpop.f32.mrf.mxu0
    %v4537 = vadd.f32 0.0, %v4536
    %v4538 = vpop.f32.mrf.mxu0
    %v4539 = vadd.f32 0.0, %v4538
    %v4540 = vpop.f32.mrf.mxu0
    %v4541 = vadd.f32 0.0, %v4540
    %v4542 = vpop.f32.mrf.mxu0
    %v4543 = vadd.f32 0.0, %v4542
    %4544 = vdwg.mxu0
    %4545 = vmatprep.subr.bf16.mxu0 0
    %4546 = vmatpush1.bf16.msra.mxu0 0
    %4547 = vmatprep.subr.bf16.mxu0 0
    %4548 = vmatpush1.bf16.msra.mxu0 0
    %4549 = vmatprep.subr.bf16.mxu0 0
    %4550 = vmatpush1.bf16.msra.mxu0 0
    %4551 = vmatprep.subr.bf16.mxu0 0
    %4552 = vmatpush1.bf16.msra.mxu0 0
    %4553 = vmatprep.subr.bf16.mxu0 0
    %4554 = vmatpush1.bf16.msra.mxu0 0
    %4555 = vmatprep.subr.bf16.mxu0 0
    %4556 = vmatpush1.bf16.msra.mxu0 0
    %4557 = vmatprep.subr.bf16.mxu0 0
    %4558 = vmatpush1.bf16.msra.mxu0 0
    %4559 = vmatprep.subr.bf16.mxu0 %v4488
    %4560 = vmatpush1.bf16.msra.mxu0 %v4485
    %4561 = vmatprep.subr.bf16.mxu0 0
    %4562 = vmatpush2.bf16.msra.mxu0 0
    %4563 = vmatprep.subr.bf16.mxu0 0
    %4564 = vmatpush2.bf16.msra.mxu0 0
    %4565 = vmatprep.subr.bf16.mxu0 0
    %4566 = vmatpush2.bf16.msra.mxu0 0
    %4567 = vmatprep.subr.bf16.mxu0 0
    %4568 = vmatpush2.bf16.msra.mxu0 0
    %4569 = vmatprep.subr.bf16.mxu0 0
    %4570 = vmatpush2.bf16.msra.mxu0 0
    %4571 = vmatprep.subr.bf16.mxu0 0
    %4572 = vmatpush2.bf16.msra.mxu0 0
    %4573 = vmatprep.subr.bf16.mxu0 0
    %4574 = vmatpush2.bf16.msra.mxu0 0
    %4575 = vmatprep.subr.bf16.mxu0 0
    %4576 = vmatpush2.bf16.msra.mxu0 0
    %4577 = vmatprep.mubr.bf16.mxu0 0
    %4578 = vmatmul.mubr.bf16.gmra.mxu0 %v4476
    %v4579 = vpop.f32.mrf.mxu0
    %v4580 = vadd.f32 0.0, %v4579
    %v4581 = vpop.f32.mrf.mxu0
    %v4582 = vadd.f32 0.0, %v4581
    %v4583 = vpop.f32.mrf.mxu0
    %v4584 = vadd.f32 0.0, %v4583
    %v4585 = vpop.f32.mrf.mxu0
    %v4586 = vadd.f32 0.0, %v4585
    %4587 = vdwg.mxu0
    %4588 = vmatprep.subr.bf16.mxu0 0
    %4589 = vmatpush1.bf16.msra.mxu0 0
    %4590 = vmatprep.subr.bf16.mxu0 0
    %4591 = vmatpush1.bf16.msra.mxu0 0
    %4592 = vmatprep.subr.bf16.mxu0 0
    %4593 = vmatpush1.bf16.msra.mxu0 0
    %4594 = vmatprep.subr.bf16.mxu0 0
    %4595 = vmatpush1.bf16.msra.mxu0 0
    %4596 = vmatprep.subr.bf16.mxu0 0
    %4597 = vmatpush1.bf16.msra.mxu0 0
    %4598 = vmatprep.subr.bf16.mxu0 0
    %4599 = vmatpush1.bf16.msra.mxu0 0
    %4600 = vmatprep.subr.bf16.mxu0 0
    %4601 = vmatpush1.bf16.msra.mxu0 0
    %4602 = vmatprep.subr.bf16.mxu0 %v4494
    %4603 = vmatpush1.bf16.msra.mxu0 %v4491
    %4604 = vmatprep.subr.bf16.mxu0 0
    %4605 = vmatpush2.bf16.msra.mxu0 0
    %4606 = vmatprep.subr.bf16.mxu0 0
    %4607 = vmatpush2.bf16.msra.mxu0 0
    %4608 = vmatprep.subr.bf16.mxu0 0
    %4609 = vmatpush2.bf16.msra.mxu0 0
    %4610 = vmatprep.subr.bf16.mxu0 0
    %4611 = vmatpush2.bf16.msra.mxu0 0
    %4612 = vmatprep.subr.bf16.mxu0 0
    %4613 = vmatpush2.bf16.msra.mxu0 0
    %4614 = vmatprep.subr.bf16.mxu0 0
    %4615 = vmatpush2.bf16.msra.mxu0 0
    %4616 = vmatprep.subr.bf16.mxu0 0
    %4617 = vmatpush2.bf16.msra.mxu0 0
    %4618 = vmatprep.subr.bf16.mxu0 0
    %4619 = vmatpush2.bf16.msra.mxu0 0
    %4620 = vmatprep.mubr.bf16.mxu0 0
    %4621 = vmatmul.mubr.bf16.gmra.mxu0 %v4476
    %v4622 = vpop.f32.mrf.mxu0
    %v4623 = vadd.f32 0.0, %v4622
    %v4624 = vpop.f32.mrf.mxu0
    %v4625 = vadd.f32 0.0, %v4624
    %v4626 = vpop.f32.mrf.mxu0
    %v4627 = vadd.f32 0.0, %v4626
    %v4628 = vpop.f32.mrf.mxu0
    %v4629 = vadd.f32 0.0, %v4628
    %4630 = vdwg.mxu0
    %4631 = vmatprep.subr.bf16.mxu0 0
    %4632 = vmatpush1.bf16.msra.mxu0 0
    %4633 = vmatprep.subr.bf16.mxu0 0
    %4634 = vmatpush1.bf16.msra.mxu0 0
    %4635 = vmatprep.subr.bf16.mxu0 0
    %4636 = vmatpush1.bf16.msra.mxu0 0
    %4637 = vmatprep.subr.bf16.mxu0 0
    %4638 = vmatpush1.bf16.msra.mxu0 0
    %4639 = vmatprep.subr.bf16.mxu0 0
    %4640 = vmatpush1.bf16.msra.mxu0 0
    %4641 = vmatprep.subr.bf16.mxu0 0
    %4642 = vmatpush1.bf16.msra.mxu0 0
    %4643 = vmatprep.subr.bf16.mxu0 0
    %4644 = vmatpush1.bf16.msra.mxu0 0
    %4645 = vmatprep.subr.bf16.mxu0 %v4500
    %4646 = vmatpush1.bf16.msra.mxu0 %v4497
    %4647 = vmatprep.subr.bf16.mxu0 0
    %4648 = vmatpush2.bf16.msra.mxu0 0
    %4649 = vmatprep.subr.bf16.mxu0 0
    %4650 = vmatpush2.bf16.msra.mxu0 0
    %4651 = vmatprep.subr.bf16.mxu0 0
    %4652 = vmatpush2.bf16.msra.mxu0 0
    %4653 = vmatprep.subr.bf16.mxu0 0
    %4654 = vmatpush2.bf16.msra.mxu0 0
    %4655 = vmatprep.subr.bf16.mxu0 0
    %4656 = vmatpush2.bf16.msra.mxu0 0
    %4657 = vmatprep.subr.bf16.mxu0 0
    %4658 = vmatpush2.bf16.msra.mxu0 0
    %4659 = vmatprep.subr.bf16.mxu0 0
    %4660 = vmatpush2.bf16.msra.mxu0 0
    %4661 = vmatprep.subr.bf16.mxu0 0
    %4662 = vmatpush2.bf16.msra.mxu0 0
    %4663 = vmatprep.mubr.bf16.mxu0 0
    %4664 = vmatmul.mubr.bf16.gmra.mxu0 %v4476
    %v4665 = vpop.f32.mrf.mxu0
    %v4666 = vadd.f32 0.0, %v4665
    %v4667 = vpop.f32.mrf.mxu0
    %v4668 = vadd.f32 0.0, %v4667
    %v4669 = vpop.f32.mrf.mxu0
    %v4670 = vadd.f32 0.0, %v4669
    %v4671 = vpop.f32.mrf.mxu0
    %v4672 = vadd.f32 0.0, %v4671
    %4673 = vdwg.mxu0
    %v4674 = vadd.f32 %v4152, %v4537
    %v4675 = vadd.f32 %v4154, %v4539
    %v4676 = vadd.f32 %v4195, %v4580
    %v4677 = vadd.f32 %v4197, %v4582
    %v4678 = vadd.f32 %v4238, %v4623
    %v4679 = vadd.f32 %v4240, %v4625
    %v4680 = vadd.f32 %v4281, %v4666
    %v4681 = vadd.f32 %v4283, %v4668
    %v4682 = vadd.f32 %v4156, %v4541
    %v4683 = vadd.f32 %v4158, %v4543
    %v4684 = vadd.f32 %v4199, %v4584
    %v4685 = vadd.f32 %v4201, %v4586
    %v4686 = vadd.f32 %v4242, %v4627
    %v4687 = vadd.f32 %v4244, %v4629
    %v4688 = vadd.f32 %v4285, %v4670
    %v4689 = vadd.f32 %v4287, %v4672
    %v4690 = vshrl.u32 %v4305, 16
    %v4691 = vpack.i.b16 %v4690, %v4690
    %v4693 = vlaneseq
    %v4694 = vshrl.u32 %v4693, 7
    %v4695 = vsub.s32 1, %v4694
    %v4696 = vrot.slane %v4691, %v4695
    %v4697 = vshrl.u32 %v4306, 16
    %v4698 = vpack.i.b16 %v4697, %v4697
    %v4700 = vlaneseq
    %v4701 = vshrl.u32 %v4700, 7
    %v4702 = vsub.s32 1, %v4701
    %v4703 = vrot.slane %v4698, %v4702
    %v4704 = vshrl.u32 %v4307, 16
    %v4705 = vpack.i.b16 %v4704, %v4704
    %v4707 = vlaneseq
    %v4708 = vshrl.u32 %v4707, 7
    %v4709 = vsub.s32 1, %v4708
    %v4710 = vrot.slane %v4705, %v4709
    %v4711 = vshrl.u32 %v4308, 16
    %v4712 = vpack.i.b16 %v4711, %v4711
    %v4714 = vlaneseq
    %v4715 = vshrl.u32 %v4714, 7
    %v4716 = vsub.s32 1, %v4715
    %v4717 = vrot.slane %v4712, %v4716
    %v4718 = vshrl.u32 %v4309, 16
    %v4719 = vpack.i.b16 %v4718, %v4718
    %v4721 = vlaneseq
    %v4722 = vshrl.u32 %v4721, 7
    %v4723 = vsub.s32 1, %v4722
    %v4724 = vrot.slane %v4719, %v4723
    %v4725 = vshrl.u32 %v4310, 16
    %v4726 = vpack.i.b16 %v4725, %v4725
    %v4728 = vlaneseq
    %v4729 = vshrl.u32 %v4728, 7
    %v4730 = vsub.s32 1, %v4729
    %v4731 = vrot.slane %v4726, %v4730
    %v4732 = vshrl.u32 %v4311, 16
    %v4733 = vpack.i.b16 %v4732, %v4732
    %v4735 = vlaneseq
    %v4736 = vshrl.u32 %v4735, 7
    %v4737 = vsub.s32 1, %v4736
    %v4738 = vrot.slane %v4733, %v4737
    %v4739 = vshrl.u32 %v4312, 16
    %v4740 = vpack.i.b16 %v4739, %v4739
    %v4742 = vlaneseq
    %v4743 = vshrl.u32 %v4742, 7
    %v4744 = vsub.s32 1, %v4743
    %v4745 = vrot.slane %v4740, %v4744
    %v4754 = vunpack.c.l.b16 %v4696
    %v4755 = vunpack.c.l.b16 %v4703
    %v4756 = vunpack.c.l.b16 %v4710
    %v4757 = vunpack.c.l.b16 %v4717
    %v4758 = vunpack.c.l.b16 %v4724
    %v4759 = vunpack.c.l.b16 %v4731
    %v4760 = vunpack.c.l.b16 %v4738
    %v4761 = vunpack.c.l.b16 %v4745
    %v4762 = vpack.c.b16 %v4755, %v4754
    %v4763 = vpack.c.b16 %v4757, %v4756
    %v4764 = vpack.c.b16 %v4759, %v4758
    %v4765 = vpack.c.b16 %v4761, %v4760
    %4766 = vrot.lane.b32.xlu0 %v4762, 127
    %v4767 = vpop.permute.xlu0 %4766
    %4768 = vrot.lane.b32.xlu0 %v4763, 127
    %v4769 = vpop.permute.xlu0 %4768
    %4770 = vrot.lane.b32.xlu0 %v4764, 127
    %v4771 = vpop.permute.xlu0 %4770
    %4772 = vrot.lane.b32.xlu0 %v4765, 127
    %v4773 = vpop.permute.xlu0 %4772
    %v4774 = vrot.slane %v4767, 4
    %v4775 = vrot.slane %v4769, 4
    %v4776 = vrot.slane %v4771, 4
    %v4777 = vrot.slane %v4773, 4
    %v4778 = vsel %vm1267, %v4774, %v4767
    %v4779 = vsel %vm188, %v4774, %v4775
    %v4780 = vsel %vm1267, %v4779, %v4769
    %v4781 = vsel %vm188, %v4775, %v4776
    %v4782 = vsel %vm1267, %v4781, %v4771
    %v4783 = vsel %vm188, %v4776, %v4777
    %v4784 = vsel %vm1267, %v4783, %v4773
    %v4790 = vmul.bf16 %v3539, %v4778
    %v4791 = vmul.bf16 %v3540, %v4780
    %v4792 = vmul.bf16 %v3541, %v4782
    %v4793 = vmul.bf16 %v3542, %v4784
    %v4794 = vmul.bf16 %v3543, %v4777
    %s4795 = scalar_lea.vmem %s6, 24
    %v4796 = vld [vmem:[%s4795] sm:$0xf]
    %v4797 = vld [vmem:[%s4795 + $0x4] sm:$0xf]
    %v4800 = vunpack.c.l.b16 %v4796
    %v4801 = vunpack.c.l.b16 %v4797
    %v4802 = vpack.c.b16 %v4801, %v4800
    %v4808 = vunpack.c.l.b16 %v4790
    %v4809 = vunpack.c.h.b16 %v4790
    %v4810 = vunpack.c.l.b16 %v4791
    %v4811 = vunpack.c.h.b16 %v4791
    %v4812 = vunpack.c.l.b16 %v4792
    %v4813 = vunpack.c.h.b16 %v4792
    %v4814 = vunpack.c.l.b16 %v4793
    %v4815 = vunpack.c.h.b16 %v4793
    %v4816 = vunpack.c.l.b16 %v4794
    %v4817 = vpack.c.b16 %v4808, %v4808
    %v4818 = vpack.c.b16 %v4809, %v4809
    %v4819 = vpack.c.b16 %v4810, %v4810
    %v4820 = vpack.c.b16 %v4811, %v4811
    %v4821 = vpack.c.b16 %v4812, %v4812
    %v4822 = vpack.c.b16 %v4813, %v4813
    %v4823 = vpack.c.b16 %v4814, %v4814
    %v4824 = vpack.c.b16 %v4815, %v4815
    %v4825 = vpack.c.b16 %v4816, %v4816
    %4826 = vrot.lane.b32.xlu0 %v4817, 1
    %v4827 = vpop.permute.xlu0 %4826
    %4828 = vrot.lane.b32.xlu0 %v4818, 1
    %v4829 = vpop.permute.xlu0 %4828
    %4830 = vrot.lane.b32.xlu0 %v4819, 1
    %v4831 = vpop.permute.xlu0 %4830
    %4832 = vrot.lane.b32.xlu0 %v4820, 1
    %v4833 = vpop.permute.xlu0 %4832
    %4834 = vrot.lane.b32.xlu0 %v4821, 1
    %v4835 = vpop.permute.xlu0 %4834
    %4836 = vrot.lane.b32.xlu0 %v4822, 1
    %v4837 = vpop.permute.xlu0 %4836
    %4838 = vrot.lane.b32.xlu0 %v4823, 1
    %v4839 = vpop.permute.xlu0 %4838
    %4840 = vrot.lane.b32.xlu0 %v4824, 1
    %v4841 = vpop.permute.xlu0 %4840
    %4842 = vrot.lane.b32.xlu0 %v4825, 1
    %v4843 = vpop.permute.xlu0 %4842
    %v4844 = vsel %vm1328, %v4827, %v4829
    %v4845 = vsel %vm1328, %v4829, %v4831
    %v4846 = vsel %vm1328, %v4831, %v4833
    %v4847 = vsel %vm1328, %v4833, %v4835
    %v4848 = vsel %vm1328, %v4835, %v4837
    %v4849 = vsel %vm1328, %v4837, %v4839
    %v4850 = vsel %vm1328, %v4839, %v4841
    %v4851 = vsel %vm1328, %v4841, %v4843
    %v4853 = vsel %vm364, %v4802, 0
    %v4856 = vsel %vm368, %v4844, 0
    %v4859 = vsel %vm368, %v4845, 0
    %v4862 = vsel %vm368, %v4846, 0
    %v4865 = vsel %vm368, %v4847, 0
    %v4868 = vsel %vm368, %v4848, 0
    %v4871 = vsel %vm368, %v4849, 0
    %v4874 = vsel %vm368, %v4850, 0
    %v4877 = vsel %vm368, %v4851, 0
    %4879 = vmatprep.subr.bf16.mxu0 0
    %4880 = vmatpush1.bf16.msra.mxu0 0
    %4881 = vmatprep.subr.bf16.mxu0 0
    %4882 = vmatpush1.bf16.msra.mxu0 0
    %4883 = vmatprep.subr.bf16.mxu0 0
    %4884 = vmatpush1.bf16.msra.mxu0 0
    %4885 = vmatprep.subr.bf16.mxu0 0
    %4886 = vmatpush1.bf16.msra.mxu0 0
    %4887 = vmatprep.subr.bf16.mxu0 0
    %4888 = vmatpush1.bf16.msra.mxu0 0
    %4889 = vmatprep.subr.bf16.mxu0 0
    %4890 = vmatpush1.bf16.msra.mxu0 0
    %4891 = vmatprep.subr.bf16.mxu0 0
    %4892 = vmatpush1.bf16.msra.mxu0 0
    %4893 = vmatprep.subr.bf16.mxu0 %v4859
    %4894 = vmatpush1.bf16.msra.mxu0 %v4856
    %4895 = vmatprep.subr.bf16.mxu0 0
    %4896 = vmatpush2.bf16.msra.mxu0 0
    %4897 = vmatprep.subr.bf16.mxu0 0
    %4898 = vmatpush2.bf16.msra.mxu0 0
    %4899 = vmatprep.subr.bf16.mxu0 0
    %4900 = vmatpush2.bf16.msra.mxu0 0
    %4901 = vmatprep.subr.bf16.mxu0 0
    %4902 = vmatpush2.bf16.msra.mxu0 0
    %4903 = vmatprep.subr.bf16.mxu0 0
    %4904 = vmatpush2.bf16.msra.mxu0 0
    %4905 = vmatprep.subr.bf16.mxu0 0
    %4906 = vmatpush2.bf16.msra.mxu0 0
    %4907 = vmatprep.subr.bf16.mxu0 0
    %4908 = vmatpush2.bf16.msra.mxu0 0
    %4909 = vmatprep.subr.bf16.mxu0 0
    %4910 = vmatpush2.bf16.msra.mxu0 0
    %4911 = vmatprep.mubr.bf16.mxu0 0
    %4912 = vmatmul.mubr.bf16.gmra.mxu0 %v4853
    %v4913 = vpop.f32.mrf.mxu0
    %v4914 = vadd.f32 0.0, %v4913
    %v4915 = vpop.f32.mrf.mxu0
    %v4916 = vadd.f32 0.0, %v4915
    %v4917 = vpop.f32.mrf.mxu0
    %v4918 = vadd.f32 0.0, %v4917
    %v4919 = vpop.f32.mrf.mxu0
    %v4920 = vadd.f32 0.0, %v4919
    %4921 = vdwg.mxu0
    %4922 = vmatprep.subr.bf16.mxu0 0
    %4923 = vmatpush1.bf16.msra.mxu0 0
    %4924 = vmatprep.subr.bf16.mxu0 0
    %4925 = vmatpush1.bf16.msra.mxu0 0
    %4926 = vmatprep.subr.bf16.mxu0 0
    %4927 = vmatpush1.bf16.msra.mxu0 0
    %4928 = vmatprep.subr.bf16.mxu0 0
    %4929 = vmatpush1.bf16.msra.mxu0 0
    %4930 = vmatprep.subr.bf16.mxu0 0
    %4931 = vmatpush1.bf16.msra.mxu0 0
    %4932 = vmatprep.subr.bf16.mxu0 0
    %4933 = vmatpush1.bf16.msra.mxu0 0
    %4934 = vmatprep.subr.bf16.mxu0 0
    %4935 = vmatpush1.bf16.msra.mxu0 0
    %4936 = vmatprep.subr.bf16.mxu0 %v4865
    %4937 = vmatpush1.bf16.msra.mxu0 %v4862
    %4938 = vmatprep.subr.bf16.mxu0 0
    %4939 = vmatpush2.bf16.msra.mxu0 0
    %4940 = vmatprep.subr.bf16.mxu0 0
    %4941 = vmatpush2.bf16.msra.mxu0 0
    %4942 = vmatprep.subr.bf16.mxu0 0
    %4943 = vmatpush2.bf16.msra.mxu0 0
    %4944 = vmatprep.subr.bf16.mxu0 0
    %4945 = vmatpush2.bf16.msra.mxu0 0
    %4946 = vmatprep.subr.bf16.mxu0 0
    %4947 = vmatpush2.bf16.msra.mxu0 0
    %4948 = vmatprep.subr.bf16.mxu0 0
    %4949 = vmatpush2.bf16.msra.mxu0 0
    %4950 = vmatprep.subr.bf16.mxu0 0
    %4951 = vmatpush2.bf16.msra.mxu0 0
    %4952 = vmatprep.subr.bf16.mxu0 0
    %4953 = vmatpush2.bf16.msra.mxu0 0
    %4954 = vmatprep.mubr.bf16.mxu0 0
    %4955 = vmatmul.mubr.bf16.gmra.mxu0 %v4853
    %v4956 = vpop.f32.mrf.mxu0
    %v4957 = vadd.f32 0.0, %v4956
    %v4958 = vpop.f32.mrf.mxu0
    %v4959 = vadd.f32 0.0, %v4958
    %v4960 = vpop.f32.mrf.mxu0
    %v4961 = vadd.f32 0.0, %v4960
    %v4962 = vpop.f32.mrf.mxu0
    %v4963 = vadd.f32 0.0, %v4962
    %4964 = vdwg.mxu0
    %4965 = vmatprep.subr.bf16.mxu0 0
    %4966 = vmatpush1.bf16.msra.mxu0 0
    %4967 = vmatprep.subr.bf16.mxu0 0
    %4968 = vmatpush1.bf16.msra.mxu0 0
    %4969 = vmatprep.subr.bf16.mxu0 0
    %4970 = vmatpush1.bf16.msra.mxu0 0
    %4971 = vmatprep.subr.bf16.mxu0 0
    %4972 = vmatpush1.bf16.msra.mxu0 0
    %4973 = vmatprep.subr.bf16.mxu0 0
    %4974 = vmatpush1.bf16.msra.mxu0 0
    %4975 = vmatprep.subr.bf16.mxu0 0
    %4976 = vmatpush1.bf16.msra.mxu0 0
    %4977 = vmatprep.subr.bf16.mxu0 0
    %4978 = vmatpush1.bf16.msra.mxu0 0
    %4979 = vmatprep.subr.bf16.mxu0 %v4871
    %4980 = vmatpush1.bf16.msra.mxu0 %v4868
    %4981 = vmatprep.subr.bf16.mxu0 0
    %4982 = vmatpush2.bf16.msra.mxu0 0
    %4983 = vmatprep.subr.bf16.mxu0 0
    %4984 = vmatpush2.bf16.msra.mxu0 0
    %4985 = vmatprep.subr.bf16.mxu0 0
    %4986 = vmatpush2.bf16.msra.mxu0 0
    %4987 = vmatprep.subr.bf16.mxu0 0
    %4988 = vmatpush2.bf16.msra.mxu0 0
    %4989 = vmatprep.subr.bf16.mxu0 0
    %4990 = vmatpush2.bf16.msra.mxu0 0
    %4991 = vmatprep.subr.bf16.mxu0 0
    %4992 = vmatpush2.bf16.msra.mxu0 0
    %4993 = vmatprep.subr.bf16.mxu0 0
    %4994 = vmatpush2.bf16.msra.mxu0 0
    %4995 = vmatprep.subr.bf16.mxu0 0
    %4996 = vmatpush2.bf16.msra.mxu0 0
    %4997 = vmatprep.mubr.bf16.mxu0 0
    %4998 = vmatmul.mubr.bf16.gmra.mxu0 %v4853
    %v4999 = vpop.f32.mrf.mxu0
    %v5000 = vadd.f32 0.0, %v4999
    %v5001 = vpop.f32.mrf.mxu0
    %v5002 = vadd.f32 0.0, %v5001
    %v5003 = vpop.f32.mrf.mxu0
    %v5004 = vadd.f32 0.0, %v5003
    %v5005 = vpop.f32.mrf.mxu0
    %v5006 = vadd.f32 0.0, %v5005
    %5007 = vdwg.mxu0
    %5008 = vmatprep.subr.bf16.mxu0 0
    %5009 = vmatpush1.bf16.msra.mxu0 0
    %5010 = vmatprep.subr.bf16.mxu0 0
    %5011 = vmatpush1.bf16.msra.mxu0 0
    %5012 = vmatprep.subr.bf16.mxu0 0
    %5013 = vmatpush1.bf16.msra.mxu0 0
    %5014 = vmatprep.subr.bf16.mxu0 0
    %5015 = vmatpush1.bf16.msra.mxu0 0
    %5016 = vmatprep.subr.bf16.mxu0 0
    %5017 = vmatpush1.bf16.msra.mxu0 0
    %5018 = vmatprep.subr.bf16.mxu0 0
    %5019 = vmatpush1.bf16.msra.mxu0 0
    %5020 = vmatprep.subr.bf16.mxu0 0
    %5021 = vmatpush1.bf16.msra.mxu0 0
    %5022 = vmatprep.subr.bf16.mxu0 %v4877
    %5023 = vmatpush1.bf16.msra.mxu0 %v4874
    %5024 = vmatprep.subr.bf16.mxu0 0
    %5025 = vmatpush2.bf16.msra.mxu0 0
    %5026 = vmatprep.subr.bf16.mxu0 0
    %5027 = vmatpush2.bf16.msra.mxu0 0
    %5028 = vmatprep.subr.bf16.mxu0 0
    %5029 = vmatpush2.bf16.msra.mxu0 0
    %5030 = vmatprep.subr.bf16.mxu0 0
    %5031 = vmatpush2.bf16.msra.mxu0 0
    %5032 = vmatprep.subr.bf16.mxu0 0
    %5033 = vmatpush2.bf16.msra.mxu0 0
    %5034 = vmatprep.subr.bf16.mxu0 0
    %5035 = vmatpush2.bf16.msra.mxu0 0
    %5036 = vmatprep.subr.bf16.mxu0 0
    %5037 = vmatpush2.bf16.msra.mxu0 0
    %5038 = vmatprep.subr.bf16.mxu0 0
    %5039 = vmatpush2.bf16.msra.mxu0 0
    %5040 = vmatprep.mubr.bf16.mxu0 0
    %5041 = vmatmul.mubr.bf16.gmra.mxu0 %v4853
    %v5042 = vpop.f32.mrf.mxu0
    %v5043 = vadd.f32 0.0, %v5042
    %v5044 = vpop.f32.mrf.mxu0
    %v5045 = vadd.f32 0.0, %v5044
    %v5046 = vpop.f32.mrf.mxu0
    %v5047 = vadd.f32 0.0, %v5046
    %v5048 = vpop.f32.mrf.mxu0
    %v5049 = vadd.f32 0.0, %v5048
    %5050 = vdwg.mxu0
    %v5051 = vadd.f32 %v4674, %v4914
    %v5052 = vadd.f32 %v4675, %v4916
    %v5053 = vadd.f32 %v4676, %v4957
    %v5054 = vadd.f32 %v4677, %v4959
    %v5055 = vadd.f32 %v4678, %v5000
    %v5056 = vadd.f32 %v4679, %v5002
    %v5057 = vadd.f32 %v4680, %v5043
    %v5058 = vadd.f32 %v4681, %v5045
    %v5059 = vadd.f32 %v4682, %v4918
    %v5060 = vadd.f32 %v4683, %v4920
    %v5061 = vadd.f32 %v4684, %v4961
    %v5062 = vadd.f32 %v4685, %v4963
    %v5063 = vadd.f32 %v4686, %v5004
    %v5064 = vadd.f32 %v4687, %v5006
    %v5065 = vadd.f32 %v4688, %v5047
    %v5066 = vadd.f32 %v4689, %v5049
    %v5067 = vld [vmem:[#allocation2 + $0x4] sm:$0xff]
    %v5068 = vld [vmem:[#allocation2 + $0xc] sm:$0xff]
    %v5069 = vld [vmem:[#allocation2 + $0x14] sm:$0xff]
    %v5070 = vld [vmem:[#allocation2 + $0x1c] sm:$0xff]
    %s5071 = scalar_lea.vmem %s6, 32
    %v5072 = vld [vmem:[%s5071] sm:$0xf]
    %v5073 = vld [vmem:[%s5071 + $0x4] sm:$0xf]
    %v5076 = vunpack.c.l.b16 %v5072
    %v5077 = vunpack.c.l.b16 %v5073
    %v5078 = vpack.c.b16 %v5077, %v5076
    %v5083 = vunpack.c.l.b16 %v5067
    %v5084 = vunpack.c.h.b16 %v5067
    %v5085 = vunpack.c.l.b16 %v5068
    %v5086 = vunpack.c.h.b16 %v5068
    %v5087 = vunpack.c.l.b16 %v5069
    %v5088 = vunpack.c.h.b16 %v5069
    %v5089 = vunpack.c.l.b16 %v5070
    %v5090 = vunpack.c.h.b16 %v5070
    %v5091 = vpack.c.b16 %v5083, %v5083
    %v5092 = vpack.c.b16 %v5084, %v5084
    %v5093 = vpack.c.b16 %v5085, %v5085
    %v5094 = vpack.c.b16 %v5086, %v5086
    %v5095 = vpack.c.b16 %v5087, %v5087
    %v5096 = vpack.c.b16 %v5088, %v5088
    %v5097 = vpack.c.b16 %v5089, %v5089
    %v5098 = vpack.c.b16 %v5090, %v5090
    %v5100 = vsel %vm364, %v5078, 0
    %v5103 = vsel %vm368, %v5091, 0
    %v5106 = vsel %vm368, %v5092, 0
    %v5109 = vsel %vm368, %v5093, 0
    %v5112 = vsel %vm368, %v5094, 0
    %v5115 = vsel %vm368, %v5095, 0
    %v5118 = vsel %vm368, %v5096, 0
    %v5121 = vsel %vm368, %v5097, 0
    %v5124 = vsel %vm368, %v5098, 0
    %5126 = vmatprep.subr.bf16.mxu0 0
    %5127 = vmatpush1.bf16.msra.mxu0 0
    %5128 = vmatprep.subr.bf16.mxu0 0
    %5129 = vmatpush1.bf16.msra.mxu0 0
    %5130 = vmatprep.subr.bf16.mxu0 0
    %5131 = vmatpush1.bf16.msra.mxu0 0
    %5132 = vmatprep.subr.bf16.mxu0 0
    %5133 = vmatpush1.bf16.msra.mxu0 0
    %5134 = vmatprep.subr.bf16.mxu0 0
    %5135 = vmatpush1.bf16.msra.mxu0 0
    %5136 = vmatprep.subr.bf16.mxu0 0
    %5137 = vmatpush1.bf16.msra.mxu0 0
    %5138 = vmatprep.subr.bf16.mxu0 0
    %5139 = vmatpush1.bf16.msra.mxu0 0
    %5140 = vmatprep.subr.bf16.mxu0 %v5106
    %5141 = vmatpush1.bf16.msra.mxu0 %v5103
    %5142 = vmatprep.subr.bf16.mxu0 0
    %5143 = vmatpush2.bf16.msra.mxu0 0
    %5144 = vmatprep.subr.bf16.mxu0 0
    %5145 = vmatpush2.bf16.msra.mxu0 0
    %5146 = vmatprep.subr.bf16.mxu0 0
    %5147 = vmatpush2.bf16.msra.mxu0 0
    %5148 = vmatprep.subr.bf16.mxu0 0
    %5149 = vmatpush2.bf16.msra.mxu0 0
    %5150 = vmatprep.subr.bf16.mxu0 0
    %5151 = vmatpush2.bf16.msra.mxu0 0
    %5152 = vmatprep.subr.bf16.mxu0 0
    %5153 = vmatpush2.bf16.msra.mxu0 0
    %5154 = vmatprep.subr.bf16.mxu0 0
    %5155 = vmatpush2.bf16.msra.mxu0 0
    %5156 = vmatprep.subr.bf16.mxu0 0
    %5157 = vmatpush2.bf16.msra.mxu0 0
    %5158 = vmatprep.mubr.bf16.mxu0 0
    %5159 = vmatmul.mubr.bf16.gmra.mxu0 %v5100
    %v5160 = vpop.f32.mrf.mxu0
    %v5161 = vadd.f32 0.0, %v5160
    %v5162 = vpop.f32.mrf.mxu0
    %v5163 = vadd.f32 0.0, %v5162
    %v5164 = vpop.f32.mrf.mxu0
    %v5165 = vadd.f32 0.0, %v5164
    %v5166 = vpop.f32.mrf.mxu0
    %v5167 = vadd.f32 0.0, %v5166
    %5168 = vdwg.mxu0
    %5169 = vmatprep.subr.bf16.mxu0 0
    %5170 = vmatpush1.bf16.msra.mxu0 0
    %5171 = vmatprep.subr.bf16.mxu0 0
    %5172 = vmatpush1.bf16.msra.mxu0 0
    %5173 = vmatprep.subr.bf16.mxu0 0
    %5174 = vmatpush1.bf16.msra.mxu0 0
    %5175 = vmatprep.subr.bf16.mxu0 0
    %5176 = vmatpush1.bf16.msra.mxu0 0
    %5177 = vmatprep.subr.bf16.mxu0 0
    %5178 = vmatpush1.bf16.msra.mxu0 0
    %5179 = vmatprep.subr.bf16.mxu0 0
    %5180 = vmatpush1.bf16.msra.mxu0 0
    %5181 = vmatprep.subr.bf16.mxu0 0
    %5182 = vmatpush1.bf16.msra.mxu0 0
    %5183 = vmatprep.subr.bf16.mxu0 %v5112
    %5184 = vmatpush1.bf16.msra.mxu0 %v5109
    %5185 = vmatprep.subr.bf16.mxu0 0
    %5186 = vmatpush2.bf16.msra.mxu0 0
    %5187 = vmatprep.subr.bf16.mxu0 0
    %5188 = vmatpush2.bf16.msra.mxu0 0
    %5189 = vmatprep.subr.bf16.mxu0 0
    %5190 = vmatpush2.bf16.msra.mxu0 0
    %5191 = vmatprep.subr.bf16.mxu0 0
    %5192 = vmatpush2.bf16.msra.mxu0 0
    %5193 = vmatprep.subr.bf16.mxu0 0
    %5194 = vmatpush2.bf16.msra.mxu0 0
    %5195 = vmatprep.subr.bf16.mxu0 0
    %5196 = vmatpush2.bf16.msra.mxu0 0
    %5197 = vmatprep.subr.bf16.mxu0 0
    %5198 = vmatpush2.bf16.msra.mxu0 0
    %5199 = vmatprep.subr.bf16.mxu0 0
    %5200 = vmatpush2.bf16.msra.mxu0 0
    %5201 = vmatprep.mubr.bf16.mxu0 0
    %5202 = vmatmul.mubr.bf16.gmra.mxu0 %v5100
    %v5203 = vpop.f32.mrf.mxu0
    %v5204 = vadd.f32 0.0, %v5203
    %v5205 = vpop.f32.mrf.mxu0
    %v5206 = vadd.f32 0.0, %v5205
    %v5207 = vpop.f32.mrf.mxu0
    %v5208 = vadd.f32 0.0, %v5207
    %v5209 = vpop.f32.mrf.mxu0
    %v5210 = vadd.f32 0.0, %v5209
    %5211 = vdwg.mxu0
    %5212 = vmatprep.subr.bf16.mxu0 0
    %5213 = vmatpush1.bf16.msra.mxu0 0
    %5214 = vmatprep.subr.bf16.mxu0 0
    %5215 = vmatpush1.bf16.msra.mxu0 0
    %5216 = vmatprep.subr.bf16.mxu0 0
    %5217 = vmatpush1.bf16.msra.mxu0 0
    %5218 = vmatprep.subr.bf16.mxu0 0
    %5219 = vmatpush1.bf16.msra.mxu0 0
    %5220 = vmatprep.subr.bf16.mxu0 0
    %5221 = vmatpush1.bf16.msra.mxu0 0
    %5222 = vmatprep.subr.bf16.mxu0 0
    %5223 = vmatpush1.bf16.msra.mxu0 0
    %5224 = vmatprep.subr.bf16.mxu0 0
    %5225 = vmatpush1.bf16.msra.mxu0 0
    %5226 = vmatprep.subr.bf16.mxu0 %v5118
    %5227 = vmatpush1.bf16.msra.mxu0 %v5115
    %5228 = vmatprep.subr.bf16.mxu0 0
    %5229 = vmatpush2.bf16.msra.mxu0 0
    %5230 = vmatprep.subr.bf16.mxu0 0
    %5231 = vmatpush2.bf16.msra.mxu0 0
    %5232 = vmatprep.subr.bf16.mxu0 0
    %5233 = vmatpush2.bf16.msra.mxu0 0
    %5234 = vmatprep.subr.bf16.mxu0 0
    %5235 = vmatpush2.bf16.msra.mxu0 0
    %5236 = vmatprep.subr.bf16.mxu0 0
    %5237 = vmatpush2.bf16.msra.mxu0 0
    %5238 = vmatprep.subr.bf16.mxu0 0
    %5239 = vmatpush2.bf16.msra.mxu0 0
    %5240 = vmatprep.subr.bf16.mxu0 0
    %5241 = vmatpush2.bf16.msra.mxu0 0
    %5242 = vmatprep.subr.bf16.mxu0 0
    %5243 = vmatpush2.bf16.msra.mxu0 0
    %5244 = vmatprep.mubr.bf16.mxu0 0
    %5245 = vmatmul.mubr.bf16.gmra.mxu0 %v5100
    %v5246 = vpop.f32.mrf.mxu0
    %v5247 = vadd.f32 0.0, %v5246
    %v5248 = vpop.f32.mrf.mxu0
    %v5249 = vadd.f32 0.0, %v5248
    %v5250 = vpop.f32.mrf.mxu0
    %v5251 = vadd.f32 0.0, %v5250
    %v5252 = vpop.f32.mrf.mxu0
    %v5253 = vadd.f32 0.0, %v5252
    %5254 = vdwg.mxu0
    %5255 = vmatprep.subr.bf16.mxu0 0
    %5256 = vmatpush1.bf16.msra.mxu0 0
    %5257 = vmatprep.subr.bf16.mxu0 0
    %5258 = vmatpush1.bf16.msra.mxu0 0
    %5259 = vmatprep.subr.bf16.mxu0 0
    %5260 = vmatpush1.bf16.msra.mxu0 0
    %5261 = vmatprep.subr.bf16.mxu0 0
    %5262 = vmatpush1.bf16.msra.mxu0 0
    %5263 = vmatprep.subr.bf16.mxu0 0
    %5264 = vmatpush1.bf16.msra.mxu0 0
    %5265 = vmatprep.subr.bf16.mxu0 0
    %5266 = vmatpush1.bf16.msra.mxu0 0
    %5267 = vmatprep.subr.bf16.mxu0 0
    %5268 = vmatpush1.bf16.msra.mxu0 0
    %5269 = vmatprep.subr.bf16.mxu0 %v5124
    %5270 = vmatpush1.bf16.msra.mxu0 %v5121
    %5271 = vmatprep.subr.bf16.mxu0 0
    %5272 = vmatpush2.bf16.msra.mxu0 0
    %5273 = vmatprep.subr.bf16.mxu0 0
    %5274 = vmatpush2.bf16.msra.mxu0 0
    %5275 = vmatprep.subr.bf16.mxu0 0
    %5276 = vmatpush2.bf16.msra.mxu0 0
    %5277 = vmatprep.subr.bf16.mxu0 0
    %5278 = vmatpush2.bf16.msra.mxu0 0
    %5279 = vmatprep.subr.bf16.mxu0 0
    %5280 = vmatpush2.bf16.msra.mxu0 0
    %5281 = vmatprep.subr.bf16.mxu0 0
    %5282 = vmatpush2.bf16.msra.mxu0 0
    %5283 = vmatprep.subr.bf16.mxu0 0
    %5284 = vmatpush2.bf16.msra.mxu0 0
    %5285 = vmatprep.subr.bf16.mxu0 0
    %5286 = vmatpush2.bf16.msra.mxu0 0
    %5287 = vmatprep.mubr.bf16.mxu0 0
    %5288 = vmatmul.mubr.bf16.gmra.mxu0 %v5100
    %v5289 = vpop.f32.mrf.mxu0
    %v5290 = vadd.f32 0.0, %v5289
    %v5291 = vpop.f32.mrf.mxu0
    %v5292 = vadd.f32 0.0, %v5291
    %v5293 = vpop.f32.mrf.mxu0
    %v5294 = vadd.f32 0.0, %v5293
    %v5295 = vpop.f32.mrf.mxu0
    %v5296 = vadd.f32 0.0, %v5295
    %5297 = vdwg.mxu0
    %v5298 = vadd.f32 %v5051, %v5161
    %v5299 = vadd.f32 %v5052, %v5163
    %v5300 = vadd.f32 %v5053, %v5204
    %v5301 = vadd.f32 %v5054, %v5206
    %v5302 = vadd.f32 %v5055, %v5247
    %v5303 = vadd.f32 %v5056, %v5249
    %v5304 = vadd.f32 %v5057, %v5290
    %v5305 = vadd.f32 %v5058, %v5292
    %v5306 = vadd.f32 %v5059, %v5165
    %v5307 = vadd.f32 %v5060, %v5167
    %v5308 = vadd.f32 %v5061, %v5208
    %v5309 = vadd.f32 %v5062, %v5210
    %v5310 = vadd.f32 %v5063, %v5251
    %v5311 = vadd.f32 %v5064, %v5253
    %v5312 = vadd.f32 %v5065, %v5294
    %v5313 = vadd.f32 %v5066, %v5296
    %v5314 = vld [vmem:[#allocation2 + $0x4] sm:$0xff]
    %v5315 = vld [vmem:[#allocation2 + $0xc] sm:$0xff]
    %v5316 = vld [vmem:[#allocation2 + $0x14] sm:$0xff]
    %v5317 = vld [vmem:[#allocation2 + $0x1c] sm:$0xff]
    %v5318 = vld [vmem:[#allocation2 + $0x24] sm:$0xf]
    %v5319 = vld [vmem:[%s1] sm:$0x44]
    %v5320 = vld [vmem:[%s1 + $0x8] sm:$0x44]
    %v5321 = vld [vmem:[%s1 + $0x10] sm:$0x44]
    %v5322 = vld [vmem:[%s1 + $0x18] sm:$0x44]
    %v5327 = vunpack.c.l.b16 %v5319
    %v5328 = vunpack.c.h.b16 %v5319
    %v5329 = vunpack.c.l.b16 %v5320
    %v5330 = vunpack.c.h.b16 %v5320
    %v5331 = vunpack.c.l.b16 %v5321
    %v5332 = vunpack.c.h.b16 %v5321
    %v5333 = vunpack.c.l.b16 %v5322
    %v5334 = vunpack.c.h.b16 %v5322
    %v5335 = vpack.c.b16 %v5327, %v5327
    %v5336 = vpack.c.b16 %v5328, %v5328
    %v5337 = vpack.c.b16 %v5329, %v5329
    %v5338 = vpack.c.b16 %v5330, %v5330
    %v5339 = vpack.c.b16 %v5331, %v5331
    %v5340 = vpack.c.b16 %v5332, %v5332
    %v5341 = vpack.c.b16 %v5333, %v5333
    %v5342 = vpack.c.b16 %v5334, %v5334
    %v5344 = vshrl.u32 %v5335, 16
    %v5345 = vpack.i.b16 %v5344, %v5344
    %v5347 = vlaneseq
    %v5348 = vshrl.u32 %v5347, 7
    %v5349 = vsub.s32 2, %v5348
    %v5350 = vrot.slane %v5345, %v5349
    %v5352 = vshrl.u32 %v5336, 16
    %v5353 = vpack.i.b16 %v5352, %v5352
    %v5355 = vlaneseq
    %v5356 = vshrl.u32 %v5355, 7
    %v5357 = vsub.s32 2, %v5356
    %v5358 = vrot.slane %v5353, %v5357
    %v5360 = vshrl.u32 %v5337, 16
    %v5361 = vpack.i.b16 %v5360, %v5360
    %v5363 = vlaneseq
    %v5364 = vshrl.u32 %v5363, 7
    %v5365 = vsub.s32 2, %v5364
    %v5366 = vrot.slane %v5361, %v5365
    %v5368 = vshrl.u32 %v5338, 16
    %v5369 = vpack.i.b16 %v5368, %v5368
    %v5371 = vlaneseq
    %v5372 = vshrl.u32 %v5371, 7
    %v5373 = vsub.s32 2, %v5372
    %v5374 = vrot.slane %v5369, %v5373
    %v5376 = vshrl.u32 %v5339, 16
    %v5377 = vpack.i.b16 %v5376, %v5376
    %v5379 = vlaneseq
    %v5380 = vshrl.u32 %v5379, 7
    %v5381 = vsub.s32 2, %v5380
    %v5382 = vrot.slane %v5377, %v5381
    %v5384 = vshrl.u32 %v5340, 16
    %v5385 = vpack.i.b16 %v5384, %v5384
    %v5387 = vlaneseq
    %v5388 = vshrl.u32 %v5387, 7
    %v5389 = vsub.s32 2, %v5388
    %v5390 = vrot.slane %v5385, %v5389
    %v5392 = vshrl.u32 %v5341, 16
    %v5393 = vpack.i.b16 %v5392, %v5392
    %v5395 = vlaneseq
    %v5396 = vshrl.u32 %v5395, 7
    %v5397 = vsub.s32 2, %v5396
    %v5398 = vrot.slane %v5393, %v5397
    %v5400 = vshrl.u32 %v5342, 16
    %v5401 = vpack.i.b16 %v5400, %v5400
    %v5403 = vlaneseq
    %v5404 = vshrl.u32 %v5403, 7
    %v5405 = vsub.s32 2, %v5404
    %v5406 = vrot.slane %v5401, %v5405
    %v5415 = vunpack.c.l.b16 %v5350
    %v5416 = vunpack.c.l.b16 %v5358
    %v5417 = vunpack.c.l.b16 %v5366
    %v5418 = vunpack.c.l.b16 %v5374
    %v5419 = vunpack.c.l.b16 %v5382
    %v5420 = vunpack.c.l.b16 %v5390
    %v5421 = vunpack.c.l.b16 %v5398
    %v5422 = vunpack.c.l.b16 %v5406
    %v5423 = vpack.c.b16 %v5416, %v5415
    %v5424 = vpack.c.b16 %v5418, %v5417
    %v5425 = vpack.c.b16 %v5420, %v5419
    %v5426 = vpack.c.b16 %v5422, %v5421
    %5427 = vrot.lane.b32.xlu0 %v5423, 1
    %v5428 = vpop.permute.xlu0 %5427
    %5429 = vrot.lane.b32.xlu0 %v5424, 1
    %v5430 = vpop.permute.xlu0 %5429
    %5431 = vrot.lane.b32.xlu0 %v5425, 1
    %v5432 = vpop.permute.xlu0 %5431
    %5433 = vrot.lane.b32.xlu0 %v5426, 1
    %v5434 = vpop.permute.xlu0 %5433
    %v5435 = vrot.slane %v5428, 4
    %v5436 = vrot.slane %v5430, 4
    %v5437 = vrot.slane %v5432, 4
    %v5438 = vrot.slane %v5434, 4
    %v5439 = vsel %vm1328, %v5435, %v5428
    %v5440 = vsel %vm188, %v5435, %v5436
    %v5441 = vsel %vm1328, %v5440, %v5430
    %v5442 = vsel %vm188, %v5436, %v5437
    %v5443 = vsel %vm1328, %v5442, %v5432
    %v5444 = vsel %vm188, %v5437, %v5438
    %v5445 = vsel %vm1328, %v5444, %v5434
    %v5451 = vmul.bf16 %v5314, %v5439
    %v5452 = vmul.bf16 %v5315, %v5441
    %v5453 = vmul.bf16 %v5316, %v5443
    %v5454 = vmul.bf16 %v5317, %v5445
    %v5455 = vmul.bf16 %v5318, %v5438
    %s5456 = scalar_lea.vmem %s6, 40
    %v5457 = vld [vmem:[%s5456] sm:$0xf]
    %v5458 = vld [vmem:[%s5456 + $0x4] sm:$0xf]
    %v5461 = vunpack.c.l.b16 %v5457
    %v5462 = vunpack.c.l.b16 %v5458
    %v5463 = vpack.c.b16 %v5462, %v5461
    %v5469 = vunpack.c.l.b16 %v5451
    %v5470 = vunpack.c.h.b16 %v5451
    %v5471 = vunpack.c.l.b16 %v5452
    %v5472 = vunpack.c.h.b16 %v5452
    %v5473 = vunpack.c.l.b16 %v5453
    %v5474 = vunpack.c.h.b16 %v5453
    %v5475 = vunpack.c.l.b16 %v5454
    %v5476 = vunpack.c.h.b16 %v5454
    %v5477 = vunpack.c.l.b16 %v5455
    %v5478 = vpack.c.b16 %v5469, %v5469
    %v5479 = vpack.c.b16 %v5470, %v5470
    %v5480 = vpack.c.b16 %v5471, %v5471
    %v5481 = vpack.c.b16 %v5472, %v5472
    %v5482 = vpack.c.b16 %v5473, %v5473
    %v5483 = vpack.c.b16 %v5474, %v5474
    %v5484 = vpack.c.b16 %v5475, %v5475
    %v5485 = vpack.c.b16 %v5476, %v5476
    %v5486 = vpack.c.b16 %v5477, %v5477
    %5487 = vrot.lane.b32.xlu0 %v5478, 127
    %v5488 = vpop.permute.xlu0 %5487
    %5489 = vrot.lane.b32.xlu0 %v5479, 127
    %v5490 = vpop.permute.xlu0 %5489
    %5491 = vrot.lane.b32.xlu0 %v5480, 127
    %v5492 = vpop.permute.xlu0 %5491
    %5493 = vrot.lane.b32.xlu0 %v5481, 127
    %v5494 = vpop.permute.xlu0 %5493
    %5495 = vrot.lane.b32.xlu0 %v5482, 127
    %v5496 = vpop.permute.xlu0 %5495
    %5497 = vrot.lane.b32.xlu0 %v5483, 127
    %v5498 = vpop.permute.xlu0 %5497
    %5499 = vrot.lane.b32.xlu0 %v5484, 127
    %v5500 = vpop.permute.xlu0 %5499
    %5501 = vrot.lane.b32.xlu0 %v5485, 127
    %v5502 = vpop.permute.xlu0 %5501
    %5503 = vrot.lane.b32.xlu0 %v5486, 127
    %v5504 = vpop.permute.xlu0 %5503
    %v5505 = vsel %vm1267, %v5488, %v5490
    %v5506 = vsel %vm1267, %v5490, %v5492
    %v5507 = vsel %vm1267, %v5492, %v5494
    %v5508 = vsel %vm1267, %v5494, %v5496
    %v5509 = vsel %vm1267, %v5496, %v5498
    %v5510 = vsel %vm1267, %v5498, %v5500
    %v5511 = vsel %vm1267, %v5500, %v5502
    %v5512 = vsel %vm1267, %v5502, %v5504
    %v5514 = vsel %vm364, %v5463, 0
    %v5517 = vsel %vm368, %v5505, 0
    %v5520 = vsel %vm368, %v5506, 0
    %v5523 = vsel %vm368, %v5507, 0
    %v5526 = vsel %vm368, %v5508, 0
    %v5529 = vsel %vm368, %v5509, 0
    %v5532 = vsel %vm368, %v5510, 0
    %v5535 = vsel %vm368, %v5511, 0
    %v5538 = vsel %vm368, %v5512, 0
    %5540 = vmatprep.subr.bf16.mxu0 0
    %5541 = vmatpush1.bf16.msra.mxu0 0
    %5542 = vmatprep.subr.bf16.mxu0 0
    %5543 = vmatpush1.bf16.msra.mxu0 0
    %5544 = vmatprep.subr.bf16.mxu0 0
    %5545 = vmatpush1.bf16.msra.mxu0 0
    %5546 = vmatprep.subr.bf16.mxu0 0
    %5547 = vmatpush1.bf16.msra.mxu0 0
    %5548 = vmatprep.subr.bf16.mxu0 0
    %5549 = vmatpush1.bf16.msra.mxu0 0
    %5550 = vmatprep.subr.bf16.mxu0 0
    %5551 = vmatpush1.bf16.msra.mxu0 0
    %5552 = vmatprep.subr.bf16.mxu0 0
    %5553 = vmatpush1.bf16.msra.mxu0 0
    %5554 = vmatprep.subr.bf16.mxu0 %v5520
    %5555 = vmatpush1.bf16.msra.mxu0 %v5517
    %5556 = vmatprep.subr.bf16.mxu0 0
    %5557 = vmatpush2.bf16.msra.mxu0 0
    %5558 = vmatprep.subr.bf16.mxu0 0
    %5559 = vmatpush2.bf16.msra.mxu0 0
    %5560 = vmatprep.subr.bf16.mxu0 0
    %5561 = vmatpush2.bf16.msra.mxu0 0
    %5562 = vmatprep.subr.bf16.mxu0 0
    %5563 = vmatpush2.bf16.msra.mxu0 0
    %5564 = vmatprep.subr.bf16.mxu0 0
    %5565 = vmatpush2.bf16.msra.mxu0 0
    %5566 = vmatprep.subr.bf16.mxu0 0
    %5567 = vmatpush2.bf16.msra.mxu0 0
    %5568 = vmatprep.subr.bf16.mxu0 0
    %5569 = vmatpush2.bf16.msra.mxu0 0
    %5570 = vmatprep.subr.bf16.mxu0 0
    %5571 = vmatpush2.bf16.msra.mxu0 0
    %5572 = vmatprep.mubr.bf16.mxu0 0
    %5573 = vmatmul.mubr.bf16.gmra.mxu0 %v5514
    %v5574 = vpop.f32.mrf.mxu0
    %v5575 = vadd.f32 0.0, %v5574
    %v5576 = vpop.f32.mrf.mxu0
    %v5577 = vadd.f32 0.0, %v5576
    %v5578 = vpop.f32.mrf.mxu0
    %v5579 = vadd.f32 0.0, %v5578
    %v5580 = vpop.f32.mrf.mxu0
    %v5581 = vadd.f32 0.0, %v5580
    %5582 = vdwg.mxu0
    %5583 = vmatprep.subr.bf16.mxu0 0
    %5584 = vmatpush1.bf16.msra.mxu0 0
    %5585 = vmatprep.subr.bf16.mxu0 0
    %5586 = vmatpush1.bf16.msra.mxu0 0
    %5587 = vmatprep.subr.bf16.mxu0 0
    %5588 = vmatpush1.bf16.msra.mxu0 0
    %5589 = vmatprep.subr.bf16.mxu0 0
    %5590 = vmatpush1.bf16.msra.mxu0 0
    %5591 = vmatprep.subr.bf16.mxu0 0
    %5592 = vmatpush1.bf16.msra.mxu0 0
    %5593 = vmatprep.subr.bf16.mxu0 0
    %5594 = vmatpush1.bf16.msra.mxu0 0
    %5595 = vmatprep.subr.bf16.mxu0 0
    %5596 = vmatpush1.bf16.msra.mxu0 0
    %5597 = vmatprep.subr.bf16.mxu0 %v5526
    %5598 = vmatpush1.bf16.msra.mxu0 %v5523
    %5599 = vmatprep.subr.bf16.mxu0 0
    %5600 = vmatpush2.bf16.msra.mxu0 0
    %5601 = vmatprep.subr.bf16.mxu0 0
    %5602 = vmatpush2.bf16.msra.mxu0 0
    %5603 = vmatprep.subr.bf16.mxu0 0
    %5604 = vmatpush2.bf16.msra.mxu0 0
    %5605 = vmatprep.subr.bf16.mxu0 0
    %5606 = vmatpush2.bf16.msra.mxu0 0
    %5607 = vmatprep.subr.bf16.mxu0 0
    %5608 = vmatpush2.bf16.msra.mxu0 0
    %5609 = vmatprep.subr.bf16.mxu0 0
    %5610 = vmatpush2.bf16.msra.mxu0 0
    %5611 = vmatprep.subr.bf16.mxu0 0
    %5612 = vmatpush2.bf16.msra.mxu0 0
    %5613 = vmatprep.subr.bf16.mxu0 0
    %5614 = vmatpush2.bf16.msra.mxu0 0
    %5615 = vmatprep.mubr.bf16.mxu0 0
    %5616 = vmatmul.mubr.bf16.gmra.mxu0 %v5514
    %v5617 = vpop.f32.mrf.mxu0
    %v5618 = vadd.f32 0.0, %v5617
    %v5619 = vpop.f32.mrf.mxu0
    %v5620 = vadd.f32 0.0, %v5619
    %v5621 = vpop.f32.mrf.mxu0
    %v5622 = vadd.f32 0.0, %v5621
    %v5623 = vpop.f32.mrf.mxu0
    %v5624 = vadd.f32 0.0, %v5623
    %5625 = vdwg.mxu0
    %5626 = vmatprep.subr.bf16.mxu0 0
    %5627 = vmatpush1.bf16.msra.mxu0 0
    %5628 = vmatprep.subr.bf16.mxu0 0
    %5629 = vmatpush1.bf16.msra.mxu0 0
    %5630 = vmatprep.subr.bf16.mxu0 0
    %5631 = vmatpush1.bf16.msra.mxu0 0
    %5632 = vmatprep.subr.bf16.mxu0 0
    %5633 = vmatpush1.bf16.msra.mxu0 0
    %5634 = vmatprep.subr.bf16.mxu0 0
    %5635 = vmatpush1.bf16.msra.mxu0 0
    %5636 = vmatprep.subr.bf16.mxu0 0
    %5637 = vmatpush1.bf16.msra.mxu0 0
    %5638 = vmatprep.subr.bf16.mxu0 0
    %5639 = vmatpush1.bf16.msra.mxu0 0
    %5640 = vmatprep.subr.bf16.mxu0 %v5532
    %5641 = vmatpush1.bf16.msra.mxu0 %v5529
    %5642 = vmatprep.subr.bf16.mxu0 0
    %5643 = vmatpush2.bf16.msra.mxu0 0
    %5644 = vmatprep.subr.bf16.mxu0 0
    %5645 = vmatpush2.bf16.msra.mxu0 0
    %5646 = vmatprep.subr.bf16.mxu0 0
    %5647 = vmatpush2.bf16.msra.mxu0 0
    %5648 = vmatprep.subr.bf16.mxu0 0
    %5649 = vmatpush2.bf16.msra.mxu0 0
    %5650 = vmatprep.subr.bf16.mxu0 0
    %5651 = vmatpush2.bf16.msra.mxu0 0
    %5652 = vmatprep.subr.bf16.mxu0 0
    %5653 = vmatpush2.bf16.msra.mxu0 0
    %5654 = vmatprep.subr.bf16.mxu0 0
    %5655 = vmatpush2.bf16.msra.mxu0 0
    %5656 = vmatprep.subr.bf16.mxu0 0
    %5657 = vmatpush2.bf16.msra.mxu0 0
    %5658 = vmatprep.mubr.bf16.mxu0 0
    %5659 = vmatmul.mubr.bf16.gmra.mxu0 %v5514
    %v5660 = vpop.f32.mrf.mxu0
    %v5661 = vadd.f32 0.0, %v5660
    %v5662 = vpop.f32.mrf.mxu0
    %v5663 = vadd.f32 0.0, %v5662
    %v5664 = vpop.f32.mrf.mxu0
    %v5665 = vadd.f32 0.0, %v5664
    %v5666 = vpop.f32.mrf.mxu0
    %v5667 = vadd.f32 0.0, %v5666
    %5668 = vdwg.mxu0
    %5669 = vmatprep.subr.bf16.mxu0 0
    %5670 = vmatpush1.bf16.msra.mxu0 0
    %5671 = vmatprep.subr.bf16.mxu0 0
    %5672 = vmatpush1.bf16.msra.mxu0 0
    %5673 = vmatprep.subr.bf16.mxu0 0
    %5674 = vmatpush1.bf16.msra.mxu0 0
    %5675 = vmatprep.subr.bf16.mxu0 0
    %5676 = vmatpush1.bf16.msra.mxu0 0
    %5677 = vmatprep.subr.bf16.mxu0 0
    %5678 = vmatpush1.bf16.msra.mxu0 0
    %5679 = vmatprep.subr.bf16.mxu0 0
    %5680 = vmatpush1.bf16.msra.mxu0 0
    %5681 = vmatprep.subr.bf16.mxu0 0
    %5682 = vmatpush1.bf16.msra.mxu0 0
    %5683 = vmatprep.subr.bf16.mxu0 %v5538
    %5684 = vmatpush1.bf16.msra.mxu0 %v5535
    %5685 = vmatprep.subr.bf16.mxu0 0
    %5686 = vmatpush2.bf16.msra.mxu0 0
    %5687 = vmatprep.subr.bf16.mxu0 0
    %5688 = vmatpush2.bf16.msra.mxu0 0
    %5689 = vmatprep.subr.bf16.mxu0 0
    %5690 = vmatpush2.bf16.msra.mxu0 0
    %5691 = vmatprep.subr.bf16.mxu0 0
    %5692 = vmatpush2.bf16.msra.mxu0 0
    %5693 = vmatprep.subr.bf16.mxu0 0
    %5694 = vmatpush2.bf16.msra.mxu0 0
    %5695 = vmatprep.subr.bf16.mxu0 0
    %5696 = vmatpush2.bf16.msra.mxu0 0
    %5697 = vmatprep.subr.bf16.mxu0 0
    %5698 = vmatpush2.bf16.msra.mxu0 0
    %5699 = vmatprep.subr.bf16.mxu0 0
    %5700 = vmatpush2.bf16.msra.mxu0 0
    %5701 = vmatprep.mubr.bf16.mxu0 0
    %5702 = vmatmul.mubr.bf16.gmra.mxu0 %v5514
    %v5703 = vpop.f32.mrf.mxu0
    %v5704 = vadd.f32 0.0, %v5703
    %v5705 = vpop.f32.mrf.mxu0
    %v5706 = vadd.f32 0.0, %v5705
    %v5707 = vpop.f32.mrf.mxu0
    %v5708 = vadd.f32 0.0, %v5707
    %v5709 = vpop.f32.mrf.mxu0
    %v5710 = vadd.f32 0.0, %v5709
    %5711 = vdwg.mxu0
    %v5712 = vadd.f32 %v5298, %v5575
    %v5713 = vadd.f32 %v5299, %v5577
    %v5714 = vadd.f32 %v5300, %v5618
    %v5715 = vadd.f32 %v5301, %v5620
    %v5716 = vadd.f32 %v5302, %v5661
    %v5717 = vadd.f32 %v5303, %v5663
    %v5718 = vadd.f32 %v5304, %v5704
    %v5719 = vadd.f32 %v5305, %v5706
    %v5720 = vadd.f32 %v5306, %v5579
    %v5721 = vadd.f32 %v5307, %v5581
    %v5722 = vadd.f32 %v5308, %v5622
    %v5723 = vadd.f32 %v5309, %v5624
    %v5724 = vadd.f32 %v5310, %v5665
    %v5725 = vadd.f32 %v5311, %v5667
    %v5726 = vadd.f32 %v5312, %v5708
    %v5727 = vadd.f32 %v5313, %v5710
    %v5728 = vld [vmem:[%s1] sm:$0x88]
    %v5729 = vld [vmem:[%s1 + $0x8] sm:$0x88]
    %v5730 = vld [vmem:[%s1 + $0x10] sm:$0x88]
    %v5731 = vld [vmem:[%s1 + $0x18] sm:$0x88]
    %v5736 = vunpack.c.l.b16 %v5728
    %v5737 = vunpack.c.h.b16 %v5728
    %v5738 = vunpack.c.l.b16 %v5729
    %v5739 = vunpack.c.h.b16 %v5729
    %v5740 = vunpack.c.l.b16 %v5730
    %v5741 = vunpack.c.h.b16 %v5730
    %v5742 = vunpack.c.l.b16 %v5731
    %v5743 = vunpack.c.h.b16 %v5731
    %v5744 = vpack.c.b16 %v5736, %v5736
    %v5745 = vpack.c.b16 %v5737, %v5737
    %v5746 = vpack.c.b16 %v5738, %v5738
    %v5747 = vpack.c.b16 %v5739, %v5739
    %v5748 = vpack.c.b16 %v5740, %v5740
    %v5749 = vpack.c.b16 %v5741, %v5741
    %v5750 = vpack.c.b16 %v5742, %v5742
    %v5751 = vpack.c.b16 %v5743, %v5743
    %v5753 = vpack.i.b16 %v5744, %v5744
    %v5755 = vlaneseq
    %v5756 = vshrl.u32 %v5755, 7
    %v5757 = vsub.s32 3, %v5756
    %v5758 = vrot.slane %v5753, %v5757
    %v5760 = vpack.i.b16 %v5745, %v5745
    %v5762 = vlaneseq
    %v5763 = vshrl.u32 %v5762, 7
    %v5764 = vsub.s32 3, %v5763
    %v5765 = vrot.slane %v5760, %v5764
    %v5767 = vpack.i.b16 %v5746, %v5746
    %v5769 = vlaneseq
    %v5770 = vshrl.u32 %v5769, 7
    %v5771 = vsub.s32 3, %v5770
    %v5772 = vrot.slane %v5767, %v5771
    %v5774 = vpack.i.b16 %v5747, %v5747
    %v5776 = vlaneseq
    %v5777 = vshrl.u32 %v5776, 7
    %v5778 = vsub.s32 3, %v5777
    %v5779 = vrot.slane %v5774, %v5778
    %v5781 = vpack.i.b16 %v5748, %v5748
    %v5783 = vlaneseq
    %v5784 = vshrl.u32 %v5783, 7
    %v5785 = vsub.s32 3, %v5784
    %v5786 = vrot.slane %v5781, %v5785
    %v5788 = vpack.i.b16 %v5749, %v5749
    %v5790 = vlaneseq
    %v5791 = vshrl.u32 %v5790, 7
    %v5792 = vsub.s32 3, %v5791
    %v5793 = vrot.slane %v5788, %v5792
    %v5795 = vpack.i.b16 %v5750, %v5750
    %v5797 = vlaneseq
    %v5798 = vshrl.u32 %v5797, 7
    %v5799 = vsub.s32 3, %v5798
    %v5800 = vrot.slane %v5795, %v5799
    %v5802 = vpack.i.b16 %v5751, %v5751
    %v5804 = vlaneseq
    %v5805 = vshrl.u32 %v5804, 7
    %v5806 = vsub.s32 3, %v5805
    %v5807 = vrot.slane %v5802, %v5806
    %v5816 = vunpack.c.l.b16 %v5758
    %v5817 = vunpack.c.l.b16 %v5765
    %v5818 = vunpack.c.l.b16 %v5772
    %v5819 = vunpack.c.l.b16 %v5779
    %v5820 = vunpack.c.l.b16 %v5786
    %v5821 = vunpack.c.l.b16 %v5793
    %v5822 = vunpack.c.l.b16 %v5800
    %v5823 = vunpack.c.l.b16 %v5807
    %v5824 = vpack.c.b16 %v5817, %v5816
    %v5825 = vpack.c.b16 %v5819, %v5818
    %v5826 = vpack.c.b16 %v5821, %v5820
    %v5827 = vpack.c.b16 %v5823, %v5822
    %5828 = vrot.lane.b32.xlu0 %v5824, 15
    %v5829 = vpop.permute.xlu0 %5828
    %5830 = vrot.lane.b32.xlu0 %v5825, 15
    %v5831 = vpop.permute.xlu0 %5830
    %5832 = vrot.lane.b32.xlu0 %v5826, 15
    %v5833 = vpop.permute.xlu0 %5832
    %5834 = vrot.lane.b32.xlu0 %v5827, 15
    %v5835 = vpop.permute.xlu0 %5834
    %v5836 = vrot.slane %v5829, 4
    %v5837 = vrot.slane %v5831, 4
    %v5838 = vrot.slane %v5833, 4
    %v5839 = vrot.slane %v5835, 4
    %v5840 = vsel %vm971, %v5836, %v5829
    %v5841 = vsel %vm188, %v5836, %v5837
    %v5842 = vsel %vm971, %v5841, %v5831
    %v5843 = vsel %vm188, %v5837, %v5838
    %v5844 = vsel %vm971, %v5843, %v5833
    %v5845 = vsel %vm188, %v5838, %v5839
    %v5846 = vsel %vm971, %v5845, %v5835
    %v5852 = vmul.bf16 %v5314, %v5840
    %v5853 = vmul.bf16 %v5315, %v5842
    %v5854 = vmul.bf16 %v5316, %v5844
    %v5855 = vmul.bf16 %v5317, %v5846
    %v5856 = vmul.bf16 %v5318, %v5839
    %s5857 = scalar_lea.vmem %s6, 48
    %v5858 = vld [vmem:[%s5857] sm:$0xf]
    %v5859 = vld [vmem:[%s5857 + $0x4] sm:$0xf]
    %v5862 = vunpack.c.l.b16 %v5858
    %v5863 = vunpack.c.l.b16 %v5859
    %v5864 = vpack.c.b16 %v5863, %v5862
    %v5870 = vunpack.c.l.b16 %v5852
    %v5871 = vunpack.c.h.b16 %v5852
    %v5872 = vunpack.c.l.b16 %v5853
    %v5873 = vunpack.c.h.b16 %v5853
    %v5874 = vunpack.c.l.b16 %v5854
    %v5875 = vunpack.c.h.b16 %v5854
    %v5876 = vunpack.c.l.b16 %v5855
    %v5877 = vunpack.c.h.b16 %v5855
    %v5878 = vunpack.c.l.b16 %v5856
    %v5879 = vpack.c.b16 %v5870, %v5870
    %v5880 = vpack.c.b16 %v5871, %v5871
    %v5881 = vpack.c.b16 %v5872, %v5872
    %v5882 = vpack.c.b16 %v5873, %v5873
    %v5883 = vpack.c.b16 %v5874, %v5874
    %v5884 = vpack.c.b16 %v5875, %v5875
    %v5885 = vpack.c.b16 %v5876, %v5876
    %v5886 = vpack.c.b16 %v5877, %v5877
    %v5887 = vpack.c.b16 %v5878, %v5878
    %5888 = vrot.lane.b32.xlu0 %v5879, 113
    %v5889 = vpop.permute.xlu0 %5888
    %5890 = vrot.lane.b32.xlu0 %v5880, 113
    %v5891 = vpop.permute.xlu0 %5890
    %5892 = vrot.lane.b32.xlu0 %v5881, 113
    %v5893 = vpop.permute.xlu0 %5892
    %5894 = vrot.lane.b32.xlu0 %v5882, 113
    %v5895 = vpop.permute.xlu0 %5894
    %5896 = vrot.lane.b32.xlu0 %v5883, 113
    %v5897 = vpop.permute.xlu0 %5896
    %5898 = vrot.lane.b32.xlu0 %v5884, 113
    %v5899 = vpop.permute.xlu0 %5898
    %5900 = vrot.lane.b32.xlu0 %v5885, 113
    %v5901 = vpop.permute.xlu0 %5900
    %5902 = vrot.lane.b32.xlu0 %v5886, 113
    %v5903 = vpop.permute.xlu0 %5902
    %5904 = vrot.lane.b32.xlu0 %v5887, 113
    %v5905 = vpop.permute.xlu0 %5904
    %v5906 = vsel %vm910, %v5889, %v5891
    %v5907 = vsel %vm910, %v5891, %v5893
    %v5908 = vsel %vm910, %v5893, %v5895
    %v5909 = vsel %vm910, %v5895, %v5897
    %v5910 = vsel %vm910, %v5897, %v5899
    %v5911 = vsel %vm910, %v5899, %v5901
    %v5912 = vsel %vm910, %v5901, %v5903
    %v5913 = vsel %vm910, %v5903, %v5905
    %v5915 = vsel %vm364, %v5864, 0
    %v5918 = vsel %vm368, %v5906, 0
    %v5921 = vsel %vm368, %v5907, 0
    %v5924 = vsel %vm368, %v5908, 0
    %v5927 = vsel %vm368, %v5909, 0
    %v5930 = vsel %vm368, %v5910, 0
    %v5933 = vsel %vm368, %v5911, 0
    %v5936 = vsel %vm368, %v5912, 0
    %v5939 = vsel %vm368, %v5913, 0
    %5941 = vmatprep.subr.bf16.mxu0 0
    %5942 = vmatpush1.bf16.msra.mxu0 0
    %5943 = vmatprep.subr.bf16.mxu0 0
    %5944 = vmatpush1.bf16.msra.mxu0 0
    %5945 = vmatprep.subr.bf16.mxu0 0
    %5946 = vmatpush1.bf16.msra.mxu0 0
    %5947 = vmatprep.subr.bf16.mxu0 0
    %5948 = vmatpush1.bf16.msra.mxu0 0
    %5949 = vmatprep.subr.bf16.mxu0 0
    %5950 = vmatpush1.bf16.msra.mxu0 0
    %5951 = vmatprep.subr.bf16.mxu0 0
    %5952 = vmatpush1.bf16.msra.mxu0 0
    %5953 = vmatprep.subr.bf16.mxu0 0
    %5954 = vmatpush1.bf16.msra.mxu0 0
    %5955 = vmatprep.subr.bf16.mxu0 %v5921
    %5956 = vmatpush1.bf16.msra.mxu0 %v5918
    %5957 = vmatprep.subr.bf16.mxu0 0
    %5958 = vmatpush2.bf16.msra.mxu0 0
    %5959 = vmatprep.subr.bf16.mxu0 0
    %5960 = vmatpush2.bf16.msra.mxu0 0
    %5961 = vmatprep.subr.bf16.mxu0 0
    %5962 = vmatpush2.bf16.msra.mxu0 0
    %5963 = vmatprep.subr.bf16.mxu0 0
    %5964 = vmatpush2.bf16.msra.mxu0 0
    %5965 = vmatprep.subr.bf16.mxu0 0
    %5966 = vmatpush2.bf16.msra.mxu0 0
    %5967 = vmatprep.subr.bf16.mxu0 0
    %5968 = vmatpush2.bf16.msra.mxu0 0
    %5969 = vmatprep.subr.bf16.mxu0 0
    %5970 = vmatpush2.bf16.msra.mxu0 0
    %5971 = vmatprep.subr.bf16.mxu0 0
    %5972 = vmatpush2.bf16.msra.mxu0 0
    %5973 = vmatprep.mubr.bf16.mxu0 0
    %5974 = vmatmul.mubr.bf16.gmra.mxu0 %v5915
    %v5975 = vpop.f32.mrf.mxu0
    %v5976 = vadd.f32 0.0, %v5975
    %v5977 = vpop.f32.mrf.mxu0
    %v5978 = vadd.f32 0.0, %v5977
    %v5979 = vpop.f32.mrf.mxu0
    %v5980 = vadd.f32 0.0, %v5979
    %v5981 = vpop.f32.mrf.mxu0
    %v5982 = vadd.f32 0.0, %v5981
    %5983 = vdwg.mxu0
    %5984 = vmatprep.subr.bf16.mxu0 0
    %5985 = vmatpush1.bf16.msra.mxu0 0
    %5986 = vmatprep.subr.bf16.mxu0 0
    %5987 = vmatpush1.bf16.msra.mxu0 0
    %5988 = vmatprep.subr.bf16.mxu0 0
    %5989 = vmatpush1.bf16.msra.mxu0 0
    %5990 = vmatprep.subr.bf16.mxu0 0
    %5991 = vmatpush1.bf16.msra.mxu0 0
    %5992 = vmatprep.subr.bf16.mxu0 0
    %5993 = vmatpush1.bf16.msra.mxu0 0
    %5994 = vmatprep.subr.bf16.mxu0 0
    %5995 = vmatpush1.bf16.msra.mxu0 0
    %5996 = vmatprep.subr.bf16.mxu0 0
    %5997 = vmatpush1.bf16.msra.mxu0 0
    %5998 = vmatprep.subr.bf16.mxu0 %v5927
    %5999 = vmatpush1.bf16.msra.mxu0 %v5924
    %6000 = vmatprep.subr.bf16.mxu0 0
    %6001 = vmatpush2.bf16.msra.mxu0 0
    %6002 = vmatprep.subr.bf16.mxu0 0
    %6003 = vmatpush2.bf16.msra.mxu0 0
    %6004 = vmatprep.subr.bf16.mxu0 0
    %6005 = vmatpush2.bf16.msra.mxu0 0
    %6006 = vmatprep.subr.bf16.mxu0 0
    %6007 = vmatpush2.bf16.msra.mxu0 0
    %6008 = vmatprep.subr.bf16.mxu0 0
    %6009 = vmatpush2.bf16.msra.mxu0 0
    %6010 = vmatprep.subr.bf16.mxu0 0
    %6011 = vmatpush2.bf16.msra.mxu0 0
    %6012 = vmatprep.subr.bf16.mxu0 0
    %6013 = vmatpush2.bf16.msra.mxu0 0
    %6014 = vmatprep.subr.bf16.mxu0 0
    %6015 = vmatpush2.bf16.msra.mxu0 0
    %6016 = vmatprep.mubr.bf16.mxu0 0
    %6017 = vmatmul.mubr.bf16.gmra.mxu0 %v5915
    %v6018 = vpop.f32.mrf.mxu0
    %v6019 = vadd.f32 0.0, %v6018
    %v6020 = vpop.f32.mrf.mxu0
    %v6021 = vadd.f32 0.0, %v6020
    %v6022 = vpop.f32.mrf.mxu0
    %v6023 = vadd.f32 0.0, %v6022
    %v6024 = vpop.f32.mrf.mxu0
    %v6025 = vadd.f32 0.0, %v6024
    %6026 = vdwg.mxu0
    %6027 = vmatprep.subr.bf16.mxu0 0
    %6028 = vmatpush1.bf16.msra.mxu0 0
    %6029 = vmatprep.subr.bf16.mxu0 0
    %6030 = vmatpush1.bf16.msra.mxu0 0
    %6031 = vmatprep.subr.bf16.mxu0 0
    %6032 = vmatpush1.bf16.msra.mxu0 0
    %6033 = vmatprep.subr.bf16.mxu0 0
    %6034 = vmatpush1.bf16.msra.mxu0 0
    %6035 = vmatprep.subr.bf16.mxu0 0
    %6036 = vmatpush1.bf16.msra.mxu0 0
    %6037 = vmatprep.subr.bf16.mxu0 0
    %6038 = vmatpush1.bf16.msra.mxu0 0
    %6039 = vmatprep.subr.bf16.mxu0 0
    %6040 = vmatpush1.bf16.msra.mxu0 0
    %6041 = vmatprep.subr.bf16.mxu0 %v5933
    %6042 = vmatpush1.bf16.msra.mxu0 %v5930
    %6043 = vmatprep.subr.bf16.mxu0 0
    %6044 = vmatpush2.bf16.msra.mxu0 0
    %6045 = vmatprep.subr.bf16.mxu0 0
    %6046 = vmatpush2.bf16.msra.mxu0 0
    %6047 = vmatprep.subr.bf16.mxu0 0
    %6048 = vmatpush2.bf16.msra.mxu0 0
    %6049 = vmatprep.subr.bf16.mxu0 0
    %6050 = vmatpush2.bf16.msra.mxu0 0
    %6051 = vmatprep.subr.bf16.mxu0 0
    %6052 = vmatpush2.bf16.msra.mxu0 0
    %6053 = vmatprep.subr.bf16.mxu0 0
    %6054 = vmatpush2.bf16.msra.mxu0 0
    %6055 = vmatprep.subr.bf16.mxu0 0
    %6056 = vmatpush2.bf16.msra.mxu0 0
    %6057 = vmatprep.subr.bf16.mxu0 0
    %6058 = vmatpush2.bf16.msra.mxu0 0
    %6059 = vmatprep.mubr.bf16.mxu0 0
    %6060 = vmatmul.mubr.bf16.gmra.mxu0 %v5915
    %v6061 = vpop.f32.mrf.mxu0
    %v6062 = vadd.f32 0.0, %v6061
    %v6063 = vpop.f32.mrf.mxu0
    %v6064 = vadd.f32 0.0, %v6063
    %v6065 = vpop.f32.mrf.mxu0
    %v6066 = vadd.f32 0.0, %v6065
    %v6067 = vpop.f32.mrf.mxu0
    %v6068 = vadd.f32 0.0, %v6067
    %6069 = vdwg.mxu0
    %6070 = vmatprep.subr.bf16.mxu0 0
    %6071 = vmatpush1.bf16.msra.mxu0 0
    %6072 = vmatprep.subr.bf16.mxu0 0
    %6073 = vmatpush1.bf16.msra.mxu0 0
    %6074 = vmatprep.subr.bf16.mxu0 0
    %6075 = vmatpush1.bf16.msra.mxu0 0
    %6076 = vmatprep.subr.bf16.mxu0 0
    %6077 = vmatpush1.bf16.msra.mxu0 0
    %6078 = vmatprep.subr.bf16.mxu0 0
    %6079 = vmatpush1.bf16.msra.mxu0 0
    %6080 = vmatprep.subr.bf16.mxu0 0
    %6081 = vmatpush1.bf16.msra.mxu0 0
    %6082 = vmatprep.subr.bf16.mxu0 0
    %6083 = vmatpush1.bf16.msra.mxu0 0
    %6084 = vmatprep.subr.bf16.mxu0 %v5939
    %6085 = vmatpush1.bf16.msra.mxu0 %v5936
    %6086 = vmatprep.subr.bf16.mxu0 0
    %6087 = vmatpush2.bf16.msra.mxu0 0
    %6088 = vmatprep.subr.bf16.mxu0 0
    %6089 = vmatpush2.bf16.msra.mxu0 0
    %6090 = vmatprep.subr.bf16.mxu0 0
    %6091 = vmatpush2.bf16.msra.mxu0 0
    %6092 = vmatprep.subr.bf16.mxu0 0
    %6093 = vmatpush2.bf16.msra.mxu0 0
    %6094 = vmatprep.subr.bf16.mxu0 0
    %6095 = vmatpush2.bf16.msra.mxu0 0
    %6096 = vmatprep.subr.bf16.mxu0 0
    %6097 = vmatpush2.bf16.msra.mxu0 0
    %6098 = vmatprep.subr.bf16.mxu0 0
    %6099 = vmatpush2.bf16.msra.mxu0 0
    %6100 = vmatprep.subr.bf16.mxu0 0
    %6101 = vmatpush2.bf16.msra.mxu0 0
    %6102 = vmatprep.mubr.bf16.mxu0 0
    %6103 = vmatmul.mubr.bf16.gmra.mxu0 %v5915
    %v6104 = vpop.f32.mrf.mxu0
    %v6105 = vadd.f32 0.0, %v6104
    %v6106 = vpop.f32.mrf.mxu0
    %v6107 = vadd.f32 0.0, %v6106
    %v6108 = vpop.f32.mrf.mxu0
    %v6109 = vadd.f32 0.0, %v6108
    %v6110 = vpop.f32.mrf.mxu0
    %v6111 = vadd.f32 0.0, %v6110
    %6112 = vdwg.mxu0
    %v6113 = vadd.f32 %v5712, %v5976
    %v6114 = vadd.f32 %v5713, %v5978
    %v6115 = vadd.f32 %v5714, %v6019
    %v6116 = vadd.f32 %v5715, %v6021
    %v6117 = vadd.f32 %v5716, %v6062
    %v6118 = vadd.f32 %v5717, %v6064
    %v6119 = vadd.f32 %v5718, %v6105
    %v6120 = vadd.f32 %v5719, %v6107
    %v6121 = vadd.f32 %v5720, %v5980
    %v6122 = vadd.f32 %v5721, %v5982
    %v6123 = vadd.f32 %v5722, %v6023
    %v6124 = vadd.f32 %v5723, %v6025
    %v6125 = vadd.f32 %v5724, %v6066
    %v6126 = vadd.f32 %v5725, %v6068
    %v6127 = vadd.f32 %v5726, %v6109
    %v6128 = vadd.f32 %v5727, %v6111
    %v6129 = vshrl.u32 %v5744, 16
    %v6130 = vpack.i.b16 %v6129, %v6129
    %v6132 = vlaneseq
    %v6133 = vshrl.u32 %v6132, 7
    %v6134 = vsub.s32 3, %v6133
    %v6135 = vrot.slane %v6130, %v6134
    %v6136 = vshrl.u32 %v5745, 16
    %v6137 = vpack.i.b16 %v6136, %v6136
    %v6139 = vlaneseq
    %v6140 = vshrl.u32 %v6139, 7
    %v6141 = vsub.s32 3, %v6140
    %v6142 = vrot.slane %v6137, %v6141
    %v6143 = vshrl.u32 %v5746, 16
    %v6144 = vpack.i.b16 %v6143, %v6143
    %v6146 = vlaneseq
    %v6147 = vshrl.u32 %v6146, 7
    %v6148 = vsub.s32 3, %v6147
    %v6149 = vrot.slane %v6144, %v6148
    %v6150 = vshrl.u32 %v5747, 16
    %v6151 = vpack.i.b16 %v6150, %v6150
    %v6153 = vlaneseq
    %v6154 = vshrl.u32 %v6153, 7
    %v6155 = vsub.s32 3, %v6154
    %v6156 = vrot.slane %v6151, %v6155
    %v6157 = vshrl.u32 %v5748, 16
    %v6158 = vpack.i.b16 %v6157, %v6157
    %v6160 = vlaneseq
    %v6161 = vshrl.u32 %v6160, 7
    %v6162 = vsub.s32 3, %v6161
    %v6163 = vrot.slane %v6158, %v6162
    %v6164 = vshrl.u32 %v5749, 16
    %v6165 = vpack.i.b16 %v6164, %v6164
    %v6167 = vlaneseq
    %v6168 = vshrl.u32 %v6167, 7
    %v6169 = vsub.s32 3, %v6168
    %v6170 = vrot.slane %v6165, %v6169
    %v6171 = vshrl.u32 %v5750, 16
    %v6172 = vpack.i.b16 %v6171, %v6171
    %v6174 = vlaneseq
    %v6175 = vshrl.u32 %v6174, 7
    %v6176 = vsub.s32 3, %v6175
    %v6177 = vrot.slane %v6172, %v6176
    %v6178 = vshrl.u32 %v5751, 16
    %v6179 = vpack.i.b16 %v6178, %v6178
    %v6181 = vlaneseq
    %v6182 = vshrl.u32 %v6181, 7
    %v6183 = vsub.s32 3, %v6182
    %v6184 = vrot.slane %v6179, %v6183
    %v6193 = vunpack.c.l.b16 %v6135
    %v6194 = vunpack.c.l.b16 %v6142
    %v6195 = vunpack.c.l.b16 %v6149
    %v6196 = vunpack.c.l.b16 %v6156
    %v6197 = vunpack.c.l.b16 %v6163
    %v6198 = vunpack.c.l.b16 %v6170
    %v6199 = vunpack.c.l.b16 %v6177
    %v6200 = vunpack.c.l.b16 %v6184
    %v6201 = vpack.c.b16 %v6194, %v6193
    %v6202 = vpack.c.b16 %v6196, %v6195
    %v6203 = vpack.c.b16 %v6198, %v6197
    %v6204 = vpack.c.b16 %v6200, %v6199
    %6205 = vrot.lane.b32.xlu0 %v6201, 16
    %v6206 = vpop.permute.xlu0 %6205
    %6207 = vrot.lane.b32.xlu0 %v6202, 16
    %v6208 = vpop.permute.xlu0 %6207
    %6209 = vrot.lane.b32.xlu0 %v6203, 16
    %v6210 = vpop.permute.xlu0 %6209
    %6211 = vrot.lane.b32.xlu0 %v6204, 16
    %v6212 = vpop.permute.xlu0 %6211
    %v6213 = vrot.slane %v6206, 4
    %v6214 = vrot.slane %v6208, 4
    %v6215 = vrot.slane %v6210, 4
    %v6216 = vrot.slane %v6212, 4
    %v6217 = vsel %vm355, %v6213, %v6206
    %v6218 = vsel %vm188, %v6213, %v6214
    %v6219 = vsel %vm355, %v6218, %v6208
    %v6220 = vsel %vm188, %v6214, %v6215
    %v6221 = vsel %vm355, %v6220, %v6210
    %v6222 = vsel %vm188, %v6215, %v6216
    %v6223 = vsel %vm355, %v6222, %v6212
    %v6229 = vmul.bf16 %v5314, %v6217
    %v6230 = vmul.bf16 %v5315, %v6219
    %v6231 = vmul.bf16 %v5316, %v6221
    %v6232 = vmul.bf16 %v5317, %v6223
    %v6233 = vmul.bf16 %v5318, %v6216
    %s6234 = scalar_lea.vmem %s6, 56
    %v6235 = vld [vmem:[%s6234] sm:$0xf]
    %v6236 = vld [vmem:[%s6234 + $0x4] sm:$0xf]
    %v6239 = vunpack.c.l.b16 %v6235
    %v6240 = vunpack.c.l.b16 %v6236
    %v6241 = vpack.c.b16 %v6240, %v6239
    %v6247 = vunpack.c.l.b16 %v6229
    %v6248 = vunpack.c.h.b16 %v6229
    %v6249 = vunpack.c.l.b16 %v6230
    %v6250 = vunpack.c.h.b16 %v6230
    %v6251 = vunpack.c.l.b16 %v6231
    %v6252 = vunpack.c.h.b16 %v6231
    %v6253 = vunpack.c.l.b16 %v6232
    %v6254 = vunpack.c.h.b16 %v6232
    %v6255 = vunpack.c.l.b16 %v6233
    %v6256 = vpack.c.b16 %v6247, %v6247
    %v6257 = vpack.c.b16 %v6248, %v6248
    %v6258 = vpack.c.b16 %v6249, %v6249
    %v6259 = vpack.c.b16 %v6250, %v6250
    %v6260 = vpack.c.b16 %v6251, %v6251
    %v6261 = vpack.c.b16 %v6252, %v6252
    %v6262 = vpack.c.b16 %v6253, %v6253
    %v6263 = vpack.c.b16 %v6254, %v6254
    %v6264 = vpack.c.b16 %v6255, %v6255
    %6265 = vrot.lane.b32.xlu0 %v6256, 112
    %v6266 = vpop.permute.xlu0 %6265
    %6267 = vrot.lane.b32.xlu0 %v6257, 112
    %v6268 = vpop.permute.xlu0 %6267
    %6269 = vrot.lane.b32.xlu0 %v6258, 112
    %v6270 = vpop.permute.xlu0 %6269
    %6271 = vrot.lane.b32.xlu0 %v6259, 112
    %v6272 = vpop.permute.xlu0 %6271
    %6273 = vrot.lane.b32.xlu0 %v6260, 112
    %v6274 = vpop.permute.xlu0 %6273
    %6275 = vrot.lane.b32.xlu0 %v6261, 112
    %v6276 = vpop.permute.xlu0 %6275
    %6277 = vrot.lane.b32.xlu0 %v6262, 112
    %v6278 = vpop.permute.xlu0 %6277
    %6279 = vrot.lane.b32.xlu0 %v6263, 112
    %v6280 = vpop.permute.xlu0 %6279
    %6281 = vrot.lane.b32.xlu0 %v6264, 112
    %v6282 = vpop.permute.xlu0 %6281
    %v6283 = vsel %vm294, %v6266, %v6268
    %v6284 = vsel %vm294, %v6268, %v6270
    %v6285 = vsel %vm294, %v6270, %v6272
    %v6286 = vsel %vm294, %v6272, %v6274
    %v6287 = vsel %vm294, %v6274, %v6276
    %v6288 = vsel %vm294, %v6276, %v6278
    %v6289 = vsel %vm294, %v6278, %v6280
    %v6290 = vsel %vm294, %v6280, %v6282
    %v6292 = vsel %vm364, %v6241, 0
    %v6295 = vsel %vm368, %v6283, 0
    %v6298 = vsel %vm368, %v6284, 0
    %v6301 = vsel %vm368, %v6285, 0
    %v6304 = vsel %vm368, %v6286, 0
    %v6307 = vsel %vm368, %v6287, 0
    %v6310 = vsel %vm368, %v6288, 0
    %v6313 = vsel %vm368, %v6289, 0
    %v6316 = vsel %vm368, %v6290, 0
    %6318 = vmatprep.subr.bf16.mxu0 0
    %6319 = vmatpush1.bf16.msra.mxu0 0
    %6320 = vmatprep.subr.bf16.mxu0 0
    %6321 = vmatpush1.bf16.msra.mxu0 0
    %6322 = vmatprep.subr.bf16.mxu0 0
    %6323 = vmatpush1.bf16.msra.mxu0 0
    %6324 = vmatprep.subr.bf16.mxu0 0
    %6325 = vmatpush1.bf16.msra.mxu0 0
    %6326 = vmatprep.subr.bf16.mxu0 0
    %6327 = vmatpush1.bf16.msra.mxu0 0
    %6328 = vmatprep.subr.bf16.mxu0 0
    %6329 = vmatpush1.bf16.msra.mxu0 0
    %6330 = vmatprep.subr.bf16.mxu0 0
    %6331 = vmatpush1.bf16.msra.mxu0 0
    %6332 = vmatprep.subr.bf16.mxu0 %v6298
    %6333 = vmatpush1.bf16.msra.mxu0 %v6295
    %6334 = vmatprep.subr.bf16.mxu0 0
    %6335 = vmatpush2.bf16.msra.mxu0 0
    %6336 = vmatprep.subr.bf16.mxu0 0
    %6337 = vmatpush2.bf16.msra.mxu0 0
    %6338 = vmatprep.subr.bf16.mxu0 0
    %6339 = vmatpush2.bf16.msra.mxu0 0
    %6340 = vmatprep.subr.bf16.mxu0 0
    %6341 = vmatpush2.bf16.msra.mxu0 0
    %6342 = vmatprep.subr.bf16.mxu0 0
    %6343 = vmatpush2.bf16.msra.mxu0 0
    %6344 = vmatprep.subr.bf16.mxu0 0
    %6345 = vmatpush2.bf16.msra.mxu0 0
    %6346 = vmatprep.subr.bf16.mxu0 0
    %6347 = vmatpush2.bf16.msra.mxu0 0
    %6348 = vmatprep.subr.bf16.mxu0 0
    %6349 = vmatpush2.bf16.msra.mxu0 0
    %6350 = vmatprep.mubr.bf16.mxu0 0
    %6351 = vmatmul.mubr.bf16.gmra.mxu0 %v6292
    %v6352 = vpop.f32.mrf.mxu0
    %v6353 = vadd.f32 0.0, %v6352
    %v6354 = vpop.f32.mrf.mxu0
    %v6355 = vadd.f32 0.0, %v6354
    %v6356 = vpop.f32.mrf.mxu0
    %v6357 = vadd.f32 0.0, %v6356
    %v6358 = vpop.f32.mrf.mxu0
    %v6359 = vadd.f32 0.0, %v6358
    %6360 = vdwg.mxu0
    %6361 = vmatprep.subr.bf16.mxu0 0
    %6362 = vmatpush1.bf16.msra.mxu0 0
    %6363 = vmatprep.subr.bf16.mxu0 0
    %6364 = vmatpush1.bf16.msra.mxu0 0
    %6365 = vmatprep.subr.bf16.mxu0 0
    %6366 = vmatpush1.bf16.msra.mxu0 0
    %6367 = vmatprep.subr.bf16.mxu0 0
    %6368 = vmatpush1.bf16.msra.mxu0 0
    %6369 = vmatprep.subr.bf16.mxu0 0
    %6370 = vmatpush1.bf16.msra.mxu0 0
    %6371 = vmatprep.subr.bf16.mxu0 0
    %6372 = vmatpush1.bf16.msra.mxu0 0
    %6373 = vmatprep.subr.bf16.mxu0 0
    %6374 = vmatpush1.bf16.msra.mxu0 0
    %6375 = vmatprep.subr.bf16.mxu0 %v6304
    %6376 = vmatpush1.bf16.msra.mxu0 %v6301
    %6377 = vmatprep.subr.bf16.mxu0 0
    %6378 = vmatpush2.bf16.msra.mxu0 0
    %6379 = vmatprep.subr.bf16.mxu0 0
    %6380 = vmatpush2.bf16.msra.mxu0 0
    %6381 = vmatprep.subr.bf16.mxu0 0
    %6382 = vmatpush2.bf16.msra.mxu0 0
    %6383 = vmatprep.subr.bf16.mxu0 0
    %6384 = vmatpush2.bf16.msra.mxu0 0
    %6385 = vmatprep.subr.bf16.mxu0 0
    %6386 = vmatpush2.bf16.msra.mxu0 0
    %6387 = vmatprep.subr.bf16.mxu0 0
    %6388 = vmatpush2.bf16.msra.mxu0 0
    %6389 = vmatprep.subr.bf16.mxu0 0
    %6390 = vmatpush2.bf16.msra.mxu0 0
    %6391 = vmatprep.subr.bf16.mxu0 0
    %6392 = vmatpush2.bf16.msra.mxu0 0
    %6393 = vmatprep.mubr.bf16.mxu0 0
    %6394 = vmatmul.mubr.bf16.gmra.mxu0 %v6292
    %v6395 = vpop.f32.mrf.mxu0
    %v6396 = vadd.f32 0.0, %v6395
    %v6397 = vpop.f32.mrf.mxu0
    %v6398 = vadd.f32 0.0, %v6397
    %v6399 = vpop.f32.mrf.mxu0
    %v6400 = vadd.f32 0.0, %v6399
    %v6401 = vpop.f32.mrf.mxu0
    %v6402 = vadd.f32 0.0, %v6401
    %6403 = vdwg.mxu0
    %6404 = vmatprep.subr.bf16.mxu0 0
    %6405 = vmatpush1.bf16.msra.mxu0 0
    %6406 = vmatprep.subr.bf16.mxu0 0
    %6407 = vmatpush1.bf16.msra.mxu0 0
    %6408 = vmatprep.subr.bf16.mxu0 0
    %6409 = vmatpush1.bf16.msra.mxu0 0
    %6410 = vmatprep.subr.bf16.mxu0 0
    %6411 = vmatpush1.bf16.msra.mxu0 0
    %6412 = vmatprep.subr.bf16.mxu0 0
    %6413 = vmatpush1.bf16.msra.mxu0 0
    %6414 = vmatprep.subr.bf16.mxu0 0
    %6415 = vmatpush1.bf16.msra.mxu0 0
    %6416 = vmatprep.subr.bf16.mxu0 0
    %6417 = vmatpush1.bf16.msra.mxu0 0
    %6418 = vmatprep.subr.bf16.mxu0 %v6310
    %6419 = vmatpush1.bf16.msra.mxu0 %v6307
    %6420 = vmatprep.subr.bf16.mxu0 0
    %6421 = vmatpush2.bf16.msra.mxu0 0
    %6422 = vmatprep.subr.bf16.mxu0 0
    %6423 = vmatpush2.bf16.msra.mxu0 0
    %6424 = vmatprep.subr.bf16.mxu0 0
    %6425 = vmatpush2.bf16.msra.mxu0 0
    %6426 = vmatprep.subr.bf16.mxu0 0
    %6427 = vmatpush2.bf16.msra.mxu0 0
    %6428 = vmatprep.subr.bf16.mxu0 0
    %6429 = vmatpush2.bf16.msra.mxu0 0
    %6430 = vmatprep.subr.bf16.mxu0 0
    %6431 = vmatpush2.bf16.msra.mxu0 0
    %6432 = vmatprep.subr.bf16.mxu0 0
    %6433 = vmatpush2.bf16.msra.mxu0 0
    %6434 = vmatprep.subr.bf16.mxu0 0
    %6435 = vmatpush2.bf16.msra.mxu0 0
    %6436 = vmatprep.mubr.bf16.mxu0 0
    %6437 = vmatmul.mubr.bf16.gmra.mxu0 %v6292
    %v6438 = vpop.f32.mrf.mxu0
    %v6439 = vadd.f32 0.0, %v6438
    %v6440 = vpop.f32.mrf.mxu0
    %v6441 = vadd.f32 0.0, %v6440
    %v6442 = vpop.f32.mrf.mxu0
    %v6443 = vadd.f32 0.0, %v6442
    %v6444 = vpop.f32.mrf.mxu0
    %v6445 = vadd.f32 0.0, %v6444
    %6446 = vdwg.mxu0
    %6447 = vmatprep.subr.bf16.mxu0 0
    %6448 = vmatpush1.bf16.msra.mxu0 0
    %6449 = vmatprep.subr.bf16.mxu0 0
    %6450 = vmatpush1.bf16.msra.mxu0 0
    %6451 = vmatprep.subr.bf16.mxu0 0
    %6452 = vmatpush1.bf16.msra.mxu0 0
    %6453 = vmatprep.subr.bf16.mxu0 0
    %6454 = vmatpush1.bf16.msra.mxu0 0
    %6455 = vmatprep.subr.bf16.mxu0 0
    %6456 = vmatpush1.bf16.msra.mxu0 0
    %6457 = vmatprep.subr.bf16.mxu0 0
    %6458 = vmatpush1.bf16.msra.mxu0 0
    %6459 = vmatprep.subr.bf16.mxu0 0
    %6460 = vmatpush1.bf16.msra.mxu0 0
    %6461 = vmatprep.subr.bf16.mxu0 %v6316
    %6462 = vmatpush1.bf16.msra.mxu0 %v6313
    %6463 = vmatprep.subr.bf16.mxu0 0
    %6464 = vmatpush2.bf16.msra.mxu0 0
    %6465 = vmatprep.subr.bf16.mxu0 0
    %6466 = vmatpush2.bf16.msra.mxu0 0
    %6467 = vmatprep.subr.bf16.mxu0 0
    %6468 = vmatpush2.bf16.msra.mxu0 0
    %6469 = vmatprep.subr.bf16.mxu0 0
    %6470 = vmatpush2.bf16.msra.mxu0 0
    %6471 = vmatprep.subr.bf16.mxu0 0
    %6472 = vmatpush2.bf16.msra.mxu0 0
    %6473 = vmatprep.subr.bf16.mxu0 0
    %6474 = vmatpush2.bf16.msra.mxu0 0
    %6475 = vmatprep.subr.bf16.mxu0 0
    %6476 = vmatpush2.bf16.msra.mxu0 0
    %6477 = vmatprep.subr.bf16.mxu0 0
    %6478 = vmatpush2.bf16.msra.mxu0 0
    %6479 = vmatprep.mubr.bf16.mxu0 0
    %6480 = vmatmul.mubr.bf16.gmra.mxu0 %v6292
    %v6481 = vpop.f32.mrf.mxu0
    %v6482 = vadd.f32 0.0, %v6481
    %v6483 = vpop.f32.mrf.mxu0
    %v6484 = vadd.f32 0.0, %v6483
    %v6485 = vpop.f32.mrf.mxu0
    %v6486 = vadd.f32 0.0, %v6485
    %v6487 = vpop.f32.mrf.mxu0
    %v6488 = vadd.f32 0.0, %v6487
    %6489 = vdwg.mxu0
    %v6490 = vadd.f32 %v6113, %v6353
    %v6491 = vadd.f32 %v6114, %v6355
    %v6492 = vadd.f32 %v6115, %v6396
    %v6493 = vadd.f32 %v6116, %v6398
    %v6494 = vadd.f32 %v6117, %v6439
    %v6495 = vadd.f32 %v6118, %v6441
    %v6496 = vadd.f32 %v6119, %v6482
    %v6497 = vadd.f32 %v6120, %v6484
    %v6498 = vadd.f32 %v6121, %v6357
    %v6499 = vadd.f32 %v6122, %v6359
    %v6500 = vadd.f32 %v6123, %v6400
    %v6501 = vadd.f32 %v6124, %v6402
    %v6502 = vadd.f32 %v6125, %v6443
    %v6503 = vadd.f32 %v6126, %v6445
    %v6504 = vadd.f32 %v6127, %v6486
    %v6505 = vadd.f32 %v6128, %v6488
    %v6506 = vld [vmem:[%s1 + $0x20] sm:$0x11]
    %v6507 = vld [vmem:[%s1 + $0x28] sm:$0x11]
    %v6508 = vld [vmem:[%s1 + $0x30] sm:$0x11]
    %v6509 = vld [vmem:[%s1 + $0x38] sm:$0x11]
    %v6514 = vunpack.c.l.b16 %v6506
    %v6515 = vunpack.c.h.b16 %v6506
    %v6516 = vunpack.c.l.b16 %v6507
    %v6517 = vunpack.c.h.b16 %v6507
    %v6518 = vunpack.c.l.b16 %v6508
    %v6519 = vunpack.c.h.b16 %v6508
    %v6520 = vunpack.c.l.b16 %v6509
    %v6521 = vunpack.c.h.b16 %v6509
    %v6522 = vpack.c.b16 %v6514, %v6514
    %v6523 = vpack.c.b16 %v6515, %v6515
    %v6524 = vpack.c.b16 %v6516, %v6516
    %v6525 = vpack.c.b16 %v6517, %v6517
    %v6526 = vpack.c.b16 %v6518, %v6518
    %v6527 = vpack.c.b16 %v6519, %v6519
    %v6528 = vpack.c.b16 %v6520, %v6520
    %v6529 = vpack.c.b16 %v6521, %v6521
    %v6531 = vpack.i.b16 %v6522, %v6522
    %v6533 = vlaneseq
    %v6534 = vshrl.u32 %v6533, 7
    %v6535 = vsub.s32 0, %v6534
    %v6536 = vrot.slane %v6531, %v6535
    %v6538 = vpack.i.b16 %v6523, %v6523
    %v6540 = vlaneseq
    %v6541 = vshrl.u32 %v6540, 7
    %v6542 = vsub.s32 0, %v6541
    %v6543 = vrot.slane %v6538, %v6542
    %v6545 = vpack.i.b16 %v6524, %v6524
    %v6547 = vlaneseq
    %v6548 = vshrl.u32 %v6547, 7
    %v6549 = vsub.s32 0, %v6548
    %v6550 = vrot.slane %v6545, %v6549
    %v6552 = vpack.i.b16 %v6525, %v6525
    %v6554 = vlaneseq
    %v6555 = vshrl.u32 %v6554, 7
    %v6556 = vsub.s32 0, %v6555
    %v6557 = vrot.slane %v6552, %v6556
    %v6559 = vpack.i.b16 %v6526, %v6526
    %v6561 = vlaneseq
    %v6562 = vshrl.u32 %v6561, 7
    %v6563 = vsub.s32 0, %v6562
    %v6564 = vrot.slane %v6559, %v6563
    %v6566 = vpack.i.b16 %v6527, %v6527
    %v6568 = vlaneseq
    %v6569 = vshrl.u32 %v6568, 7
    %v6570 = vsub.s32 0, %v6569
    %v6571 = vrot.slane %v6566, %v6570
    %v6573 = vpack.i.b16 %v6528, %v6528
    %v6575 = vlaneseq
    %v6576 = vshrl.u32 %v6575, 7
    %v6577 = vsub.s32 0, %v6576
    %v6578 = vrot.slane %v6573, %v6577
    %v6580 = vpack.i.b16 %v6529, %v6529
    %v6582 = vlaneseq
    %v6583 = vshrl.u32 %v6582, 7
    %v6584 = vsub.s32 0, %v6583
    %v6585 = vrot.slane %v6580, %v6584
    %v6594 = vunpack.c.l.b16 %v6536
    %v6595 = vunpack.c.l.b16 %v6543
    %v6596 = vunpack.c.l.b16 %v6550
    %v6597 = vunpack.c.l.b16 %v6557
    %v6598 = vunpack.c.l.b16 %v6564
    %v6599 = vunpack.c.l.b16 %v6571
    %v6600 = vunpack.c.l.b16 %v6578
    %v6601 = vunpack.c.l.b16 %v6585
    %v6602 = vpack.c.b16 %v6595, %v6594
    %v6603 = vpack.c.b16 %v6597, %v6596
    %v6604 = vpack.c.b16 %v6599, %v6598
    %v6605 = vpack.c.b16 %v6601, %v6600
    %6606 = vrot.lane.b32.xlu0 %v6602, 17
    %v6607 = vpop.permute.xlu0 %6606
    %6608 = vrot.lane.b32.xlu0 %v6603, 17
    %v6609 = vpop.permute.xlu0 %6608
    %6610 = vrot.lane.b32.xlu0 %v6604, 17
    %v6611 = vpop.permute.xlu0 %6610
    %6612 = vrot.lane.b32.xlu0 %v6605, 17
    %v6613 = vpop.permute.xlu0 %6612
    %v6614 = vrot.slane %v6607, 4
    %v6615 = vrot.slane %v6609, 4
    %v6616 = vrot.slane %v6611, 4
    %v6617 = vrot.slane %v6613, 4
    %v6618 = vsel %vm598, %v6614, %v6607
    %v6619 = vsel %vm188, %v6614, %v6615
    %v6620 = vsel %vm598, %v6619, %v6609
    %v6621 = vsel %vm188, %v6615, %v6616
    %v6622 = vsel %vm598, %v6621, %v6611
    %v6623 = vsel %vm188, %v6616, %v6617
    %v6624 = vsel %vm598, %v6623, %v6613
    %v6630 = vmul.bf16 %v5314, %v6618
    %v6631 = vmul.bf16 %v5315, %v6620
    %v6632 = vmul.bf16 %v5316, %v6622
    %v6633 = vmul.bf16 %v5317, %v6624
    %v6634 = vmul.bf16 %v5318, %v6617
    %s6635 = scalar_lea.vmem %s6, 64
    %v6636 = vld [vmem:[%s6635] sm:$0xf]
    %v6637 = vld [vmem:[%s6635 + $0x4] sm:$0xf]
    %v6640 = vunpack.c.l.b16 %v6636
    %v6641 = vunpack.c.l.b16 %v6637
    %v6642 = vpack.c.b16 %v6641, %v6640
    %v6648 = vunpack.c.l.b16 %v6630
    %v6649 = vunpack.c.h.b16 %v6630
    %v6650 = vunpack.c.l.b16 %v6631
    %v6651 = vunpack.c.h.b16 %v6631
    %v6652 = vunpack.c.l.b16 %v6632
    %v6653 = vunpack.c.h.b16 %v6632
    %v6654 = vunpack.c.l.b16 %v6633
    %v6655 = vunpack.c.h.b16 %v6633
    %v6656 = vunpack.c.l.b16 %v6634
    %v6657 = vpack.c.b16 %v6648, %v6648
    %v6658 = vpack.c.b16 %v6649, %v6649
    %v6659 = vpack.c.b16 %v6650, %v6650
    %v6660 = vpack.c.b16 %v6651, %v6651
    %v6661 = vpack.c.b16 %v6652, %v6652
    %v6662 = vpack.c.b16 %v6653, %v6653
    %v6663 = vpack.c.b16 %v6654, %v6654
    %v6664 = vpack.c.b16 %v6655, %v6655
    %v6665 = vpack.c.b16 %v6656, %v6656
    %6666 = vrot.lane.b32.xlu0 %v6657, 111
    %v6667 = vpop.permute.xlu0 %6666
    %6668 = vrot.lane.b32.xlu0 %v6658, 111
    %v6669 = vpop.permute.xlu0 %6668
    %6670 = vrot.lane.b32.xlu0 %v6659, 111
    %v6671 = vpop.permute.xlu0 %6670
    %6672 = vrot.lane.b32.xlu0 %v6660, 111
    %v6673 = vpop.permute.xlu0 %6672
    %6674 = vrot.lane.b32.xlu0 %v6661, 111
    %v6675 = vpop.permute.xlu0 %6674
    %6676 = vrot.lane.b32.xlu0 %v6662, 111
    %v6677 = vpop.permute.xlu0 %6676
    %6678 = vrot.lane.b32.xlu0 %v6663, 111
    %v6679 = vpop.permute.xlu0 %6678
    %6680 = vrot.lane.b32.xlu0 %v6664, 111
    %v6681 = vpop.permute.xlu0 %6680
    %6682 = vrot.lane.b32.xlu0 %v6665, 111
    %v6683 = vpop.permute.xlu0 %6682
    %v6684 = vsel %vm186, %v6667, %v6669
    %v6685 = vsel %vm186, %v6669, %v6671
    %v6686 = vsel %vm186, %v6671, %v6673
    %v6687 = vsel %vm186, %v6673, %v6675
    %v6688 = vsel %vm186, %v6675, %v6677
    %v6689 = vsel %vm186, %v6677, %v6679
    %v6690 = vsel %vm186, %v6679, %v6681
    %v6691 = vsel %vm186, %v6681, %v6683
    %v6693 = vsel %vm364, %v6642, 0
    %v6696 = vsel %vm368, %v6684, 0
    %v6699 = vsel %vm368, %v6685, 0
    %v6702 = vsel %vm368, %v6686, 0
    %v6705 = vsel %vm368, %v6687, 0
    %v6708 = vsel %vm368, %v6688, 0
    %v6711 = vsel %vm368, %v6689, 0
    %v6714 = vsel %vm368, %v6690, 0
    %v6717 = vsel %vm368, %v6691, 0
    %6719 = vmatprep.subr.bf16.mxu0 0
    %6720 = vmatpush1.bf16.msra.mxu0 0
    %6721 = vmatprep.subr.bf16.mxu0 0
    %6722 = vmatpush1.bf16.msra.mxu0 0
    %6723 = vmatprep.subr.bf16.mxu0 0
    %6724 = vmatpush1.bf16.msra.mxu0 0
    %6725 = vmatprep.subr.bf16.mxu0 0
    %6726 = vmatpush1.bf16.msra.mxu0 0
    %6727 = vmatprep.subr.bf16.mxu0 0
    %6728 = vmatpush1.bf16.msra.mxu0 0
    %6729 = vmatprep.subr.bf16.mxu0 0
    %6730 = vmatpush1.bf16.msra.mxu0 0
    %6731 = vmatprep.subr.bf16.mxu0 0
    %6732 = vmatpush1.bf16.msra.mxu0 0
    %6733 = vmatprep.subr.bf16.mxu0 %v6699
    %6734 = vmatpush1.bf16.msra.mxu0 %v6696
    %6735 = vmatprep.subr.bf16.mxu0 0
    %6736 = vmatpush2.bf16.msra.mxu0 0
    %6737 = vmatprep.subr.bf16.mxu0 0
    %6738 = vmatpush2.bf16.msra.mxu0 0
    %6739 = vmatprep.subr.bf16.mxu0 0
    %6740 = vmatpush2.bf16.msra.mxu0 0
    %6741 = vmatprep.subr.bf16.mxu0 0
    %6742 = vmatpush2.bf16.msra.mxu0 0
    %6743 = vmatprep.subr.bf16.mxu0 0
    %6744 = vmatpush2.bf16.msra.mxu0 0
    %6745 = vmatprep.subr.bf16.mxu0 0
    %6746 = vmatpush2.bf16.msra.mxu0 0
    %6747 = vmatprep.subr.bf16.mxu0 0
    %6748 = vmatpush2.bf16.msra.mxu0 0
    %6749 = vmatprep.subr.bf16.mxu0 0
    %6750 = vmatpush2.bf16.msra.mxu0 0
    %6751 = vmatprep.mubr.bf16.mxu0 0
    %6752 = vmatmul.mubr.bf16.gmra.mxu0 %v6693
    %v6753 = vpop.f32.mrf.mxu0
    %v6754 = vadd.f32 0.0, %v6753
    %v6755 = vpop.f32.mrf.mxu0
    %v6756 = vadd.f32 0.0, %v6755
    %v6757 = vpop.f32.mrf.mxu0
    %v6758 = vadd.f32 0.0, %v6757
    %v6759 = vpop.f32.mrf.mxu0
    %v6760 = vadd.f32 0.0, %v6759
    %6761 = vdwg.mxu0
    %6762 = vmatprep.subr.bf16.mxu0 0
    %6763 = vmatpush1.bf16.msra.mxu0 0
    %6764 = vmatprep.subr.bf16.mxu0 0
    %6765 = vmatpush1.bf16.msra.mxu0 0
    %6766 = vmatprep.subr.bf16.mxu0 0
    %6767 = vmatpush1.bf16.msra.mxu0 0
    %6768 = vmatprep.subr.bf16.mxu0 0
    %6769 = vmatpush1.bf16.msra.mxu0 0
    %6770 = vmatprep.subr.bf16.mxu0 0
    %6771 = vmatpush1.bf16.msra.mxu0 0
    %6772 = vmatprep.subr.bf16.mxu0 0
    %6773 = vmatpush1.bf16.msra.mxu0 0
    %6774 = vmatprep.subr.bf16.mxu0 0
    %6775 = vmatpush1.bf16.msra.mxu0 0
    %6776 = vmatprep.subr.bf16.mxu0 %v6705
    %6777 = vmatpush1.bf16.msra.mxu0 %v6702
    %6778 = vmatprep.subr.bf16.mxu0 0
    %6779 = vmatpush2.bf16.msra.mxu0 0
    %6780 = vmatprep.subr.bf16.mxu0 0
    %6781 = vmatpush2.bf16.msra.mxu0 0
    %6782 = vmatprep.subr.bf16.mxu0 0
    %6783 = vmatpush2.bf16.msra.mxu0 0
    %6784 = vmatprep.subr.bf16.mxu0 0
    %6785 = vmatpush2.bf16.msra.mxu0 0
    %6786 = vmatprep.subr.bf16.mxu0 0
    %6787 = vmatpush2.bf16.msra.mxu0 0
    %6788 = vmatprep.subr.bf16.mxu0 0
    %6789 = vmatpush2.bf16.msra.mxu0 0
    %6790 = vmatprep.subr.bf16.mxu0 0
    %6791 = vmatpush2.bf16.msra.mxu0 0
    %6792 = vmatprep.subr.bf16.mxu0 0
    %6793 = vmatpush2.bf16.msra.mxu0 0
    %6794 = vmatprep.mubr.bf16.mxu0 0
    %6795 = vmatmul.mubr.bf16.gmra.mxu0 %v6693
    %v6796 = vpop.f32.mrf.mxu0
    %v6797 = vadd.f32 0.0, %v6796
    %v6798 = vpop.f32.mrf.mxu0
    %v6799 = vadd.f32 0.0, %v6798
    %v6800 = vpop.f32.mrf.mxu0
    %v6801 = vadd.f32 0.0, %v6800
    %v6802 = vpop.f32.mrf.mxu0
    %v6803 = vadd.f32 0.0, %v6802
    %6804 = vdwg.mxu0
    %6805 = vmatprep.subr.bf16.mxu0 0
    %6806 = vmatpush1.bf16.msra.mxu0 0
    %6807 = vmatprep.subr.bf16.mxu0 0
    %6808 = vmatpush1.bf16.msra.mxu0 0
    %6809 = vmatprep.subr.bf16.mxu0 0
    %6810 = vmatpush1.bf16.msra.mxu0 0
    %6811 = vmatprep.subr.bf16.mxu0 0
    %6812 = vmatpush1.bf16.msra.mxu0 0
    %6813 = vmatprep.subr.bf16.mxu0 0
    %6814 = vmatpush1.bf16.msra.mxu0 0
    %6815 = vmatprep.subr.bf16.mxu0 0
    %6816 = vmatpush1.bf16.msra.mxu0 0
    %6817 = vmatprep.subr.bf16.mxu0 0
    %6818 = vmatpush1.bf16.msra.mxu0 0
    %6819 = vmatprep.subr.bf16.mxu0 %v6711
    %6820 = vmatpush1.bf16.msra.mxu0 %v6708
    %6821 = vmatprep.subr.bf16.mxu0 0
    %6822 = vmatpush2.bf16.msra.mxu0 0
    %6823 = vmatprep.subr.bf16.mxu0 0
    %6824 = vmatpush2.bf16.msra.mxu0 0
    %6825 = vmatprep.subr.bf16.mxu0 0
    %6826 = vmatpush2.bf16.msra.mxu0 0
    %6827 = vmatprep.subr.bf16.mxu0 0
    %6828 = vmatpush2.bf16.msra.mxu0 0
    %6829 = vmatprep.subr.bf16.mxu0 0
    %6830 = vmatpush2.bf16.msra.mxu0 0
    %6831 = vmatprep.subr.bf16.mxu0 0
    %6832 = vmatpush2.bf16.msra.mxu0 0
    %6833 = vmatprep.subr.bf16.mxu0 0
    %6834 = vmatpush2.bf16.msra.mxu0 0
    %6835 = vmatprep.subr.bf16.mxu0 0
    %6836 = vmatpush2.bf16.msra.mxu0 0
    %6837 = vmatprep.mubr.bf16.mxu0 0
    %6838 = vmatmul.mubr.bf16.gmra.mxu0 %v6693
    %v6839 = vpop.f32.mrf.mxu0
    %v6840 = vadd.f32 0.0, %v6839
    %v6841 = vpop.f32.mrf.mxu0
    %v6842 = vadd.f32 0.0, %v6841
    %v6843 = vpop.f32.mrf.mxu0
    %v6844 = vadd.f32 0.0, %v6843
    %v6845 = vpop.f32.mrf.mxu0
    %v6846 = vadd.f32 0.0, %v6845
    %6847 = vdwg.mxu0
    %6848 = vmatprep.subr.bf16.mxu0 0
    %6849 = vmatpush1.bf16.msra.mxu0 0
    %6850 = vmatprep.subr.bf16.mxu0 0
    %6851 = vmatpush1.bf16.msra.mxu0 0
    %6852 = vmatprep.subr.bf16.mxu0 0
    %6853 = vmatpush1.bf16.msra.mxu0 0
    %6854 = vmatprep.subr.bf16.mxu0 0
    %6855 = vmatpush1.bf16.msra.mxu0 0
    %6856 = vmatprep.subr.bf16.mxu0 0
    %6857 = vmatpush1.bf16.msra.mxu0 0
    %6858 = vmatprep.subr.bf16.mxu0 0
    %6859 = vmatpush1.bf16.msra.mxu0 0
    %6860 = vmatprep.subr.bf16.mxu0 0
    %6861 = vmatpush1.bf16.msra.mxu0 0
    %6862 = vmatprep.subr.bf16.mxu0 %v6717
    %6863 = vmatpush1.bf16.msra.mxu0 %v6714
    %6864 = vmatprep.subr.bf16.mxu0 0
    %6865 = vmatpush2.bf16.msra.mxu0 0
    %6866 = vmatprep.subr.bf16.mxu0 0
    %6867 = vmatpush2.bf16.msra.mxu0 0
    %6868 = vmatprep.subr.bf16.mxu0 0
    %6869 = vmatpush2.bf16.msra.mxu0 0
    %6870 = vmatprep.subr.bf16.mxu0 0
    %6871 = vmatpush2.bf16.msra.mxu0 0
    %6872 = vmatprep.subr.bf16.mxu0 0
    %6873 = vmatpush2.bf16.msra.mxu0 0
    %6874 = vmatprep.subr.bf16.mxu0 0
    %6875 = vmatpush2.bf16.msra.mxu0 0
    %6876 = vmatprep.subr.bf16.mxu0 0
    %6877 = vmatpush2.bf16.msra.mxu0 0
    %6878 = vmatprep.subr.bf16.mxu0 0
    %6879 = vmatpush2.bf16.msra.mxu0 0
    %6880 = vmatprep.mubr.bf16.mxu0 0
    %6881 = vmatmul.mubr.bf16.gmra.mxu0 %v6693
    %v6882 = vpop.f32.mrf.mxu0
    %v6883 = vadd.f32 0.0, %v6882
    %v6884 = vpop.f32.mrf.mxu0
    %v6885 = vadd.f32 0.0, %v6884
    %v6886 = vpop.f32.mrf.mxu0
    %v6887 = vadd.f32 0.0, %v6886
    %v6888 = vpop.f32.mrf.mxu0
    %v6889 = vadd.f32 0.0, %v6888
    %6890 = vdwg.mxu0
    %v6891 = vadd.f32 %v6490, %v6754
    %v6892 = vadd.f32 %v6491, %v6756
    %v6893 = vadd.f32 %v6492, %v6797
    %v6894 = vadd.f32 %v6493, %v6799
    %v6895 = vadd.f32 %v6494, %v6840
    %v6896 = vadd.f32 %v6495, %v6842
    %v6897 = vadd.f32 %v6496, %v6883
    %v6898 = vadd.f32 %v6497, %v6885
    %v6899 = vadd.f32 %v6498, %v6758
    %v6900 = vadd.f32 %v6499, %v6760
    %v6901 = vadd.f32 %v6500, %v6801
    %v6902 = vadd.f32 %v6501, %v6803
    %v6903 = vadd.f32 %v6502, %v6844
    %v6904 = vadd.f32 %v6503, %v6846
    %v6905 = vadd.f32 %v6504, %v6887
    %v6906 = vadd.f32 %v6505, %v6889
    %v6907 = vld [vmem:[%s7] sm:$0xff]
    %v6908 = vld [vmem:[%s7 + $0x8] sm:$0xff]
    %6910 = vset.pattern.permute.xlu0 0
    %6911 = vperm.xlu0 %6910, %v6907
    %v6912 = vpop.permute.xlu0 %6911
    %6915 = vset.pattern.permute.xlu0 0
    %6916 = vperm.xlu0 %6915, %v6908
    %v6917 = vpop.permute.xlu0 %6916
    %v6919 = vadd.f32 %v6891, %v6912
    %v6920 = vadd.f32 %v6892, %v6912
    %v6921 = vadd.f32 %v6893, %v6912
    %v6922 = vadd.f32 %v6894, %v6912
    %v6923 = vadd.f32 %v6895, %v6912
    %v6924 = vadd.f32 %v6896, %v6912
    %v6925 = vadd.f32 %v6897, %v6912
    %v6926 = vadd.f32 %v6898, %v6912
    %v6927 = vadd.f32 %v6899, %v6917
    %v6928 = vadd.f32 %v6900, %v6917
    %v6929 = vadd.f32 %v6901, %v6917
    %v6930 = vadd.f32 %v6902, %v6917
    %v6931 = vadd.f32 %v6903, %v6917
    %v6932 = vadd.f32 %v6904, %v6917
    %v6933 = vadd.f32 %v6905, %v6917
    %v6934 = vadd.f32 %v6906, %v6917
    %v6935 = vmax.f32 %v6919, 0.0
    %v6936 = vmax.f32 %v6920, 0.0
    %v6937 = vmax.f32 %v6921, 0.0
    %v6938 = vmax.f32 %v6922, 0.0
    %v6939 = vmax.f32 %v6923, 0.0
    %v6940 = vmax.f32 %v6924, 0.0
    %v6941 = vmax.f32 %v6925, 0.0
    %v6942 = vmax.f32 %v6926, 0.0
    %v6943 = vmax.f32 %v6927, 0.0
    %v6944 = vmax.f32 %v6928, 0.0
    %v6945 = vmax.f32 %v6929, 0.0
    %v6946 = vmax.f32 %v6930, 0.0
    %v6947 = vmax.f32 %v6931, 0.0
    %v6948 = vmax.f32 %v6932, 0.0
    %v6949 = vmax.f32 %v6933, 0.0
    %v6950 = vmax.f32 %v6934, 0.0
    %v6951 = vpack.c.bf16 %v6943, %v6935
    %v6952 = vpack.c.bf16 %v6944, %v6936
    %v6953 = vpack.c.bf16 %v6945, %v6937
    %v6954 = vpack.c.bf16 %v6946, %v6938
    %v6955 = vpack.c.bf16 %v6947, %v6939
    %v6956 = vpack.c.bf16 %v6948, %v6940
    %v6957 = vpack.c.bf16 %v6949, %v6941
    %v6958 = vpack.c.bf16 %v6950, %v6942
    %v6959 = vsub.f32 %v6935, %v6939
    %v6960 = vsub.f32 %v6936, %v6940
    %v6961 = vsub.f32 %v6937, %v6941
    %v6962 = vsub.f32 %v6938, %v6942
    %v6963 = vsub.f32 %v6943, %v6947
    %v6964 = vsub.f32 %v6944, %v6948
    %v6965 = vsub.f32 %v6945, %v6949
    %v6966 = vsub.f32 %v6946, %v6950
    %v6967 = vand.u32 2147483647, %v6959
    %v6968 = vand.u32 2147483647, %v6960
    %v6969 = vand.u32 2147483647, %v6961
    %v6970 = vand.u32 2147483647, %v6962
    %v6971 = vand.u32 2147483647, %v6963
    %v6972 = vand.u32 2147483647, %v6964
    %v6973 = vand.u32 2147483647, %v6965
    %v6974 = vand.u32 2147483647, %v6966
    %v6975 = vadd.f32 %v6967, %v6968
    %v6976 = vadd.f32 %v6975, %v6969
    %v6977 = vadd.f32 %v6976, %v6970
    %v6978 = vadd.f32 %v6977, %v6971
    %v6979 = vadd.f32 %v6978, %v6972
    %v6980 = vadd.f32 %v6979, %v6973
    %v6981 = vadd.f32 %v6980, %v6974
    %6982 = vadd.xlane.f32.xlu0 %v6981
    %v6983 = vpop.xlane.xlu0 %6982
    %v6984 = vrot.slane %v6983, 4
    %v6985 = vadd.f32 %v6983, %v6984
    %v6986 = vrot.slane %v6985, 2
    %v6987 = vadd.f32 %v6985, %v6986
    %v6988 = vrot.slane %v6987, 1
    %v6989 = vadd.f32 %v6987, %v6988
    %s6990 = vtos %v6989
    %v6991 = vstv %s6990
    %v6992 = vmul.f32 %v6991, 0.00012207031
    %6993 = vst.msk [vmem:[#allocation8] sm:$0x1] %vm67, %v6992
    %6994 = vmatprep.subr.bf16.mxu0 0
    %6995 = vmatpush1.bf16.xpose.msra.mxu0 0
    %6996 = vmatprep.subr.bf16.mxu0 0
    %6997 = vmatpush1.bf16.xpose.msra.mxu0 0
    %6998 = vmatprep.subr.bf16.mxu0 0
    %6999 = vmatpush1.bf16.xpose.msra.mxu0 0
    %7000 = vmatprep.subr.bf16.mxu0 0
    %7001 = vmatpush1.bf16.xpose.msra.mxu0 0
    %7002 = vmatprep.subr.bf16.mxu0 0
    %7003 = vmatpush1.bf16.xpose.msra.mxu0 0
    %7004 = vmatprep.subr.bf16.mxu0 0
    %7005 = vmatpush1.bf16.xpose.msra.mxu0 0
    %7006 = vmatprep.subr.bf16.mxu0 0
    %7007 = vmatpush1.bf16.xpose.msra.mxu0 0
    %7008 = vmatprep.subr.bf16.mxu0 %v6952
    %7009 = vmatpush1.bf16.xpose.msra.mxu0 %v6951
    %7010 = vmatprep.subr.bf16.mxu0 0
    %7011 = vmatpush2.bf16.xpose.msra.mxu0 0
    %7012 = vmatprep.subr.bf16.mxu0 0
    %7013 = vmatpush2.bf16.xpose.msra.mxu0 0
    %7014 = vmatprep.subr.bf16.mxu0 0
    %7015 = vmatpush2.bf16.xpose.msra.mxu0 0
    %7016 = vmatprep.subr.bf16.mxu0 0
    %7017 = vmatpush2.bf16.xpose.msra.mxu0 0
    %7018 = vmatprep.subr.bf16.mxu0 0
    %7019 = vmatpush2.bf16.xpose.msra.mxu0 0
    %7020 = vmatprep.subr.bf16.mxu0 0
    %7021 = vmatpush2.bf16.xpose.msra.mxu0 0
    %7022 = vmatprep.subr.bf16.mxu0 0
    %7023 = vmatpush2.bf16.xpose.msra.mxu0 0
    %7024 = vmatprep.subr.bf16.mxu0 0
    %7025 = vmatpush2.bf16.xpose.msra.mxu0 0
    %7026 = vmatprep.mubr.bf16.mxu0 %v6952
    %7027 = vmatmul.mubr.bf16.gmra.mxu0 %v6951
    %v7028 = vpop.f32.mrf.mxu0
    %v7029 = vadd.f32 0.0, %v7028
    %v7030 = vpop.f32.mrf.mxu0
    %v7031 = vpop.f32.mrf.mxu0
    %v7032 = vadd.f32 0.0, %v7031
    %v7033 = vpop.f32.mrf.mxu0
    %7034 = vdwg.mxu0
    %7035 = vmatprep.subr.bf16.mxu0 0
    %7036 = vmatpush1.bf16.xpose.msra.mxu0 0
    %7037 = vmatprep.subr.bf16.mxu0 0
    %7038 = vmatpush1.bf16.xpose.msra.mxu0 0
    %7039 = vmatprep.subr.bf16.mxu0 0
    %7040 = vmatpush1.bf16.xpose.msra.mxu0 0
    %7041 = vmatprep.subr.bf16.mxu0 0
    %7042 = vmatpush1.bf16.xpose.msra.mxu0 0
    %7043 = vmatprep.subr.bf16.mxu0 0
    %7044 = vmatpush1.bf16.xpose.msra.mxu0 0
    %7045 = vmatprep.subr.bf16.mxu0 0
    %7046 = vmatpush1.bf16.xpose.msra.mxu0 0
    %7047 = vmatprep.subr.bf16.mxu0 0
    %7048 = vmatpush1.bf16.xpose.msra.mxu0 0
    %7049 = vmatprep.subr.bf16.mxu0 %v6956
    %7050 = vmatpush1.bf16.xpose.msra.mxu0 %v6955
    %7051 = vmatprep.subr.bf16.mxu0 0
    %7052 = vmatpush2.bf16.xpose.msra.mxu0 0
    %7053 = vmatprep.subr.bf16.mxu0 0
    %7054 = vmatpush2.bf16.xpose.msra.mxu0 0
    %7055 = vmatprep.subr.bf16.mxu0 0
    %7056 = vmatpush2.bf16.xpose.msra.mxu0 0
    %7057 = vmatprep.subr.bf16.mxu0 0
    %7058 = vmatpush2.bf16.xpose.msra.mxu0 0
    %7059 = vmatprep.subr.bf16.mxu0 0
    %7060 = vmatpush2.bf16.xpose.msra.mxu0 0
    %7061 = vmatprep.subr.bf16.mxu0 0
    %7062 = vmatpush2.bf16.xpose.msra.mxu0 0
    %7063 = vmatprep.subr.bf16.mxu0 0
    %7064 = vmatpush2.bf16.xpose.msra.mxu0 0
    %7065 = vmatprep.subr.bf16.mxu0 0
    %7066 = vmatpush2.bf16.xpose.msra.mxu0 0
    %7067 = vmatprep.mubr.bf16.mxu0 %v6956
    %7068 = vmatmul.mubr.bf16.gmra.mxu0 %v6955
    %v7069 = vpop.f32.mrf.mxu0
    %v7070 = vadd.f32 0.0, %v7069
    %v7071 = vpop.f32.mrf.mxu0
    %v7072 = vpop.f32.mrf.mxu0
    %v7073 = vadd.f32 0.0, %v7072
    %v7074 = vpop.f32.mrf.mxu0
    %7075 = vdwg.mxu0
    %v7076 = vsub.f32 %v7029, %v7070
    %v7077 = vsub.f32 %v7032, %v7073
    %v7078 = vand.u32 2147483647, %v7076
    %v7079 = vand.u32 2147483647, %v7077
    %vm7080 = vcmask 130048
    %v7081 = vsel %vm7080, %v7078, 0.0
    %v7082 = vsel %vm7080, %v7079, 0.0
    %v7083 = vadd.f32 %v7081, %v7082
    %7084 = vadd.xlane.f32.xlu0 %v7083
    %v7085 = vpop.xlane.xlu0 %7084
    %v7086 = vrot.slane %v7085, 4
    %v7087 = vadd.f32 %v7085, %v7086
    %v7088 = vrot.slane %v7087, 2
    %v7089 = vadd.f32 %v7087, %v7088
    %v7090 = vrot.slane %v7089, 1
    %v7091 = vadd.f32 %v7089, %v7090
    %s7092 = vtos %v7091
    %v7093 = vstv %s7092
    %v7094 = vadd.f32 %v7093, 0.0
    %7095 = vmatprep.subr.bf16.mxu0 0
    %7096 = vmatpush1.bf16.xpose.msra.mxu0 0
    %7097 = vmatprep.subr.bf16.mxu0 0
    %7098 = vmatpush1.bf16.xpose.msra.mxu0 0
    %7099 = vmatprep.subr.bf16.mxu0 0
    %7100 = vmatpush1.bf16.xpose.msra.mxu0 0
    %7101 = vmatprep.subr.bf16.mxu0 0
    %7102 = vmatpush1.bf16.xpose.msra.mxu0 0
    %7103 = vmatprep.subr.bf16.mxu0 0
    %7104 = vmatpush1.bf16.xpose.msra.mxu0 0
    %7105 = vmatprep.subr.bf16.mxu0 0
    %7106 = vmatpush1.bf16.xpose.msra.mxu0 0
    %7107 = vmatprep.subr.bf16.mxu0 0
    %7108 = vmatpush1.bf16.xpose.msra.mxu0 0
    %7109 = vmatprep.subr.bf16.mxu0 %v6954
    %7110 = vmatpush1.bf16.xpose.msra.mxu0 %v6953
    %7111 = vmatprep.subr.bf16.mxu0 0
    %7112 = vmatpush2.bf16.xpose.msra.mxu0 0
    %7113 = vmatprep.subr.bf16.mxu0 0
    %7114 = vmatpush2.bf16.xpose.msra.mxu0 0
    %7115 = vmatprep.subr.bf16.mxu0 0
    %7116 = vmatpush2.bf16.xpose.msra.mxu0 0
    %7117 = vmatprep.subr.bf16.mxu0 0
    %7118 = vmatpush2.bf16.xpose.msra.mxu0 0
    %7119 = vmatprep.subr.bf16.mxu0 0
    %7120 = vmatpush2.bf16.xpose.msra.mxu0 0
    %7121 = vmatprep.subr.bf16.mxu0 0
    %7122 = vmatpush2.bf16.xpose.msra.mxu0 0
    %7123 = vmatprep.subr.bf16.mxu0 0
    %7124 = vmatpush2.bf16.xpose.msra.mxu0 0
    %7125 = vmatprep.subr.bf16.mxu0 0
    %7126 = vmatpush2.bf16.xpose.msra.mxu0 0
    %7127 = vmatprep.mubr.bf16.mxu0 %v6954
    %7128 = vmatmul.mubr.bf16.gmra.mxu0 %v6953
    %v7129 = vpop.f32.mrf.mxu0
    %v7130 = vadd.f32 0.0, %v7129
    %v7131 = vpop.f32.mrf.mxu0
    %v7132 = vpop.f32.mrf.mxu0
    %v7133 = vadd.f32 0.0, %v7132
    %v7134 = vpop.f32.mrf.mxu0
    %7135 = vdwg.mxu0
    %7136 = vmatprep.subr.bf16.mxu0 0
    %7137 = vmatpush1.bf16.xpose.msra.mxu0 0
    %7138 = vmatprep.subr.bf16.mxu0 0
    %7139 = vmatpush1.bf16.xpose.msra.mxu0 0
    %7140 = vmatprep.subr.bf16.mxu0 0
    %7141 = vmatpush1.bf16.xpose.msra.mxu0 0
    %7142 = vmatprep.subr.bf16.mxu0 0
    %7143 = vmatpush1.bf16.xpose.msra.mxu0 0
    %7144 = vmatprep.subr.bf16.mxu0 0
    %7145 = vmatpush1.bf16.xpose.msra.mxu0 0
    %7146 = vmatprep.subr.bf16.mxu0 0
    %7147 = vmatpush1.bf16.xpose.msra.mxu0 0
    %7148 = vmatprep.subr.bf16.mxu0 0
    %7149 = vmatpush1.bf16.xpose.msra.mxu0 0
    %7150 = vmatprep.subr.bf16.mxu0 %v6958
    %7151 = vmatpush1.bf16.xpose.msra.mxu0 %v6957
    %7152 = vmatprep.subr.bf16.mxu0 0
    %7153 = vmatpush2.bf16.xpose.msra.mxu0 0
    %7154 = vmatprep.subr.bf16.mxu0 0
    %7155 = vmatpush2.bf16.xpose.msra.mxu0 0
    %7156 = vmatprep.subr.bf16.mxu0 0
    %7157 = vmatpush2.bf16.xpose.msra.mxu0 0
    %7158 = vmatprep.subr.bf16.mxu0 0
    %7159 = vmatpush2.bf16.xpose.msra.mxu0 0
    %7160 = vmatprep.subr.bf16.mxu0 0
    %7161 = vmatpush2.bf16.xpose.msra.mxu0 0
    %7162 = vmatprep.subr.bf16.mxu0 0
    %7163 = vmatpush2.bf16.xpose.msra.mxu0 0
    %7164 = vmatprep.subr.bf16.mxu0 0
    %7165 = vmatpush2.bf16.xpose.msra.mxu0 0
    %7166 = vmatprep.subr.bf16.mxu0 0
    %7167 = vmatpush2.bf16.xpose.msra.mxu0 0
    %7168 = vmatprep.mubr.bf16.mxu0 %v6958
    %7169 = vmatmul.mubr.bf16.gmra.mxu0 %v6957
    %v7170 = vpop.f32.mrf.mxu0
    %v7171 = vadd.f32 0.0, %v7170
    %v7172 = vpop.f32.mrf.mxu0
    %v7173 = vpop.f32.mrf.mxu0
    %v7174 = vadd.f32 0.0, %v7173
    %v7175 = vpop.f32.mrf.mxu0
    %7176 = vdwg.mxu0
    %v7177 = vsub.f32 %v7130, %v7171
    %v7178 = vsub.f32 %v7133, %v7174
    %v7179 = vand.u32 2147483647, %v7177
    %v7180 = vand.u32 2147483647, %v7178
    %v7181 = vsel %vm7080, %v7179, 0.0
    %v7182 = vsel %vm7080, %v7180, 0.0
    %v7183 = vadd.f32 %v7181, %v7182
    %7184 = vadd.xlane.f32.xlu0 %v7183
    %v7185 = vpop.xlane.xlu0 %7184
    %v7186 = vrot.slane %v7185, 4
    %v7187 = vadd.f32 %v7185, %v7186
    %v7188 = vrot.slane %v7187, 2
    %v7189 = vadd.f32 %v7187, %v7188
    %v7190 = vrot.slane %v7189, 1
    %v7191 = vadd.f32 %v7189, %v7190
    %s7192 = vtos %v7191
    %v7193 = vstv %s7192
    %v7194 = vadd.f32 %v7094, %v7193
    %v7195 = vmul.f32 %v7194, 4.7683716e-07
    %7196 = vst.msk [vmem:[#allocation12] sm:$0x1] %vm67, %v7195
    %7197 = vst [vmem:[#allocation3] sm:$0xf] 0
    %7198 = vst [vmem:[#allocation3 + $0x28] sm:$0xf] 0
    %7199 = vst [vmem:[#allocation3 + $0x24] sm:$0xf] 0
    %7200 = vst [vmem:[#allocation3 + $0x4c] sm:$0xf] 0
    %v7209 = vunpack.c.l.b16 %v6951
    %v7210 = vunpack.c.l.b16 %v6952
    %v7211 = vunpack.c.l.b16 %v6953
    %v7212 = vunpack.c.l.b16 %v6954
    %v7213 = vunpack.c.l.b16 %v6955
    %v7214 = vunpack.c.l.b16 %v6956
    %v7215 = vunpack.c.l.b16 %v6957
    %v7216 = vunpack.c.l.b16 %v6958
    %v7217 = vunpack.c.h.b16 %v6951
    %v7218 = vunpack.c.h.b16 %v6952
    %v7219 = vunpack.c.h.b16 %v6953
    %v7220 = vunpack.c.h.b16 %v6954
    %v7221 = vunpack.c.h.b16 %v6955
    %v7222 = vunpack.c.h.b16 %v6956
    %v7223 = vunpack.c.h.b16 %v6957
    %v7224 = vunpack.c.h.b16 %v6958
    %v7225 = vpack.c.b16 %v7210, %v7209
    %v7226 = vpack.c.b16 %v7212, %v7211
    %v7227 = vpack.c.b16 %v7214, %v7213
    %v7228 = vpack.c.b16 %v7216, %v7215
    %v7229 = vpack.c.b16 %v7218, %v7217
    %v7230 = vpack.c.b16 %v7220, %v7219
    %v7231 = vpack.c.b16 %v7222, %v7221
    %v7232 = vpack.c.b16 %v7224, %v7223
    %7241 = vst [vmem:[#allocation3 + $0x4] sm:$0xff] %v7225
    %7242 = vst [vmem:[#allocation3 + $0xc] sm:$0xff] %v7226
    %7243 = vst [vmem:[#allocation3 + $0x14] sm:$0xff] %v7227
    %7244 = vst [vmem:[#allocation3 + $0x1c] sm:$0xff] %v7228
    %7245 = vst [vmem:[#allocation3 + $0x2c] sm:$0xff] %v7229
    %7246 = vst [vmem:[#allocation3 + $0x34] sm:$0xff] %v7230
    %7247 = vst [vmem:[#allocation3 + $0x3c] sm:$0xff] %v7231
    %7248 = vst [vmem:[#allocation3 + $0x44] sm:$0xff] %v7232
    %v7249 = vld [vmem:[#allocation3] sm:$0xff]
    %v7250 = vld [vmem:[#allocation3 + $0x8] sm:$0xff]
    %v7251 = vld [vmem:[#allocation3 + $0x10] sm:$0xff]
    %v7252 = vld [vmem:[#allocation3 + $0x18] sm:$0xff]
    %v7253 = vld [vmem:[#allocation3 + $0x20] sm:$0xf]
    %v7254 = vld [vmem:[#allocation3 + $0x28] sm:$0xff]
    %v7255 = vld [vmem:[#allocation3 + $0x30] sm:$0xff]
    %v7256 = vld [vmem:[#allocation3 + $0x38] sm:$0xff]
    %v7257 = vld [vmem:[#allocation3 + $0x40] sm:$0xff]
    %v7258 = vld [vmem:[#allocation3 + $0x48] sm:$0xf]
    %v7259 = vld [vmem:[%s1] sm:$0x11]
    %v7260 = vld [vmem:[%s1 + $0x8] sm:$0x11]
    %v7261 = vld [vmem:[%s1 + $0x10] sm:$0x11]
    %v7262 = vld [vmem:[%s1 + $0x18] sm:$0x11]
    %v7267 = vunpack.c.l.b16 %v7259
    %v7268 = vunpack.c.h.b16 %v7259
    %v7269 = vunpack.c.l.b16 %v7260
    %v7270 = vunpack.c.h.b16 %v7260
    %v7271 = vunpack.c.l.b16 %v7261
    %v7272 = vunpack.c.h.b16 %v7261
    %v7273 = vunpack.c.l.b16 %v7262
    %v7274 = vunpack.c.h.b16 %v7262
    %v7275 = vpack.c.b16 %v7267, %v7267
    %v7276 = vpack.c.b16 %v7268, %v7268
    %v7277 = vpack.c.b16 %v7269, %v7269
    %v7278 = vpack.c.b16 %v7270, %v7270
    %v7279 = vpack.c.b16 %v7271, %v7271
    %v7280 = vpack.c.b16 %v7272, %v7272
    %v7281 = vpack.c.b16 %v7273, %v7273
    %v7282 = vpack.c.b16 %v7274, %v7274
    %v7284 = vpack.i.b16 %v7275, %v7275
    %v7286 = vlaneseq
    %v7287 = vshrl.u32 %v7286, 7
    %v7288 = vsub.s32 0, %v7287
    %v7289 = vrot.slane %v7284, %v7288
    %v7291 = vpack.i.b16 %v7276, %v7276
    %v7293 = vlaneseq
    %v7294 = vshrl.u32 %v7293, 7
    %v7295 = vsub.s32 0, %v7294
    %v7296 = vrot.slane %v7291, %v7295
    %v7298 = vpack.i.b16 %v7277, %v7277
    %v7300 = vlaneseq
    %v7301 = vshrl.u32 %v7300, 7
    %v7302 = vsub.s32 0, %v7301
    %v7303 = vrot.slane %v7298, %v7302
    %v7305 = vpack.i.b16 %v7278, %v7278
    %v7307 = vlaneseq
    %v7308 = vshrl.u32 %v7307, 7
    %v7309 = vsub.s32 0, %v7308
    %v7310 = vrot.slane %v7305, %v7309
    %v7312 = vpack.i.b16 %v7279, %v7279
    %v7314 = vlaneseq
    %v7315 = vshrl.u32 %v7314, 7
    %v7316 = vsub.s32 0, %v7315
    %v7317 = vrot.slane %v7312, %v7316
    %v7319 = vpack.i.b16 %v7280, %v7280
    %v7321 = vlaneseq
    %v7322 = vshrl.u32 %v7321, 7
    %v7323 = vsub.s32 0, %v7322
    %v7324 = vrot.slane %v7319, %v7323
    %v7326 = vpack.i.b16 %v7281, %v7281
    %v7328 = vlaneseq
    %v7329 = vshrl.u32 %v7328, 7
    %v7330 = vsub.s32 0, %v7329
    %v7331 = vrot.slane %v7326, %v7330
    %v7333 = vpack.i.b16 %v7282, %v7282
    %v7335 = vlaneseq
    %v7336 = vshrl.u32 %v7335, 7
    %v7337 = vsub.s32 0, %v7336
    %v7338 = vrot.slane %v7333, %v7337
    %v7347 = vunpack.c.l.b16 %v7289
    %v7348 = vunpack.c.l.b16 %v7296
    %v7349 = vunpack.c.l.b16 %v7303
    %v7350 = vunpack.c.l.b16 %v7310
    %v7351 = vunpack.c.l.b16 %v7317
    %v7352 = vunpack.c.l.b16 %v7324
    %v7353 = vunpack.c.l.b16 %v7331
    %v7354 = vunpack.c.l.b16 %v7338
    %v7355 = vpack.c.b16 %v7348, %v7347
    %v7356 = vpack.c.b16 %v7350, %v7349
    %v7357 = vpack.c.b16 %v7352, %v7351
    %v7358 = vpack.c.b16 %v7354, %v7353
    %7359 = vrot.lane.b32.xlu0 %v7355, 111
    %v7360 = vpop.permute.xlu0 %7359
    %7361 = vrot.lane.b32.xlu0 %v7356, 111
    %v7362 = vpop.permute.xlu0 %7361
    %7363 = vrot.lane.b32.xlu0 %v7357, 111
    %v7364 = vpop.permute.xlu0 %7363
    %7365 = vrot.lane.b32.xlu0 %v7358, 111
    %v7366 = vpop.permute.xlu0 %7365
    %v7367 = vrot.slane %v7360, 4
    %v7368 = vrot.slane %v7362, 4
    %v7369 = vrot.slane %v7364, 4
    %v7370 = vrot.slane %v7366, 4
    %v7371 = vsel %vm186, %v7367, %v7360
    %v7372 = vsel %vm188, %v7367, %v7368
    %v7373 = vsel %vm186, %v7372, %v7362
    %v7374 = vsel %vm188, %v7368, %v7369
    %v7375 = vsel %vm186, %v7374, %v7364
    %v7376 = vsel %vm188, %v7369, %v7370
    %v7377 = vsel %vm186, %v7376, %v7366
    %v7383 = vmul.bf16 %v7249, %v7371
    %v7384 = vmul.bf16 %v7250, %v7373
    %v7385 = vmul.bf16 %v7251, %v7375
    %v7386 = vmul.bf16 %v7252, %v7377
    %v7387 = vmul.bf16 %v7253, %v7370
    %v7388 = vmul.bf16 %v7254, %v7371
    %v7389 = vmul.bf16 %v7255, %v7373
    %v7390 = vmul.bf16 %v7256, %v7375
    %v7391 = vmul.bf16 %v7257, %v7377
    %v7392 = vmul.bf16 %v7258, %v7370
    %v7393 = vld [vmem:[%s8] sm:$0xf]
    %v7394 = vld [vmem:[%s8 + $0x4] sm:$0xf]
    %v7395 = vshrl.u32 %v7275, 16
    %v7396 = vpack.i.b16 %v7395, %v7395
    %v7398 = vlaneseq
    %v7399 = vshrl.u32 %v7398, 7
    %v7400 = vsub.s32 0, %v7399
    %v7401 = vrot.slane %v7396, %v7400
    %v7402 = vshrl.u32 %v7276, 16
    %v7403 = vpack.i.b16 %v7402, %v7402
    %v7405 = vlaneseq
    %v7406 = vshrl.u32 %v7405, 7
    %v7407 = vsub.s32 0, %v7406
    %v7408 = vrot.slane %v7403, %v7407
    %v7409 = vshrl.u32 %v7277, 16
    %v7410 = vpack.i.b16 %v7409, %v7409
    %v7412 = vlaneseq
    %v7413 = vshrl.u32 %v7412, 7
    %v7414 = vsub.s32 0, %v7413
    %v7415 = vrot.slane %v7410, %v7414
    %v7416 = vshrl.u32 %v7278, 16
    %v7417 = vpack.i.b16 %v7416, %v7416
    %v7419 = vlaneseq
    %v7420 = vshrl.u32 %v7419, 7
    %v7421 = vsub.s32 0, %v7420
    %v7422 = vrot.slane %v7417, %v7421
    %v7423 = vshrl.u32 %v7279, 16
    %v7424 = vpack.i.b16 %v7423, %v7423
    %v7426 = vlaneseq
    %v7427 = vshrl.u32 %v7426, 7
    %v7428 = vsub.s32 0, %v7427
    %v7429 = vrot.slane %v7424, %v7428
    %v7430 = vshrl.u32 %v7280, 16
    %v7431 = vpack.i.b16 %v7430, %v7430
    %v7433 = vlaneseq
    %v7434 = vshrl.u32 %v7433, 7
    %v7435 = vsub.s32 0, %v7434
    %v7436 = vrot.slane %v7431, %v7435
    %v7437 = vshrl.u32 %v7281, 16
    %v7438 = vpack.i.b16 %v7437, %v7437
    %v7440 = vlaneseq
    %v7441 = vshrl.u32 %v7440, 7
    %v7442 = vsub.s32 0, %v7441
    %v7443 = vrot.slane %v7438, %v7442
    %v7444 = vshrl.u32 %v7282, 16
    %v7445 = vpack.i.b16 %v7444, %v7444
    %v7447 = vlaneseq
    %v7448 = vshrl.u32 %v7447, 7
    %v7449 = vsub.s32 0, %v7448
    %v7450 = vrot.slane %v7445, %v7449
    %v7459 = vunpack.c.l.b16 %v7401
    %v7460 = vunpack.c.l.b16 %v7408
    %v7461 = vunpack.c.l.b16 %v7415
    %v7462 = vunpack.c.l.b16 %v7422
    %v7463 = vunpack.c.l.b16 %v7429
    %v7464 = vunpack.c.l.b16 %v7436
    %v7465 = vunpack.c.l.b16 %v7443
    %v7466 = vunpack.c.l.b16 %v7450
    %v7467 = vpack.c.b16 %v7460, %v7459
    %v7468 = vpack.c.b16 %v7462, %v7461
    %v7469 = vpack.c.b16 %v7464, %v7463
    %v7470 = vpack.c.b16 %v7466, %v7465
    %7471 = vrot.lane.b32.xlu0 %v7467, 112
    %v7472 = vpop.permute.xlu0 %7471
    %7473 = vrot.lane.b32.xlu0 %v7468, 112
    %v7474 = vpop.permute.xlu0 %7473
    %7475 = vrot.lane.b32.xlu0 %v7469, 112
    %v7476 = vpop.permute.xlu0 %7475
    %7477 = vrot.lane.b32.xlu0 %v7470, 112
    %v7478 = vpop.permute.xlu0 %7477
    %v7479 = vrot.slane %v7472, 4
    %v7480 = vrot.slane %v7474, 4
    %v7481 = vrot.slane %v7476, 4
    %v7482 = vrot.slane %v7478, 4
    %v7483 = vsel %vm294, %v7479, %v7472
    %v7484 = vsel %vm188, %v7479, %v7480
    %v7485 = vsel %vm294, %v7484, %v7474
    %v7486 = vsel %vm188, %v7480, %v7481
    %v7487 = vsel %vm294, %v7486, %v7476
    %v7488 = vsel %vm188, %v7481, %v7482
    %v7489 = vsel %vm294, %v7488, %v7478
    %v7495 = vmul.bf16 %v7249, %v7483
    %v7496 = vmul.bf16 %v7250, %v7485
    %v7497 = vmul.bf16 %v7251, %v7487
    %v7498 = vmul.bf16 %v7252, %v7489
    %v7499 = vmul.bf16 %v7253, %v7482
    %v7500 = vmul.bf16 %v7254, %v7483
    %v7501 = vmul.bf16 %v7255, %v7485
    %v7502 = vmul.bf16 %v7256, %v7487
    %v7503 = vmul.bf16 %v7257, %v7489
    %v7504 = vmul.bf16 %v7258, %v7482
    %s7505 = scalar_lea.vmem %s8, 8
    %v7506 = vld [vmem:[%s7505] sm:$0xf]
    %v7507 = vld [vmem:[%s7505 + $0x4] sm:$0xf]
    %v7510 = vunpack.c.l.b16 %v7506
    %v7511 = vunpack.c.l.b16 %v7507
    %v7512 = vpack.c.b16 %v7511, %v7510
    %v7523 = vunpack.c.l.b16 %v7495
    %v7524 = vunpack.c.h.b16 %v7495
    %v7525 = vunpack.c.l.b16 %v7496
    %v7526 = vunpack.c.h.b16 %v7496
    %v7527 = vunpack.c.l.b16 %v7497
    %v7528 = vunpack.c.h.b16 %v7497
    %v7529 = vunpack.c.l.b16 %v7498
    %v7530 = vunpack.c.h.b16 %v7498
    %v7531 = vunpack.c.l.b16 %v7499
    %v7532 = vunpack.c.l.b16 %v7500
    %v7533 = vunpack.c.h.b16 %v7500
    %v7534 = vunpack.c.l.b16 %v7501
    %v7535 = vunpack.c.h.b16 %v7501
    %v7536 = vunpack.c.l.b16 %v7502
    %v7537 = vunpack.c.h.b16 %v7502
    %v7538 = vunpack.c.l.b16 %v7503
    %v7539 = vunpack.c.h.b16 %v7503
    %v7540 = vunpack.c.l.b16 %v7504
    %v7541 = vpack.c.b16 %v7532, %v7523
    %v7542 = vpack.c.b16 %v7533, %v7524
    %v7543 = vpack.c.b16 %v7534, %v7525
    %v7544 = vpack.c.b16 %v7535, %v7526
    %v7545 = vpack.c.b16 %v7536, %v7527
    %v7546 = vpack.c.b16 %v7537, %v7528
    %v7547 = vpack.c.b16 %v7538, %v7529
    %v7548 = vpack.c.b16 %v7539, %v7530
    %v7549 = vpack.c.b16 %v7540, %v7531
    %7550 = vrot.lane.b32.xlu0 %v7541, 16
    %v7551 = vpop.permute.xlu0 %7550
    %7552 = vrot.lane.b32.xlu0 %v7542, 16
    %v7553 = vpop.permute.xlu0 %7552
    %7554 = vrot.lane.b32.xlu0 %v7543, 16
    %v7555 = vpop.permute.xlu0 %7554
    %7556 = vrot.lane.b32.xlu0 %v7544, 16
    %v7557 = vpop.permute.xlu0 %7556
    %7558 = vrot.lane.b32.xlu0 %v7545, 16
    %v7559 = vpop.permute.xlu0 %7558
    %7560 = vrot.lane.b32.xlu0 %v7546, 16
    %v7561 = vpop.permute.xlu0 %7560
    %7562 = vrot.lane.b32.xlu0 %v7547, 16
    %v7563 = vpop.permute.xlu0 %7562
    %7564 = vrot.lane.b32.xlu0 %v7548, 16
    %v7565 = vpop.permute.xlu0 %7564
    %7566 = vrot.lane.b32.xlu0 %v7549, 16
    %v7567 = vpop.permute.xlu0 %7566
    %v7568 = vsel %vm355, %v7551, %v7553
    %v7569 = vsel %vm355, %v7553, %v7555
    %v7570 = vsel %vm355, %v7555, %v7557
    %v7571 = vsel %vm355, %v7557, %v7559
    %v7572 = vsel %vm355, %v7559, %v7561
    %v7573 = vsel %vm355, %v7561, %v7563
    %v7574 = vsel %vm355, %v7563, %v7565
    %v7575 = vsel %vm355, %v7565, %v7567
    %v7585 = vsel %vm7080, %v7512, 0
    %7587 = vmatprep.subr.bf16.mxu0 0
    %7588 = vmatpush1.bf16.msra.mxu0 0
    %7589 = vmatprep.subr.bf16.mxu0 0
    %7590 = vmatpush1.bf16.msra.mxu0 0
    %7591 = vmatprep.subr.bf16.mxu0 0
    %7592 = vmatpush1.bf16.msra.mxu0 0
    %7593 = vmatprep.subr.bf16.mxu0 0
    %7594 = vmatpush1.bf16.msra.mxu0 0
    %7595 = vmatprep.subr.bf16.mxu0 0
    %7596 = vmatpush1.bf16.msra.mxu0 0
    %7597 = vmatprep.subr.bf16.mxu0 0
    %7598 = vmatpush1.bf16.msra.mxu0 0
    %7599 = vmatprep.subr.bf16.mxu0 0
    %7600 = vmatpush1.bf16.msra.mxu0 0
    %7601 = vmatprep.subr.bf16.mxu0 %v7569
    %7602 = vmatpush1.bf16.msra.mxu0 %v7568
    %7603 = vmatprep.subr.bf16.mxu0 0
    %7604 = vmatpush2.bf16.msra.mxu0 0
    %7605 = vmatprep.subr.bf16.mxu0 0
    %7606 = vmatpush2.bf16.msra.mxu0 0
    %7607 = vmatprep.subr.bf16.mxu0 0
    %7608 = vmatpush2.bf16.msra.mxu0 0
    %7609 = vmatprep.subr.bf16.mxu0 0
    %7610 = vmatpush2.bf16.msra.mxu0 0
    %7611 = vmatprep.subr.bf16.mxu0 0
    %7612 = vmatpush2.bf16.msra.mxu0 0
    %7613 = vmatprep.subr.bf16.mxu0 0
    %7614 = vmatpush2.bf16.msra.mxu0 0
    %7615 = vmatprep.subr.bf16.mxu0 0
    %7616 = vmatpush2.bf16.msra.mxu0 0
    %7617 = vmatprep.subr.bf16.mxu0 0
    %7618 = vmatpush2.bf16.msra.mxu0 0
    %7619 = vmatprep.mubr.bf16.mxu0 0
    %7620 = vmatmul.mubr.bf16.gmra.mxu0 %v7585
    %v7621 = vpop.f32.mrf.mxu0
    %v7622 = vadd.f32 0.0, %v7621
    %v7623 = vpop.f32.mrf.mxu0
    %v7624 = vadd.f32 0.0, %v7623
    %v7625 = vpop.f32.mrf.mxu0
    %v7626 = vadd.f32 0.0, %v7625
    %v7627 = vpop.f32.mrf.mxu0
    %v7628 = vadd.f32 0.0, %v7627
    %7629 = vdwg.mxu0
    %7630 = vmatprep.subr.bf16.mxu0 0
    %7631 = vmatpush1.bf16.msra.mxu0 0
    %7632 = vmatprep.subr.bf16.mxu0 0
    %7633 = vmatpush1.bf16.msra.mxu0 0
    %7634 = vmatprep.subr.bf16.mxu0 0
    %7635 = vmatpush1.bf16.msra.mxu0 0
    %7636 = vmatprep.subr.bf16.mxu0 0
    %7637 = vmatpush1.bf16.msra.mxu0 0
    %7638 = vmatprep.subr.bf16.mxu0 0
    %7639 = vmatpush1.bf16.msra.mxu0 0
    %7640 = vmatprep.subr.bf16.mxu0 0
    %7641 = vmatpush1.bf16.msra.mxu0 0
    %7642 = vmatprep.subr.bf16.mxu0 0
    %7643 = vmatpush1.bf16.msra.mxu0 0
    %7644 = vmatprep.subr.bf16.mxu0 %v7571
    %7645 = vmatpush1.bf16.msra.mxu0 %v7570
    %7646 = vmatprep.subr.bf16.mxu0 0
    %7647 = vmatpush2.bf16.msra.mxu0 0
    %7648 = vmatprep.subr.bf16.mxu0 0
    %7649 = vmatpush2.bf16.msra.mxu0 0
    %7650 = vmatprep.subr.bf16.mxu0 0
    %7651 = vmatpush2.bf16.msra.mxu0 0
    %7652 = vmatprep.subr.bf16.mxu0 0
    %7653 = vmatpush2.bf16.msra.mxu0 0
    %7654 = vmatprep.subr.bf16.mxu0 0
    %7655 = vmatpush2.bf16.msra.mxu0 0
    %7656 = vmatprep.subr.bf16.mxu0 0
    %7657 = vmatpush2.bf16.msra.mxu0 0
    %7658 = vmatprep.subr.bf16.mxu0 0
    %7659 = vmatpush2.bf16.msra.mxu0 0
    %7660 = vmatprep.subr.bf16.mxu0 0
    %7661 = vmatpush2.bf16.msra.mxu0 0
    %7662 = vmatprep.mubr.bf16.mxu0 0
    %7663 = vmatmul.mubr.bf16.gmra.mxu0 %v7585
    %v7664 = vpop.f32.mrf.mxu0
    %v7665 = vadd.f32 0.0, %v7664
    %v7666 = vpop.f32.mrf.mxu0
    %v7667 = vadd.f32 0.0, %v7666
    %v7668 = vpop.f32.mrf.mxu0
    %v7669 = vadd.f32 0.0, %v7668
    %v7670 = vpop.f32.mrf.mxu0
    %v7671 = vadd.f32 0.0, %v7670
    %7672 = vdwg.mxu0
    %7673 = vmatprep.subr.bf16.mxu0 0
    %7674 = vmatpush1.bf16.msra.mxu0 0
    %7675 = vmatprep.subr.bf16.mxu0 0
    %7676 = vmatpush1.bf16.msra.mxu0 0
    %7677 = vmatprep.subr.bf16.mxu0 0
    %7678 = vmatpush1.bf16.msra.mxu0 0
    %7679 = vmatprep.subr.bf16.mxu0 0
    %7680 = vmatpush1.bf16.msra.mxu0 0
    %7681 = vmatprep.subr.bf16.mxu0 0
    %7682 = vmatpush1.bf16.msra.mxu0 0
    %7683 = vmatprep.subr.bf16.mxu0 0
    %7684 = vmatpush1.bf16.msra.mxu0 0
    %7685 = vmatprep.subr.bf16.mxu0 0
    %7686 = vmatpush1.bf16.msra.mxu0 0
    %7687 = vmatprep.subr.bf16.mxu0 %v7573
    %7688 = vmatpush1.bf16.msra.mxu0 %v7572
    %7689 = vmatprep.subr.bf16.mxu0 0
    %7690 = vmatpush2.bf16.msra.mxu0 0
    %7691 = vmatprep.subr.bf16.mxu0 0
    %7692 = vmatpush2.bf16.msra.mxu0 0
    %7693 = vmatprep.subr.bf16.mxu0 0
    %7694 = vmatpush2.bf16.msra.mxu0 0
    %7695 = vmatprep.subr.bf16.mxu0 0
    %7696 = vmatpush2.bf16.msra.mxu0 0
    %7697 = vmatprep.subr.bf16.mxu0 0
    %7698 = vmatpush2.bf16.msra.mxu0 0
    %7699 = vmatprep.subr.bf16.mxu0 0
    %7700 = vmatpush2.bf16.msra.mxu0 0
    %7701 = vmatprep.subr.bf16.mxu0 0
    %7702 = vmatpush2.bf16.msra.mxu0 0
    %7703 = vmatprep.subr.bf16.mxu0 0
    %7704 = vmatpush2.bf16.msra.mxu0 0
    %7705 = vmatprep.mubr.bf16.mxu0 0
    %7706 = vmatmul.mubr.bf16.gmra.mxu0 %v7585
    %v7707 = vpop.f32.mrf.mxu0
    %v7708 = vadd.f32 0.0, %v7707
    %v7709 = vpop.f32.mrf.mxu0
    %v7710 = vadd.f32 0.0, %v7709
    %v7711 = vpop.f32.mrf.mxu0
    %v7712 = vadd.f32 0.0, %v7711
    %v7713 = vpop.f32.mrf.mxu0
    %v7714 = vadd.f32 0.0, %v7713
    %7715 = vdwg.mxu0
    %7716 = vmatprep.subr.bf16.mxu0 0
    %7717 = vmatpush1.bf16.msra.mxu0 0
    %7718 = vmatprep.subr.bf16.mxu0 0
    %7719 = vmatpush1.bf16.msra.mxu0 0
    %7720 = vmatprep.subr.bf16.mxu0 0
    %7721 = vmatpush1.bf16.msra.mxu0 0
    %7722 = vmatprep.subr.bf16.mxu0 0
    %7723 = vmatpush1.bf16.msra.mxu0 0
    %7724 = vmatprep.subr.bf16.mxu0 0
    %7725 = vmatpush1.bf16.msra.mxu0 0
    %7726 = vmatprep.subr.bf16.mxu0 0
    %7727 = vmatpush1.bf16.msra.mxu0 0
    %7728 = vmatprep.subr.bf16.mxu0 0
    %7729 = vmatpush1.bf16.msra.mxu0 0
    %7730 = vmatprep.subr.bf16.mxu0 %v7575
    %7731 = vmatpush1.bf16.msra.mxu0 %v7574
    %7732 = vmatprep.subr.bf16.mxu0 0
    %7733 = vmatpush2.bf16.msra.mxu0 0
    %7734 = vmatprep.subr.bf16.mxu0 0
    %7735 = vmatpush2.bf16.msra.mxu0 0
    %7736 = vmatprep.subr.bf16.mxu0 0
    %7737 = vmatpush2.bf16.msra.mxu0 0
    %7738 = vmatprep.subr.bf16.mxu0 0
    %7739 = vmatpush2.bf16.msra.mxu0 0
    %7740 = vmatprep.subr.bf16.mxu0 0
    %7741 = vmatpush2.bf16.msra.mxu0 0
    %7742 = vmatprep.subr.bf16.mxu0 0
    %7743 = vmatpush2.bf16.msra.mxu0 0
    %7744 = vmatprep.subr.bf16.mxu0 0
    %7745 = vmatpush2.bf16.msra.mxu0 0
    %7746 = vmatprep.subr.bf16.mxu0 0
    %7747 = vmatpush2.bf16.msra.mxu0 0
    %7748 = vmatprep.mubr.bf16.mxu0 0
    %7749 = vmatmul.mubr.bf16.gmra.mxu0 %v7585
    %v7750 = vpop.f32.mrf.mxu0
    %v7751 = vadd.f32 0.0, %v7750
    %v7752 = vpop.f32.mrf.mxu0
    %v7753 = vadd.f32 0.0, %v7752
    %v7754 = vpop.f32.mrf.mxu0
    %v7755 = vadd.f32 0.0, %v7754
    %v7756 = vpop.f32.mrf.mxu0
    %v7757 = vadd.f32 0.0, %v7756
    %7758 = vdwg.mxu0
    %v7761 = vunpack.c.l.b16 %v7393
    %v7762 = vunpack.c.l.b16 %v7394
    %v7763 = vpack.c.b16 %v7762, %v7761
    %v7774 = vunpack.c.l.b16 %v7383
    %v7775 = vunpack.c.h.b16 %v7383
    %v7776 = vunpack.c.l.b16 %v7384
    %v7777 = vunpack.c.h.b16 %v7384
    %v7778 = vunpack.c.l.b16 %v7385
    %v7779 = vunpack.c.h.b16 %v7385
    %v7780 = vunpack.c.l.b16 %v7386
    %v7781 = vunpack.c.h.b16 %v7386
    %v7782 = vunpack.c.l.b16 %v7387
    %v7783 = vunpack.c.l.b16 %v7388
    %v7784 = vunpack.c.h.b16 %v7388
    %v7785 = vunpack.c.l.b16 %v7389
    %v7786 = vunpack.c.h.b16 %v7389
    %v7787 = vunpack.c.l.b16 %v7390
    %v7788 = vunpack.c.h.b16 %v7390
    %v7789 = vunpack.c.l.b16 %v7391
    %v7790 = vunpack.c.h.b16 %v7391
    %v7791 = vunpack.c.l.b16 %v7392
    %v7792 = vpack.c.b16 %v7783, %v7774
    %v7793 = vpack.c.b16 %v7784, %v7775
    %v7794 = vpack.c.b16 %v7785, %v7776
    %v7795 = vpack.c.b16 %v7786, %v7777
    %v7796 = vpack.c.b16 %v7787, %v7778
    %v7797 = vpack.c.b16 %v7788, %v7779
    %v7798 = vpack.c.b16 %v7789, %v7780
    %v7799 = vpack.c.b16 %v7790, %v7781
    %v7800 = vpack.c.b16 %v7791, %v7782
    %7801 = vrot.lane.b32.xlu0 %v7792, 17
    %v7802 = vpop.permute.xlu0 %7801
    %7803 = vrot.lane.b32.xlu0 %v7793, 17
    %v7804 = vpop.permute.xlu0 %7803
    %7805 = vrot.lane.b32.xlu0 %v7794, 17
    %v7806 = vpop.permute.xlu0 %7805
    %7807 = vrot.lane.b32.xlu0 %v7795, 17
    %v7808 = vpop.permute.xlu0 %7807
    %7809 = vrot.lane.b32.xlu0 %v7796, 17
    %v7810 = vpop.permute.xlu0 %7809
    %7811 = vrot.lane.b32.xlu0 %v7797, 17
    %v7812 = vpop.permute.xlu0 %7811
    %7813 = vrot.lane.b32.xlu0 %v7798, 17
    %v7814 = vpop.permute.xlu0 %7813
    %7815 = vrot.lane.b32.xlu0 %v7799, 17
    %v7816 = vpop.permute.xlu0 %7815
    %7817 = vrot.lane.b32.xlu0 %v7800, 17
    %v7818 = vpop.permute.xlu0 %7817
    %v7819 = vsel %vm598, %v7802, %v7804
    %v7820 = vsel %vm598, %v7804, %v7806
    %v7821 = vsel %vm598, %v7806, %v7808
    %v7822 = vsel %vm598, %v7808, %v7810
    %v7823 = vsel %vm598, %v7810, %v7812
    %v7824 = vsel %vm598, %v7812, %v7814
    %v7825 = vsel %vm598, %v7814, %v7816
    %v7826 = vsel %vm598, %v7816, %v7818
    %v7836 = vsel %vm7080, %v7763, 0
    %7838 = vmatprep.subr.bf16.mxu0 0
    %7839 = vmatpush1.bf16.msra.mxu0 0
    %7840 = vmatprep.subr.bf16.mxu0 0
    %7841 = vmatpush1.bf16.msra.mxu0 0
    %7842 = vmatprep.subr.bf16.mxu0 0
    %7843 = vmatpush1.bf16.msra.mxu0 0
    %7844 = vmatprep.subr.bf16.mxu0 0
    %7845 = vmatpush1.bf16.msra.mxu0 0
    %7846 = vmatprep.subr.bf16.mxu0 0
    %7847 = vmatpush1.bf16.msra.mxu0 0
    %7848 = vmatprep.subr.bf16.mxu0 0
    %7849 = vmatpush1.bf16.msra.mxu0 0
    %7850 = vmatprep.subr.bf16.mxu0 0
    %7851 = vmatpush1.bf16.msra.mxu0 0
    %7852 = vmatprep.subr.bf16.mxu0 %v7820
    %7853 = vmatpush1.bf16.msra.mxu0 %v7819
    %7854 = vmatprep.subr.bf16.mxu0 0
    %7855 = vmatpush2.bf16.msra.mxu0 0
    %7856 = vmatprep.subr.bf16.mxu0 0
    %7857 = vmatpush2.bf16.msra.mxu0 0
    %7858 = vmatprep.subr.bf16.mxu0 0
    %7859 = vmatpush2.bf16.msra.mxu0 0
    %7860 = vmatprep.subr.bf16.mxu0 0
    %7861 = vmatpush2.bf16.msra.mxu0 0
    %7862 = vmatprep.subr.bf16.mxu0 0
    %7863 = vmatpush2.bf16.msra.mxu0 0
    %7864 = vmatprep.subr.bf16.mxu0 0
    %7865 = vmatpush2.bf16.msra.mxu0 0
    %7866 = vmatprep.subr.bf16.mxu0 0
    %7867 = vmatpush2.bf16.msra.mxu0 0
    %7868 = vmatprep.subr.bf16.mxu0 0
    %7869 = vmatpush2.bf16.msra.mxu0 0
    %7870 = vmatprep.mubr.bf16.mxu0 0
    %7871 = vmatmul.mubr.bf16.gmra.mxu0 %v7836
    %v7872 = vpop.f32.mrf.mxu0
    %v7873 = vadd.f32 %v7622, %v7872
    %v7874 = vpop.f32.mrf.mxu0
    %v7875 = vadd.f32 %v7624, %v7874
    %v7876 = vpop.f32.mrf.mxu0
    %v7877 = vadd.f32 %v7626, %v7876
    %v7878 = vpop.f32.mrf.mxu0
    %v7879 = vadd.f32 %v7628, %v7878
    %7880 = vdwg.mxu0
    %7881 = vmatprep.subr.bf16.mxu0 0
    %7882 = vmatpush1.bf16.msra.mxu0 0
    %7883 = vmatprep.subr.bf16.mxu0 0
    %7884 = vmatpush1.bf16.msra.mxu0 0
    %7885 = vmatprep.subr.bf16.mxu0 0
    %7886 = vmatpush1.bf16.msra.mxu0 0
    %7887 = vmatprep.subr.bf16.mxu0 0
    %7888 = vmatpush1.bf16.msra.mxu0 0
    %7889 = vmatprep.subr.bf16.mxu0 0
    %7890 = vmatpush1.bf16.msra.mxu0 0
    %7891 = vmatprep.subr.bf16.mxu0 0
    %7892 = vmatpush1.bf16.msra.mxu0 0
    %7893 = vmatprep.subr.bf16.mxu0 0
    %7894 = vmatpush1.bf16.msra.mxu0 0
    %7895 = vmatprep.subr.bf16.mxu0 %v7822
    %7896 = vmatpush1.bf16.msra.mxu0 %v7821
    %7897 = vmatprep.subr.bf16.mxu0 0
    %7898 = vmatpush2.bf16.msra.mxu0 0
    %7899 = vmatprep.subr.bf16.mxu0 0
    %7900 = vmatpush2.bf16.msra.mxu0 0
    %7901 = vmatprep.subr.bf16.mxu0 0
    %7902 = vmatpush2.bf16.msra.mxu0 0
    %7903 = vmatprep.subr.bf16.mxu0 0
    %7904 = vmatpush2.bf16.msra.mxu0 0
    %7905 = vmatprep.subr.bf16.mxu0 0
    %7906 = vmatpush2.bf16.msra.mxu0 0
    %7907 = vmatprep.subr.bf16.mxu0 0
    %7908 = vmatpush2.bf16.msra.mxu0 0
    %7909 = vmatprep.subr.bf16.mxu0 0
    %7910 = vmatpush2.bf16.msra.mxu0 0
    %7911 = vmatprep.subr.bf16.mxu0 0
    %7912 = vmatpush2.bf16.msra.mxu0 0
    %7913 = vmatprep.mubr.bf16.mxu0 0
    %7914 = vmatmul.mubr.bf16.gmra.mxu0 %v7836
    %v7915 = vpop.f32.mrf.mxu0
    %v7916 = vadd.f32 %v7665, %v7915
    %v7917 = vpop.f32.mrf.mxu0
    %v7918 = vadd.f32 %v7667, %v7917
    %v7919 = vpop.f32.mrf.mxu0
    %v7920 = vadd.f32 %v7669, %v7919
    %v7921 = vpop.f32.mrf.mxu0
    %v7922 = vadd.f32 %v7671, %v7921
    %7923 = vdwg.mxu0
    %7924 = vmatprep.subr.bf16.mxu0 0
    %7925 = vmatpush1.bf16.msra.mxu0 0
    %7926 = vmatprep.subr.bf16.mxu0 0
    %7927 = vmatpush1.bf16.msra.mxu0 0
    %7928 = vmatprep.subr.bf16.mxu0 0
    %7929 = vmatpush1.bf16.msra.mxu0 0
    %7930 = vmatprep.subr.bf16.mxu0 0
    %7931 = vmatpush1.bf16.msra.mxu0 0
    %7932 = vmatprep.subr.bf16.mxu0 0
    %7933 = vmatpush1.bf16.msra.mxu0 0
    %7934 = vmatprep.subr.bf16.mxu0 0
    %7935 = vmatpush1.bf16.msra.mxu0 0
    %7936 = vmatprep.subr.bf16.mxu0 0
    %7937 = vmatpush1.bf16.msra.mxu0 0
    %7938 = vmatprep.subr.bf16.mxu0 %v7824
    %7939 = vmatpush1.bf16.msra.mxu0 %v7823
    %7940 = vmatprep.subr.bf16.mxu0 0
    %7941 = vmatpush2.bf16.msra.mxu0 0
    %7942 = vmatprep.subr.bf16.mxu0 0
    %7943 = vmatpush2.bf16.msra.mxu0 0
    %7944 = vmatprep.subr.bf16.mxu0 0
    %7945 = vmatpush2.bf16.msra.mxu0 0
    %7946 = vmatprep.subr.bf16.mxu0 0
    %7947 = vmatpush2.bf16.msra.mxu0 0
    %7948 = vmatprep.subr.bf16.mxu0 0
    %7949 = vmatpush2.bf16.msra.mxu0 0
    %7950 = vmatprep.subr.bf16.mxu0 0
    %7951 = vmatpush2.bf16.msra.mxu0 0
    %7952 = vmatprep.subr.bf16.mxu0 0
    %7953 = vmatpush2.bf16.msra.mxu0 0
    %7954 = vmatprep.subr.bf16.mxu0 0
    %7955 = vmatpush2.bf16.msra.mxu0 0
    %7956 = vmatprep.mubr.bf16.mxu0 0
    %7957 = vmatmul.mubr.bf16.gmra.mxu0 %v7836
    %v7958 = vpop.f32.mrf.mxu0
    %v7959 = vadd.f32 %v7708, %v7958
    %v7960 = vpop.f32.mrf.mxu0
    %v7961 = vadd.f32 %v7710, %v7960
    %v7962 = vpop.f32.mrf.mxu0
    %v7963 = vadd.f32 %v7712, %v7962
    %v7964 = vpop.f32.mrf.mxu0
    %v7965 = vadd.f32 %v7714, %v7964
    %7966 = vdwg.mxu0
    %7967 = vmatprep.subr.bf16.mxu0 0
    %7968 = vmatpush1.bf16.msra.mxu0 0
    %7969 = vmatprep.subr.bf16.mxu0 0
    %7970 = vmatpush1.bf16.msra.mxu0 0
    %7971 = vmatprep.subr.bf16.mxu0 0
    %7972 = vmatpush1.bf16.msra.mxu0 0
    %7973 = vmatprep.subr.bf16.mxu0 0
    %7974 = vmatpush1.bf16.msra.mxu0 0
    %7975 = vmatprep.subr.bf16.mxu0 0
    %7976 = vmatpush1.bf16.msra.mxu0 0
    %7977 = vmatprep.subr.bf16.mxu0 0
    %7978 = vmatpush1.bf16.msra.mxu0 0
    %7979 = vmatprep.subr.bf16.mxu0 0
    %7980 = vmatpush1.bf16.msra.mxu0 0
    %7981 = vmatprep.subr.bf16.mxu0 %v7826
    %7982 = vmatpush1.bf16.msra.mxu0 %v7825
    %7983 = vmatprep.subr.bf16.mxu0 0
    %7984 = vmatpush2.bf16.msra.mxu0 0
    %7985 = vmatprep.subr.bf16.mxu0 0
    %7986 = vmatpush2.bf16.msra.mxu0 0
    %7987 = vmatprep.subr.bf16.mxu0 0
    %7988 = vmatpush2.bf16.msra.mxu0 0
    %7989 = vmatprep.subr.bf16.mxu0 0
    %7990 = vmatpush2.bf16.msra.mxu0 0
    %7991 = vmatprep.subr.bf16.mxu0 0
    %7992 = vmatpush2.bf16.msra.mxu0 0
    %7993 = vmatprep.subr.bf16.mxu0 0
    %7994 = vmatpush2.bf16.msra.mxu0 0
    %7995 = vmatprep.subr.bf16.mxu0 0
    %7996 = vmatpush2.bf16.msra.mxu0 0
    %7997 = vmatprep.subr.bf16.mxu0 0
    %7998 = vmatpush2.bf16.msra.mxu0 0
    %7999 = vmatprep.mubr.bf16.mxu0 0
    %8000 = vmatmul.mubr.bf16.gmra.mxu0 %v7836
    %v8001 = vpop.f32.mrf.mxu0
    %v8002 = vadd.f32 %v7751, %v8001
    %v8003 = vpop.f32.mrf.mxu0
    %v8004 = vadd.f32 %v7753, %v8003
    %v8005 = vpop.f32.mrf.mxu0
    %v8006 = vadd.f32 %v7755, %v8005
    %v8007 = vpop.f32.mrf.mxu0
    %v8008 = vadd.f32 %v7757, %v8007
    %8009 = vdwg.mxu0
    %v8010 = vld [vmem:[%s1] sm:$0x22]
    %v8011 = vld [vmem:[%s1 + $0x8] sm:$0x22]
    %v8012 = vld [vmem:[%s1 + $0x10] sm:$0x22]
    %v8013 = vld [vmem:[%s1 + $0x18] sm:$0x22]
    %v8018 = vunpack.c.l.b16 %v8010
    %v8019 = vunpack.c.h.b16 %v8010
    %v8020 = vunpack.c.l.b16 %v8011
    %v8021 = vunpack.c.h.b16 %v8011
    %v8022 = vunpack.c.l.b16 %v8012
    %v8023 = vunpack.c.h.b16 %v8012
    %v8024 = vunpack.c.l.b16 %v8013
    %v8025 = vunpack.c.h.b16 %v8013
    %v8026 = vpack.c.b16 %v8018, %v8018
    %v8027 = vpack.c.b16 %v8019, %v8019
    %v8028 = vpack.c.b16 %v8020, %v8020
    %v8029 = vpack.c.b16 %v8021, %v8021
    %v8030 = vpack.c.b16 %v8022, %v8022
    %v8031 = vpack.c.b16 %v8023, %v8023
    %v8032 = vpack.c.b16 %v8024, %v8024
    %v8033 = vpack.c.b16 %v8025, %v8025
    %v8035 = vpack.i.b16 %v8026, %v8026
    %v8037 = vlaneseq
    %v8038 = vshrl.u32 %v8037, 7
    %v8039 = vsub.s32 1, %v8038
    %v8040 = vrot.slane %v8035, %v8039
    %v8042 = vpack.i.b16 %v8027, %v8027
    %v8044 = vlaneseq
    %v8045 = vshrl.u32 %v8044, 7
    %v8046 = vsub.s32 1, %v8045
    %v8047 = vrot.slane %v8042, %v8046
    %v8049 = vpack.i.b16 %v8028, %v8028
    %v8051 = vlaneseq
    %v8052 = vshrl.u32 %v8051, 7
    %v8053 = vsub.s32 1, %v8052
    %v8054 = vrot.slane %v8049, %v8053
    %v8056 = vpack.i.b16 %v8029, %v8029
    %v8058 = vlaneseq
    %v8059 = vshrl.u32 %v8058, 7
    %v8060 = vsub.s32 1, %v8059
    %v8061 = vrot.slane %v8056, %v8060
    %v8063 = vpack.i.b16 %v8030, %v8030
    %v8065 = vlaneseq
    %v8066 = vshrl.u32 %v8065, 7
    %v8067 = vsub.s32 1, %v8066
    %v8068 = vrot.slane %v8063, %v8067
    %v8070 = vpack.i.b16 %v8031, %v8031
    %v8072 = vlaneseq
    %v8073 = vshrl.u32 %v8072, 7
    %v8074 = vsub.s32 1, %v8073
    %v8075 = vrot.slane %v8070, %v8074
    %v8077 = vpack.i.b16 %v8032, %v8032
    %v8079 = vlaneseq
    %v8080 = vshrl.u32 %v8079, 7
    %v8081 = vsub.s32 1, %v8080
    %v8082 = vrot.slane %v8077, %v8081
    %v8084 = vpack.i.b16 %v8033, %v8033
    %v8086 = vlaneseq
    %v8087 = vshrl.u32 %v8086, 7
    %v8088 = vsub.s32 1, %v8087
    %v8089 = vrot.slane %v8084, %v8088
    %v8098 = vunpack.c.l.b16 %v8040
    %v8099 = vunpack.c.l.b16 %v8047
    %v8100 = vunpack.c.l.b16 %v8054
    %v8101 = vunpack.c.l.b16 %v8061
    %v8102 = vunpack.c.l.b16 %v8068
    %v8103 = vunpack.c.l.b16 %v8075
    %v8104 = vunpack.c.l.b16 %v8082
    %v8105 = vunpack.c.l.b16 %v8089
    %v8106 = vpack.c.b16 %v8099, %v8098
    %v8107 = vpack.c.b16 %v8101, %v8100
    %v8108 = vpack.c.b16 %v8103, %v8102
    %v8109 = vpack.c.b16 %v8105, %v8104
    %8110 = vrot.lane.b32.xlu0 %v8106, 113
    %v8111 = vpop.permute.xlu0 %8110
    %8112 = vrot.lane.b32.xlu0 %v8107, 113
    %v8113 = vpop.permute.xlu0 %8112
    %8114 = vrot.lane.b32.xlu0 %v8108, 113
    %v8115 = vpop.permute.xlu0 %8114
    %8116 = vrot.lane.b32.xlu0 %v8109, 113
    %v8117 = vpop.permute.xlu0 %8116
    %v8118 = vrot.slane %v8111, 4
    %v8119 = vrot.slane %v8113, 4
    %v8120 = vrot.slane %v8115, 4
    %v8121 = vrot.slane %v8117, 4
    %v8122 = vsel %vm910, %v8118, %v8111
    %v8123 = vsel %vm188, %v8118, %v8119
    %v8124 = vsel %vm910, %v8123, %v8113
    %v8125 = vsel %vm188, %v8119, %v8120
    %v8126 = vsel %vm910, %v8125, %v8115
    %v8127 = vsel %vm188, %v8120, %v8121
    %v8128 = vsel %vm910, %v8127, %v8117
    %v8134 = vmul.bf16 %v7249, %v8122
    %v8135 = vmul.bf16 %v7250, %v8124
    %v8136 = vmul.bf16 %v7251, %v8126
    %v8137 = vmul.bf16 %v7252, %v8128
    %v8138 = vmul.bf16 %v7253, %v8121
    %v8139 = vmul.bf16 %v7254, %v8122
    %v8140 = vmul.bf16 %v7255, %v8124
    %v8141 = vmul.bf16 %v7256, %v8126
    %v8142 = vmul.bf16 %v7257, %v8128
    %v8143 = vmul.bf16 %v7258, %v8121
    %s8144 = scalar_lea.vmem %s8, 16
    %v8145 = vld [vmem:[%s8144] sm:$0xf]
    %v8146 = vld [vmem:[%s8144 + $0x4] sm:$0xf]
    %v8149 = vunpack.c.l.b16 %v8145
    %v8150 = vunpack.c.l.b16 %v8146
    %v8151 = vpack.c.b16 %v8150, %v8149
    %v8162 = vunpack.c.l.b16 %v8134
    %v8163 = vunpack.c.h.b16 %v8134
    %v8164 = vunpack.c.l.b16 %v8135
    %v8165 = vunpack.c.h.b16 %v8135
    %v8166 = vunpack.c.l.b16 %v8136
    %v8167 = vunpack.c.h.b16 %v8136
    %v8168 = vunpack.c.l.b16 %v8137
    %v8169 = vunpack.c.h.b16 %v8137
    %v8170 = vunpack.c.l.b16 %v8138
    %v8171 = vunpack.c.l.b16 %v8139
    %v8172 = vunpack.c.h.b16 %v8139
    %v8173 = vunpack.c.l.b16 %v8140
    %v8174 = vunpack.c.h.b16 %v8140
    %v8175 = vunpack.c.l.b16 %v8141
    %v8176 = vunpack.c.h.b16 %v8141
    %v8177 = vunpack.c.l.b16 %v8142
    %v8178 = vunpack.c.h.b16 %v8142
    %v8179 = vunpack.c.l.b16 %v8143
    %v8180 = vpack.c.b16 %v8171, %v8162
    %v8181 = vpack.c.b16 %v8172, %v8163
    %v8182 = vpack.c.b16 %v8173, %v8164
    %v8183 = vpack.c.b16 %v8174, %v8165
    %v8184 = vpack.c.b16 %v8175, %v8166
    %v8185 = vpack.c.b16 %v8176, %v8167
    %v8186 = vpack.c.b16 %v8177, %v8168
    %v8187 = vpack.c.b16 %v8178, %v8169
    %v8188 = vpack.c.b16 %v8179, %v8170
    %8189 = vrot.lane.b32.xlu0 %v8180, 15
    %v8190 = vpop.permute.xlu0 %8189
    %8191 = vrot.lane.b32.xlu0 %v8181, 15
    %v8192 = vpop.permute.xlu0 %8191
    %8193 = vrot.lane.b32.xlu0 %v8182, 15
    %v8194 = vpop.permute.xlu0 %8193
    %8195 = vrot.lane.b32.xlu0 %v8183, 15
    %v8196 = vpop.permute.xlu0 %8195
    %8197 = vrot.lane.b32.xlu0 %v8184, 15
    %v8198 = vpop.permute.xlu0 %8197
    %8199 = vrot.lane.b32.xlu0 %v8185, 15
    %v8200 = vpop.permute.xlu0 %8199
    %8201 = vrot.lane.b32.xlu0 %v8186, 15
    %v8202 = vpop.permute.xlu0 %8201
    %8203 = vrot.lane.b32.xlu0 %v8187, 15
    %v8204 = vpop.permute.xlu0 %8203
    %8205 = vrot.lane.b32.xlu0 %v8188, 15
    %v8206 = vpop.permute.xlu0 %8205
    %v8207 = vsel %vm971, %v8190, %v8192
    %v8208 = vsel %vm971, %v8192, %v8194
    %v8209 = vsel %vm971, %v8194, %v8196
    %v8210 = vsel %vm971, %v8196, %v8198
    %v8211 = vsel %vm971, %v8198, %v8200
    %v8212 = vsel %vm971, %v8200, %v8202
    %v8213 = vsel %vm971, %v8202, %v8204
    %v8214 = vsel %vm971, %v8204, %v8206
    %v8224 = vsel %vm7080, %v8151, 0
    %8226 = vmatprep.subr.bf16.mxu0 0
    %8227 = vmatpush1.bf16.msra.mxu0 0
    %8228 = vmatprep.subr.bf16.mxu0 0
    %8229 = vmatpush1.bf16.msra.mxu0 0
    %8230 = vmatprep.subr.bf16.mxu0 0
    %8231 = vmatpush1.bf16.msra.mxu0 0
    %8232 = vmatprep.subr.bf16.mxu0 0
    %8233 = vmatpush1.bf16.msra.mxu0 0
    %8234 = vmatprep.subr.bf16.mxu0 0
    %8235 = vmatpush1.bf16.msra.mxu0 0
    %8236 = vmatprep.subr.bf16.mxu0 0
    %8237 = vmatpush1.bf16.msra.mxu0 0
    %8238 = vmatprep.subr.bf16.mxu0 0
    %8239 = vmatpush1.bf16.msra.mxu0 0
    %8240 = vmatprep.subr.bf16.mxu0 %v8208
    %8241 = vmatpush1.bf16.msra.mxu0 %v8207
    %8242 = vmatprep.subr.bf16.mxu0 0
    %8243 = vmatpush2.bf16.msra.mxu0 0
    %8244 = vmatprep.subr.bf16.mxu0 0
    %8245 = vmatpush2.bf16.msra.mxu0 0
    %8246 = vmatprep.subr.bf16.mxu0 0
    %8247 = vmatpush2.bf16.msra.mxu0 0
    %8248 = vmatprep.subr.bf16.mxu0 0
    %8249 = vmatpush2.bf16.msra.mxu0 0
    %8250 = vmatprep.subr.bf16.mxu0 0
    %8251 = vmatpush2.bf16.msra.mxu0 0
    %8252 = vmatprep.subr.bf16.mxu0 0
    %8253 = vmatpush2.bf16.msra.mxu0 0
    %8254 = vmatprep.subr.bf16.mxu0 0
    %8255 = vmatpush2.bf16.msra.mxu0 0
    %8256 = vmatprep.subr.bf16.mxu0 0
    %8257 = vmatpush2.bf16.msra.mxu0 0
    %8258 = vmatprep.mubr.bf16.mxu0 0
    %8259 = vmatmul.mubr.bf16.gmra.mxu0 %v8224
    %v8260 = vpop.f32.mrf.mxu0
    %v8261 = vadd.f32 0.0, %v8260
    %v8262 = vpop.f32.mrf.mxu0
    %v8263 = vadd.f32 0.0, %v8262
    %v8264 = vpop.f32.mrf.mxu0
    %v8265 = vadd.f32 0.0, %v8264
    %v8266 = vpop.f32.mrf.mxu0
    %v8267 = vadd.f32 0.0, %v8266
    %8268 = vdwg.mxu0
    %8269 = vmatprep.subr.bf16.mxu0 0
    %8270 = vmatpush1.bf16.msra.mxu0 0
    %8271 = vmatprep.subr.bf16.mxu0 0
    %8272 = vmatpush1.bf16.msra.mxu0 0
    %8273 = vmatprep.subr.bf16.mxu0 0
    %8274 = vmatpush1.bf16.msra.mxu0 0
    %8275 = vmatprep.subr.bf16.mxu0 0
    %8276 = vmatpush1.bf16.msra.mxu0 0
    %8277 = vmatprep.subr.bf16.mxu0 0
    %8278 = vmatpush1.bf16.msra.mxu0 0
    %8279 = vmatprep.subr.bf16.mxu0 0
    %8280 = vmatpush1.bf16.msra.mxu0 0
    %8281 = vmatprep.subr.bf16.mxu0 0
    %8282 = vmatpush1.bf16.msra.mxu0 0
    %8283 = vmatprep.subr.bf16.mxu0 %v8210
    %8284 = vmatpush1.bf16.msra.mxu0 %v8209
    %8285 = vmatprep.subr.bf16.mxu0 0
    %8286 = vmatpush2.bf16.msra.mxu0 0
    %8287 = vmatprep.subr.bf16.mxu0 0
    %8288 = vmatpush2.bf16.msra.mxu0 0
    %8289 = vmatprep.subr.bf16.mxu0 0
    %8290 = vmatpush2.bf16.msra.mxu0 0
    %8291 = vmatprep.subr.bf16.mxu0 0
    %8292 = vmatpush2.bf16.msra.mxu0 0
    %8293 = vmatprep.subr.bf16.mxu0 0
    %8294 = vmatpush2.bf16.msra.mxu0 0
    %8295 = vmatprep.subr.bf16.mxu0 0
    %8296 = vmatpush2.bf16.msra.mxu0 0
    %8297 = vmatprep.subr.bf16.mxu0 0
    %8298 = vmatpush2.bf16.msra.mxu0 0
    %8299 = vmatprep.subr.bf16.mxu0 0
    %8300 = vmatpush2.bf16.msra.mxu0 0
    %8301 = vmatprep.mubr.bf16.mxu0 0
    %8302 = vmatmul.mubr.bf16.gmra.mxu0 %v8224
    %v8303 = vpop.f32.mrf.mxu0
    %v8304 = vadd.f32 0.0, %v8303
    %v8305 = vpop.f32.mrf.mxu0
    %v8306 = vadd.f32 0.0, %v8305
    %v8307 = vpop.f32.mrf.mxu0
    %v8308 = vadd.f32 0.0, %v8307
    %v8309 = vpop.f32.mrf.mxu0
    %v8310 = vadd.f32 0.0, %v8309
    %8311 = vdwg.mxu0
    %8312 = vmatprep.subr.bf16.mxu0 0
    %8313 = vmatpush1.bf16.msra.mxu0 0
    %8314 = vmatprep.subr.bf16.mxu0 0
    %8315 = vmatpush1.bf16.msra.mxu0 0
    %8316 = vmatprep.subr.bf16.mxu0 0
    %8317 = vmatpush1.bf16.msra.mxu0 0
    %8318 = vmatprep.subr.bf16.mxu0 0
    %8319 = vmatpush1.bf16.msra.mxu0 0
    %8320 = vmatprep.subr.bf16.mxu0 0
    %8321 = vmatpush1.bf16.msra.mxu0 0
    %8322 = vmatprep.subr.bf16.mxu0 0
    %8323 = vmatpush1.bf16.msra.mxu0 0
    %8324 = vmatprep.subr.bf16.mxu0 0
    %8325 = vmatpush1.bf16.msra.mxu0 0
    %8326 = vmatprep.subr.bf16.mxu0 %v8212
    %8327 = vmatpush1.bf16.msra.mxu0 %v8211
    %8328 = vmatprep.subr.bf16.mxu0 0
    %8329 = vmatpush2.bf16.msra.mxu0 0
    %8330 = vmatprep.subr.bf16.mxu0 0
    %8331 = vmatpush2.bf16.msra.mxu0 0
    %8332 = vmatprep.subr.bf16.mxu0 0
    %8333 = vmatpush2.bf16.msra.mxu0 0
    %8334 = vmatprep.subr.bf16.mxu0 0
    %8335 = vmatpush2.bf16.msra.mxu0 0
    %8336 = vmatprep.subr.bf16.mxu0 0
    %8337 = vmatpush2.bf16.msra.mxu0 0
    %8338 = vmatprep.subr.bf16.mxu0 0
    %8339 = vmatpush2.bf16.msra.mxu0 0
    %8340 = vmatprep.subr.bf16.mxu0 0
    %8341 = vmatpush2.bf16.msra.mxu0 0
    %8342 = vmatprep.subr.bf16.mxu0 0
    %8343 = vmatpush2.bf16.msra.mxu0 0
    %8344 = vmatprep.mubr.bf16.mxu0 0
    %8345 = vmatmul.mubr.bf16.gmra.mxu0 %v8224
    %v8346 = vpop.f32.mrf.mxu0
    %v8347 = vadd.f32 0.0, %v8346
    %v8348 = vpop.f32.mrf.mxu0
    %v8349 = vadd.f32 0.0, %v8348
    %v8350 = vpop.f32.mrf.mxu0
    %v8351 = vadd.f32 0.0, %v8350
    %v8352 = vpop.f32.mrf.mxu0
    %v8353 = vadd.f32 0.0, %v8352
    %8354 = vdwg.mxu0
    %8355 = vmatprep.subr.bf16.mxu0 0
    %8356 = vmatpush1.bf16.msra.mxu0 0
    %8357 = vmatprep.subr.bf16.mxu0 0
    %8358 = vmatpush1.bf16.msra.mxu0 0
    %8359 = vmatprep.subr.bf16.mxu0 0
    %8360 = vmatpush1.bf16.msra.mxu0 0
    %8361 = vmatprep.subr.bf16.mxu0 0
    %8362 = vmatpush1.bf16.msra.mxu0 0
    %8363 = vmatprep.subr.bf16.mxu0 0
    %8364 = vmatpush1.bf16.msra.mxu0 0
    %8365 = vmatprep.subr.bf16.mxu0 0
    %8366 = vmatpush1.bf16.msra.mxu0 0
    %8367 = vmatprep.subr.bf16.mxu0 0
    %8368 = vmatpush1.bf16.msra.mxu0 0
    %8369 = vmatprep.subr.bf16.mxu0 %v8214
    %8370 = vmatpush1.bf16.msra.mxu0 %v8213
    %8371 = vmatprep.subr.bf16.mxu0 0
    %8372 = vmatpush2.bf16.msra.mxu0 0
    %8373 = vmatprep.subr.bf16.mxu0 0
    %8374 = vmatpush2.bf16.msra.mxu0 0
    %8375 = vmatprep.subr.bf16.mxu0 0
    %8376 = vmatpush2.bf16.msra.mxu0 0
    %8377 = vmatprep.subr.bf16.mxu0 0
    %8378 = vmatpush2.bf16.msra.mxu0 0
    %8379 = vmatprep.subr.bf16.mxu0 0
    %8380 = vmatpush2.bf16.msra.mxu0 0
    %8381 = vmatprep.subr.bf16.mxu0 0
    %8382 = vmatpush2.bf16.msra.mxu0 0
    %8383 = vmatprep.subr.bf16.mxu0 0
    %8384 = vmatpush2.bf16.msra.mxu0 0
    %8385 = vmatprep.subr.bf16.mxu0 0
    %8386 = vmatpush2.bf16.msra.mxu0 0
    %8387 = vmatprep.mubr.bf16.mxu0 0
    %8388 = vmatmul.mubr.bf16.gmra.mxu0 %v8224
    %v8389 = vpop.f32.mrf.mxu0
    %v8390 = vadd.f32 0.0, %v8389
    %v8391 = vpop.f32.mrf.mxu0
    %v8392 = vadd.f32 0.0, %v8391
    %v8393 = vpop.f32.mrf.mxu0
    %v8394 = vadd.f32 0.0, %v8393
    %v8395 = vpop.f32.mrf.mxu0
    %v8396 = vadd.f32 0.0, %v8395
    %8397 = vdwg.mxu0
    %v8398 = vadd.f32 %v7873, %v8261
    %v8399 = vadd.f32 %v7875, %v8263
    %v8400 = vadd.f32 %v7916, %v8304
    %v8401 = vadd.f32 %v7918, %v8306
    %v8402 = vadd.f32 %v7959, %v8347
    %v8403 = vadd.f32 %v7961, %v8349
    %v8404 = vadd.f32 %v8002, %v8390
    %v8405 = vadd.f32 %v8004, %v8392
    %v8406 = vadd.f32 %v7877, %v8265
    %v8407 = vadd.f32 %v7879, %v8267
    %v8408 = vadd.f32 %v7920, %v8308
    %v8409 = vadd.f32 %v7922, %v8310
    %v8410 = vadd.f32 %v7963, %v8351
    %v8411 = vadd.f32 %v7965, %v8353
    %v8412 = vadd.f32 %v8006, %v8394
    %v8413 = vadd.f32 %v8008, %v8396
    %v8414 = vshrl.u32 %v8026, 16
    %v8415 = vpack.i.b16 %v8414, %v8414
    %v8417 = vlaneseq
    %v8418 = vshrl.u32 %v8417, 7
    %v8419 = vsub.s32 1, %v8418
    %v8420 = vrot.slane %v8415, %v8419
    %v8421 = vshrl.u32 %v8027, 16
    %v8422 = vpack.i.b16 %v8421, %v8421
    %v8424 = vlaneseq
    %v8425 = vshrl.u32 %v8424, 7
    %v8426 = vsub.s32 1, %v8425
    %v8427 = vrot.slane %v8422, %v8426
    %v8428 = vshrl.u32 %v8028, 16
    %v8429 = vpack.i.b16 %v8428, %v8428
    %v8431 = vlaneseq
    %v8432 = vshrl.u32 %v8431, 7
    %v8433 = vsub.s32 1, %v8432
    %v8434 = vrot.slane %v8429, %v8433
    %v8435 = vshrl.u32 %v8029, 16
    %v8436 = vpack.i.b16 %v8435, %v8435
    %v8438 = vlaneseq
    %v8439 = vshrl.u32 %v8438, 7
    %v8440 = vsub.s32 1, %v8439
    %v8441 = vrot.slane %v8436, %v8440
    %v8442 = vshrl.u32 %v8030, 16
    %v8443 = vpack.i.b16 %v8442, %v8442
    %v8445 = vlaneseq
    %v8446 = vshrl.u32 %v8445, 7
    %v8447 = vsub.s32 1, %v8446
    %v8448 = vrot.slane %v8443, %v8447
    %v8449 = vshrl.u32 %v8031, 16
    %v8450 = vpack.i.b16 %v8449, %v8449
    %v8452 = vlaneseq
    %v8453 = vshrl.u32 %v8452, 7
    %v8454 = vsub.s32 1, %v8453
    %v8455 = vrot.slane %v8450, %v8454
    %v8456 = vshrl.u32 %v8032, 16
    %v8457 = vpack.i.b16 %v8456, %v8456
    %v8459 = vlaneseq
    %v8460 = vshrl.u32 %v8459, 7
    %v8461 = vsub.s32 1, %v8460
    %v8462 = vrot.slane %v8457, %v8461
    %v8463 = vshrl.u32 %v8033, 16
    %v8464 = vpack.i.b16 %v8463, %v8463
    %v8466 = vlaneseq
    %v8467 = vshrl.u32 %v8466, 7
    %v8468 = vsub.s32 1, %v8467
    %v8469 = vrot.slane %v8464, %v8468
    %v8478 = vunpack.c.l.b16 %v8420
    %v8479 = vunpack.c.l.b16 %v8427
    %v8480 = vunpack.c.l.b16 %v8434
    %v8481 = vunpack.c.l.b16 %v8441
    %v8482 = vunpack.c.l.b16 %v8448
    %v8483 = vunpack.c.l.b16 %v8455
    %v8484 = vunpack.c.l.b16 %v8462
    %v8485 = vunpack.c.l.b16 %v8469
    %v8486 = vpack.c.b16 %v8479, %v8478
    %v8487 = vpack.c.b16 %v8481, %v8480
    %v8488 = vpack.c.b16 %v8483, %v8482
    %v8489 = vpack.c.b16 %v8485, %v8484
    %8490 = vrot.lane.b32.xlu0 %v8486, 127
    %v8491 = vpop.permute.xlu0 %8490
    %8492 = vrot.lane.b32.xlu0 %v8487, 127
    %v8493 = vpop.permute.xlu0 %8492
    %8494 = vrot.lane.b32.xlu0 %v8488, 127
    %v8495 = vpop.permute.xlu0 %8494
    %8496 = vrot.lane.b32.xlu0 %v8489, 127
    %v8497 = vpop.permute.xlu0 %8496
    %v8498 = vrot.slane %v8491, 4
    %v8499 = vrot.slane %v8493, 4
    %v8500 = vrot.slane %v8495, 4
    %v8501 = vrot.slane %v8497, 4
    %v8502 = vsel %vm1267, %v8498, %v8491
    %v8503 = vsel %vm188, %v8498, %v8499
    %v8504 = vsel %vm1267, %v8503, %v8493
    %v8505 = vsel %vm188, %v8499, %v8500
    %v8506 = vsel %vm1267, %v8505, %v8495
    %v8507 = vsel %vm188, %v8500, %v8501
    %v8508 = vsel %vm1267, %v8507, %v8497
    %v8514 = vmul.bf16 %v7249, %v8502
    %v8515 = vmul.bf16 %v7250, %v8504
    %v8516 = vmul.bf16 %v7251, %v8506
    %v8517 = vmul.bf16 %v7252, %v8508
    %v8518 = vmul.bf16 %v7253, %v8501
    %v8519 = vmul.bf16 %v7254, %v8502
    %v8520 = vmul.bf16 %v7255, %v8504
    %v8521 = vmul.bf16 %v7256, %v8506
    %v8522 = vmul.bf16 %v7257, %v8508
    %v8523 = vmul.bf16 %v7258, %v8501
    %s8524 = scalar_lea.vmem %s8, 24
    %v8525 = vld [vmem:[%s8524] sm:$0xf]
    %v8526 = vld [vmem:[%s8524 + $0x4] sm:$0xf]
    %v8529 = vunpack.c.l.b16 %v8525
    %v8530 = vunpack.c.l.b16 %v8526
    %v8531 = vpack.c.b16 %v8530, %v8529
    %v8542 = vunpack.c.l.b16 %v8514
    %v8543 = vunpack.c.h.b16 %v8514
    %v8544 = vunpack.c.l.b16 %v8515
    %v8545 = vunpack.c.h.b16 %v8515
    %v8546 = vunpack.c.l.b16 %v8516
    %v8547 = vunpack.c.h.b16 %v8516
    %v8548 = vunpack.c.l.b16 %v8517
    %v8549 = vunpack.c.h.b16 %v8517
    %v8550 = vunpack.c.l.b16 %v8518
    %v8551 = vunpack.c.l.b16 %v8519
    %v8552 = vunpack.c.h.b16 %v8519
    %v8553 = vunpack.c.l.b16 %v8520
    %v8554 = vunpack.c.h.b16 %v8520
    %v8555 = vunpack.c.l.b16 %v8521
    %v8556 = vunpack.c.h.b16 %v8521
    %v8557 = vunpack.c.l.b16 %v8522
    %v8558 = vunpack.c.h.b16 %v8522
    %v8559 = vunpack.c.l.b16 %v8523
    %v8560 = vpack.c.b16 %v8551, %v8542
    %v8561 = vpack.c.b16 %v8552, %v8543
    %v8562 = vpack.c.b16 %v8553, %v8544
    %v8563 = vpack.c.b16 %v8554, %v8545
    %v8564 = vpack.c.b16 %v8555, %v8546
    %v8565 = vpack.c.b16 %v8556, %v8547
    %v8566 = vpack.c.b16 %v8557, %v8548
    %v8567 = vpack.c.b16 %v8558, %v8549
    %v8568 = vpack.c.b16 %v8559, %v8550
    %8569 = vrot.lane.b32.xlu0 %v8560, 1
    %v8570 = vpop.permute.xlu0 %8569
    %8571 = vrot.lane.b32.xlu0 %v8561, 1
    %v8572 = vpop.permute.xlu0 %8571
    %8573 = vrot.lane.b32.xlu0 %v8562, 1
    %v8574 = vpop.permute.xlu0 %8573
    %8575 = vrot.lane.b32.xlu0 %v8563, 1
    %v8576 = vpop.permute.xlu0 %8575
    %8577 = vrot.lane.b32.xlu0 %v8564, 1
    %v8578 = vpop.permute.xlu0 %8577
    %8579 = vrot.lane.b32.xlu0 %v8565, 1
    %v8580 = vpop.permute.xlu0 %8579
    %8581 = vrot.lane.b32.xlu0 %v8566, 1
    %v8582 = vpop.permute.xlu0 %8581
    %8583 = vrot.lane.b32.xlu0 %v8567, 1
    %v8584 = vpop.permute.xlu0 %8583
    %8585 = vrot.lane.b32.xlu0 %v8568, 1
    %v8586 = vpop.permute.xlu0 %8585
    %v8587 = vsel %vm1328, %v8570, %v8572
    %v8588 = vsel %vm1328, %v8572, %v8574
    %v8589 = vsel %vm1328, %v8574, %v8576
    %v8590 = vsel %vm1328, %v8576, %v8578
    %v8591 = vsel %vm1328, %v8578, %v8580
    %v8592 = vsel %vm1328, %v8580, %v8582
    %v8593 = vsel %vm1328, %v8582, %v8584
    %v8594 = vsel %vm1328, %v8584, %v8586
    %v8604 = vsel %vm7080, %v8531, 0
    %8606 = vmatprep.subr.bf16.mxu0 0
    %8607 = vmatpush1.bf16.msra.mxu0 0
    %8608 = vmatprep.subr.bf16.mxu0 0
    %8609 = vmatpush1.bf16.msra.mxu0 0
    %8610 = vmatprep.subr.bf16.mxu0 0
    %8611 = vmatpush1.bf16.msra.mxu0 0
    %8612 = vmatprep.subr.bf16.mxu0 0
    %8613 = vmatpush1.bf16.msra.mxu0 0
    %8614 = vmatprep.subr.bf16.mxu0 0
    %8615 = vmatpush1.bf16.msra.mxu0 0
    %8616 = vmatprep.subr.bf16.mxu0 0
    %8617 = vmatpush1.bf16.msra.mxu0 0
    %8618 = vmatprep.subr.bf16.mxu0 0
    %8619 = vmatpush1.bf16.msra.mxu0 0
    %8620 = vmatprep.subr.bf16.mxu0 %v8588
    %8621 = vmatpush1.bf16.msra.mxu0 %v8587
    %8622 = vmatprep.subr.bf16.mxu0 0
    %8623 = vmatpush2.bf16.msra.mxu0 0
    %8624 = vmatprep.subr.bf16.mxu0 0
    %8625 = vmatpush2.bf16.msra.mxu0 0
    %8626 = vmatprep.subr.bf16.mxu0 0
    %8627 = vmatpush2.bf16.msra.mxu0 0
    %8628 = vmatprep.subr.bf16.mxu0 0
    %8629 = vmatpush2.bf16.msra.mxu0 0
    %8630 = vmatprep.subr.bf16.mxu0 0
    %8631 = vmatpush2.bf16.msra.mxu0 0
    %8632 = vmatprep.subr.bf16.mxu0 0
    %8633 = vmatpush2.bf16.msra.mxu0 0
    %8634 = vmatprep.subr.bf16.mxu0 0
    %8635 = vmatpush2.bf16.msra.mxu0 0
    %8636 = vmatprep.subr.bf16.mxu0 0
    %8637 = vmatpush2.bf16.msra.mxu0 0
    %8638 = vmatprep.mubr.bf16.mxu0 0
    %8639 = vmatmul.mubr.bf16.gmra.mxu0 %v8604
    %v8640 = vpop.f32.mrf.mxu0
    %v8641 = vadd.f32 0.0, %v8640
    %v8642 = vpop.f32.mrf.mxu0
    %v8643 = vadd.f32 0.0, %v8642
    %v8644 = vpop.f32.mrf.mxu0
    %v8645 = vadd.f32 0.0, %v8644
    %v8646 = vpop.f32.mrf.mxu0
    %v8647 = vadd.f32 0.0, %v8646
    %8648 = vdwg.mxu0
    %8649 = vmatprep.subr.bf16.mxu0 0
    %8650 = vmatpush1.bf16.msra.mxu0 0
    %8651 = vmatprep.subr.bf16.mxu0 0
    %8652 = vmatpush1.bf16.msra.mxu0 0
    %8653 = vmatprep.subr.bf16.mxu0 0
    %8654 = vmatpush1.bf16.msra.mxu0 0
    %8655 = vmatprep.subr.bf16.mxu0 0
    %8656 = vmatpush1.bf16.msra.mxu0 0
    %8657 = vmatprep.subr.bf16.mxu0 0
    %8658 = vmatpush1.bf16.msra.mxu0 0
    %8659 = vmatprep.subr.bf16.mxu0 0
    %8660 = vmatpush1.bf16.msra.mxu0 0
    %8661 = vmatprep.subr.bf16.mxu0 0
    %8662 = vmatpush1.bf16.msra.mxu0 0
    %8663 = vmatprep.subr.bf16.mxu0 %v8590
    %8664 = vmatpush1.bf16.msra.mxu0 %v8589
    %8665 = vmatprep.subr.bf16.mxu0 0
    %8666 = vmatpush2.bf16.msra.mxu0 0
    %8667 = vmatprep.subr.bf16.mxu0 0
    %8668 = vmatpush2.bf16.msra.mxu0 0
    %8669 = vmatprep.subr.bf16.mxu0 0
    %8670 = vmatpush2.bf16.msra.mxu0 0
    %8671 = vmatprep.subr.bf16.mxu0 0
    %8672 = vmatpush2.bf16.msra.mxu0 0
    %8673 = vmatprep.subr.bf16.mxu0 0
    %8674 = vmatpush2.bf16.msra.mxu0 0
    %8675 = vmatprep.subr.bf16.mxu0 0
    %8676 = vmatpush2.bf16.msra.mxu0 0
    %8677 = vmatprep.subr.bf16.mxu0 0
    %8678 = vmatpush2.bf16.msra.mxu0 0
    %8679 = vmatprep.subr.bf16.mxu0 0
    %8680 = vmatpush2.bf16.msra.mxu0 0
    %8681 = vmatprep.mubr.bf16.mxu0 0
    %8682 = vmatmul.mubr.bf16.gmra.mxu0 %v8604
    %v8683 = vpop.f32.mrf.mxu0
    %v8684 = vadd.f32 0.0, %v8683
    %v8685 = vpop.f32.mrf.mxu0
    %v8686 = vadd.f32 0.0, %v8685
    %v8687 = vpop.f32.mrf.mxu0
    %v8688 = vadd.f32 0.0, %v8687
    %v8689 = vpop.f32.mrf.mxu0
    %v8690 = vadd.f32 0.0, %v8689
    %8691 = vdwg.mxu0
    %8692 = vmatprep.subr.bf16.mxu0 0
    %8693 = vmatpush1.bf16.msra.mxu0 0
    %8694 = vmatprep.subr.bf16.mxu0 0
    %8695 = vmatpush1.bf16.msra.mxu0 0
    %8696 = vmatprep.subr.bf16.mxu0 0
    %8697 = vmatpush1.bf16.msra.mxu0 0
    %8698 = vmatprep.subr.bf16.mxu0 0
    %8699 = vmatpush1.bf16.msra.mxu0 0
    %8700 = vmatprep.subr.bf16.mxu0 0
    %8701 = vmatpush1.bf16.msra.mxu0 0
    %8702 = vmatprep.subr.bf16.mxu0 0
    %8703 = vmatpush1.bf16.msra.mxu0 0
    %8704 = vmatprep.subr.bf16.mxu0 0
    %8705 = vmatpush1.bf16.msra.mxu0 0
    %8706 = vmatprep.subr.bf16.mxu0 %v8592
    %8707 = vmatpush1.bf16.msra.mxu0 %v8591
    %8708 = vmatprep.subr.bf16.mxu0 0
    %8709 = vmatpush2.bf16.msra.mxu0 0
    %8710 = vmatprep.subr.bf16.mxu0 0
    %8711 = vmatpush2.bf16.msra.mxu0 0
    %8712 = vmatprep.subr.bf16.mxu0 0
    %8713 = vmatpush2.bf16.msra.mxu0 0
    %8714 = vmatprep.subr.bf16.mxu0 0
    %8715 = vmatpush2.bf16.msra.mxu0 0
    %8716 = vmatprep.subr.bf16.mxu0 0
    %8717 = vmatpush2.bf16.msra.mxu0 0
    %8718 = vmatprep.subr.bf16.mxu0 0
    %8719 = vmatpush2.bf16.msra.mxu0 0
    %8720 = vmatprep.subr.bf16.mxu0 0
    %8721 = vmatpush2.bf16.msra.mxu0 0
    %8722 = vmatprep.subr.bf16.mxu0 0
    %8723 = vmatpush2.bf16.msra.mxu0 0
    %8724 = vmatprep.mubr.bf16.mxu0 0
    %8725 = vmatmul.mubr.bf16.gmra.mxu0 %v8604
    %v8726 = vpop.f32.mrf.mxu0
    %v8727 = vadd.f32 0.0, %v8726
    %v8728 = vpop.f32.mrf.mxu0
    %v8729 = vadd.f32 0.0, %v8728
    %v8730 = vpop.f32.mrf.mxu0
    %v8731 = vadd.f32 0.0, %v8730
    %v8732 = vpop.f32.mrf.mxu0
    %v8733 = vadd.f32 0.0, %v8732
    %8734 = vdwg.mxu0
    %8735 = vmatprep.subr.bf16.mxu0 0
    %8736 = vmatpush1.bf16.msra.mxu0 0
    %8737 = vmatprep.subr.bf16.mxu0 0
    %8738 = vmatpush1.bf16.msra.mxu0 0
    %8739 = vmatprep.subr.bf16.mxu0 0
    %8740 = vmatpush1.bf16.msra.mxu0 0
    %8741 = vmatprep.subr.bf16.mxu0 0
    %8742 = vmatpush1.bf16.msra.mxu0 0
    %8743 = vmatprep.subr.bf16.mxu0 0
    %8744 = vmatpush1.bf16.msra.mxu0 0
    %8745 = vmatprep.subr.bf16.mxu0 0
    %8746 = vmatpush1.bf16.msra.mxu0 0
    %8747 = vmatprep.subr.bf16.mxu0 0
    %8748 = vmatpush1.bf16.msra.mxu0 0
    %8749 = vmatprep.subr.bf16.mxu0 %v8594
    %8750 = vmatpush1.bf16.msra.mxu0 %v8593
    %8751 = vmatprep.subr.bf16.mxu0 0
    %8752 = vmatpush2.bf16.msra.mxu0 0
    %8753 = vmatprep.subr.bf16.mxu0 0
    %8754 = vmatpush2.bf16.msra.mxu0 0
    %8755 = vmatprep.subr.bf16.mxu0 0
    %8756 = vmatpush2.bf16.msra.mxu0 0
    %8757 = vmatprep.subr.bf16.mxu0 0
    %8758 = vmatpush2.bf16.msra.mxu0 0
    %8759 = vmatprep.subr.bf16.mxu0 0
    %8760 = vmatpush2.bf16.msra.mxu0 0
    %8761 = vmatprep.subr.bf16.mxu0 0
    %8762 = vmatpush2.bf16.msra.mxu0 0
    %8763 = vmatprep.subr.bf16.mxu0 0
    %8764 = vmatpush2.bf16.msra.mxu0 0
    %8765 = vmatprep.subr.bf16.mxu0 0
    %8766 = vmatpush2.bf16.msra.mxu0 0
    %8767 = vmatprep.mubr.bf16.mxu0 0
    %8768 = vmatmul.mubr.bf16.gmra.mxu0 %v8604
    %v8769 = vpop.f32.mrf.mxu0
    %v8770 = vadd.f32 0.0, %v8769
    %v8771 = vpop.f32.mrf.mxu0
    %v8772 = vadd.f32 0.0, %v8771
    %v8773 = vpop.f32.mrf.mxu0
    %v8774 = vadd.f32 0.0, %v8773
    %v8775 = vpop.f32.mrf.mxu0
    %v8776 = vadd.f32 0.0, %v8775
    %8777 = vdwg.mxu0
    %v8778 = vadd.f32 %v8398, %v8641
    %v8779 = vadd.f32 %v8399, %v8643
    %v8780 = vadd.f32 %v8400, %v8684
    %v8781 = vadd.f32 %v8401, %v8686
    %v8782 = vadd.f32 %v8402, %v8727
    %v8783 = vadd.f32 %v8403, %v8729
    %v8784 = vadd.f32 %v8404, %v8770
    %v8785 = vadd.f32 %v8405, %v8772
    %v8786 = vadd.f32 %v8406, %v8645
    %v8787 = vadd.f32 %v8407, %v8647
    %v8788 = vadd.f32 %v8408, %v8688
    %v8789 = vadd.f32 %v8409, %v8690
    %v8790 = vadd.f32 %v8410, %v8731
    %v8791 = vadd.f32 %v8411, %v8733
    %v8792 = vadd.f32 %v8412, %v8774
    %v8793 = vadd.f32 %v8413, %v8776
    %v8794 = vld [vmem:[#allocation3 + $0x4] sm:$0xff]
    %v8795 = vld [vmem:[#allocation3 + $0xc] sm:$0xff]
    %v8796 = vld [vmem:[#allocation3 + $0x14] sm:$0xff]
    %v8797 = vld [vmem:[#allocation3 + $0x1c] sm:$0xff]
    %v8798 = vld [vmem:[#allocation3 + $0x2c] sm:$0xff]
    %v8799 = vld [vmem:[#allocation3 + $0x34] sm:$0xff]
    %v8800 = vld [vmem:[#allocation3 + $0x3c] sm:$0xff]
    %v8801 = vld [vmem:[#allocation3 + $0x44] sm:$0xff]
    %s8802 = scalar_lea.vmem %s8, 32
    %v8803 = vld [vmem:[%s8802] sm:$0xf]
    %v8804 = vld [vmem:[%s8802 + $0x4] sm:$0xf]
    %v8807 = vunpack.c.l.b16 %v8803
    %v8808 = vunpack.c.l.b16 %v8804
    %v8809 = vpack.c.b16 %v8808, %v8807
    %v8818 = vunpack.c.l.b16 %v8794
    %v8819 = vunpack.c.h.b16 %v8794
    %v8820 = vunpack.c.l.b16 %v8795
    %v8821 = vunpack.c.h.b16 %v8795
    %v8822 = vunpack.c.l.b16 %v8796
    %v8823 = vunpack.c.h.b16 %v8796
    %v8824 = vunpack.c.l.b16 %v8797
    %v8825 = vunpack.c.h.b16 %v8797
    %v8826 = vunpack.c.l.b16 %v8798
    %v8827 = vunpack.c.h.b16 %v8798
    %v8828 = vunpack.c.l.b16 %v8799
    %v8829 = vunpack.c.h.b16 %v8799
    %v8830 = vunpack.c.l.b16 %v8800
    %v8831 = vunpack.c.h.b16 %v8800
    %v8832 = vunpack.c.l.b16 %v8801
    %v8833 = vunpack.c.h.b16 %v8801
    %v8834 = vpack.c.b16 %v8826, %v8818
    %v8835 = vpack.c.b16 %v8827, %v8819
    %v8836 = vpack.c.b16 %v8828, %v8820
    %v8837 = vpack.c.b16 %v8829, %v8821
    %v8838 = vpack.c.b16 %v8830, %v8822
    %v8839 = vpack.c.b16 %v8831, %v8823
    %v8840 = vpack.c.b16 %v8832, %v8824
    %v8841 = vpack.c.b16 %v8833, %v8825
    %v8851 = vsel %vm7080, %v8809, 0
    %8853 = vmatprep.subr.bf16.mxu0 0
    %8854 = vmatpush1.bf16.msra.mxu0 0
    %8855 = vmatprep.subr.bf16.mxu0 0
    %8856 = vmatpush1.bf16.msra.mxu0 0
    %8857 = vmatprep.subr.bf16.mxu0 0
    %8858 = vmatpush1.bf16.msra.mxu0 0
    %8859 = vmatprep.subr.bf16.mxu0 0
    %8860 = vmatpush1.bf16.msra.mxu0 0
    %8861 = vmatprep.subr.bf16.mxu0 0
    %8862 = vmatpush1.bf16.msra.mxu0 0
    %8863 = vmatprep.subr.bf16.mxu0 0
    %8864 = vmatpush1.bf16.msra.mxu0 0
    %8865 = vmatprep.subr.bf16.mxu0 0
    %8866 = vmatpush1.bf16.msra.mxu0 0
    %8867 = vmatprep.subr.bf16.mxu0 %v8835
    %8868 = vmatpush1.bf16.msra.mxu0 %v8834
    %8869 = vmatprep.subr.bf16.mxu0 0
    %8870 = vmatpush2.bf16.msra.mxu0 0
    %8871 = vmatprep.subr.bf16.mxu0 0
    %8872 = vmatpush2.bf16.msra.mxu0 0
    %8873 = vmatprep.subr.bf16.mxu0 0
    %8874 = vmatpush2.bf16.msra.mxu0 0
    %8875 = vmatprep.subr.bf16.mxu0 0
    %8876 = vmatpush2.bf16.msra.mxu0 0
    %8877 = vmatprep.subr.bf16.mxu0 0
    %8878 = vmatpush2.bf16.msra.mxu0 0
    %8879 = vmatprep.subr.bf16.mxu0 0
    %8880 = vmatpush2.bf16.msra.mxu0 0
    %8881 = vmatprep.subr.bf16.mxu0 0
    %8882 = vmatpush2.bf16.msra.mxu0 0
    %8883 = vmatprep.subr.bf16.mxu0 0
    %8884 = vmatpush2.bf16.msra.mxu0 0
    %8885 = vmatprep.mubr.bf16.mxu0 0
    %8886 = vmatmul.mubr.bf16.gmra.mxu0 %v8851
    %v8887 = vpop.f32.mrf.mxu0
    %v8888 = vadd.f32 0.0, %v8887
    %v8889 = vpop.f32.mrf.mxu0
    %v8890 = vadd.f32 0.0, %v8889
    %v8891 = vpop.f32.mrf.mxu0
    %v8892 = vadd.f32 0.0, %v8891
    %v8893 = vpop.f32.mrf.mxu0
    %v8894 = vadd.f32 0.0, %v8893
    %8895 = vdwg.mxu0
    %8896 = vmatprep.subr.bf16.mxu0 0
    %8897 = vmatpush1.bf16.msra.mxu0 0
    %8898 = vmatprep.subr.bf16.mxu0 0
    %8899 = vmatpush1.bf16.msra.mxu0 0
    %8900 = vmatprep.subr.bf16.mxu0 0
    %8901 = vmatpush1.bf16.msra.mxu0 0
    %8902 = vmatprep.subr.bf16.mxu0 0
    %8903 = vmatpush1.bf16.msra.mxu0 0
    %8904 = vmatprep.subr.bf16.mxu0 0
    %8905 = vmatpush1.bf16.msra.mxu0 0
    %8906 = vmatprep.subr.bf16.mxu0 0
    %8907 = vmatpush1.bf16.msra.mxu0 0
    %8908 = vmatprep.subr.bf16.mxu0 0
    %8909 = vmatpush1.bf16.msra.mxu0 0
    %8910 = vmatprep.subr.bf16.mxu0 %v8837
    %8911 = vmatpush1.bf16.msra.mxu0 %v8836
    %8912 = vmatprep.subr.bf16.mxu0 0
    %8913 = vmatpush2.bf16.msra.mxu0 0
    %8914 = vmatprep.subr.bf16.mxu0 0
    %8915 = vmatpush2.bf16.msra.mxu0 0
    %8916 = vmatprep.subr.bf16.mxu0 0
    %8917 = vmatpush2.bf16.msra.mxu0 0
    %8918 = vmatprep.subr.bf16.mxu0 0
    %8919 = vmatpush2.bf16.msra.mxu0 0
    %8920 = vmatprep.subr.bf16.mxu0 0
    %8921 = vmatpush2.bf16.msra.mxu0 0
    %8922 = vmatprep.subr.bf16.mxu0 0
    %8923 = vmatpush2.bf16.msra.mxu0 0
    %8924 = vmatprep.subr.bf16.mxu0 0
    %8925 = vmatpush2.bf16.msra.mxu0 0
    %8926 = vmatprep.subr.bf16.mxu0 0
    %8927 = vmatpush2.bf16.msra.mxu0 0
    %8928 = vmatprep.mubr.bf16.mxu0 0
    %8929 = vmatmul.mubr.bf16.gmra.mxu0 %v8851
    %v8930 = vpop.f32.mrf.mxu0
    %v8931 = vadd.f32 0.0, %v8930
    %v8932 = vpop.f32.mrf.mxu0
    %v8933 = vadd.f32 0.0, %v8932
    %v8934 = vpop.f32.mrf.mxu0
    %v8935 = vadd.f32 0.0, %v8934
    %v8936 = vpop.f32.mrf.mxu0
    %v8937 = vadd.f32 0.0, %v8936
    %8938 = vdwg.mxu0
    %8939 = vmatprep.subr.bf16.mxu0 0
    %8940 = vmatpush1.bf16.msra.mxu0 0
    %8941 = vmatprep.subr.bf16.mxu0 0
    %8942 = vmatpush1.bf16.msra.mxu0 0
    %8943 = vmatprep.subr.bf16.mxu0 0
    %8944 = vmatpush1.bf16.msra.mxu0 0
    %8945 = vmatprep.subr.bf16.mxu0 0
    %8946 = vmatpush1.bf16.msra.mxu0 0
    %8947 = vmatprep.subr.bf16.mxu0 0
    %8948 = vmatpush1.bf16.msra.mxu0 0
    %8949 = vmatprep.subr.bf16.mxu0 0
    %8950 = vmatpush1.bf16.msra.mxu0 0
    %8951 = vmatprep.subr.bf16.mxu0 0
    %8952 = vmatpush1.bf16.msra.mxu0 0
    %8953 = vmatprep.subr.bf16.mxu0 %v8839
    %8954 = vmatpush1.bf16.msra.mxu0 %v8838
    %8955 = vmatprep.subr.bf16.mxu0 0
    %8956 = vmatpush2.bf16.msra.mxu0 0
    %8957 = vmatprep.subr.bf16.mxu0 0
    %8958 = vmatpush2.bf16.msra.mxu0 0
    %8959 = vmatprep.subr.bf16.mxu0 0
    %8960 = vmatpush2.bf16.msra.mxu0 0
    %8961 = vmatprep.subr.bf16.mxu0 0
    %8962 = vmatpush2.bf16.msra.mxu0 0
    %8963 = vmatprep.subr.bf16.mxu0 0
    %8964 = vmatpush2.bf16.msra.mxu0 0
    %8965 = vmatprep.subr.bf16.mxu0 0
    %8966 = vmatpush2.bf16.msra.mxu0 0
    %8967 = vmatprep.subr.bf16.mxu0 0
    %8968 = vmatpush2.bf16.msra.mxu0 0
    %8969 = vmatprep.subr.bf16.mxu0 0
    %8970 = vmatpush2.bf16.msra.mxu0 0
    %8971 = vmatprep.mubr.bf16.mxu0 0
    %8972 = vmatmul.mubr.bf16.gmra.mxu0 %v8851
    %v8973 = vpop.f32.mrf.mxu0
    %v8974 = vadd.f32 0.0, %v8973
    %v8975 = vpop.f32.mrf.mxu0
    %v8976 = vadd.f32 0.0, %v8975
    %v8977 = vpop.f32.mrf.mxu0
    %v8978 = vadd.f32 0.0, %v8977
    %v8979 = vpop.f32.mrf.mxu0
    %v8980 = vadd.f32 0.0, %v8979
    %8981 = vdwg.mxu0
    %8982 = vmatprep.subr.bf16.mxu0 0
    %8983 = vmatpush1.bf16.msra.mxu0 0
    %8984 = vmatprep.subr.bf16.mxu0 0
    %8985 = vmatpush1.bf16.msra.mxu0 0
    %8986 = vmatprep.subr.bf16.mxu0 0
    %8987 = vmatpush1.bf16.msra.mxu0 0
    %8988 = vmatprep.subr.bf16.mxu0 0
    %8989 = vmatpush1.bf16.msra.mxu0 0
    %8990 = vmatprep.subr.bf16.mxu0 0
    %8991 = vmatpush1.bf16.msra.mxu0 0
    %8992 = vmatprep.subr.bf16.mxu0 0
    %8993 = vmatpush1.bf16.msra.mxu0 0
    %8994 = vmatprep.subr.bf16.mxu0 0
    %8995 = vmatpush1.bf16.msra.mxu0 0
    %8996 = vmatprep.subr.bf16.mxu0 %v8841
    %8997 = vmatpush1.bf16.msra.mxu0 %v8840
    %8998 = vmatprep.subr.bf16.mxu0 0
    %8999 = vmatpush2.bf16.msra.mxu0 0
    %9000 = vmatprep.subr.bf16.mxu0 0
    %9001 = vmatpush2.bf16.msra.mxu0 0
    %9002 = vmatprep.subr.bf16.mxu0 0
    %9003 = vmatpush2.bf16.msra.mxu0 0
    %9004 = vmatprep.subr.bf16.mxu0 0
    %9005 = vmatpush2.bf16.msra.mxu0 0
    %9006 = vmatprep.subr.bf16.mxu0 0
    %9007 = vmatpush2.bf16.msra.mxu0 0
    %9008 = vmatprep.subr.bf16.mxu0 0
    %9009 = vmatpush2.bf16.msra.mxu0 0
    %9010 = vmatprep.subr.bf16.mxu0 0
    %9011 = vmatpush2.bf16.msra.mxu0 0
    %9012 = vmatprep.subr.bf16.mxu0 0
    %9013 = vmatpush2.bf16.msra.mxu0 0
    %9014 = vmatprep.mubr.bf16.mxu0 0
    %9015 = vmatmul.mubr.bf16.gmra.mxu0 %v8851
    %v9016 = vpop.f32.mrf.mxu0
    %v9017 = vadd.f32 0.0, %v9016
    %v9018 = vpop.f32.mrf.mxu0
    %v9019 = vadd.f32 0.0, %v9018
    %v9020 = vpop.f32.mrf.mxu0
    %v9021 = vadd.f32 0.0, %v9020
    %v9022 = vpop.f32.mrf.mxu0
    %v9023 = vadd.f32 0.0, %v9022
    %9024 = vdwg.mxu0
    %v9025 = vadd.f32 %v8778, %v8888
    %v9026 = vadd.f32 %v8779, %v8890
    %v9027 = vadd.f32 %v8780, %v8931
    %v9028 = vadd.f32 %v8781, %v8933
    %v9029 = vadd.f32 %v8782, %v8974
    %v9030 = vadd.f32 %v8783, %v8976
    %v9031 = vadd.f32 %v8784, %v9017
    %v9032 = vadd.f32 %v8785, %v9019
    %v9033 = vadd.f32 %v8786, %v8892
    %v9034 = vadd.f32 %v8787, %v8894
    %v9035 = vadd.f32 %v8788, %v8935
    %v9036 = vadd.f32 %v8789, %v8937
    %v9037 = vadd.f32 %v8790, %v8978
    %v9038 = vadd.f32 %v8791, %v8980
    %v9039 = vadd.f32 %v8792, %v9021
    %v9040 = vadd.f32 %v8793, %v9023
    %v9041 = vld [vmem:[#allocation3 + $0x4] sm:$0xff]
    %v9042 = vld [vmem:[#allocation3 + $0xc] sm:$0xff]
    %v9043 = vld [vmem:[#allocation3 + $0x14] sm:$0xff]
    %v9044 = vld [vmem:[#allocation3 + $0x1c] sm:$0xff]
    %v9045 = vld [vmem:[#allocation3 + $0x24] sm:$0xf]
    %v9046 = vld [vmem:[#allocation3 + $0x2c] sm:$0xff]
    %v9047 = vld [vmem:[#allocation3 + $0x34] sm:$0xff]
    %v9048 = vld [vmem:[#allocation3 + $0x3c] sm:$0xff]
    %v9049 = vld [vmem:[#allocation3 + $0x44] sm:$0xff]
    %v9050 = vld [vmem:[#allocation3 + $0x4c] sm:$0xf]
    %v9051 = vld [vmem:[%s1] sm:$0x44]
    %v9052 = vld [vmem:[%s1 + $0x8] sm:$0x44]
    %v9053 = vld [vmem:[%s1 + $0x10] sm:$0x44]
    %v9054 = vld [vmem:[%s1 + $0x18] sm:$0x44]
    %v9059 = vunpack.c.l.b16 %v9051
    %v9060 = vunpack.c.h.b16 %v9051
    %v9061 = vunpack.c.l.b16 %v9052
    %v9062 = vunpack.c.h.b16 %v9052
    %v9063 = vunpack.c.l.b16 %v9053
    %v9064 = vunpack.c.h.b16 %v9053
    %v9065 = vunpack.c.l.b16 %v9054
    %v9066 = vunpack.c.h.b16 %v9054
    %v9067 = vpack.c.b16 %v9059, %v9059
    %v9068 = vpack.c.b16 %v9060, %v9060
    %v9069 = vpack.c.b16 %v9061, %v9061
    %v9070 = vpack.c.b16 %v9062, %v9062
    %v9071 = vpack.c.b16 %v9063, %v9063
    %v9072 = vpack.c.b16 %v9064, %v9064
    %v9073 = vpack.c.b16 %v9065, %v9065
    %v9074 = vpack.c.b16 %v9066, %v9066
    %v9076 = vshrl.u32 %v9067, 16
    %v9077 = vpack.i.b16 %v9076, %v9076
    %v9079 = vlaneseq
    %v9080 = vshrl.u32 %v9079, 7
    %v9081 = vsub.s32 2, %v9080
    %v9082 = vrot.slane %v9077, %v9081
    %v9084 = vshrl.u32 %v9068, 16
    %v9085 = vpack.i.b16 %v9084, %v9084
    %v9087 = vlaneseq
    %v9088 = vshrl.u32 %v9087, 7
    %v9089 = vsub.s32 2, %v9088
    %v9090 = vrot.slane %v9085, %v9089
    %v9092 = vshrl.u32 %v9069, 16
    %v9093 = vpack.i.b16 %v9092, %v9092
    %v9095 = vlaneseq
    %v9096 = vshrl.u32 %v9095, 7
    %v9097 = vsub.s32 2, %v9096
    %v9098 = vrot.slane %v9093, %v9097
    %v9100 = vshrl.u32 %v9070, 16
    %v9101 = vpack.i.b16 %v9100, %v9100
    %v9103 = vlaneseq
    %v9104 = vshrl.u32 %v9103, 7
    %v9105 = vsub.s32 2, %v9104
    %v9106 = vrot.slane %v9101, %v9105
    %v9108 = vshrl.u32 %v9071, 16
    %v9109 = vpack.i.b16 %v9108, %v9108
    %v9111 = vlaneseq
    %v9112 = vshrl.u32 %v9111, 7
    %v9113 = vsub.s32 2, %v9112
    %v9114 = vrot.slane %v9109, %v9113
    %v9116 = vshrl.u32 %v9072, 16
    %v9117 = vpack.i.b16 %v9116, %v9116
    %v9119 = vlaneseq
    %v9120 = vshrl.u32 %v9119, 7
    %v9121 = vsub.s32 2, %v9120
    %v9122 = vrot.slane %v9117, %v9121
    %v9124 = vshrl.u32 %v9073, 16
    %v9125 = vpack.i.b16 %v9124, %v9124
    %v9127 = vlaneseq
    %v9128 = vshrl.u32 %v9127, 7
    %v9129 = vsub.s32 2, %v9128
    %v9130 = vrot.slane %v9125, %v9129
    %v9132 = vshrl.u32 %v9074, 16
    %v9133 = vpack.i.b16 %v9132, %v9132
    %v9135 = vlaneseq
    %v9136 = vshrl.u32 %v9135, 7
    %v9137 = vsub.s32 2, %v9136
    %v9138 = vrot.slane %v9133, %v9137
    %v9147 = vunpack.c.l.b16 %v9082
    %v9148 = vunpack.c.l.b16 %v9090
    %v9149 = vunpack.c.l.b16 %v9098
    %v9150 = vunpack.c.l.b16 %v9106
    %v9151 = vunpack.c.l.b16 %v9114
    %v9152 = vunpack.c.l.b16 %v9122
    %v9153 = vunpack.c.l.b16 %v9130
    %v9154 = vunpack.c.l.b16 %v9138
    %v9155 = vpack.c.b16 %v9148, %v9147
    %v9156 = vpack.c.b16 %v9150, %v9149
    %v9157 = vpack.c.b16 %v9152, %v9151
    %v9158 = vpack.c.b16 %v9154, %v9153
    %9159 = vrot.lane.b32.xlu0 %v9155, 1
    %v9160 = vpop.permute.xlu0 %9159
    %9161 = vrot.lane.b32.xlu0 %v9156, 1
    %v9162 = vpop.permute.xlu0 %9161
    %9163 = vrot.lane.b32.xlu0 %v9157, 1
    %v9164 = vpop.permute.xlu0 %9163
    %9165 = vrot.lane.b32.xlu0 %v9158, 1
    %v9166 = vpop.permute.xlu0 %9165
    %v9167 = vrot.slane %v9160, 4
    %v9168 = vrot.slane %v9162, 4
    %v9169 = vrot.slane %v9164, 4
    %v9170 = vrot.slane %v9166, 4
    %v9171 = vsel %vm1328, %v9167, %v9160
    %v9172 = vsel %vm188, %v9167, %v9168
    %v9173 = vsel %vm1328, %v9172, %v9162
    %v9174 = vsel %vm188, %v9168, %v9169
    %v9175 = vsel %vm1328, %v9174, %v9164
    %v9176 = vsel %vm188, %v9169, %v9170
    %v9177 = vsel %vm1328, %v9176, %v9166
    %v9183 = vmul.bf16 %v9041, %v9171
    %v9184 = vmul.bf16 %v9042, %v9173
    %v9185 = vmul.bf16 %v9043, %v9175
    %v9186 = vmul.bf16 %v9044, %v9177
    %v9187 = vmul.bf16 %v9045, %v9170
    %v9188 = vmul.bf16 %v9046, %v9171
    %v9189 = vmul.bf16 %v9047, %v9173
    %v9190 = vmul.bf16 %v9048, %v9175
    %v9191 = vmul.bf16 %v9049, %v9177
    %v9192 = vmul.bf16 %v9050, %v9170
    %s9193 = scalar_lea.vmem %s8, 40
    %v9194 = vld [vmem:[%s9193] sm:$0xf]
    %v9195 = vld [vmem:[%s9193 + $0x4] sm:$0xf]
    %v9198 = vunpack.c.l.b16 %v9194
    %v9199 = vunpack.c.l.b16 %v9195
    %v9200 = vpack.c.b16 %v9199, %v9198
    %v9211 = vunpack.c.l.b16 %v9183
    %v9212 = vunpack.c.h.b16 %v9183
    %v9213 = vunpack.c.l.b16 %v9184
    %v9214 = vunpack.c.h.b16 %v9184
    %v9215 = vunpack.c.l.b16 %v9185
    %v9216 = vunpack.c.h.b16 %v9185
    %v9217 = vunpack.c.l.b16 %v9186
    %v9218 = vunpack.c.h.b16 %v9186
    %v9219 = vunpack.c.l.b16 %v9187
    %v9220 = vunpack.c.l.b16 %v9188
    %v9221 = vunpack.c.h.b16 %v9188
    %v9222 = vunpack.c.l.b16 %v9189
    %v9223 = vunpack.c.h.b16 %v9189
    %v9224 = vunpack.c.l.b16 %v9190
    %v9225 = vunpack.c.h.b16 %v9190
    %v9226 = vunpack.c.l.b16 %v9191
    %v9227 = vunpack.c.h.b16 %v9191
    %v9228 = vunpack.c.l.b16 %v9192
    %v9229 = vpack.c.b16 %v9220, %v9211
    %v9230 = vpack.c.b16 %v9221, %v9212
    %v9231 = vpack.c.b16 %v9222, %v9213
    %v9232 = vpack.c.b16 %v9223, %v9214
    %v9233 = vpack.c.b16 %v9224, %v9215
    %v9234 = vpack.c.b16 %v9225, %v9216
    %v9235 = vpack.c.b16 %v9226, %v9217
    %v9236 = vpack.c.b16 %v9227, %v9218
    %v9237 = vpack.c.b16 %v9228, %v9219
    %9238 = vrot.lane.b32.xlu0 %v9229, 127
    %v9239 = vpop.permute.xlu0 %9238
    %9240 = vrot.lane.b32.xlu0 %v9230, 127
    %v9241 = vpop.permute.xlu0 %9240
    %9242 = vrot.lane.b32.xlu0 %v9231, 127
    %v9243 = vpop.permute.xlu0 %9242
    %9244 = vrot.lane.b32.xlu0 %v9232, 127
    %v9245 = vpop.permute.xlu0 %9244
    %9246 = vrot.lane.b32.xlu0 %v9233, 127
    %v9247 = vpop.permute.xlu0 %9246
    %9248 = vrot.lane.b32.xlu0 %v9234, 127
    %v9249 = vpop.permute.xlu0 %9248
    %9250 = vrot.lane.b32.xlu0 %v9235, 127
    %v9251 = vpop.permute.xlu0 %9250
    %9252 = vrot.lane.b32.xlu0 %v9236, 127
    %v9253 = vpop.permute.xlu0 %9252
    %9254 = vrot.lane.b32.xlu0 %v9237, 127
    %v9255 = vpop.permute.xlu0 %9254
    %v9256 = vsel %vm1267, %v9239, %v9241
    %v9257 = vsel %vm1267, %v9241, %v9243
    %v9258 = vsel %vm1267, %v9243, %v9245
    %v9259 = vsel %vm1267, %v9245, %v9247
    %v9260 = vsel %vm1267, %v9247, %v9249
    %v9261 = vsel %vm1267, %v9249, %v9251
    %v9262 = vsel %vm1267, %v9251, %v9253
    %v9263 = vsel %vm1267, %v9253, %v9255
    %v9273 = vsel %vm7080, %v9200, 0
    %9275 = vmatprep.subr.bf16.mxu0 0
    %9276 = vmatpush1.bf16.msra.mxu0 0
    %9277 = vmatprep.subr.bf16.mxu0 0
    %9278 = vmatpush1.bf16.msra.mxu0 0
    %9279 = vmatprep.subr.bf16.mxu0 0
    %9280 = vmatpush1.bf16.msra.mxu0 0
    %9281 = vmatprep.subr.bf16.mxu0 0
    %9282 = vmatpush1.bf16.msra.mxu0 0
    %9283 = vmatprep.subr.bf16.mxu0 0
    %9284 = vmatpush1.bf16.msra.mxu0 0
    %9285 = vmatprep.subr.bf16.mxu0 0
    %9286 = vmatpush1.bf16.msra.mxu0 0
    %9287 = vmatprep.subr.bf16.mxu0 0
    %9288 = vmatpush1.bf16.msra.mxu0 0
    %9289 = vmatprep.subr.bf16.mxu0 %v9257
    %9290 = vmatpush1.bf16.msra.mxu0 %v9256
    %9291 = vmatprep.subr.bf16.mxu0 0
    %9292 = vmatpush2.bf16.msra.mxu0 0
    %9293 = vmatprep.subr.bf16.mxu0 0
    %9294 = vmatpush2.bf16.msra.mxu0 0
    %9295 = vmatprep.subr.bf16.mxu0 0
    %9296 = vmatpush2.bf16.msra.mxu0 0
    %9297 = vmatprep.subr.bf16.mxu0 0
    %9298 = vmatpush2.bf16.msra.mxu0 0
    %9299 = vmatprep.subr.bf16.mxu0 0
    %9300 = vmatpush2.bf16.msra.mxu0 0
    %9301 = vmatprep.subr.bf16.mxu0 0
    %9302 = vmatpush2.bf16.msra.mxu0 0
    %9303 = vmatprep.subr.bf16.mxu0 0
    %9304 = vmatpush2.bf16.msra.mxu0 0
    %9305 = vmatprep.subr.bf16.mxu0 0
    %9306 = vmatpush2.bf16.msra.mxu0 0
    %9307 = vmatprep.mubr.bf16.mxu0 0
    %9308 = vmatmul.mubr.bf16.gmra.mxu0 %v9273
    %v9309 = vpop.f32.mrf.mxu0
    %v9310 = vadd.f32 0.0, %v9309
    %v9311 = vpop.f32.mrf.mxu0
    %v9312 = vadd.f32 0.0, %v9311
    %v9313 = vpop.f32.mrf.mxu0
    %v9314 = vadd.f32 0.0, %v9313
    %v9315 = vpop.f32.mrf.mxu0
    %v9316 = vadd.f32 0.0, %v9315
    %9317 = vdwg.mxu0
    %9318 = vmatprep.subr.bf16.mxu0 0
    %9319 = vmatpush1.bf16.msra.mxu0 0
    %9320 = vmatprep.subr.bf16.mxu0 0
    %9321 = vmatpush1.bf16.msra.mxu0 0
    %9322 = vmatprep.subr.bf16.mxu0 0
    %9323 = vmatpush1.bf16.msra.mxu0 0
    %9324 = vmatprep.subr.bf16.mxu0 0
    %9325 = vmatpush1.bf16.msra.mxu0 0
    %9326 = vmatprep.subr.bf16.mxu0 0
    %9327 = vmatpush1.bf16.msra.mxu0 0
    %9328 = vmatprep.subr.bf16.mxu0 0
    %9329 = vmatpush1.bf16.msra.mxu0 0
    %9330 = vmatprep.subr.bf16.mxu0 0
    %9331 = vmatpush1.bf16.msra.mxu0 0
    %9332 = vmatprep.subr.bf16.mxu0 %v9259
    %9333 = vmatpush1.bf16.msra.mxu0 %v9258
    %9334 = vmatprep.subr.bf16.mxu0 0
    %9335 = vmatpush2.bf16.msra.mxu0 0
    %9336 = vmatprep.subr.bf16.mxu0 0
    %9337 = vmatpush2.bf16.msra.mxu0 0
    %9338 = vmatprep.subr.bf16.mxu0 0
    %9339 = vmatpush2.bf16.msra.mxu0 0
    %9340 = vmatprep.subr.bf16.mxu0 0
    %9341 = vmatpush2.bf16.msra.mxu0 0
    %9342 = vmatprep.subr.bf16.mxu0 0
    %9343 = vmatpush2.bf16.msra.mxu0 0
    %9344 = vmatprep.subr.bf16.mxu0 0
    %9345 = vmatpush2.bf16.msra.mxu0 0
    %9346 = vmatprep.subr.bf16.mxu0 0
    %9347 = vmatpush2.bf16.msra.mxu0 0
    %9348 = vmatprep.subr.bf16.mxu0 0
    %9349 = vmatpush2.bf16.msra.mxu0 0
    %9350 = vmatprep.mubr.bf16.mxu0 0
    %9351 = vmatmul.mubr.bf16.gmra.mxu0 %v9273
    %v9352 = vpop.f32.mrf.mxu0
    %v9353 = vadd.f32 0.0, %v9352
    %v9354 = vpop.f32.mrf.mxu0
    %v9355 = vadd.f32 0.0, %v9354
    %v9356 = vpop.f32.mrf.mxu0
    %v9357 = vadd.f32 0.0, %v9356
    %v9358 = vpop.f32.mrf.mxu0
    %v9359 = vadd.f32 0.0, %v9358
    %9360 = vdwg.mxu0
    %9361 = vmatprep.subr.bf16.mxu0 0
    %9362 = vmatpush1.bf16.msra.mxu0 0
    %9363 = vmatprep.subr.bf16.mxu0 0
    %9364 = vmatpush1.bf16.msra.mxu0 0
    %9365 = vmatprep.subr.bf16.mxu0 0
    %9366 = vmatpush1.bf16.msra.mxu0 0
    %9367 = vmatprep.subr.bf16.mxu0 0
    %9368 = vmatpush1.bf16.msra.mxu0 0
    %9369 = vmatprep.subr.bf16.mxu0 0
    %9370 = vmatpush1.bf16.msra.mxu0 0
    %9371 = vmatprep.subr.bf16.mxu0 0
    %9372 = vmatpush1.bf16.msra.mxu0 0
    %9373 = vmatprep.subr.bf16.mxu0 0
    %9374 = vmatpush1.bf16.msra.mxu0 0
    %9375 = vmatprep.subr.bf16.mxu0 %v9261
    %9376 = vmatpush1.bf16.msra.mxu0 %v9260
    %9377 = vmatprep.subr.bf16.mxu0 0
    %9378 = vmatpush2.bf16.msra.mxu0 0
    %9379 = vmatprep.subr.bf16.mxu0 0
    %9380 = vmatpush2.bf16.msra.mxu0 0
    %9381 = vmatprep.subr.bf16.mxu0 0
    %9382 = vmatpush2.bf16.msra.mxu0 0
    %9383 = vmatprep.subr.bf16.mxu0 0
    %9384 = vmatpush2.bf16.msra.mxu0 0
    %9385 = vmatprep.subr.bf16.mxu0 0
    %9386 = vmatpush2.bf16.msra.mxu0 0
    %9387 = vmatprep.subr.bf16.mxu0 0
    %9388 = vmatpush2.bf16.msra.mxu0 0
    %9389 = vmatprep.subr.bf16.mxu0 0
    %9390 = vmatpush2.bf16.msra.mxu0 0
    %9391 = vmatprep.subr.bf16.mxu0 0
    %9392 = vmatpush2.bf16.msra.mxu0 0
    %9393 = vmatprep.mubr.bf16.mxu0 0
    %9394 = vmatmul.mubr.bf16.gmra.mxu0 %v9273
    %v9395 = vpop.f32.mrf.mxu0
    %v9396 = vadd.f32 0.0, %v9395
    %v9397 = vpop.f32.mrf.mxu0
    %v9398 = vadd.f32 0.0, %v9397
    %v9399 = vpop.f32.mrf.mxu0
    %v9400 = vadd.f32 0.0, %v9399
    %v9401 = vpop.f32.mrf.mxu0
    %v9402 = vadd.f32 0.0, %v9401
    %9403 = vdwg.mxu0
    %9404 = vmatprep.subr.bf16.mxu0 0
    %9405 = vmatpush1.bf16.msra.mxu0 0
    %9406 = vmatprep.subr.bf16.mxu0 0
    %9407 = vmatpush1.bf16.msra.mxu0 0
    %9408 = vmatprep.subr.bf16.mxu0 0
    %9409 = vmatpush1.bf16.msra.mxu0 0
    %9410 = vmatprep.subr.bf16.mxu0 0
    %9411 = vmatpush1.bf16.msra.mxu0 0
    %9412 = vmatprep.subr.bf16.mxu0 0
    %9413 = vmatpush1.bf16.msra.mxu0 0
    %9414 = vmatprep.subr.bf16.mxu0 0
    %9415 = vmatpush1.bf16.msra.mxu0 0
    %9416 = vmatprep.subr.bf16.mxu0 0
    %9417 = vmatpush1.bf16.msra.mxu0 0
    %9418 = vmatprep.subr.bf16.mxu0 %v9263
    %9419 = vmatpush1.bf16.msra.mxu0 %v9262
    %9420 = vmatprep.subr.bf16.mxu0 0
    %9421 = vmatpush2.bf16.msra.mxu0 0
    %9422 = vmatprep.subr.bf16.mxu0 0
    %9423 = vmatpush2.bf16.msra.mxu0 0
    %9424 = vmatprep.subr.bf16.mxu0 0
    %9425 = vmatpush2.bf16.msra.mxu0 0
    %9426 = vmatprep.subr.bf16.mxu0 0
    %9427 = vmatpush2.bf16.msra.mxu0 0
    %9428 = vmatprep.subr.bf16.mxu0 0
    %9429 = vmatpush2.bf16.msra.mxu0 0
    %9430 = vmatprep.subr.bf16.mxu0 0
    %9431 = vmatpush2.bf16.msra.mxu0 0
    %9432 = vmatprep.subr.bf16.mxu0 0
    %9433 = vmatpush2.bf16.msra.mxu0 0
    %9434 = vmatprep.subr.bf16.mxu0 0
    %9435 = vmatpush2.bf16.msra.mxu0 0
    %9436 = vmatprep.mubr.bf16.mxu0 0
    %9437 = vmatmul.mubr.bf16.gmra.mxu0 %v9273
    %v9438 = vpop.f32.mrf.mxu0
    %v9439 = vadd.f32 0.0, %v9438
    %v9440 = vpop.f32.mrf.mxu0
    %v9441 = vadd.f32 0.0, %v9440
    %v9442 = vpop.f32.mrf.mxu0
    %v9443 = vadd.f32 0.0, %v9442
    %v9444 = vpop.f32.mrf.mxu0
    %v9445 = vadd.f32 0.0, %v9444
    %9446 = vdwg.mxu0
    %v9447 = vadd.f32 %v9025, %v9310
    %v9448 = vadd.f32 %v9026, %v9312
    %v9449 = vadd.f32 %v9027, %v9353
    %v9450 = vadd.f32 %v9028, %v9355
    %v9451 = vadd.f32 %v9029, %v9396
    %v9452 = vadd.f32 %v9030, %v9398
    %v9453 = vadd.f32 %v9031, %v9439
    %v9454 = vadd.f32 %v9032, %v9441
    %v9455 = vadd.f32 %v9033, %v9314
    %v9456 = vadd.f32 %v9034, %v9316
    %v9457 = vadd.f32 %v9035, %v9357
    %v9458 = vadd.f32 %v9036, %v9359
    %v9459 = vadd.f32 %v9037, %v9400
    %v9460 = vadd.f32 %v9038, %v9402
    %v9461 = vadd.f32 %v9039, %v9443
    %v9462 = vadd.f32 %v9040, %v9445
    %v9463 = vld [vmem:[%s1] sm:$0x88]
    %v9464 = vld [vmem:[%s1 + $0x8] sm:$0x88]
    %v9465 = vld [vmem:[%s1 + $0x10] sm:$0x88]
    %v9466 = vld [vmem:[%s1 + $0x18] sm:$0x88]
    %v9471 = vunpack.c.l.b16 %v9463
    %v9472 = vunpack.c.h.b16 %v9463
    %v9473 = vunpack.c.l.b16 %v9464
    %v9474 = vunpack.c.h.b16 %v9464
    %v9475 = vunpack.c.l.b16 %v9465
    %v9476 = vunpack.c.h.b16 %v9465
    %v9477 = vunpack.c.l.b16 %v9466
    %v9478 = vunpack.c.h.b16 %v9466
    %v9479 = vpack.c.b16 %v9471, %v9471
    %v9480 = vpack.c.b16 %v9472, %v9472
    %v9481 = vpack.c.b16 %v9473, %v9473
    %v9482 = vpack.c.b16 %v9474, %v9474
    %v9483 = vpack.c.b16 %v9475, %v9475
    %v9484 = vpack.c.b16 %v9476, %v9476
    %v9485 = vpack.c.b16 %v9477, %v9477
    %v9486 = vpack.c.b16 %v9478, %v9478
    %v9488 = vpack.i.b16 %v9479, %v9479
    %v9490 = vlaneseq
    %v9491 = vshrl.u32 %v9490, 7
    %v9492 = vsub.s32 3, %v9491
    %v9493 = vrot.slane %v9488, %v9492
    %v9495 = vpack.i.b16 %v9480, %v9480
    %v9497 = vlaneseq
    %v9498 = vshrl.u32 %v9497, 7
    %v9499 = vsub.s32 3, %v9498
    %v9500 = vrot.slane %v9495, %v9499
    %v9502 = vpack.i.b16 %v9481, %v9481
    %v9504 = vlaneseq
    %v9505 = vshrl.u32 %v9504, 7
    %v9506 = vsub.s32 3, %v9505
    %v9507 = vrot.slane %v9502, %v9506
    %v9509 = vpack.i.b16 %v9482, %v9482
    %v9511 = vlaneseq
    %v9512 = vshrl.u32 %v9511, 7
    %v9513 = vsub.s32 3, %v9512
    %v9514 = vrot.slane %v9509, %v9513
    %v9516 = vpack.i.b16 %v9483, %v9483
    %v9518 = vlaneseq
    %v9519 = vshrl.u32 %v9518, 7
    %v9520 = vsub.s32 3, %v9519
    %v9521 = vrot.slane %v9516, %v9520
    %v9523 = vpack.i.b16 %v9484, %v9484
    %v9525 = vlaneseq
    %v9526 = vshrl.u32 %v9525, 7
    %v9527 = vsub.s32 3, %v9526
    %v9528 = vrot.slane %v9523, %v9527
    %v9530 = vpack.i.b16 %v9485, %v9485
    %v9532 = vlaneseq
    %v9533 = vshrl.u32 %v9532, 7
    %v9534 = vsub.s32 3, %v9533
    %v9535 = vrot.slane %v9530, %v9534
    %v9537 = vpack.i.b16 %v9486, %v9486
    %v9539 = vlaneseq
    %v9540 = vshrl.u32 %v9539, 7
    %v9541 = vsub.s32 3, %v9540
    %v9542 = vrot.slane %v9537, %v9541
    %v9551 = vunpack.c.l.b16 %v9493
    %v9552 = vunpack.c.l.b16 %v9500
    %v9553 = vunpack.c.l.b16 %v9507
    %v9554 = vunpack.c.l.b16 %v9514
    %v9555 = vunpack.c.l.b16 %v9521
    %v9556 = vunpack.c.l.b16 %v9528
    %v9557 = vunpack.c.l.b16 %v9535
    %v9558 = vunpack.c.l.b16 %v9542
    %v9559 = vpack.c.b16 %v9552, %v9551
    %v9560 = vpack.c.b16 %v9554, %v9553
    %v9561 = vpack.c.b16 %v9556, %v9555
    %v9562 = vpack.c.b16 %v9558, %v9557
    %9563 = vrot.lane.b32.xlu0 %v9559, 15
    %v9564 = vpop.permute.xlu0 %9563
    %9565 = vrot.lane.b32.xlu0 %v9560, 15
    %v9566 = vpop.permute.xlu0 %9565
    %9567 = vrot.lane.b32.xlu0 %v9561, 15
    %v9568 = vpop.permute.xlu0 %9567
    %9569 = vrot.lane.b32.xlu0 %v9562, 15
    %v9570 = vpop.permute.xlu0 %9569
    %v9571 = vrot.slane %v9564, 4
    %v9572 = vrot.slane %v9566, 4
    %v9573 = vrot.slane %v9568, 4
    %v9574 = vrot.slane %v9570, 4
    %v9575 = vsel %vm971, %v9571, %v9564
    %v9576 = vsel %vm188, %v9571, %v9572
    %v9577 = vsel %vm971, %v9576, %v9566
    %v9578 = vsel %vm188, %v9572, %v9573
    %v9579 = vsel %vm971, %v9578, %v9568
    %v9580 = vsel %vm188, %v9573, %v9574
    %v9581 = vsel %vm971, %v9580, %v9570
    %v9587 = vmul.bf16 %v9041, %v9575
    %v9588 = vmul.bf16 %v9042, %v9577
    %v9589 = vmul.bf16 %v9043, %v9579
    %v9590 = vmul.bf16 %v9044, %v9581
    %v9591 = vmul.bf16 %v9045, %v9574
    %v9592 = vmul.bf16 %v9046, %v9575
    %v9593 = vmul.bf16 %v9047, %v9577
    %v9594 = vmul.bf16 %v9048, %v9579
    %v9595 = vmul.bf16 %v9049, %v9581
    %v9596 = vmul.bf16 %v9050, %v9574
    %s9597 = scalar_lea.vmem %s8, 48
    %v9598 = vld [vmem:[%s9597] sm:$0xf]
    %v9599 = vld [vmem:[%s9597 + $0x4] sm:$0xf]
    %v9602 = vunpack.c.l.b16 %v9598
    %v9603 = vunpack.c.l.b16 %v9599
    %v9604 = vpack.c.b16 %v9603, %v9602
    %v9615 = vunpack.c.l.b16 %v9587
    %v9616 = vunpack.c.h.b16 %v9587
    %v9617 = vunpack.c.l.b16 %v9588
    %v9618 = vunpack.c.h.b16 %v9588
    %v9619 = vunpack.c.l.b16 %v9589
    %v9620 = vunpack.c.h.b16 %v9589
    %v9621 = vunpack.c.l.b16 %v9590
    %v9622 = vunpack.c.h.b16 %v9590
    %v9623 = vunpack.c.l.b16 %v9591
    %v9624 = vunpack.c.l.b16 %v9592
    %v9625 = vunpack.c.h.b16 %v9592
    %v9626 = vunpack.c.l.b16 %v9593
    %v9627 = vunpack.c.h.b16 %v9593
    %v9628 = vunpack.c.l.b16 %v9594
    %v9629 = vunpack.c.h.b16 %v9594
    %v9630 = vunpack.c.l.b16 %v9595
    %v9631 = vunpack.c.h.b16 %v9595
    %v9632 = vunpack.c.l.b16 %v9596
    %v9633 = vpack.c.b16 %v9624, %v9615
    %v9634 = vpack.c.b16 %v9625, %v9616
    %v9635 = vpack.c.b16 %v9626, %v9617
    %v9636 = vpack.c.b16 %v9627, %v9618
    %v9637 = vpack.c.b16 %v9628, %v9619
    %v9638 = vpack.c.b16 %v9629, %v9620
    %v9639 = vpack.c.b16 %v9630, %v9621
    %v9640 = vpack.c.b16 %v9631, %v9622
    %v9641 = vpack.c.b16 %v9632, %v9623
    %9642 = vrot.lane.b32.xlu0 %v9633, 113
    %v9643 = vpop.permute.xlu0 %9642
    %9644 = vrot.lane.b32.xlu0 %v9634, 113
    %v9645 = vpop.permute.xlu0 %9644
    %9646 = vrot.lane.b32.xlu0 %v9635, 113
    %v9647 = vpop.permute.xlu0 %9646
    %9648 = vrot.lane.b32.xlu0 %v9636, 113
    %v9649 = vpop.permute.xlu0 %9648
    %9650 = vrot.lane.b32.xlu0 %v9637, 113
    %v9651 = vpop.permute.xlu0 %9650
    %9652 = vrot.lane.b32.xlu0 %v9638, 113
    %v9653 = vpop.permute.xlu0 %9652
    %9654 = vrot.lane.b32.xlu0 %v9639, 113
    %v9655 = vpop.permute.xlu0 %9654
    %9656 = vrot.lane.b32.xlu0 %v9640, 113
    %v9657 = vpop.permute.xlu0 %9656
    %9658 = vrot.lane.b32.xlu0 %v9641, 113
    %v9659 = vpop.permute.xlu0 %9658
    %v9660 = vsel %vm910, %v9643, %v9645
    %v9661 = vsel %vm910, %v9645, %v9647
    %v9662 = vsel %vm910, %v9647, %v9649
    %v9663 = vsel %vm910, %v9649, %v9651
    %v9664 = vsel %vm910, %v9651, %v9653
    %v9665 = vsel %vm910, %v9653, %v9655
    %v9666 = vsel %vm910, %v9655, %v9657
    %v9667 = vsel %vm910, %v9657, %v9659
    %v9677 = vsel %vm7080, %v9604, 0
    %9679 = vmatprep.subr.bf16.mxu0 0
    %9680 = vmatpush1.bf16.msra.mxu0 0
    %9681 = vmatprep.subr.bf16.mxu0 0
    %9682 = vmatpush1.bf16.msra.mxu0 0
    %9683 = vmatprep.subr.bf16.mxu0 0
    %9684 = vmatpush1.bf16.msra.mxu0 0
    %9685 = vmatprep.subr.bf16.mxu0 0
    %9686 = vmatpush1.bf16.msra.mxu0 0
    %9687 = vmatprep.subr.bf16.mxu0 0
    %9688 = vmatpush1.bf16.msra.mxu0 0
    %9689 = vmatprep.subr.bf16.mxu0 0
    %9690 = vmatpush1.bf16.msra.mxu0 0
    %9691 = vmatprep.subr.bf16.mxu0 0
    %9692 = vmatpush1.bf16.msra.mxu0 0
    %9693 = vmatprep.subr.bf16.mxu0 %v9661
    %9694 = vmatpush1.bf16.msra.mxu0 %v9660
    %9695 = vmatprep.subr.bf16.mxu0 0
    %9696 = vmatpush2.bf16.msra.mxu0 0
    %9697 = vmatprep.subr.bf16.mxu0 0
    %9698 = vmatpush2.bf16.msra.mxu0 0
    %9699 = vmatprep.subr.bf16.mxu0 0
    %9700 = vmatpush2.bf16.msra.mxu0 0
    %9701 = vmatprep.subr.bf16.mxu0 0
    %9702 = vmatpush2.bf16.msra.mxu0 0
    %9703 = vmatprep.subr.bf16.mxu0 0
    %9704 = vmatpush2.bf16.msra.mxu0 0
    %9705 = vmatprep.subr.bf16.mxu0 0
    %9706 = vmatpush2.bf16.msra.mxu0 0
    %9707 = vmatprep.subr.bf16.mxu0 0
    %9708 = vmatpush2.bf16.msra.mxu0 0
    %9709 = vmatprep.subr.bf16.mxu0 0
    %9710 = vmatpush2.bf16.msra.mxu0 0
    %9711 = vmatprep.mubr.bf16.mxu0 0
    %9712 = vmatmul.mubr.bf16.gmra.mxu0 %v9677
    %v9713 = vpop.f32.mrf.mxu0
    %v9714 = vadd.f32 0.0, %v9713
    %v9715 = vpop.f32.mrf.mxu0
    %v9716 = vadd.f32 0.0, %v9715
    %v9717 = vpop.f32.mrf.mxu0
    %v9718 = vadd.f32 0.0, %v9717
    %v9719 = vpop.f32.mrf.mxu0
    %v9720 = vadd.f32 0.0, %v9719
    %9721 = vdwg.mxu0
    %9722 = vmatprep.subr.bf16.mxu0 0
    %9723 = vmatpush1.bf16.msra.mxu0 0
    %9724 = vmatprep.subr.bf16.mxu0 0
    %9725 = vmatpush1.bf16.msra.mxu0 0
    %9726 = vmatprep.subr.bf16.mxu0 0
    %9727 = vmatpush1.bf16.msra.mxu0 0
    %9728 = vmatprep.subr.bf16.mxu0 0
    %9729 = vmatpush1.bf16.msra.mxu0 0
    %9730 = vmatprep.subr.bf16.mxu0 0
    %9731 = vmatpush1.bf16.msra.mxu0 0
    %9732 = vmatprep.subr.bf16.mxu0 0
    %9733 = vmatpush1.bf16.msra.mxu0 0
    %9734 = vmatprep.subr.bf16.mxu0 0
    %9735 = vmatpush1.bf16.msra.mxu0 0
    %9736 = vmatprep.subr.bf16.mxu0 %v9663
    %9737 = vmatpush1.bf16.msra.mxu0 %v9662
    %9738 = vmatprep.subr.bf16.mxu0 0
    %9739 = vmatpush2.bf16.msra.mxu0 0
    %9740 = vmatprep.subr.bf16.mxu0 0
    %9741 = vmatpush2.bf16.msra.mxu0 0
    %9742 = vmatprep.subr.bf16.mxu0 0
    %9743 = vmatpush2.bf16.msra.mxu0 0
    %9744 = vmatprep.subr.bf16.mxu0 0
    %9745 = vmatpush2.bf16.msra.mxu0 0
    %9746 = vmatprep.subr.bf16.mxu0 0
    %9747 = vmatpush2.bf16.msra.mxu0 0
    %9748 = vmatprep.subr.bf16.mxu0 0
    %9749 = vmatpush2.bf16.msra.mxu0 0
    %9750 = vmatprep.subr.bf16.mxu0 0
    %9751 = vmatpush2.bf16.msra.mxu0 0
    %9752 = vmatprep.subr.bf16.mxu0 0
    %9753 = vmatpush2.bf16.msra.mxu0 0
    %9754 = vmatprep.mubr.bf16.mxu0 0
    %9755 = vmatmul.mubr.bf16.gmra.mxu0 %v9677
    %v9756 = vpop.f32.mrf.mxu0
    %v9757 = vadd.f32 0.0, %v9756
    %v9758 = vpop.f32.mrf.mxu0
    %v9759 = vadd.f32 0.0, %v9758
    %v9760 = vpop.f32.mrf.mxu0
    %v9761 = vadd.f32 0.0, %v9760
    %v9762 = vpop.f32.mrf.mxu0
    %v9763 = vadd.f32 0.0, %v9762
    %9764 = vdwg.mxu0
    %9765 = vmatprep.subr.bf16.mxu0 0
    %9766 = vmatpush1.bf16.msra.mxu0 0
    %9767 = vmatprep.subr.bf16.mxu0 0
    %9768 = vmatpush1.bf16.msra.mxu0 0
    %9769 = vmatprep.subr.bf16.mxu0 0
    %9770 = vmatpush1.bf16.msra.mxu0 0
    %9771 = vmatprep.subr.bf16.mxu0 0
    %9772 = vmatpush1.bf16.msra.mxu0 0
    %9773 = vmatprep.subr.bf16.mxu0 0
    %9774 = vmatpush1.bf16.msra.mxu0 0
    %9775 = vmatprep.subr.bf16.mxu0 0
    %9776 = vmatpush1.bf16.msra.mxu0 0
    %9777 = vmatprep.subr.bf16.mxu0 0
    %9778 = vmatpush1.bf16.msra.mxu0 0
    %9779 = vmatprep.subr.bf16.mxu0 %v9665
    %9780 = vmatpush1.bf16.msra.mxu0 %v9664
    %9781 = vmatprep.subr.bf16.mxu0 0
    %9782 = vmatpush2.bf16.msra.mxu0 0
    %9783 = vmatprep.subr.bf16.mxu0 0
    %9784 = vmatpush2.bf16.msra.mxu0 0
    %9785 = vmatprep.subr.bf16.mxu0 0
    %9786 = vmatpush2.bf16.msra.mxu0 0
    %9787 = vmatprep.subr.bf16.mxu0 0
    %9788 = vmatpush2.bf16.msra.mxu0 0
    %9789 = vmatprep.subr.bf16.mxu0 0
    %9790 = vmatpush2.bf16.msra.mxu0 0
    %9791 = vmatprep.subr.bf16.mxu0 0
    %9792 = vmatpush2.bf16.msra.mxu0 0
    %9793 = vmatprep.subr.bf16.mxu0 0
    %9794 = vmatpush2.bf16.msra.mxu0 0
    %9795 = vmatprep.subr.bf16.mxu0 0
    %9796 = vmatpush2.bf16.msra.mxu0 0
    %9797 = vmatprep.mubr.bf16.mxu0 0
    %9798 = vmatmul.mubr.bf16.gmra.mxu0 %v9677
    %v9799 = vpop.f32.mrf.mxu0
    %v9800 = vadd.f32 0.0, %v9799
    %v9801 = vpop.f32.mrf.mxu0
    %v9802 = vadd.f32 0.0, %v9801
    %v9803 = vpop.f32.mrf.mxu0
    %v9804 = vadd.f32 0.0, %v9803
    %v9805 = vpop.f32.mrf.mxu0
    %v9806 = vadd.f32 0.0, %v9805
    %9807 = vdwg.mxu0
    %9808 = vmatprep.subr.bf16.mxu0 0
    %9809 = vmatpush1.bf16.msra.mxu0 0
    %9810 = vmatprep.subr.bf16.mxu0 0
    %9811 = vmatpush1.bf16.msra.mxu0 0
    %9812 = vmatprep.subr.bf16.mxu0 0
    %9813 = vmatpush1.bf16.msra.mxu0 0
    %9814 = vmatprep.subr.bf16.mxu0 0
    %9815 = vmatpush1.bf16.msra.mxu0 0
    %9816 = vmatprep.subr.bf16.mxu0 0
    %9817 = vmatpush1.bf16.msra.mxu0 0
    %9818 = vmatprep.subr.bf16.mxu0 0
    %9819 = vmatpush1.bf16.msra.mxu0 0
    %9820 = vmatprep.subr.bf16.mxu0 0
    %9821 = vmatpush1.bf16.msra.mxu0 0
    %9822 = vmatprep.subr.bf16.mxu0 %v9667
    %9823 = vmatpush1.bf16.msra.mxu0 %v9666
    %9824 = vmatprep.subr.bf16.mxu0 0
    %9825 = vmatpush2.bf16.msra.mxu0 0
    %9826 = vmatprep.subr.bf16.mxu0 0
    %9827 = vmatpush2.bf16.msra.mxu0 0
    %9828 = vmatprep.subr.bf16.mxu0 0
    %9829 = vmatpush2.bf16.msra.mxu0 0
    %9830 = vmatprep.subr.bf16.mxu0 0
    %9831 = vmatpush2.bf16.msra.mxu0 0
    %9832 = vmatprep.subr.bf16.mxu0 0
    %9833 = vmatpush2.bf16.msra.mxu0 0
    %9834 = vmatprep.subr.bf16.mxu0 0
    %9835 = vmatpush2.bf16.msra.mxu0 0
    %9836 = vmatprep.subr.bf16.mxu0 0
    %9837 = vmatpush2.bf16.msra.mxu0 0
    %9838 = vmatprep.subr.bf16.mxu0 0
    %9839 = vmatpush2.bf16.msra.mxu0 0
    %9840 = vmatprep.mubr.bf16.mxu0 0
    %9841 = vmatmul.mubr.bf16.gmra.mxu0 %v9677
    %v9842 = vpop.f32.mrf.mxu0
    %v9843 = vadd.f32 0.0, %v9842
    %v9844 = vpop.f32.mrf.mxu0
    %v9845 = vadd.f32 0.0, %v9844
    %v9846 = vpop.f32.mrf.mxu0
    %v9847 = vadd.f32 0.0, %v9846
    %v9848 = vpop.f32.mrf.mxu0
    %v9849 = vadd.f32 0.0, %v9848
    %9850 = vdwg.mxu0
    %v9851 = vadd.f32 %v9447, %v9714
    %v9852 = vadd.f32 %v9448, %v9716
    %v9853 = vadd.f32 %v9449, %v9757
    %v9854 = vadd.f32 %v9450, %v9759
    %v9855 = vadd.f32 %v9451, %v9800
    %v9856 = vadd.f32 %v9452, %v9802
    %v9857 = vadd.f32 %v9453, %v9843
    %v9858 = vadd.f32 %v9454, %v9845
    %v9859 = vadd.f32 %v9455, %v9718
    %v9860 = vadd.f32 %v9456, %v9720
    %v9861 = vadd.f32 %v9457, %v9761
    %v9862 = vadd.f32 %v9458, %v9763
    %v9863 = vadd.f32 %v9459, %v9804
    %v9864 = vadd.f32 %v9460, %v9806
    %v9865 = vadd.f32 %v9461, %v9847
    %v9866 = vadd.f32 %v9462, %v9849
    %v9867 = vshrl.u32 %v9479, 16
    %v9868 = vpack.i.b16 %v9867, %v9867
    %v9870 = vlaneseq
    %v9871 = vshrl.u32 %v9870, 7
    %v9872 = vsub.s32 3, %v9871
    %v9873 = vrot.slane %v9868, %v9872
    %v9874 = vshrl.u32 %v9480, 16
    %v9875 = vpack.i.b16 %v9874, %v9874
    %v9877 = vlaneseq
    %v9878 = vshrl.u32 %v9877, 7
    %v9879 = vsub.s32 3, %v9878
    %v9880 = vrot.slane %v9875, %v9879
    %v9881 = vshrl.u32 %v9481, 16
    %v9882 = vpack.i.b16 %v9881, %v9881
    %v9884 = vlaneseq
    %v9885 = vshrl.u32 %v9884, 7
    %v9886 = vsub.s32 3, %v9885
    %v9887 = vrot.slane %v9882, %v9886
    %v9888 = vshrl.u32 %v9482, 16
    %v9889 = vpack.i.b16 %v9888, %v9888
    %v9891 = vlaneseq
    %v9892 = vshrl.u32 %v9891, 7
    %v9893 = vsub.s32 3, %v9892
    %v9894 = vrot.slane %v9889, %v9893
    %v9895 = vshrl.u32 %v9483, 16
    %v9896 = vpack.i.b16 %v9895, %v9895
    %v9898 = vlaneseq
    %v9899 = vshrl.u32 %v9898, 7
    %v9900 = vsub.s32 3, %v9899
    %v9901 = vrot.slane %v9896, %v9900
    %v9902 = vshrl.u32 %v9484, 16
    %v9903 = vpack.i.b16 %v9902, %v9902
    %v9905 = vlaneseq
    %v9906 = vshrl.u32 %v9905, 7
    %v9907 = vsub.s32 3, %v9906
    %v9908 = vrot.slane %v9903, %v9907
    %v9909 = vshrl.u32 %v9485, 16
    %v9910 = vpack.i.b16 %v9909, %v9909
    %v9912 = vlaneseq
    %v9913 = vshrl.u32 %v9912, 7
    %v9914 = vsub.s32 3, %v9913
    %v9915 = vrot.slane %v9910, %v9914
    %v9916 = vshrl.u32 %v9486, 16
    %v9917 = vpack.i.b16 %v9916, %v9916
    %v9919 = vlaneseq
    %v9920 = vshrl.u32 %v9919, 7
    %v9921 = vsub.s32 3, %v9920
    %v9922 = vrot.slane %v9917, %v9921
    %v9931 = vunpack.c.l.b16 %v9873
    %v9932 = vunpack.c.l.b16 %v9880
    %v9933 = vunpack.c.l.b16 %v9887
    %v9934 = vunpack.c.l.b16 %v9894
    %v9935 = vunpack.c.l.b16 %v9901
    %v9936 = vunpack.c.l.b16 %v9908
    %v9937 = vunpack.c.l.b16 %v9915
    %v9938 = vunpack.c.l.b16 %v9922
    %v9939 = vpack.c.b16 %v9932, %v9931
    %v9940 = vpack.c.b16 %v9934, %v9933
    %v9941 = vpack.c.b16 %v9936, %v9935
    %v9942 = vpack.c.b16 %v9938, %v9937
    %9943 = vrot.lane.b32.xlu0 %v9939, 16
    %v9944 = vpop.permute.xlu0 %9943
    %9945 = vrot.lane.b32.xlu0 %v9940, 16
    %v9946 = vpop.permute.xlu0 %9945
    %9947 = vrot.lane.b32.xlu0 %v9941, 16
    %v9948 = vpop.permute.xlu0 %9947
    %9949 = vrot.lane.b32.xlu0 %v9942, 16
    %v9950 = vpop.permute.xlu0 %9949
    %v9951 = vrot.slane %v9944, 4
    %v9952 = vrot.slane %v9946, 4
    %v9953 = vrot.slane %v9948, 4
    %v9954 = vrot.slane %v9950, 4
    %v9955 = vsel %vm355, %v9951, %v9944
    %v9956 = vsel %vm188, %v9951, %v9952
    %v9957 = vsel %vm355, %v9956, %v9946
    %v9958 = vsel %vm188, %v9952, %v9953
    %v9959 = vsel %vm355, %v9958, %v9948
    %v9960 = vsel %vm188, %v9953, %v9954
    %v9961 = vsel %vm355, %v9960, %v9950
    %v9967 = vmul.bf16 %v9041, %v9955
    %v9968 = vmul.bf16 %v9042, %v9957
    %v9969 = vmul.bf16 %v9043, %v9959
    %v9970 = vmul.bf16 %v9044, %v9961
    %v9971 = vmul.bf16 %v9045, %v9954
    %v9972 = vmul.bf16 %v9046, %v9955
    %v9973 = vmul.bf16 %v9047, %v9957
    %v9974 = vmul.bf16 %v9048, %v9959
    %v9975 = vmul.bf16 %v9049, %v9961
    %v9976 = vmul.bf16 %v9050, %v9954
    %s9977 = scalar_lea.vmem %s8, 56
    %v9978 = vld [vmem:[%s9977] sm:$0xf]
    %v9979 = vld [vmem:[%s9977 + $0x4] sm:$0xf]
    %v9982 = vunpack.c.l.b16 %v9978
    %v9983 = vunpack.c.l.b16 %v9979
    %v9984 = vpack.c.b16 %v9983, %v9982
    %v9995 = vunpack.c.l.b16 %v9967
    %v9996 = vunpack.c.h.b16 %v9967
    %v9997 = vunpack.c.l.b16 %v9968
    %v9998 = vunpack.c.h.b16 %v9968
    %v9999 = vunpack.c.l.b16 %v9969
    %v10000 = vunpack.c.h.b16 %v9969
    %v10001 = vunpack.c.l.b16 %v9970
    %v10002 = vunpack.c.h.b16 %v9970
    %v10003 = vunpack.c.l.b16 %v9971
    %v10004 = vunpack.c.l.b16 %v9972
    %v10005 = vunpack.c.h.b16 %v9972
    %v10006 = vunpack.c.l.b16 %v9973
    %v10007 = vunpack.c.h.b16 %v9973
    %v10008 = vunpack.c.l.b16 %v9974
    %v10009 = vunpack.c.h.b16 %v9974
    %v10010 = vunpack.c.l.b16 %v9975
    %v10011 = vunpack.c.h.b16 %v9975
    %v10012 = vunpack.c.l.b16 %v9976
    %v10013 = vpack.c.b16 %v10004, %v9995
    %v10014 = vpack.c.b16 %v10005, %v9996
    %v10015 = vpack.c.b16 %v10006, %v9997
    %v10016 = vpack.c.b16 %v10007, %v9998
    %v10017 = vpack.c.b16 %v10008, %v9999
    %v10018 = vpack.c.b16 %v10009, %v10000
    %v10019 = vpack.c.b16 %v10010, %v10001
    %v10020 = vpack.c.b16 %v10011, %v10002
    %v10021 = vpack.c.b16 %v10012, %v10003
    %10022 = vrot.lane.b32.xlu0 %v10013, 112
    %v10023 = vpop.permute.xlu0 %10022
    %10024 = vrot.lane.b32.xlu0 %v10014, 112
    %v10025 = vpop.permute.xlu0 %10024
    %10026 = vrot.lane.b32.xlu0 %v10015, 112
    %v10027 = vpop.permute.xlu0 %10026
    %10028 = vrot.lane.b32.xlu0 %v10016, 112
    %v10029 = vpop.permute.xlu0 %10028
    %10030 = vrot.lane.b32.xlu0 %v10017, 112
    %v10031 = vpop.permute.xlu0 %10030
    %10032 = vrot.lane.b32.xlu0 %v10018, 112
    %v10033 = vpop.permute.xlu0 %10032
    %10034 = vrot.lane.b32.xlu0 %v10019, 112
    %v10035 = vpop.permute.xlu0 %10034
    %10036 = vrot.lane.b32.xlu0 %v10020, 112
    %v10037 = vpop.permute.xlu0 %10036
    %10038 = vrot.lane.b32.xlu0 %v10021, 112
    %v10039 = vpop.permute.xlu0 %10038
    %v10040 = vsel %vm294, %v10023, %v10025
    %v10041 = vsel %vm294, %v10025, %v10027
    %v10042 = vsel %vm294, %v10027, %v10029
    %v10043 = vsel %vm294, %v10029, %v10031
    %v10044 = vsel %vm294, %v10031, %v10033
    %v10045 = vsel %vm294, %v10033, %v10035
    %v10046 = vsel %vm294, %v10035, %v10037
    %v10047 = vsel %vm294, %v10037, %v10039
    %v10057 = vsel %vm7080, %v9984, 0
    %10059 = vmatprep.subr.bf16.mxu0 0
    %10060 = vmatpush1.bf16.msra.mxu0 0
    %10061 = vmatprep.subr.bf16.mxu0 0
    %10062 = vmatpush1.bf16.msra.mxu0 0
    %10063 = vmatprep.subr.bf16.mxu0 0
    %10064 = vmatpush1.bf16.msra.mxu0 0
    %10065 = vmatprep.subr.bf16.mxu0 0
    %10066 = vmatpush1.bf16.msra.mxu0 0
    %10067 = vmatprep.subr.bf16.mxu0 0
    %10068 = vmatpush1.bf16.msra.mxu0 0
    %10069 = vmatprep.subr.bf16.mxu0 0
    %10070 = vmatpush1.bf16.msra.mxu0 0
    %10071 = vmatprep.subr.bf16.mxu0 0
    %10072 = vmatpush1.bf16.msra.mxu0 0
    %10073 = vmatprep.subr.bf16.mxu0 %v10041
    %10074 = vmatpush1.bf16.msra.mxu0 %v10040
    %10075 = vmatprep.subr.bf16.mxu0 0
    %10076 = vmatpush2.bf16.msra.mxu0 0
    %10077 = vmatprep.subr.bf16.mxu0 0
    %10078 = vmatpush2.bf16.msra.mxu0 0
    %10079 = vmatprep.subr.bf16.mxu0 0
    %10080 = vmatpush2.bf16.msra.mxu0 0
    %10081 = vmatprep.subr.bf16.mxu0 0
    %10082 = vmatpush2.bf16.msra.mxu0 0
    %10083 = vmatprep.subr.bf16.mxu0 0
    %10084 = vmatpush2.bf16.msra.mxu0 0
    %10085 = vmatprep.subr.bf16.mxu0 0
    %10086 = vmatpush2.bf16.msra.mxu0 0
    %10087 = vmatprep.subr.bf16.mxu0 0
    %10088 = vmatpush2.bf16.msra.mxu0 0
    %10089 = vmatprep.subr.bf16.mxu0 0
    %10090 = vmatpush2.bf16.msra.mxu0 0
    %10091 = vmatprep.mubr.bf16.mxu0 0
    %10092 = vmatmul.mubr.bf16.gmra.mxu0 %v10057
    %v10093 = vpop.f32.mrf.mxu0
    %v10094 = vadd.f32 0.0, %v10093
    %v10095 = vpop.f32.mrf.mxu0
    %v10096 = vadd.f32 0.0, %v10095
    %v10097 = vpop.f32.mrf.mxu0
    %v10098 = vadd.f32 0.0, %v10097
    %v10099 = vpop.f32.mrf.mxu0
    %v10100 = vadd.f32 0.0, %v10099
    %10101 = vdwg.mxu0
    %10102 = vmatprep.subr.bf16.mxu0 0
    %10103 = vmatpush1.bf16.msra.mxu0 0
    %10104 = vmatprep.subr.bf16.mxu0 0
    %10105 = vmatpush1.bf16.msra.mxu0 0
    %10106 = vmatprep.subr.bf16.mxu0 0
    %10107 = vmatpush1.bf16.msra.mxu0 0
    %10108 = vmatprep.subr.bf16.mxu0 0
    %10109 = vmatpush1.bf16.msra.mxu0 0
    %10110 = vmatprep.subr.bf16.mxu0 0
    %10111 = vmatpush1.bf16.msra.mxu0 0
    %10112 = vmatprep.subr.bf16.mxu0 0
    %10113 = vmatpush1.bf16.msra.mxu0 0
    %10114 = vmatprep.subr.bf16.mxu0 0
    %10115 = vmatpush1.bf16.msra.mxu0 0
    %10116 = vmatprep.subr.bf16.mxu0 %v10043
    %10117 = vmatpush1.bf16.msra.mxu0 %v10042
    %10118 = vmatprep.subr.bf16.mxu0 0
    %10119 = vmatpush2.bf16.msra.mxu0 0
    %10120 = vmatprep.subr.bf16.mxu0 0
    %10121 = vmatpush2.bf16.msra.mxu0 0
    %10122 = vmatprep.subr.bf16.mxu0 0
    %10123 = vmatpush2.bf16.msra.mxu0 0
    %10124 = vmatprep.subr.bf16.mxu0 0
    %10125 = vmatpush2.bf16.msra.mxu0 0
    %10126 = vmatprep.subr.bf16.mxu0 0
    %10127 = vmatpush2.bf16.msra.mxu0 0
    %10128 = vmatprep.subr.bf16.mxu0 0
    %10129 = vmatpush2.bf16.msra.mxu0 0
    %10130 = vmatprep.subr.bf16.mxu0 0
    %10131 = vmatpush2.bf16.msra.mxu0 0
    %10132 = vmatprep.subr.bf16.mxu0 0
    %10133 = vmatpush2.bf16.msra.mxu0 0
    %10134 = vmatprep.mubr.bf16.mxu0 0
    %10135 = vmatmul.mubr.bf16.gmra.mxu0 %v10057
    %v10136 = vpop.f32.mrf.mxu0
    %v10137 = vadd.f32 0.0, %v10136
    %v10138 = vpop.f32.mrf.mxu0
    %v10139 = vadd.f32 0.0, %v10138
    %v10140 = vpop.f32.mrf.mxu0
    %v10141 = vadd.f32 0.0, %v10140
    %v10142 = vpop.f32.mrf.mxu0
    %v10143 = vadd.f32 0.0, %v10142
    %10144 = vdwg.mxu0
    %10145 = vmatprep.subr.bf16.mxu0 0
    %10146 = vmatpush1.bf16.msra.mxu0 0
    %10147 = vmatprep.subr.bf16.mxu0 0
    %10148 = vmatpush1.bf16.msra.mxu0 0
    %10149 = vmatprep.subr.bf16.mxu0 0
    %10150 = vmatpush1.bf16.msra.mxu0 0
    %10151 = vmatprep.subr.bf16.mxu0 0
    %10152 = vmatpush1.bf16.msra.mxu0 0
    %10153 = vmatprep.subr.bf16.mxu0 0
    %10154 = vmatpush1.bf16.msra.mxu0 0
    %10155 = vmatprep.subr.bf16.mxu0 0
    %10156 = vmatpush1.bf16.msra.mxu0 0
    %10157 = vmatprep.subr.bf16.mxu0 0
    %10158 = vmatpush1.bf16.msra.mxu0 0
    %10159 = vmatprep.subr.bf16.mxu0 %v10045
    %10160 = vmatpush1.bf16.msra.mxu0 %v10044
    %10161 = vmatprep.subr.bf16.mxu0 0
    %10162 = vmatpush2.bf16.msra.mxu0 0
    %10163 = vmatprep.subr.bf16.mxu0 0
    %10164 = vmatpush2.bf16.msra.mxu0 0
    %10165 = vmatprep.subr.bf16.mxu0 0
    %10166 = vmatpush2.bf16.msra.mxu0 0
    %10167 = vmatprep.subr.bf16.mxu0 0
    %10168 = vmatpush2.bf16.msra.mxu0 0
    %10169 = vmatprep.subr.bf16.mxu0 0
    %10170 = vmatpush2.bf16.msra.mxu0 0
    %10171 = vmatprep.subr.bf16.mxu0 0
    %10172 = vmatpush2.bf16.msra.mxu0 0
    %10173 = vmatprep.subr.bf16.mxu0 0
    %10174 = vmatpush2.bf16.msra.mxu0 0
    %10175 = vmatprep.subr.bf16.mxu0 0
    %10176 = vmatpush2.bf16.msra.mxu0 0
    %10177 = vmatprep.mubr.bf16.mxu0 0
    %10178 = vmatmul.mubr.bf16.gmra.mxu0 %v10057
    %v10179 = vpop.f32.mrf.mxu0
    %v10180 = vadd.f32 0.0, %v10179
    %v10181 = vpop.f32.mrf.mxu0
    %v10182 = vadd.f32 0.0, %v10181
    %v10183 = vpop.f32.mrf.mxu0
    %v10184 = vadd.f32 0.0, %v10183
    %v10185 = vpop.f32.mrf.mxu0
    %v10186 = vadd.f32 0.0, %v10185
    %10187 = vdwg.mxu0
    %10188 = vmatprep.subr.bf16.mxu0 0
    %10189 = vmatpush1.bf16.msra.mxu0 0
    %10190 = vmatprep.subr.bf16.mxu0 0
    %10191 = vmatpush1.bf16.msra.mxu0 0
    %10192 = vmatprep.subr.bf16.mxu0 0
    %10193 = vmatpush1.bf16.msra.mxu0 0
    %10194 = vmatprep.subr.bf16.mxu0 0
    %10195 = vmatpush1.bf16.msra.mxu0 0
    %10196 = vmatprep.subr.bf16.mxu0 0
    %10197 = vmatpush1.bf16.msra.mxu0 0
    %10198 = vmatprep.subr.bf16.mxu0 0
    %10199 = vmatpush1.bf16.msra.mxu0 0
    %10200 = vmatprep.subr.bf16.mxu0 0
    %10201 = vmatpush1.bf16.msra.mxu0 0
    %10202 = vmatprep.subr.bf16.mxu0 %v10047
    %10203 = vmatpush1.bf16.msra.mxu0 %v10046
    %10204 = vmatprep.subr.bf16.mxu0 0
    %10205 = vmatpush2.bf16.msra.mxu0 0
    %10206 = vmatprep.subr.bf16.mxu0 0
    %10207 = vmatpush2.bf16.msra.mxu0 0
    %10208 = vmatprep.subr.bf16.mxu0 0
    %10209 = vmatpush2.bf16.msra.mxu0 0
    %10210 = vmatprep.subr.bf16.mxu0 0
    %10211 = vmatpush2.bf16.msra.mxu0 0
    %10212 = vmatprep.subr.bf16.mxu0 0
    %10213 = vmatpush2.bf16.msra.mxu0 0
    %10214 = vmatprep.subr.bf16.mxu0 0
    %10215 = vmatpush2.bf16.msra.mxu0 0
    %10216 = vmatprep.subr.bf16.mxu0 0
    %10217 = vmatpush2.bf16.msra.mxu0 0
    %10218 = vmatprep.subr.bf16.mxu0 0
    %10219 = vmatpush2.bf16.msra.mxu0 0
    %10220 = vmatprep.mubr.bf16.mxu0 0
    %10221 = vmatmul.mubr.bf16.gmra.mxu0 %v10057
    %v10222 = vpop.f32.mrf.mxu0
    %v10223 = vadd.f32 0.0, %v10222
    %v10224 = vpop.f32.mrf.mxu0
    %v10225 = vadd.f32 0.0, %v10224
    %v10226 = vpop.f32.mrf.mxu0
    %v10227 = vadd.f32 0.0, %v10226
    %v10228 = vpop.f32.mrf.mxu0
    %v10229 = vadd.f32 0.0, %v10228
    %10230 = vdwg.mxu0
    %v10231 = vadd.f32 %v9851, %v10094
    %v10232 = vadd.f32 %v9852, %v10096
    %v10233 = vadd.f32 %v9853, %v10137
    %v10234 = vadd.f32 %v9854, %v10139
    %v10235 = vadd.f32 %v9855, %v10180
    %v10236 = vadd.f32 %v9856, %v10182
    %v10237 = vadd.f32 %v9857, %v10223
    %v10238 = vadd.f32 %v9858, %v10225
    %v10239 = vadd.f32 %v9859, %v10098
    %v10240 = vadd.f32 %v9860, %v10100
    %v10241 = vadd.f32 %v9861, %v10141
    %v10242 = vadd.f32 %v9862, %v10143
    %v10243 = vadd.f32 %v9863, %v10184
    %v10244 = vadd.f32 %v9864, %v10186
    %v10245 = vadd.f32 %v9865, %v10227
    %v10246 = vadd.f32 %v9866, %v10229
    %v10247 = vld [vmem:[%s1 + $0x20] sm:$0x11]
    %v10248 = vld [vmem:[%s1 + $0x28] sm:$0x11]
    %v10249 = vld [vmem:[%s1 + $0x30] sm:$0x11]
    %v10250 = vld [vmem:[%s1 + $0x38] sm:$0x11]
    %v10255 = vunpack.c.l.b16 %v10247
    %v10256 = vunpack.c.h.b16 %v10247
    %v10257 = vunpack.c.l.b16 %v10248
    %v10258 = vunpack.c.h.b16 %v10248
    %v10259 = vunpack.c.l.b16 %v10249
    %v10260 = vunpack.c.h.b16 %v10249
    %v10261 = vunpack.c.l.b16 %v10250
    %v10262 = vunpack.c.h.b16 %v10250
    %v10263 = vpack.c.b16 %v10255, %v10255
    %v10264 = vpack.c.b16 %v10256, %v10256
    %v10265 = vpack.c.b16 %v10257, %v10257
    %v10266 = vpack.c.b16 %v10258, %v10258
    %v10267 = vpack.c.b16 %v10259, %v10259
    %v10268 = vpack.c.b16 %v10260, %v10260
    %v10269 = vpack.c.b16 %v10261, %v10261
    %v10270 = vpack.c.b16 %v10262, %v10262
    %v10272 = vpack.i.b16 %v10263, %v10263
    %v10274 = vlaneseq
    %v10275 = vshrl.u32 %v10274, 7
    %v10276 = vsub.s32 0, %v10275
    %v10277 = vrot.slane %v10272, %v10276
    %v10279 = vpack.i.b16 %v10264, %v10264
    %v10281 = vlaneseq
    %v10282 = vshrl.u32 %v10281, 7
    %v10283 = vsub.s32 0, %v10282
    %v10284 = vrot.slane %v10279, %v10283
    %v10286 = vpack.i.b16 %v10265, %v10265
    %v10288 = vlaneseq
    %v10289 = vshrl.u32 %v10288, 7
    %v10290 = vsub.s32 0, %v10289
    %v10291 = vrot.slane %v10286, %v10290
    %v10293 = vpack.i.b16 %v10266, %v10266
    %v10295 = vlaneseq
    %v10296 = vshrl.u32 %v10295, 7
    %v10297 = vsub.s32 0, %v10296
    %v10298 = vrot.slane %v10293, %v10297
    %v10300 = vpack.i.b16 %v10267, %v10267
    %v10302 = vlaneseq
    %v10303 = vshrl.u32 %v10302, 7
    %v10304 = vsub.s32 0, %v10303
    %v10305 = vrot.slane %v10300, %v10304
    %v10307 = vpack.i.b16 %v10268, %v10268
    %v10309 = vlaneseq
    %v10310 = vshrl.u32 %v10309, 7
    %v10311 = vsub.s32 0, %v10310
    %v10312 = vrot.slane %v10307, %v10311
    %v10314 = vpack.i.b16 %v10269, %v10269
    %v10316 = vlaneseq
    %v10317 = vshrl.u32 %v10316, 7
    %v10318 = vsub.s32 0, %v10317
    %v10319 = vrot.slane %v10314, %v10318
    %v10321 = vpack.i.b16 %v10270, %v10270
    %v10323 = vlaneseq
    %v10324 = vshrl.u32 %v10323, 7
    %v10325 = vsub.s32 0, %v10324
    %v10326 = vrot.slane %v10321, %v10325
    %v10335 = vunpack.c.l.b16 %v10277
    %v10336 = vunpack.c.l.b16 %v10284
    %v10337 = vunpack.c.l.b16 %v10291
    %v10338 = vunpack.c.l.b16 %v10298
    %v10339 = vunpack.c.l.b16 %v10305
    %v10340 = vunpack.c.l.b16 %v10312
    %v10341 = vunpack.c.l.b16 %v10319
    %v10342 = vunpack.c.l.b16 %v10326
    %v10343 = vpack.c.b16 %v10336, %v10335
    %v10344 = vpack.c.b16 %v10338, %v10337
    %v10345 = vpack.c.b16 %v10340, %v10339
    %v10346 = vpack.c.b16 %v10342, %v10341
    %10347 = vrot.lane.b32.xlu0 %v10343, 17
    %v10348 = vpop.permute.xlu0 %10347
    %10349 = vrot.lane.b32.xlu0 %v10344, 17
    %v10350 = vpop.permute.xlu0 %10349
    %10351 = vrot.lane.b32.xlu0 %v10345, 17
    %v10352 = vpop.permute.xlu0 %10351
    %10353 = vrot.lane.b32.xlu0 %v10346, 17
    %v10354 = vpop.permute.xlu0 %10353
    %v10355 = vrot.slane %v10348, 4
    %v10356 = vrot.slane %v10350, 4
    %v10357 = vrot.slane %v10352, 4
    %v10358 = vrot.slane %v10354, 4
    %v10359 = vsel %vm598, %v10355, %v10348
    %v10360 = vsel %vm188, %v10355, %v10356
    %v10361 = vsel %vm598, %v10360, %v10350
    %v10362 = vsel %vm188, %v10356, %v10357
    %v10363 = vsel %vm598, %v10362, %v10352
    %v10364 = vsel %vm188, %v10357, %v10358
    %v10365 = vsel %vm598, %v10364, %v10354
    %v10371 = vmul.bf16 %v9041, %v10359
    %v10372 = vmul.bf16 %v9042, %v10361
    %v10373 = vmul.bf16 %v9043, %v10363
    %v10374 = vmul.bf16 %v9044, %v10365
    %v10375 = vmul.bf16 %v9045, %v10358
    %v10376 = vmul.bf16 %v9046, %v10359
    %v10377 = vmul.bf16 %v9047, %v10361
    %v10378 = vmul.bf16 %v9048, %v10363
    %v10379 = vmul.bf16 %v9049, %v10365
    %v10380 = vmul.bf16 %v9050, %v10358
    %s10381 = scalar_lea.vmem %s8, 64
    %v10382 = vld [vmem:[%s10381] sm:$0xf]
    %v10383 = vld [vmem:[%s10381 + $0x4] sm:$0xf]
    %v10386 = vunpack.c.l.b16 %v10382
    %v10387 = vunpack.c.l.b16 %v10383
    %v10388 = vpack.c.b16 %v10387, %v10386
    %v10399 = vunpack.c.l.b16 %v10371
    %v10400 = vunpack.c.h.b16 %v10371
    %v10401 = vunpack.c.l.b16 %v10372
    %v10402 = vunpack.c.h.b16 %v10372
    %v10403 = vunpack.c.l.b16 %v10373
    %v10404 = vunpack.c.h.b16 %v10373
    %v10405 = vunpack.c.l.b16 %v10374
    %v10406 = vunpack.c.h.b16 %v10374
    %v10407 = vunpack.c.l.b16 %v10375
    %v10408 = vunpack.c.l.b16 %v10376
    %v10409 = vunpack.c.h.b16 %v10376
    %v10410 = vunpack.c.l.b16 %v10377
    %v10411 = vunpack.c.h.b16 %v10377
    %v10412 = vunpack.c.l.b16 %v10378
    %v10413 = vunpack.c.h.b16 %v10378
    %v10414 = vunpack.c.l.b16 %v10379
    %v10415 = vunpack.c.h.b16 %v10379
    %v10416 = vunpack.c.l.b16 %v10380
    %v10417 = vpack.c.b16 %v10408, %v10399
    %v10418 = vpack.c.b16 %v10409, %v10400
    %v10419 = vpack.c.b16 %v10410, %v10401
    %v10420 = vpack.c.b16 %v10411, %v10402
    %v10421 = vpack.c.b16 %v10412, %v10403
    %v10422 = vpack.c.b16 %v10413, %v10404
    %v10423 = vpack.c.b16 %v10414, %v10405
    %v10424 = vpack.c.b16 %v10415, %v10406
    %v10425 = vpack.c.b16 %v10416, %v10407
    %10426 = vrot.lane.b32.xlu0 %v10417, 111
    %v10427 = vpop.permute.xlu0 %10426
    %10428 = vrot.lane.b32.xlu0 %v10418, 111
    %v10429 = vpop.permute.xlu0 %10428
    %10430 = vrot.lane.b32.xlu0 %v10419, 111
    %v10431 = vpop.permute.xlu0 %10430
    %10432 = vrot.lane.b32.xlu0 %v10420, 111
    %v10433 = vpop.permute.xlu0 %10432
    %10434 = vrot.lane.b32.xlu0 %v10421, 111
    %v10435 = vpop.permute.xlu0 %10434
    %10436 = vrot.lane.b32.xlu0 %v10422, 111
    %v10437 = vpop.permute.xlu0 %10436
    %10438 = vrot.lane.b32.xlu0 %v10423, 111
    %v10439 = vpop.permute.xlu0 %10438
    %10440 = vrot.lane.b32.xlu0 %v10424, 111
    %v10441 = vpop.permute.xlu0 %10440
    %10442 = vrot.lane.b32.xlu0 %v10425, 111
    %v10443 = vpop.permute.xlu0 %10442
    %v10444 = vsel %vm186, %v10427, %v10429
    %v10445 = vsel %vm186, %v10429, %v10431
    %v10446 = vsel %vm186, %v10431, %v10433
    %v10447 = vsel %vm186, %v10433, %v10435
    %v10448 = vsel %vm186, %v10435, %v10437
    %v10449 = vsel %vm186, %v10437, %v10439
    %v10450 = vsel %vm186, %v10439, %v10441
    %v10451 = vsel %vm186, %v10441, %v10443
    %v10461 = vsel %vm7080, %v10388, 0
    %10463 = vmatprep.subr.bf16.mxu0 0
    %10464 = vmatpush1.bf16.msra.mxu0 0
    %10465 = vmatprep.subr.bf16.mxu0 0
    %10466 = vmatpush1.bf16.msra.mxu0 0
    %10467 = vmatprep.subr.bf16.mxu0 0
    %10468 = vmatpush1.bf16.msra.mxu0 0
    %10469 = vmatprep.subr.bf16.mxu0 0
    %10470 = vmatpush1.bf16.msra.mxu0 0
    %10471 = vmatprep.subr.bf16.mxu0 0
    %10472 = vmatpush1.bf16.msra.mxu0 0
    %10473 = vmatprep.subr.bf16.mxu0 0
    %10474 = vmatpush1.bf16.msra.mxu0 0
    %10475 = vmatprep.subr.bf16.mxu0 0
    %10476 = vmatpush1.bf16.msra.mxu0 0
    %10477 = vmatprep.subr.bf16.mxu0 %v10445
    %10478 = vmatpush1.bf16.msra.mxu0 %v10444
    %10479 = vmatprep.subr.bf16.mxu0 0
    %10480 = vmatpush2.bf16.msra.mxu0 0
    %10481 = vmatprep.subr.bf16.mxu0 0
    %10482 = vmatpush2.bf16.msra.mxu0 0
    %10483 = vmatprep.subr.bf16.mxu0 0
    %10484 = vmatpush2.bf16.msra.mxu0 0
    %10485 = vmatprep.subr.bf16.mxu0 0
    %10486 = vmatpush2.bf16.msra.mxu0 0
    %10487 = vmatprep.subr.bf16.mxu0 0
    %10488 = vmatpush2.bf16.msra.mxu0 0
    %10489 = vmatprep.subr.bf16.mxu0 0
    %10490 = vmatpush2.bf16.msra.mxu0 0
    %10491 = vmatprep.subr.bf16.mxu0 0
    %10492 = vmatpush2.bf16.msra.mxu0 0
    %10493 = vmatprep.subr.bf16.mxu0 0
    %10494 = vmatpush2.bf16.msra.mxu0 0
    %10495 = vmatprep.mubr.bf16.mxu0 0
    %10496 = vmatmul.mubr.bf16.gmra.mxu0 %v10461
    %v10497 = vpop.f32.mrf.mxu0
    %v10498 = vadd.f32 0.0, %v10497
    %v10499 = vpop.f32.mrf.mxu0
    %v10500 = vadd.f32 0.0, %v10499
    %v10501 = vpop.f32.mrf.mxu0
    %v10502 = vadd.f32 0.0, %v10501
    %v10503 = vpop.f32.mrf.mxu0
    %v10504 = vadd.f32 0.0, %v10503
    %10505 = vdwg.mxu0
    %10506 = vmatprep.subr.bf16.mxu0 0
    %10507 = vmatpush1.bf16.msra.mxu0 0
    %10508 = vmatprep.subr.bf16.mxu0 0
    %10509 = vmatpush1.bf16.msra.mxu0 0
    %10510 = vmatprep.subr.bf16.mxu0 0
    %10511 = vmatpush1.bf16.msra.mxu0 0
    %10512 = vmatprep.subr.bf16.mxu0 0
    %10513 = vmatpush1.bf16.msra.mxu0 0
    %10514 = vmatprep.subr.bf16.mxu0 0
    %10515 = vmatpush1.bf16.msra.mxu0 0
    %10516 = vmatprep.subr.bf16.mxu0 0
    %10517 = vmatpush1.bf16.msra.mxu0 0
    %10518 = vmatprep.subr.bf16.mxu0 0
    %10519 = vmatpush1.bf16.msra.mxu0 0
    %10520 = vmatprep.subr.bf16.mxu0 %v10447
    %10521 = vmatpush1.bf16.msra.mxu0 %v10446
    %10522 = vmatprep.subr.bf16.mxu0 0
    %10523 = vmatpush2.bf16.msra.mxu0 0
    %10524 = vmatprep.subr.bf16.mxu0 0
    %10525 = vmatpush2.bf16.msra.mxu0 0
    %10526 = vmatprep.subr.bf16.mxu0 0
    %10527 = vmatpush2.bf16.msra.mxu0 0
    %10528 = vmatprep.subr.bf16.mxu0 0
    %10529 = vmatpush2.bf16.msra.mxu0 0
    %10530 = vmatprep.subr.bf16.mxu0 0
    %10531 = vmatpush2.bf16.msra.mxu0 0
    %10532 = vmatprep.subr.bf16.mxu0 0
    %10533 = vmatpush2.bf16.msra.mxu0 0
    %10534 = vmatprep.subr.bf16.mxu0 0
    %10535 = vmatpush2.bf16.msra.mxu0 0
    %10536 = vmatprep.subr.bf16.mxu0 0
    %10537 = vmatpush2.bf16.msra.mxu0 0
    %10538 = vmatprep.mubr.bf16.mxu0 0
    %10539 = vmatmul.mubr.bf16.gmra.mxu0 %v10461
    %v10540 = vpop.f32.mrf.mxu0
    %v10541 = vadd.f32 0.0, %v10540
    %v10542 = vpop.f32.mrf.mxu0
    %v10543 = vadd.f32 0.0, %v10542
    %v10544 = vpop.f32.mrf.mxu0
    %v10545 = vadd.f32 0.0, %v10544
    %v10546 = vpop.f32.mrf.mxu0
    %v10547 = vadd.f32 0.0, %v10546
    %10548 = vdwg.mxu0
    %10549 = vmatprep.subr.bf16.mxu0 0
    %10550 = vmatpush1.bf16.msra.mxu0 0
    %10551 = vmatprep.subr.bf16.mxu0 0
    %10552 = vmatpush1.bf16.msra.mxu0 0
    %10553 = vmatprep.subr.bf16.mxu0 0
    %10554 = vmatpush1.bf16.msra.mxu0 0
    %10555 = vmatprep.subr.bf16.mxu0 0
    %10556 = vmatpush1.bf16.msra.mxu0 0
    %10557 = vmatprep.subr.bf16.mxu0 0
    %10558 = vmatpush1.bf16.msra.mxu0 0
    %10559 = vmatprep.subr.bf16.mxu0 0
    %10560 = vmatpush1.bf16.msra.mxu0 0
    %10561 = vmatprep.subr.bf16.mxu0 0
    %10562 = vmatpush1.bf16.msra.mxu0 0
    %10563 = vmatprep.subr.bf16.mxu0 %v10449
    %10564 = vmatpush1.bf16.msra.mxu0 %v10448
    %10565 = vmatprep.subr.bf16.mxu0 0
    %10566 = vmatpush2.bf16.msra.mxu0 0
    %10567 = vmatprep.subr.bf16.mxu0 0
    %10568 = vmatpush2.bf16.msra.mxu0 0
    %10569 = vmatprep.subr.bf16.mxu0 0
    %10570 = vmatpush2.bf16.msra.mxu0 0
    %10571 = vmatprep.subr.bf16.mxu0 0
    %10572 = vmatpush2.bf16.msra.mxu0 0
    %10573 = vmatprep.subr.bf16.mxu0 0
    %10574 = vmatpush2.bf16.msra.mxu0 0
    %10575 = vmatprep.subr.bf16.mxu0 0
    %10576 = vmatpush2.bf16.msra.mxu0 0
    %10577 = vmatprep.subr.bf16.mxu0 0
    %10578 = vmatpush2.bf16.msra.mxu0 0
    %10579 = vmatprep.subr.bf16.mxu0 0
    %10580 = vmatpush2.bf16.msra.mxu0 0
    %10581 = vmatprep.mubr.bf16.mxu0 0
    %10582 = vmatmul.mubr.bf16.gmra.mxu0 %v10461
    %v10583 = vpop.f32.mrf.mxu0
    %v10584 = vadd.f32 0.0, %v10583
    %v10585 = vpop.f32.mrf.mxu0
    %v10586 = vadd.f32 0.0, %v10585
    %v10587 = vpop.f32.mrf.mxu0
    %v10588 = vadd.f32 0.0, %v10587
    %v10589 = vpop.f32.mrf.mxu0
    %v10590 = vadd.f32 0.0, %v10589
    %10591 = vdwg.mxu0
    %10592 = vmatprep.subr.bf16.mxu0 0
    %10593 = vmatpush1.bf16.msra.mxu0 0
    %10594 = vmatprep.subr.bf16.mxu0 0
    %10595 = vmatpush1.bf16.msra.mxu0 0
    %10596 = vmatprep.subr.bf16.mxu0 0
    %10597 = vmatpush1.bf16.msra.mxu0 0
    %10598 = vmatprep.subr.bf16.mxu0 0
    %10599 = vmatpush1.bf16.msra.mxu0 0
    %10600 = vmatprep.subr.bf16.mxu0 0
    %10601 = vmatpush1.bf16.msra.mxu0 0
    %10602 = vmatprep.subr.bf16.mxu0 0
    %10603 = vmatpush1.bf16.msra.mxu0 0
    %10604 = vmatprep.subr.bf16.mxu0 0
    %10605 = vmatpush1.bf16.msra.mxu0 0
    %10606 = vmatprep.subr.bf16.mxu0 %v10451
    %10607 = vmatpush1.bf16.msra.mxu0 %v10450
    %10608 = vmatprep.subr.bf16.mxu0 0
    %10609 = vmatpush2.bf16.msra.mxu0 0
    %10610 = vmatprep.subr.bf16.mxu0 0
    %10611 = vmatpush2.bf16.msra.mxu0 0
    %10612 = vmatprep.subr.bf16.mxu0 0
    %10613 = vmatpush2.bf16.msra.mxu0 0
    %10614 = vmatprep.subr.bf16.mxu0 0
    %10615 = vmatpush2.bf16.msra.mxu0 0
    %10616 = vmatprep.subr.bf16.mxu0 0
    %10617 = vmatpush2.bf16.msra.mxu0 0
    %10618 = vmatprep.subr.bf16.mxu0 0
    %10619 = vmatpush2.bf16.msra.mxu0 0
    %10620 = vmatprep.subr.bf16.mxu0 0
    %10621 = vmatpush2.bf16.msra.mxu0 0
    %10622 = vmatprep.subr.bf16.mxu0 0
    %10623 = vmatpush2.bf16.msra.mxu0 0
    %10624 = vmatprep.mubr.bf16.mxu0 0
    %10625 = vmatmul.mubr.bf16.gmra.mxu0 %v10461
    %v10626 = vpop.f32.mrf.mxu0
    %v10627 = vadd.f32 0.0, %v10626
    %v10628 = vpop.f32.mrf.mxu0
    %v10629 = vadd.f32 0.0, %v10628
    %v10630 = vpop.f32.mrf.mxu0
    %v10631 = vadd.f32 0.0, %v10630
    %v10632 = vpop.f32.mrf.mxu0
    %v10633 = vadd.f32 0.0, %v10632
    %10634 = vdwg.mxu0
    %v10635 = vadd.f32 %v10231, %v10498
    %v10636 = vadd.f32 %v10232, %v10500
    %v10637 = vadd.f32 %v10233, %v10541
    %v10638 = vadd.f32 %v10234, %v10543
    %v10639 = vadd.f32 %v10235, %v10584
    %v10640 = vadd.f32 %v10236, %v10586
    %v10641 = vadd.f32 %v10237, %v10627
    %v10642 = vadd.f32 %v10238, %v10629
    %v10643 = vadd.f32 %v10239, %v10502
    %v10644 = vadd.f32 %v10240, %v10504
    %v10645 = vadd.f32 %v10241, %v10545
    %v10646 = vadd.f32 %v10242, %v10547
    %v10647 = vadd.f32 %v10243, %v10588
    %v10648 = vadd.f32 %v10244, %v10590
    %v10649 = vadd.f32 %v10245, %v10631
    %v10650 = vadd.f32 %v10246, %v10633
    %v10651 = vld [vmem:[%s9] sm:$0xff]
    %v10652 = vld [vmem:[%s9 + $0x8] sm:$0xff]
    %10654 = vset.pattern.permute.xlu0 0
    %10655 = vperm.xlu0 %10654, %v10651
    %v10656 = vpop.permute.xlu0 %10655
    %10659 = vset.pattern.permute.xlu0 0
    %10660 = vperm.xlu0 %10659, %v10652
    %v10661 = vpop.permute.xlu0 %10660
    %v10663 = vadd.f32 %v10635, %v10656
    %v10664 = vadd.f32 %v10636, %v10656
    %v10665 = vadd.f32 %v10637, %v10656
    %v10666 = vadd.f32 %v10638, %v10656
    %v10667 = vadd.f32 %v10639, %v10656
    %v10668 = vadd.f32 %v10640, %v10656
    %v10669 = vadd.f32 %v10641, %v10656
    %v10670 = vadd.f32 %v10642, %v10656
    %v10671 = vadd.f32 %v10643, %v10661
    %v10672 = vadd.f32 %v10644, %v10661
    %v10673 = vadd.f32 %v10645, %v10661
    %v10674 = vadd.f32 %v10646, %v10661
    %v10675 = vadd.f32 %v10647, %v10661
    %v10676 = vadd.f32 %v10648, %v10661
    %v10677 = vadd.f32 %v10649, %v10661
    %v10678 = vadd.f32 %v10650, %v10661
    %v10679 = vmax.f32 %v10663, 0.0
    %v10680 = vmax.f32 %v10664, 0.0
    %v10681 = vmax.f32 %v10665, 0.0
    %v10682 = vmax.f32 %v10666, 0.0
    %v10683 = vmax.f32 %v10667, 0.0
    %v10684 = vmax.f32 %v10668, 0.0
    %v10685 = vmax.f32 %v10669, 0.0
    %v10686 = vmax.f32 %v10670, 0.0
    %v10687 = vmax.f32 %v10671, 0.0
    %v10688 = vmax.f32 %v10672, 0.0
    %v10689 = vmax.f32 %v10673, 0.0
    %v10690 = vmax.f32 %v10674, 0.0
    %v10691 = vmax.f32 %v10675, 0.0
    %v10692 = vmax.f32 %v10676, 0.0
    %v10693 = vmax.f32 %v10677, 0.0
    %v10694 = vmax.f32 %v10678, 0.0
    %v10695 = vpack.c.bf16 %v10687, %v10679
    %v10696 = vpack.c.bf16 %v10688, %v10680
    %v10697 = vpack.c.bf16 %v10689, %v10681
    %v10698 = vpack.c.bf16 %v10690, %v10682
    %v10699 = vpack.c.bf16 %v10691, %v10683
    %v10700 = vpack.c.bf16 %v10692, %v10684
    %v10701 = vpack.c.bf16 %v10693, %v10685
    %v10702 = vpack.c.bf16 %v10694, %v10686
    %v10703 = vsub.f32 %v10679, %v10683
    %v10704 = vsub.f32 %v10680, %v10684
    %v10705 = vsub.f32 %v10681, %v10685
    %v10706 = vsub.f32 %v10682, %v10686
    %v10707 = vsub.f32 %v10687, %v10691
    %v10708 = vsub.f32 %v10688, %v10692
    %v10709 = vsub.f32 %v10689, %v10693
    %v10710 = vsub.f32 %v10690, %v10694
    %v10711 = vand.u32 2147483647, %v10703
    %v10712 = vand.u32 2147483647, %v10704
    %v10713 = vand.u32 2147483647, %v10705
    %v10714 = vand.u32 2147483647, %v10706
    %v10715 = vand.u32 2147483647, %v10707
    %v10716 = vand.u32 2147483647, %v10708
    %v10717 = vand.u32 2147483647, %v10709
    %v10718 = vand.u32 2147483647, %v10710
    %v10719 = vadd.f32 %v10711, %v10712
    %v10720 = vadd.f32 %v10719, %v10713
    %v10721 = vadd.f32 %v10720, %v10714
    %v10722 = vadd.f32 %v10721, %v10715
    %v10723 = vadd.f32 %v10722, %v10716
    %v10724 = vadd.f32 %v10723, %v10717
    %v10725 = vadd.f32 %v10724, %v10718
    %10726 = vadd.xlane.f32.xlu0 %v10725
    %v10727 = vpop.xlane.xlu0 %10726
    %v10728 = vrot.slane %v10727, 4
    %v10729 = vadd.f32 %v10727, %v10728
    %v10730 = vrot.slane %v10729, 2
    %v10731 = vadd.f32 %v10729, %v10730
    %v10732 = vrot.slane %v10731, 1
    %v10733 = vadd.f32 %v10731, %v10732
    %s10734 = vtos %v10733
    %v10735 = vstv %s10734
    %v10736 = vmul.f32 %v10735, 0.00012207031
    %10737 = vst.msk [vmem:[#allocation9] sm:$0x1] %vm67, %v10736
    %10738 = vmatprep.subr.bf16.mxu0 0
    %10739 = vmatpush1.bf16.xpose.msra.mxu0 0
    %10740 = vmatprep.subr.bf16.mxu0 0
    %10741 = vmatpush1.bf16.xpose.msra.mxu0 0
    %10742 = vmatprep.subr.bf16.mxu0 0
    %10743 = vmatpush1.bf16.xpose.msra.mxu0 0
    %10744 = vmatprep.subr.bf16.mxu0 0
    %10745 = vmatpush1.bf16.xpose.msra.mxu0 0
    %10746 = vmatprep.subr.bf16.mxu0 0
    %10747 = vmatpush1.bf16.xpose.msra.mxu0 0
    %10748 = vmatprep.subr.bf16.mxu0 0
    %10749 = vmatpush1.bf16.xpose.msra.mxu0 0
    %10750 = vmatprep.subr.bf16.mxu0 0
    %10751 = vmatpush1.bf16.xpose.msra.mxu0 0
    %10752 = vmatprep.subr.bf16.mxu0 %v10696
    %10753 = vmatpush1.bf16.xpose.msra.mxu0 %v10695
    %10754 = vmatprep.subr.bf16.mxu0 0
    %10755 = vmatpush2.bf16.xpose.msra.mxu0 0
    %10756 = vmatprep.subr.bf16.mxu0 0
    %10757 = vmatpush2.bf16.xpose.msra.mxu0 0
    %10758 = vmatprep.subr.bf16.mxu0 0
    %10759 = vmatpush2.bf16.xpose.msra.mxu0 0
    %10760 = vmatprep.subr.bf16.mxu0 0
    %10761 = vmatpush2.bf16.xpose.msra.mxu0 0
    %10762 = vmatprep.subr.bf16.mxu0 0
    %10763 = vmatpush2.bf16.xpose.msra.mxu0 0
    %10764 = vmatprep.subr.bf16.mxu0 0
    %10765 = vmatpush2.bf16.xpose.msra.mxu0 0
    %10766 = vmatprep.subr.bf16.mxu0 0
    %10767 = vmatpush2.bf16.xpose.msra.mxu0 0
    %10768 = vmatprep.subr.bf16.mxu0 0
    %10769 = vmatpush2.bf16.xpose.msra.mxu0 0
    %10770 = vmatprep.mubr.bf16.mxu0 %v10696
    %10771 = vmatmul.mubr.bf16.gmra.mxu0 %v10695
    %v10772 = vpop.f32.mrf.mxu0
    %v10773 = vadd.f32 0.0, %v10772
    %v10774 = vpop.f32.mrf.mxu0
    %v10775 = vpop.f32.mrf.mxu0
    %v10776 = vadd.f32 0.0, %v10775
    %v10777 = vpop.f32.mrf.mxu0
    %10778 = vdwg.mxu0
    %10779 = vmatprep.subr.bf16.mxu0 0
    %10780 = vmatpush1.bf16.xpose.msra.mxu0 0
    %10781 = vmatprep.subr.bf16.mxu0 0
    %10782 = vmatpush1.bf16.xpose.msra.mxu0 0
    %10783 = vmatprep.subr.bf16.mxu0 0
    %10784 = vmatpush1.bf16.xpose.msra.mxu0 0
    %10785 = vmatprep.subr.bf16.mxu0 0
    %10786 = vmatpush1.bf16.xpose.msra.mxu0 0
    %10787 = vmatprep.subr.bf16.mxu0 0
    %10788 = vmatpush1.bf16.xpose.msra.mxu0 0
    %10789 = vmatprep.subr.bf16.mxu0 0
    %10790 = vmatpush1.bf16.xpose.msra.mxu0 0
    %10791 = vmatprep.subr.bf16.mxu0 0
    %10792 = vmatpush1.bf16.xpose.msra.mxu0 0
    %10793 = vmatprep.subr.bf16.mxu0 %v10700
    %10794 = vmatpush1.bf16.xpose.msra.mxu0 %v10699
    %10795 = vmatprep.subr.bf16.mxu0 0
    %10796 = vmatpush2.bf16.xpose.msra.mxu0 0
    %10797 = vmatprep.subr.bf16.mxu0 0
    %10798 = vmatpush2.bf16.xpose.msra.mxu0 0
    %10799 = vmatprep.subr.bf16.mxu0 0
    %10800 = vmatpush2.bf16.xpose.msra.mxu0 0
    %10801 = vmatprep.subr.bf16.mxu0 0
    %10802 = vmatpush2.bf16.xpose.msra.mxu0 0
    %10803 = vmatprep.subr.bf16.mxu0 0
    %10804 = vmatpush2.bf16.xpose.msra.mxu0 0
    %10805 = vmatprep.subr.bf16.mxu0 0
    %10806 = vmatpush2.bf16.xpose.msra.mxu0 0
    %10807 = vmatprep.subr.bf16.mxu0 0
    %10808 = vmatpush2.bf16.xpose.msra.mxu0 0
    %10809 = vmatprep.subr.bf16.mxu0 0
    %10810 = vmatpush2.bf16.xpose.msra.mxu0 0
    %10811 = vmatprep.mubr.bf16.mxu0 %v10700
    %10812 = vmatmul.mubr.bf16.gmra.mxu0 %v10699
    %v10813 = vpop.f32.mrf.mxu0
    %v10814 = vadd.f32 0.0, %v10813
    %v10815 = vpop.f32.mrf.mxu0
    %v10816 = vpop.f32.mrf.mxu0
    %v10817 = vadd.f32 0.0, %v10816
    %v10818 = vpop.f32.mrf.mxu0
    %10819 = vdwg.mxu0
    %v10820 = vsub.f32 %v10773, %v10814
    %v10821 = vsub.f32 %v10776, %v10817
    %v10822 = vand.u32 2147483647, %v10820
    %v10823 = vand.u32 2147483647, %v10821
    %v10824 = vsel %vm7080, %v10822, 0.0
    %v10825 = vsel %vm7080, %v10823, 0.0
    %v10826 = vadd.f32 %v10824, %v10825
    %10827 = vadd.xlane.f32.xlu0 %v10826
    %v10828 = vpop.xlane.xlu0 %10827
    %v10829 = vrot.slane %v10828, 4
    %v10830 = vadd.f32 %v10828, %v10829
    %v10831 = vrot.slane %v10830, 2
    %v10832 = vadd.f32 %v10830, %v10831
    %v10833 = vrot.slane %v10832, 1
    %v10834 = vadd.f32 %v10832, %v10833
    %s10835 = vtos %v10834
    %v10836 = vstv %s10835
    %v10837 = vadd.f32 %v10836, 0.0
    %10838 = vmatprep.subr.bf16.mxu0 0
    %10839 = vmatpush1.bf16.xpose.msra.mxu0 0
    %10840 = vmatprep.subr.bf16.mxu0 0
    %10841 = vmatpush1.bf16.xpose.msra.mxu0 0
    %10842 = vmatprep.subr.bf16.mxu0 0
    %10843 = vmatpush1.bf16.xpose.msra.mxu0 0
    %10844 = vmatprep.subr.bf16.mxu0 0
    %10845 = vmatpush1.bf16.xpose.msra.mxu0 0
    %10846 = vmatprep.subr.bf16.mxu0 0
    %10847 = vmatpush1.bf16.xpose.msra.mxu0 0
    %10848 = vmatprep.subr.bf16.mxu0 0
    %10849 = vmatpush1.bf16.xpose.msra.mxu0 0
    %10850 = vmatprep.subr.bf16.mxu0 0
    %10851 = vmatpush1.bf16.xpose.msra.mxu0 0
    %10852 = vmatprep.subr.bf16.mxu0 %v10698
    %10853 = vmatpush1.bf16.xpose.msra.mxu0 %v10697
    %10854 = vmatprep.subr.bf16.mxu0 0
    %10855 = vmatpush2.bf16.xpose.msra.mxu0 0
    %10856 = vmatprep.subr.bf16.mxu0 0
    %10857 = vmatpush2.bf16.xpose.msra.mxu0 0
    %10858 = vmatprep.subr.bf16.mxu0 0
    %10859 = vmatpush2.bf16.xpose.msra.mxu0 0
    %10860 = vmatprep.subr.bf16.mxu0 0
    %10861 = vmatpush2.bf16.xpose.msra.mxu0 0
    %10862 = vmatprep.subr.bf16.mxu0 0
    %10863 = vmatpush2.bf16.xpose.msra.mxu0 0
    %10864 = vmatprep.subr.bf16.mxu0 0
    %10865 = vmatpush2.bf16.xpose.msra.mxu0 0
    %10866 = vmatprep.subr.bf16.mxu0 0
    %10867 = vmatpush2.bf16.xpose.msra.mxu0 0
    %10868 = vmatprep.subr.bf16.mxu0 0
    %10869 = vmatpush2.bf16.xpose.msra.mxu0 0
    %10870 = vmatprep.mubr.bf16.mxu0 %v10698
    %10871 = vmatmul.mubr.bf16.gmra.mxu0 %v10697
    %v10872 = vpop.f32.mrf.mxu0
    %v10873 = vadd.f32 0.0, %v10872
    %v10874 = vpop.f32.mrf.mxu0
    %v10875 = vpop.f32.mrf.mxu0
    %v10876 = vadd.f32 0.0, %v10875
    %v10877 = vpop.f32.mrf.mxu0
    %10878 = vdwg.mxu0
    %10879 = vmatprep.subr.bf16.mxu0 0
    %10880 = vmatpush1.bf16.xpose.msra.mxu0 0
    %10881 = vmatprep.subr.bf16.mxu0 0
    %10882 = vmatpush1.bf16.xpose.msra.mxu0 0
    %10883 = vmatprep.subr.bf16.mxu0 0
    %10884 = vmatpush1.bf16.xpose.msra.mxu0 0
    %10885 = vmatprep.subr.bf16.mxu0 0
    %10886 = vmatpush1.bf16.xpose.msra.mxu0 0
    %10887 = vmatprep.subr.bf16.mxu0 0
    %10888 = vmatpush1.bf16.xpose.msra.mxu0 0
    %10889 = vmatprep.subr.bf16.mxu0 0
    %10890 = vmatpush1.bf16.xpose.msra.mxu0 0
    %10891 = vmatprep.subr.bf16.mxu0 0
    %10892 = vmatpush1.bf16.xpose.msra.mxu0 0
    %10893 = vmatprep.subr.bf16.mxu0 %v10702
    %10894 = vmatpush1.bf16.xpose.msra.mxu0 %v10701
    %10895 = vmatprep.subr.bf16.mxu0 0
    %10896 = vmatpush2.bf16.xpose.msra.mxu0 0
    %10897 = vmatprep.subr.bf16.mxu0 0
    %10898 = vmatpush2.bf16.xpose.msra.mxu0 0
    %10899 = vmatprep.subr.bf16.mxu0 0
    %10900 = vmatpush2.bf16.xpose.msra.mxu0 0
    %10901 = vmatprep.subr.bf16.mxu0 0
    %10902 = vmatpush2.bf16.xpose.msra.mxu0 0
    %10903 = vmatprep.subr.bf16.mxu0 0
    %10904 = vmatpush2.bf16.xpose.msra.mxu0 0
    %10905 = vmatprep.subr.bf16.mxu0 0
    %10906 = vmatpush2.bf16.xpose.msra.mxu0 0
    %10907 = vmatprep.subr.bf16.mxu0 0
    %10908 = vmatpush2.bf16.xpose.msra.mxu0 0
    %10909 = vmatprep.subr.bf16.mxu0 0
    %10910 = vmatpush2.bf16.xpose.msra.mxu0 0
    %10911 = vmatprep.mubr.bf16.mxu0 %v10702
    %10912 = vmatmul.mubr.bf16.gmra.mxu0 %v10701
    %v10913 = vpop.f32.mrf.mxu0
    %v10914 = vadd.f32 0.0, %v10913
    %v10915 = vpop.f32.mrf.mxu0
    %v10916 = vpop.f32.mrf.mxu0
    %v10917 = vadd.f32 0.0, %v10916
    %v10918 = vpop.f32.mrf.mxu0
    %10919 = vdwg.mxu0
    %v10920 = vsub.f32 %v10873, %v10914
    %v10921 = vsub.f32 %v10876, %v10917
    %v10922 = vand.u32 2147483647, %v10920
    %v10923 = vand.u32 2147483647, %v10921
    %v10924 = vsel %vm7080, %v10922, 0.0
    %v10925 = vsel %vm7080, %v10923, 0.0
    %v10926 = vadd.f32 %v10924, %v10925
    %10927 = vadd.xlane.f32.xlu0 %v10926
    %v10928 = vpop.xlane.xlu0 %10927
    %v10929 = vrot.slane %v10928, 4
    %v10930 = vadd.f32 %v10928, %v10929
    %v10931 = vrot.slane %v10930, 2
    %v10932 = vadd.f32 %v10930, %v10931
    %v10933 = vrot.slane %v10932, 1
    %v10934 = vadd.f32 %v10932, %v10933
    %s10935 = vtos %v10934
    %v10936 = vstv %s10935
    %v10937 = vadd.f32 %v10837, %v10936
    %v10938 = vmul.f32 %v10937, 4.7683716e-07
    %10939 = vst.msk [vmem:[#allocation14] sm:$0x1] %vm67, %v10938
    // Predicated region
    $region42: #{_lambda_.1} parent=1 // pred_check
      _
    $region43: #{_lambda_.1} parent=1 // pred_check_branch
      %10941 = sbr.rel (0) target = $region45
    $region44: #{_lambda_.1} parent=1 // pred_region
      %s10943 = ssub.s32 16, 16
      %10944 = vsyncadd [#allocation5], %s10943
      %s10946 = sshll.u32 [#allocation4], 4
      %s10947 = int_to_ptr.vmem [resolvable:$true] %s10946
      %10949 = dma.vmem_to_hbm [thread:$0]  %s10947, 16, %s10, [#allocation5]
    $region45: #{_lambda_.1} parent=1 // pred_fallthru
      _
    // Predicated region
    $region46: #{_lambda_.1} parent=1 // pred_check
      _
    $region47: #{_lambda_.1} parent=1 // pred_check_branch
      %10951 = sbr.rel (0) target = $region49
    $region48: #{_lambda_.1} parent=1 // pred_region
      %s10953 = ssub.s32 16, 16
      %10954 = vsyncadd [#allocation7], %s10953
      %s10956 = sshll.u32 [#allocation6], 4
      %s10957 = int_to_ptr.vmem [resolvable:$true] %s10956
      %10959 = dma.vmem_to_hbm [thread:$0]  %s10957, 16, %s11, [#allocation7]
    $region49: #{_lambda_.1} parent=1 // pred_fallthru
      _
    // Predicated region
    $region50: #{_lambda_.1} parent=1 // pred_check
      _
    $region51: #{_lambda_.1} parent=1 // pred_check_branch
      %10961 = sbr.rel (0) target = $region53
    $region52: #{_lambda_.1} parent=1 // pred_region
      %s10963 = ssub.s32 16, 16
      %10964 = vsyncadd [#allocation7], %s10963
      %s10966 = sshll.u32 [#allocation8], 4
      %s10967 = int_to_ptr.vmem [resolvable:$true] %s10966
      %10969 = dma.vmem_to_hbm [thread:$0]  %s10967, 16, %s12, [#allocation7]
    $region53: #{_lambda_.1} parent=1 // pred_fallthru
      _
    // Predicated region
    $region54: #{_lambda_.1} parent=1 // pred_check
      _
    $region55: #{_lambda_.1} parent=1 // pred_check_branch
      %10971 = sbr.rel (0) target = $region57
    $region56: #{_lambda_.1} parent=1 // pred_region
      %s10973 = ssub.s32 16, 16
      %10974 = vsyncadd [#allocation10], %s10973
      %s10976 = sshll.u32 [#allocation9], 4
      %s10977 = int_to_ptr.vmem [resolvable:$true] %s10976
      %10979 = dma.vmem_to_hbm [thread:$0]  %s10977, 16, %s13, [#allocation10]
    $region57: #{_lambda_.1} parent=1 // pred_fallthru
      _
    // Predicated region
    $region58: #{_lambda_.1} parent=1 // pred_check
      _
    $region59: #{_lambda_.1} parent=1 // pred_check_branch
      %10981 = sbr.rel (0) target = $region61
    $region60: #{_lambda_.1} parent=1 // pred_region
      %s10983 = ssub.s32 16, 16
      %10984 = vsyncadd [#allocation10], %s10983
      %s10986 = sshll.u32 [#allocation11], 4
      %s10987 = int_to_ptr.vmem [resolvable:$true] %s10986
      %10989 = dma.vmem_to_hbm [thread:$0]  %s10987, 16, %s14, [#allocation10]
    $region61: #{_lambda_.1} parent=1 // pred_fallthru
      _
    // Predicated region
    $region62: #{_lambda_.1} parent=1 // pred_check
      _
    $region63: #{_lambda_.1} parent=1 // pred_check_branch
      %10991 = sbr.rel (0) target = $region65
    $region64: #{_lambda_.1} parent=1 // pred_region
      %s10993 = ssub.s32 16, 16
      %10994 = vsyncadd [#allocation13], %s10993
      %s10996 = sshll.u32 [#allocation12], 4
      %s10997 = int_to_ptr.vmem [resolvable:$true] %s10996
      %10999 = dma.vmem_to_hbm [thread:$0]  %s10997, 16, %s15, [#allocation13]
    $region65: #{_lambda_.1} parent=1 // pred_fallthru
      _
    // Predicated region
    $region66: #{_lambda_.1} parent=1 // pred_check
      _
    $region67: #{_lambda_.1} parent=1 // pred_check_branch
      %11001 = sbr.rel (0) target = $region69
    $region68: #{_lambda_.1} parent=1 // pred_region
      %s11003 = ssub.s32 16, 16
      %11004 = vsyncadd [#allocation13], %s11003
      %s11006 = sshll.u32 [#allocation14], 4
      %s11007 = int_to_ptr.vmem [resolvable:$true] %s11006
      %11009 = dma.vmem_to_hbm [thread:$0]  %s11007, 16, %s16, [#allocation13]
    $region69: #{_lambda_.1} parent=1 // pred_fallthru
      _
    // Predicated region
    $region70: #{_lambda_.1} parent=1 // pred_check
      _
    $region71: #{_lambda_.1} parent=1 // pred_check_branch
      %11011 = sbr.rel (0) target = $region73
    $region72: #{_lambda_.1} parent=1 // pred_region
      %11012 = dma.done [#allocation5], 16
    $region73: #{_lambda_.1} parent=1 // pred_fallthru
      _
    // Predicated region
    $region74: #{_lambda_.1} parent=1 // pred_check
      _
    $region75: #{_lambda_.1} parent=1 // pred_check_branch
      %11014 = sbr.rel (0) target = $region77
    $region76: #{_lambda_.1} parent=1 // pred_region
      %11015 = dma.done [#allocation7], 16
    $region77: #{_lambda_.1} parent=1 // pred_fallthru
      _
    // Predicated region
    $region78: #{_lambda_.1} parent=1 // pred_check
      _
    $region79: #{_lambda_.1} parent=1 // pred_check_branch
      %11017 = sbr.rel (0) target = $region81
    $region80: #{_lambda_.1} parent=1 // pred_region
      %11018 = dma.done [#allocation7], 16
    $region81: #{_lambda_.1} parent=1 // pred_fallthru
      _
    // Predicated region
    $region82: #{_lambda_.1} parent=1 // pred_check
      _
    $region83: #{_lambda_.1} parent=1 // pred_check_branch
      %11020 = sbr.rel (0) target = $region85
    $region84: #{_lambda_.1} parent=1 // pred_region
      %11021 = dma.done [#allocation10], 16
    $region85: #{_lambda_.1} parent=1 // pred_fallthru
      _
    // Predicated region
    $region86: #{_lambda_.1} parent=1 // pred_check
      _
    $region87: #{_lambda_.1} parent=1 // pred_check_branch
      %11023 = sbr.rel (0) target = $region89
    $region88: #{_lambda_.1} parent=1 // pred_region
      %11024 = dma.done [#allocation10], 16
    $region89: #{_lambda_.1} parent=1 // pred_fallthru
      _
    // Predicated region
    $region90: #{_lambda_.1} parent=1 // pred_check
      _
    $region91: #{_lambda_.1} parent=1 // pred_check_branch
      %11026 = sbr.rel (0) target = $region93
    $region92: #{_lambda_.1} parent=1 // pred_region
      %11027 = dma.done [#allocation13], 16
    $region93: #{_lambda_.1} parent=1 // pred_fallthru
      _
    // Predicated region
    $region94: #{_lambda_.1} parent=1 // pred_check
      _
    $region95: #{_lambda_.1} parent=1 // pred_check_branch
      %11029 = sbr.rel (0) target = $region97
    $region96: #{_lambda_.1} parent=1 // pred_region
      %11030 = dma.done [#allocation13], 16
    $region97: #{_lambda_.1} parent=1 // pred_fallthru
      _
    %11031 = vsyncpa [#allocation5], 1
    %11032 = vsyncpa [#allocation7], 1
    %11033 = vsyncpa [#allocation10], 1
    %11034 = vsyncpa [#allocation13], 1

</llo_original>
